<compile_context>
chip_gen: v5e
topology: v5e:2x2
jax: 0.10.0
libtpu: 0.0.40
codegen_flags: <defaults>
</compile_context>

<pallas_src>
import functools
import math

import jax
import jax.numpy as jnp
from jax.experimental import pallas as pl
from jax.experimental.pallas import tpu as pltpu


# --------------------------------------------------------------------------
# Helpers
# --------------------------------------------------------------------------
def _round_up(x, m):
    return ((x + m - 1) // m) * m


def _pick_tile(dim, candidates):
    for c in candidates:
        if dim % c == 0:
            return c
    return dim


@functools.lru_cache(maxsize=1)
def _vmem_budget_bytes():
    """~3/4 of physical VMEM (128 MiB on v5e/v6e, 64 MiB on v7x)."""
    try:
        cap = int(pltpu.get_tpu_info().vmem_capacity_bytes)
    except Exception:
        cap = 64 * 1024 * 1024
    return max(32 * 1024 * 1024, min(cap * 3 // 4, 100 * 1024 * 1024))


# --------------------------------------------------------------------------
# Fused tiled linear kernel: y = x @ w + b [, relu] [, + residual] [, LN]
# --------------------------------------------------------------------------
def _linear_kernel(x_ref, w_ref, b_ref, *rest, relu, has_res, has_ln, ln_valid):
    idx = 0
    res_ref = g_ref = b2_ref = None
    if has_res:
        res_ref = rest[idx]; idx += 1
    if has_ln:
        g_ref, b2_ref = rest[idx], rest[idx + 1]; idx += 2
    o_ref, acc_ref = rest[idx], rest[idx + 1]

    k = pl.program_id(2)

    @pl.when(k == 0)
    def _init():
        acc_ref[...] = jnp.zeros_like(acc_ref)

    acc_ref[...] += jnp.dot(x_ref[...], w_ref[...],
                            preferred_element_type=jnp.float32)

    @pl.when(k == pl.num_programs(2) - 1)
    def _epilogue():
        y = acc_ref[...] + b_ref[...]
        if relu:
            y = jnp.maximum(y, 0.0)
        if has_res:
            y = y + res_ref[...].astype(jnp.float32)
        if has_ln:
            n_pad = y.shape[-1]
            if ln_valid == n_pad:
                mean = jnp.mean(y, axis=-1, keepdims=True)
                c = y - mean
                var = jnp.mean(c * c, axis=-1, keepdims=True)
            else:
                col = jax.lax.broadcasted_iota(jnp.int32, y.shape, 1)
                ok = col < ln_valid
                inv_n = 1.0 / ln_valid
                mean = jnp.sum(jnp.where(ok, y, 0.0), axis=-1,
                               keepdims=True) * inv_n
                c = jnp.where(ok, y - mean, 0.0)
                var = jnp.sum(c * c, axis=-1, keepdims=True) * inv_n
            y = c * jax.lax.rsqrt(var + 1e-5) * g_ref[...] + b2_ref[...]
        o_ref[...] = y.astype(o_ref.dtype)


def linear_p(x, lin, *, relu=False, residual=None, ln=None, ln_valid=0,
             out_dtype=jnp.bfloat16):
    """Fused y = x @ w + b [, relu][, + residual][, LayerNorm].

    x:        (..., K_pad) activations (cast to bf16; padded feature dims).
    lin:      {'w': (K_pad, N_pad) bf16, 'b': (1, N_pad) f32}  -- prepared once
              at init, so no per-call weight pad/cast HBM traffic.
    residual: (..., N_pad) added before LN.  ln: (gamma, beta) each (1, N_pad).
    """
    w, b = lin['w'], lin['b']
    K_pad, N_pad = w.shape
    lead = x.shape[:-1]
    x2 = x.reshape(-1, K_pad).astype(jnp.bfloat16)
    M = x2.shape[0]

    M_run = M if M % 8 == 0 else _round_up(M, 8)
    if M_run != M:                       # only the tiny latent-head calls
        assert residual is None
        x2 = jnp.pad(x2, ((0, M_run - M), (0, 0)))

    budget = _vmem_budget_bytes()
    big = budget >= 64 * 1024 * 1024
    tm = _pick_tile(M_run, (512, 256, 128, 64, 32, 16, 8) if big
                    else (256, 128, 64, 32, 16, 8))
    tk = _pick_tile(K_pad, (512, 256, 128) if big else (256, 128))
    if ln is not None:
        tn = N_pad                       # LayerNorm needs the full feature row
        # v7x guard: keep full-row (tm, N_pad) epilogue tiles well inside VMEM.
        while tm >= 16 and tm % 2 == 0 and tm * N_pad * 16 > budget // 2:
            tm //= 2
    else:
        tn = _pick_tile(N_pad, (512, 256, 128) if big else (256, 128))

    operands = [x2, w, b]
    in_specs = [
        pl.BlockSpec((tm, tk), lambda i, j, k: (i, k)),
        pl.BlockSpec((tk, tn), lambda i, j, k: (k, j)),
        pl.BlockSpec((1, tn), lambda i, j, k: (0, j)),
    ]
    if residual is not None:
        operands.append(residual.reshape(-1, N_pad))
        in_specs.append(pl.BlockSpec((tm, tn), lambda i, j, k: (i, j)))
    if ln is not None:
        operands += [ln[0], ln[1]]
        in_specs += [pl.BlockSpec((1, tn), lambda i, j, k: (0, j)),
                     pl.BlockSpec((1, tn), lambda i, j, k: (0, j))]

    out = pl.pallas_call(
        functools.partial(_linear_kernel, relu=relu,
                          has_res=residual is not None,
                          has_ln=ln is not None, ln_valid=ln_valid),
        out_shape=jax.ShapeDtypeStruct((M_run, N_pad), out_dtype),
        grid=(M_run // tm, N_pad // tn, K_pad // tk),
        in_specs=in_specs,
        out_specs=pl.BlockSpec((tm, tn), lambda i, j, k: (i, j)),
        scratch_shapes=[pltpu.VMEM((tm, tn), jnp.float32)],
        compiler_params=pltpu.CompilerParams(
            dimension_semantics=("parallel", "parallel", "arbitrary"),
            vmem_limit_bytes=budget),
    )(*operands)
    if M_run != M:
        out = out[:M]
    return out.reshape(lead + (N_pad,))


# --------------------------------------------------------------------------
# Multi-head self-attention, lane-aligned per-head layout, grid = (B, H)
# --------------------------------------------------------------------------
def _mha_kernel(qkv_ref, o_ref, *, causal, l_valid):
    dk_pad = o_ref.shape[-1]
    qkv = qkv_ref[...]                               # (1, L_pad, 3*dk_pad) bf16
    q = qkv[0, :, 0 * dk_pad:1 * dk_pad]             # lane-aligned slices
    k = qkv[0, :, 1 * dk_pad:2 * dk_pad]
    v = qkv[0, :, 2 * dk_pad:3 * dk_pad]
    # 1/sqrt(dk) is folded into the Q weight columns at init.
    s = jax.lax.dot_general(q, k, (((1,), (1,)), ((), ())),
                            preferred_element_type=jnp.float32)
    l_pad = s.shape[0]
    if causal or l_valid < l_pad:
        col = jax.lax.broadcasted_iota(jnp.int32, (l_pad, l_pad), 1)
        bad = col >= l_valid                          # padded keys
        if causal:
            row = jax.lax.broadcasted_iota(jnp.int32, (l_pad, l_pad), 0)
            bad = jnp.logical_or(bad, col > row)      # strictly-upper illegal
        s = jnp.where(bad, -1e9, s)
    s = s - jnp.max(s, axis=-1, keepdims=True)
    p = jnp.exp(s)
    p = p * pl.reciprocal(jnp.sum(p, axis=-1, keepdims=True), approx=True)
    ctx = jnp.dot(p.astype(jnp.bfloat16), v, preferred_element_type=jnp.float32)
    o_ref[...] = ctx[None].astype(o_ref.dtype)


def self_attention(qkv, n_heads, dk_pad, l_valid, causal):
    """qkv: (B, L_pad, H*3*dk_pad) bf16 (head-major, 128-lane aligned chunks)
    -> (B, L_pad, H*dk_pad) bf16.  Per-head slicing done by BlockSpec DMA."""
    B, L_pad, _ = qkv.shape
    # TODO(synk): flash-tile over keys for long L (esp. v7x 64 MiB VMEM).
    return pl.pallas_call(
        functools.partial(_mha_kernel, causal=causal, l_valid=l_valid),
        out_shape=jax.ShapeDtypeStruct((B, L_pad, n_heads * dk_pad),
                                       jnp.bfloat16),
        grid=(B, n_heads),
        in_specs=[pl.BlockSpec((1, L_pad, 3 * dk_pad), lambda b, h: (b, 0, h))],
        out_specs=pl.BlockSpec((1, L_pad, dk_pad), lambda b, h: (b, 0, h)),
        compiler_params=pltpu.CompilerParams(
            dimension_semantics=("parallel", "parallel"),
            vmem_limit_bytes=_vmem_budget_bytes()),
    )(qkv)


# --------------------------------------------------------------------------
# Fused (x + broadcast(r)) -> LayerNorm kernel (decoder cross-attention tail)
# --------------------------------------------------------------------------
def _add_ln_kernel(x_ref, r_ref, g_ref, b_ref, o_ref, *, ln_valid):
    y = x_ref[...].astype(jnp.float32) + r_ref[...].astype(jnp.float32)
    n_pad = y.shape[-1]
    if ln_valid == n_pad:
        mean = jnp.mean(y, axis=-1, keepdims=True)
        c = y - mean
        var = jnp.mean(c * c, axis=-1, keepdims=True)
    else:
        col = jax.lax.broadcasted_iota(jnp.int32, y.shape, 2)
        ok = col < ln_valid
        inv_n = 1.0 / ln_valid
        mean = jnp.sum(jnp.where(ok, y, 0.0), axis=-1, keepdims=True) * inv_n
        c = jnp.where(ok, y - mean, 0.0)
        var = jnp.sum(c * c, axis=-1, keepdims=True) * inv_n
    o_ref[...] = (c * jax.lax.rsqrt(var + 1e-5) * g_ref[...]
                  + b_ref[...]).astype(o_ref.dtype)


def add_broadcast_ln(x, r, gamma, beta, ln_valid):
    """LN(x + r), x: (B, L_pad, D_pad), r: (B, 1, D_pad) broadcast over L."""
    B, L_pad, D_pad = x.shape
    return pl.pallas_call(
        functools.partial(_add_ln_kernel, ln_valid=ln_valid),
        out_shape=jax.ShapeDtypeStruct((B, L_pad, D_pad), jnp.bfloat16),
        grid=(B,),
        in_specs=[
            pl.BlockSpec((1, L_pad, D_pad), lambda b: (b, 0, 0)),
            pl.BlockSpec((1, 1, D_pad), lambda b: (b, 0, 0)),
            pl.BlockSpec((1, 1, D_pad), lambda b: (0, 0, 0)),
            pl.BlockSpec((1, 1, D_pad), lambda b: (0, 0, 0)),
        ],
        out_specs=pl.BlockSpec((1, L_pad, D_pad), lambda b: (b, 0, 0)),
        compiler_params=pltpu.CompilerParams(
            dimension_semantics=("parallel",)),
    )(x, r, gamma.reshape(1, 1, D_pad), beta.reshape(1, 1, D_pad))


# --------------------------------------------------------------------------
# Config + parameter preparation (pad/pack/cast ONCE at init)
# --------------------------------------------------------------------------
def make_config(*, max_seq_len, vocab_size, emb_size, dim_m, dim_i, n_heads,
                num_layers, latent_size):
    assert dim_m % n_heads == 0
    dk = dim_m // n_heads
    return dict(
        max_seq_len=max_seq_len, vocab_size=vocab_size, emb_size=emb_size,
        dim_m=dim_m, dim_i=dim_i, n_heads=n_heads, num_layers=num_layers,
        latent=latent_size, dk=dk,
        dk_pad=_round_up(dk, 128),
        dim_m_pad=_round_up(dim_m, 128),
        dim_i_pad=_round_up(dim_i, 128),
        emb_pad=_round_up(emb_size, 128),
        vocab_pad=_round_up(vocab_size, 128),
        latent_pad=_round_up(latent_size, 128),
        lat2_pad=_round_up(2 * latent_size, 128),
    )


def _torch_linear(key, fan_in, fan_out):
    kw, kb = jax.random.split(key)
    lim = 1.0 / math.sqrt(fan_in)
    return (jax.random.uniform(kw, (fan_in, fan_out), jnp.float32, -lim, lim),
            jax.random.uniform(kb, (fan_out,), jnp.float32, -lim, lim))


def _pack(w, b, k_pad, n_pad):
    K, N = w.shape
    wp = jnp.zeros((k_pad, n_pad), jnp.float32).at[:K, :N].set(w)
    bp = jnp.zeros((1, n_pad), jnp.float32).at[:, :N].set(b[None, :])
    return {'w': wp.astype(jnp.bfloat16), 'b': bp}


def _pack_qkv(wq, bq, wk, bk, wv, bv, cfg):
    """Head-major [q|k|v] chunks, each padded to dk_pad (128-lane aligned);
    the 1/sqrt(dk) softmax scale is folded into the Q columns/bias."""
    H, dk, dkp = cfg['n_heads'], cfg['dk'], cfg['dk_pad']
    scale = 1.0 / math.sqrt(dk)
    K = wq.shape[0]
    w = jnp.zeros((cfg['dim_m_pad'], 3 * H * dkp), jnp.float32)
    b = jnp.zeros((1, 3 * H * dkp), jnp.float32)
    for h in range(H):
        base = 3 * h * dkp
        w = w.at[:K, base:base + dk].set(wq[:, h * dk:(h + 1) * dk] * scale)
        b = b.at[0, base:base + dk].set(bq[h * dk:(h + 1) * dk] * scale)
        w = w.at[:K, base + dkp:base + dkp + dk].set(wk[:, h * dk:(h + 1) * dk])
        b = b.at[0, base + dkp:base + dkp + dk].set(bk[h * dk:(h + 1) * dk])
        w = w.at[:K, base + 2 * dkp:base + 2 * dkp + dk].set(
            wv[:, h * dk:(h + 1) * dk])
        b = b.at[0, base + 2 * dkp:base + 2 * dkp + dk].set(
            bv[h * dk:(h + 1) * dk])
    return {'w': w.astype(jnp.bfloat16), 'b': b}


def _pack_attn_out(wo, bo, cfg):
    """Re-layout O-projection rows to the padded per-head layout (zero rows in
    the padding positions), so the attention output needs no compaction."""
    H, dk, dkp = cfg['n_heads'], cfg['dk'], cfg['dk_pad']
    dim_m, dmp = cfg['dim_m'], cfg['dim_m_pad']
    w = jnp.zeros((H * dkp, dmp), jnp.float32)
    for h in range(H):
        w = w.at[h * dkp:h * dkp + dk, :dim_m].set(wo[h * dk:(h + 1) * dk, :])
    b = jnp.zeros((1, dmp), jnp.float32).at[0, :dim_m].set(bo)
    return {'w': w.astype(jnp.bfloat16), 'b': b}


def _ln_params(cfg):
    g = jnp.zeros((1, cfg['dim_m_pad']), jnp.float32).at[:, :cfg['dim_m']].set(1.0)
    b = jnp.zeros((1, cfg['dim_m_pad']), jnp.float32)
    return g, b


def _sinusoid_table(max_len, dim, dim_pad):
    pos = jnp.arange(max_len, dtype=jnp.float32)[:, None]
    i = jnp.arange(dim, dtype=jnp.float32)[None, :]
    angle = pos / jnp.power(10000.0, 2.0 * jnp.floor(i / 2.0) / dim)
    tab = jnp.where((jnp.arange(dim) % 2) == 0, jnp.sin(angle), jnp.cos(angle))
    out = jnp.zeros((max_len, dim_pad), jnp.float32).at[:, :dim].set(tab)
    return out.astype(jnp.bfloat16)


def init_params(key, cfg):
    keys = iter(jax.random.split(key, 512))
    nxt = lambda: next(keys)
    dim_m, dim_i = cfg['dim_m'], cfg['dim_i']
    dmp, dip = cfg['dim_m_pad'], cfg['dim_i_pad']

    def self_mha():
        wq, bq = _torch_linear(nxt(), dim_m, dim_m)
        wk, bk = _torch_linear(nxt(), dim_m, dim_m)
        wv, bv = _torch_linear(nxt(), dim_m, dim_m)
        wo, bo = _torch_linear(nxt(), dim_m, dim_m)
        g, b = _ln_params(cfg)
        return {'qkv': _pack_qkv(wq, bq, wk, bk, wv, bv, cfg),
                'o': _pack_attn_out(wo, bo, cfg), 'ln_g': g, 'ln_b': b}

    def cross_mha():
        # Single-token memory: softmax over one key == 1, so only V/O matter;
        # pre-compose them in f32 at init (one tiny matmul per layer).
        wv, bv = _torch_linear(nxt(), dim_m, dim_m)
        wo, bo = _torch_linear(nxt(), dim_m, dim_m)
        w_vo = wv @ wo
        b_vo = bv @ wo + bo
        g, b = _ln_params(cfg)
        return {'vo': _pack(w_vo, b_vo, dmp, dmp), 'ln_g': g, 'ln_b': b}

    def ffn():
        w1, b1 = _torch_linear(nxt(), dim_m, dim_i)
        w2, b2 = _torch_linear(nxt(), dim_i, dim_m)
        g, b = _ln_params(cfg)
        return {'fc1': _pack(w1, b1, dmp, dip), 'fc2': _pack(w2, b2, dip, dmp),
                'ln_g': g, 'ln_b': b}

    emb = jax.random.normal(nxt(), (cfg['vocab_size'], cfg['emb_size']),
                            jnp.float32)
    emb_tab = jnp.zeros((cfg['vocab_size'], cfg['emb_pad']), jnp.float32
                        ).at[:, :cfg['emb_size']].set(emb).astype(jnp.bfloat16)
    w_ep, b_ep = _torch_linear(nxt(), cfg['emb_size'], dim_m)
    repr_tok = jax.random.normal(nxt(), (1, dim_m), jnp.float32)
    repr_pad = jnp.zeros((1, dmp), jnp.float32
                         ).at[:, :dim_m].set(repr_tok).astype(jnp.bfloat16)

    w_out, b_out = _torch_linear(nxt(), dim_m, cfg['vocab_size'])
    w_mu, b_mu = _torch_linear(nxt(), dim_m, cfg['latent'])
    w_lv, b_lv = _torch_linear(nxt(), dim_m, cfg['latent'])
    w_mlv = jnp.concatenate([w_mu, w_lv], axis=1)      # fused latent heads
    b_mlv = jnp.concatenate([b_mu, b_lv])
    w_dl, b_dl = _torch_linear(nxt(), cfg['latent'], dim_m)

    return {
        'embedding': emb_tab,                              # (V, emb_pad) bf16
        'emb_proj': _pack(w_ep, b_ep, cfg['emb_pad'], dmp),
        'pos_enc': _sinusoid_table(cfg['max_seq_len'], dim_m, dmp),
        'repr_token': repr_pad,
        'encoder': [{'self_attn': self_mha(), 'ffn': ffn()}
                    for _ in range(cfg['num_layers'])],
        'decoder': [{'self_attn': self_mha(), 'cross_attn': cross_mha(),
                     'ffn': ffn()} for _ in range(cfg['num_layers'])],
        'out': _pack(w_out, b_out, dmp, cfg['vocab_pad']),
        'to_mu_logvar': _pack(w_mlv, b_mlv, dmp, cfg['lat2_pad']),
        'decode_latent': _pack(w_dl, b_dl, cfg['latent_pad'], dmp),
    }


# --------------------------------------------------------------------------
# Model blocks
# --------------------------------------------------------------------------
def mha_block(p, x, cfg, causal, l_valid):
    qkv = linear_p(x, p['qkv'])                               # fused QKV proj
    ctx = self_attention(qkv, cfg['n_heads'], cfg['dk_pad'], l_valid, causal)
    return linear_p(ctx, p['o'], residual=x,
                    ln=(p['ln_g'], p['ln_b']), ln_valid=cfg['dim_m'])


def cross_block(p, x, memory, cfg):
    cross = linear_p(memory, p['vo'])                         # (B, 1, dmp)
    return add_broadcast_ln(x, cross, p['ln_g'], p['ln_b'], cfg['dim_m'])


def ffn_block(p, x, cfg):
    h = linear_p(x, p['fc1'], relu=True)
    return linear_p(h, p['fc2'], residual=x,
                    ln=(p['ln_g'], p['ln_b']), ln_valid=cfg['dim_m'])


def transformer_vae_forward(params, tokens, rng, cfg):
    B, L = tokens.shape
    dmp = cfg['dim_m_pad']
    L_dec = _round_up(L, 8)
    L_enc = _round_up(L + 1, 8)

    # --- Positional embedding (gather from pre-padded bf16 table). ---
    emb = jnp.take(params['embedding'], tokens, axis=0)       # (B, L, emb_pad)
    if L_dec != L:
        emb = jnp.pad(emb, ((0, 0), (0, L_dec - L), (0, 0)))
    x = linear_p(emb, params['emb_proj'])                     # (B, L_dec, dmp)
    pe = params['pos_enc'][:L]
    if L_dec != L:
        pe = jnp.pad(pe, ((0, L_dec - L), (0, 0)))
    input_embedded = x + pe[None]

    # --- Encoder with appended representation token (pool_context=False). ---
    repr_tok = jnp.broadcast_to(params['repr_token'][None], (B, 1, dmp))
    enc = jnp.concatenate([input_embedded[:, :L], repr_tok], axis=1)
    if L_enc != L + 1:
        enc = jnp.pad(enc, ((0, 0), (0, L_enc - (L + 1)), (0, 0)))
    for layer in params['encoder']:
        enc = mha_block(layer['self_attn'], enc, cfg, causal=False,
                        l_valid=L + 1)
        enc = ffn_block(layer['ffn'], enc, cfg)

    seq_repr = enc[:, L, :]                                   # repr-token row
    mlv = linear_p(seq_repr, params['to_mu_logvar'], out_dtype=jnp.float32)
    mu = mlv[:, :cfg['latent']]
    logvar = mlv[:, cfg['latent']:2 * cfg['latent']]

    # --- Reparameterization trick. ---
    std = jnp.exp(0.5 * logvar)
    eps = jax.random.normal(rng, std.shape, jnp.float32)
    z = eps * std + mu

    z_pad = jnp.pad(z, ((0, 0), (0, cfg['latent_pad'] - cfg['latent'])))
    memory = linear_p(z_pad, params['decode_latent']).reshape(B, 1, dmp)

    # --- Decoder. ---
    dec = input_embedded
    for layer in params['decoder']:
        dec = mha_block(layer['self_attn'], dec, cfg, causal=True, l_valid=L)
        dec = cross_block(layer['cross_attn'], dec, memory, cfg)
        dec = ffn_block(layer['ffn'], dec, cfg)

    logits = linear_p(dec, params['out'], out_dtype=jnp.float32)
    logits = logits[:, :L - 1, :cfg['vocab_size']]
    return logits, mu, logvar


# --------------------------------------------------------------------------
if __name__ == "__main__":
    batch = 2
    seq_len = 8
    cfg = make_config(max_seq_len=16, vocab_size=32, emb_size=16, dim_m=32,
                      dim_i=64, n_heads=4, num_layers=2, latent_size=8)

    root = jax.random.PRNGKey(0)
    k_params, k_tokens, k_eps = jax.random.split(root, 3)

    params = init_params(k_params, cfg)
    tokens = jax.random.randint(k_tokens, (batch, seq_len), 0,
                                cfg['vocab_size'], dtype=jnp.int32)

    fwd = jax.jit(functools.partial(transformer_vae_forward, cfg=cfg))
    logits, mu, logvar = fwd(params, tokens, k_eps)
    jax.block_until_ready((logits, mu, logvar))

    assert logits.shape == (batch, seq_len - 1, cfg['vocab_size'])
    assert mu.shape == (batch, cfg['latent'])
    assert logvar.shape == (batch, cfg['latent'])
    assert bool(jnp.all(jnp.isfinite(logits)))
    assert bool(jnp.all(jnp.isfinite(mu))) and bool(jnp.all(jnp.isfinite(logvar)))
    print("KERNEL_OK")
</pallas_src>

<mosaic_0001>
module attributes {stable_mosaic.version = 11 : i64} {
  func.func @_linear_kernel(%arg0: i32, %arg1: i32, %arg2: i32, %arg3: memref<16x128xbf16, #tpu.memory_space<vmem>>, %arg4: memref<128x128xbf16, #tpu.memory_space<vmem>>, %arg5: memref<1x128xf32, #tpu.memory_space<vmem>>, %arg6: memref<16x128xbf16, #tpu.memory_space<vmem>>, %arg7: memref<16x128xf32, #tpu.memory_space<vmem>>) attributes {dimension_semantics = [#tpu.dimension_semantics<parallel>, #tpu.dimension_semantics<parallel>, #tpu.dimension_semantics<arbitrary>], iteration_bounds = array<i64: 1, 1, 1>, scalar_prefetch = 0 : i64, scratch_operands = 1 : i64, tpu.core_type = #tpu.core_type<tc>, window_params = [{transform_indices = @transform_0, window_bounds = array<i64: 16, 128>}, {transform_indices = @transform_1, window_bounds = array<i64: 128, 128>}, {transform_indices = @transform_2, window_bounds = array<i64: 1, 128>}, {transform_indices = @transform_3, window_bounds = array<i64: 16, 128>}]} {
    %c0_i32 = arith.constant 0 : i32
    %0 = arith.cmpi eq, %arg2, %c0_i32 : i32
    %1 = arith.extui %0 : i1 to i32
    %c0_i32_0 = arith.constant 0 : i32
    %2 = arith.cmpi ne, %1, %c0_i32_0 : i32
    scf.if %2 {
      %cst_10 = arith.constant 0.000000e+00 : f32
      %12 = vector.broadcast %cst_10 : f32 to vector<16x128xf32>
      %c0_11 = arith.constant 0 : index
      %c0_12 = arith.constant 0 : index
      %13 = vector.load %arg7[%c0_11, %c0_12] : memref<16x128xf32, #tpu.memory_space<vmem>>, vector<16x128xf32>
      tpu.vector_store %arg7[%c0_11, %c0_12], %12 {strides = array<i32>} : memref<16x128xf32, #tpu.memory_space<vmem>>, vector<16x128xf32>,
    } else {
    }
    %c0 = arith.constant 0 : index
    %c0_1 = arith.constant 0 : index
    %3 = vector.load %arg7[%c0, %c0_1] : memref<16x128xf32, #tpu.memory_space<vmem>>, vector<16x128xf32>
    %c0_2 = arith.constant 0 : index
    %c0_3 = arith.constant 0 : index
    %4 = vector.load %arg3[%c0_2, %c0_3] : memref<16x128xbf16, #tpu.memory_space<vmem>>, vector<16x128xbf16>
    %c0_4 = arith.constant 0 : index
    %c0_5 = arith.constant 0 : index
    %5 = vector.load %arg4[%c0_4, %c0_5] : memref<128x128xbf16, #tpu.memory_space<vmem>>, vector<128x128xbf16>
    %cst = arith.constant dense<0.000000e+00> : vector<16x128xf32>
    %6 = tpu.matmul %4, %5, %cst {dimension_numbers = #tpu.dot_dimension_numbers<[1], [0], [0], [1], [0, 0, 1, 1], [], []>} : vector<16x128xbf16>, vector<128x128xbf16>, vector<16x128xf32> -> vector<16x128xf32>
    %7 = arith.addf %3, %6 : vector<16x128xf32>
    %c0_6 = arith.constant 0 : index
    %c0_7 = arith.constant 0 : index
    %8 = vector.load %arg7[%c0_6, %c0_7] : memref<16x128xf32, #tpu.memory_space<vmem>>, vector<16x128xf32>
    tpu.vector_store %arg7[%c0_6, %c0_7], %7 {strides = array<i32>} : memref<16x128xf32, #tpu.memory_space<vmem>>, vector<16x128xf32>,
    %c0_i32_8 = arith.constant 0 : i32
    %9 = arith.cmpi eq, %arg2, %c0_i32_8 : i32
    %10 = arith.extui %9 : i1 to i32
    %c0_i32_9 = arith.constant 0 : i32
    %11 = arith.cmpi ne, %10, %c0_i32_9 : i32
    scf.if %11 {
      %c0_10 = arith.constant 0 : index
      %c0_11 = arith.constant 0 : index
      %12 = vector.load %arg7[%c0_10, %c0_11] : memref<16x128xf32, #tpu.memory_space<vmem>>, vector<16x128xf32>
      %c0_12 = arith.constant 0 : index
      %c0_13 = arith.constant 0 : index
      %13 = vector.load %arg5[%c0_12, %c0_13] : memref<1x128xf32, #tpu.memory_space<vmem>>, vector<1x128xf32>
      %14 = vector.broadcast %13 : vector<1x128xf32> to vector<16x128xf32>
      %15 = arith.addf %12, %14 : vector<16x128xf32>
      %16 = arith.truncf %15 : vector<16x128xf32> to vector<16x128xbf16>
      %c0_14 = arith.constant 0 : index
      %c0_15 = arith.constant 0 : index
      %17 = vector.load %arg6[%c0_14, %c0_15] : memref<16x128xbf16, #tpu.memory_space<vmem>>, vector<16x128xbf16>
      tpu.vector_store %arg6[%c0_14, %c0_15], %16 {strides = array<i32>} : memref<16x128xbf16, #tpu.memory_space<vmem>>, vector<16x128xbf16>,
    } else {
    }
    return
  }
  func.func @transform_0(%arg0: i32, %arg1: i32, %arg2: i32) -> (i32, i32) {
    %c0_i32 = arith.constant 0 : i32
    return %arg0, %arg2 : i32, i32
  }
  func.func @transform_1(%arg0: i32, %arg1: i32, %arg2: i32) -> (i32, i32) {
    %c0_i32 = arith.constant 0 : i32
    return %arg2, %arg1 : i32, i32
  }
  func.func @transform_2(%arg0: i32, %arg1: i32, %arg2: i32) -> (i32, i32) {
    %c0_i32 = arith.constant 0 : i32
    %c0_i32_0 = arith.constant 0 : i32
    return %c0_i32, %arg1 : i32, i32
  }
  func.func @transform_3(%arg0: i32, %arg1: i32, %arg2: i32) -> (i32, i32) {
    %c0_i32 = arith.constant 0 : i32
    return %arg0, %arg1 : i32, i32
  }
}

module attributes {stable_mosaic.version = 11 : i64} {
  func.func @_linear_kernel(%arg0: i32, %arg1: i32, %arg2: i32, %arg3: memref<32x128xbf16, #tpu.memory_space<vmem>>, %arg4: memref<128x256xbf16, #tpu.memory_space<vmem>>, %arg5: memref<1x256xf32, #tpu.memory_space<vmem>>, %arg6: memref<32x256xbf16, #tpu.memory_space<vmem>>, %arg7: memref<32x256xf32, #tpu.memory_space<vmem>>) attributes {dimension_semantics = [#tpu.dimension_semantics<parallel>, #tpu.dimension_semantics<parallel>, #tpu.dimension_semantics<arbitrary>], iteration_bounds = array<i64: 1, 6, 1>, scalar_prefetch = 0 : i64, scratch_operands = 1 : i64, tpu.core_type = #tpu.core_type<tc>, window_params = [{transform_indices = @transform_0, window_bounds = array<i64: 32, 128>}, {transform_indices = @transform_1, window_bounds = array<i64: 128, 256>}, {transform_indices = @transform_2, window_bounds = array<i64: 1, 256>}, {transform_indices = @transform_3, window_bounds = array<i64: 32, 256>}]} {
    %c0_i32 = arith.constant 0 : i32
    %0 = arith.cmpi eq, %arg2, %c0_i32 : i32
    %1 = arith.extui %0 : i1 to i32
    %c0_i32_0 = arith.constant 0 : i32
    %2 = arith.cmpi ne, %1, %c0_i32_0 : i32
    scf.if %2 {
      %cst_10 = arith.constant 0.000000e+00 : f32
      %12 = vector.broadcast %cst_10 : f32 to vector<32x256xf32>
      %c0_11 = arith.constant 0 : index
      %c0_12 = arith.constant 0 : index
      %13 = vector.load %arg7[%c0_11, %c0_12] : memref<32x256xf32, #tpu.memory_space<vmem>>, vector<32x256xf32>
      tpu.vector_store %arg7[%c0_11, %c0_12], %12 {strides = array<i32>} : memref<32x256xf32, #tpu.memory_space<vmem>>, vector<32x256xf32>,
    } else {
    }
    %c0 = arith.constant 0 : index
    %c0_1 = arith.constant 0 : index
    %3 = vector.load %arg7[%c0, %c0_1] : memref<32x256xf32, #tpu.memory_space<vmem>>, vector<32x256xf32>
    %c0_2 = arith.constant 0 : index
    %c0_3 = arith.constant 0 : index
    %4 = vector.load %arg3[%c0_2, %c0_3] : memref<32x128xbf16, #tpu.memory_space<vmem>>, vector<32x128xbf16>
    %c0_4 = arith.constant 0 : index
    %c0_5 = arith.constant 0 : index
    %5 = vector.load %arg4[%c0_4, %c0_5] : memref<128x256xbf16, #tpu.memory_space<vmem>>, vector<128x256xbf16>
    %cst = arith.constant dense<0.000000e+00> : vector<32x256xf32>
    %6 = tpu.matmul %4, %5, %cst {dimension_numbers = #tpu.dot_dimension_numbers<[1], [0], [0], [1], [0, 0, 1, 1], [], []>} : vector<32x128xbf16>, vector<128x256xbf16>, vector<32x256xf32> -> vector<32x256xf32>
    %7 = arith.addf %3, %6 : vector<32x256xf32>
    %c0_6 = arith.constant 0 : index
    %c0_7 = arith.constant 0 : index
    %8 = vector.load %arg7[%c0_6, %c0_7] : memref<32x256xf32, #tpu.memory_space<vmem>>, vector<32x256xf32>
    tpu.vector_store %arg7[%c0_6, %c0_7], %7 {strides = array<i32>} : memref<32x256xf32, #tpu.memory_space<vmem>>, vector<32x256xf32>,
    %c0_i32_8 = arith.constant 0 : i32
    %9 = arith.cmpi eq, %arg2, %c0_i32_8 : i32
    %10 = arith.extui %9 : i1 to i32
    %c0_i32_9 = arith.constant 0 : i32
    %11 = arith.cmpi ne, %10, %c0_i32_9 : i32
    scf.if %11 {
      %c0_10 = arith.constant 0 : index
      %c0_11 = arith.constant 0 : index
      %12 = vector.load %arg7[%c0_10, %c0_11] : memref<32x256xf32, #tpu.memory_space<vmem>>, vector<32x256xf32>
      %c0_12 = arith.constant 0 : index
      %c0_13 = arith.constant 0 : index
      %13 = vector.load %arg5[%c0_12, %c0_13] : memref<1x256xf32, #tpu.memory_space<vmem>>, vector<1x256xf32>
      %14 = vector.broadcast %13 : vector<1x256xf32> to vector<32x256xf32>
      %15 = arith.addf %12, %14 : vector<32x256xf32>
      %16 = arith.truncf %15 : vector<32x256xf32> to vector<32x256xbf16>
      %c0_14 = arith.constant 0 : index
      %c0_15 = arith.constant 0 : index
      %17 = vector.load %arg6[%c0_14, %c0_15] : memref<32x256xbf16, #tpu.memory_space<vmem>>, vector<32x256xbf16>
      tpu.vector_store %arg6[%c0_14, %c0_15], %16 {strides = array<i32>} : memref<32x256xbf16, #tpu.memory_space<vmem>>, vector<32x256xbf16>,
    } else {
    }
    return
  }
  func.func @transform_0(%arg0: i32, %arg1: i32, %arg2: i32) -> (i32, i32) {
    %c0_i32 = arith.constant 0 : i32
    return %arg0, %arg2 : i32, i32
  }
  func.func @transform_1(%arg0: i32, %arg1: i32, %arg2: i32) -> (i32, i32) {
    %c0_i32 = arith.constant 0 : i32
    return %arg2, %arg1 : i32, i32
  }
  func.func @transform_2(%arg0: i32, %arg1: i32, %arg2: i32) -> (i32, i32) {
    %c0_i32 = arith.constant 0 : i32
    %c0_i32_0 = arith.constant 0 : i32
    return %c0_i32, %arg1 : i32, i32
  }
  func.func @transform_3(%arg0: i32, %arg1: i32, %arg2: i32) -> (i32, i32) {
    %c0_i32 = arith.constant 0 : i32
    return %arg0, %arg1 : i32, i32
  }
}

module attributes {stable_mosaic.version = 11 : i64} {
  func.func @_linear_kernel(%arg0: i32, %arg1: i32, %arg2: i32, %arg3: memref<32x256xbf16, #tpu.memory_space<vmem>>, %arg4: memref<256x128xbf16, #tpu.memory_space<vmem>>, %arg5: memref<1x128xf32, #tpu.memory_space<vmem>>, %arg6: memref<32x128xbf16, #tpu.memory_space<vmem>>, %arg7: memref<1x128xf32, #tpu.memory_space<vmem>>, %arg8: memref<1x128xf32, #tpu.memory_space<vmem>>, %arg9: memref<32x128xbf16, #tpu.memory_space<vmem>>, %arg10: memref<32x128xf32, #tpu.memory_space<vmem>>) attributes {dimension_semantics = [#tpu.dimension_semantics<parallel>, #tpu.dimension_semantics<parallel>, #tpu.dimension_semantics<arbitrary>], iteration_bounds = array<i64: 1, 1, 2>, scalar_prefetch = 0 : i64, scratch_operands = 1 : i64, tpu.core_type = #tpu.core_type<tc>, window_params = [{transform_indices = @transform_0, window_bounds = array<i64: 32, 256>}, {transform_indices = @transform_1, window_bounds = array<i64: 256, 128>}, {transform_indices = @transform_2, window_bounds = array<i64: 1, 128>}, {transform_indices = @transform_3, window_bounds = array<i64: 32, 128>}, {transform_indices = @transform_4, window_bounds = array<i64: 1, 128>}, {transform_indices = @transform_5, window_bounds = array<i64: 1, 128>}, {transform_indices = @transform_6, window_bounds = array<i64: 32, 128>}]} {
    %c0_i32 = arith.constant 0 : i32
    %0 = arith.cmpi eq, %arg2, %c0_i32 : i32
    %1 = arith.extui %0 : i1 to i32
    %c0_i32_0 = arith.constant 0 : i32
    %2 = arith.cmpi ne, %1, %c0_i32_0 : i32
    scf.if %2 {
      %cst_9 = arith.constant 0.000000e+00 : f32
      %12 = vector.broadcast %cst_9 : f32 to vector<32x128xf32>
      %c0_10 = arith.constant 0 : index
      %c0_11 = arith.constant 0 : index
      %13 = vector.load %arg10[%c0_10, %c0_11] : memref<32x128xf32, #tpu.memory_space<vmem>>, vector<32x128xf32>
      tpu.vector_store %arg10[%c0_10, %c0_11], %12 {strides = array<i32>} : memref<32x128xf32, #tpu.memory_space<vmem>>, vector<32x128xf32>,
    } else {
    }
    %c0 = arith.constant 0 : index
    %c0_1 = arith.constant 0 : index
    %3 = vector.load %arg10[%c0, %c0_1] : memref<32x128xf32, #tpu.memory_space<vmem>>, vector<32x128xf32>
    %c0_2 = arith.constant 0 : index
    %c0_3 = arith.constant 0 : index
    %4 = vector.load %arg3[%c0_2, %c0_3] : memref<32x256xbf16, #tpu.memory_space<vmem>>, vector<32x256xbf16>
    %c0_4 = arith.constant 0 : index
    %c0_5 = arith.constant 0 : index
    %5 = vector.load %arg4[%c0_4, %c0_5] : memref<256x128xbf16, #tpu.memory_space<vmem>>, vector<256x128xbf16>
    %cst = arith.constant dense<0.000000e+00> : vector<32x128xf32>
    %6 = tpu.matmul %4, %5, %cst {dimension_numbers = #tpu.dot_dimension_numbers<[1], [0], [0], [1], [0, 0, 1, 1], [], []>} : vector<32x256xbf16>, vector<256x128xbf16>, vector<32x128xf32> -> vector<32x128xf32>
    %7 = arith.addf %3, %6 : vector<32x128xf32>
    %c0_6 = arith.constant 0 : index
    %c0_7 = arith.constant 0 : index
    %8 = vector.load %arg10[%c0_6, %c0_7] : memref<32x128xf32, #tpu.memory_space<vmem>>, vector<32x128xf32>
    tpu.vector_store %arg10[%c0_6, %c0_7], %7 {strides = array<i32>} : memref<32x128xf32, #tpu.memory_space<vmem>>, vector<32x128xf32>,
    %c1_i32 = arith.constant 1 : i32
    %9 = arith.cmpi eq, %arg2, %c1_i32 : i32
    %10 = arith.extui %9 : i1 to i32
    %c0_i32_8 = arith.constant 0 : i32
    %11 = arith.cmpi ne, %10, %c0_i32_8 : i32
    scf.if %11 {
      %c0_9 = arith.constant 0 : index
      %c0_10 = arith.constant 0 : index
      %12 = vector.load %arg10[%c0_9, %c0_10] : memref<32x128xf32, #tpu.memory_space<vmem>>, vector<32x128xf32>
      %c0_11 = arith.constant 0 : index
      %c0_12 = arith.constant 0 : index
      %13 = vector.load %arg5[%c0_11, %c0_12] : memref<1x128xf32, #tpu.memory_space<vmem>>, vector<1x128xf32>
      %14 = vector.broadcast %13 : vector<1x128xf32> to vector<32x128xf32>
      %15 = arith.addf %12, %14 : vector<32x128xf32>
      %c0_13 = arith.constant 0 : index
      %c0_14 = arith.constant 0 : index
      %16 = vector.load %arg6[%c0_13, %c0_14] : memref<32x128xbf16, #tpu.memory_space<vmem>>, vector<32x128xbf16>
      %17 = arith.extf %16 : vector<32x128xbf16> to vector<32x128xf32>
      %18 = arith.addf %15, %17 : vector<32x128xf32>
      %19 = tpu.iota {dimensions = array<i32: 1>} : vector<32x128xi32>
      %c32_i32 = arith.constant 32 : i32
      %20 = vector.broadcast %c32_i32 : i32 to vector<32x128xi32>
      %21 = arith.cmpi slt, %19, %20 : vector<32x128xi32>
      %cst_15 = arith.constant 0.000000e+00 : f32
      %22 = vector.broadcast %cst_15 : f32 to vector<32x128xf32>
      %23 = arith.select %21, %18, %22 : vector<32x128xi1>, vector<32x128xf32>
      %cst_16 = arith.constant dense<0.000000e+00> : vector<32xf32>
      %24 = vector.multi_reduction <add>, %23, %cst_16 [1] : vector<32x128xf32> to vector<32xf32>
      %25 = vector.shape_cast %24 : vector<32xf32> to vector<32x1xf32>
      %cst_17 = arith.constant 3.125000e-02 : f32
      %26 = vector.broadcast %cst_17 : f32 to vector<32x1xf32>
      %27 = arith.mulf %25, %26 : vector<32x1xf32>
      %28 = vector.broadcast %27 : vector<32x1xf32> to vector<32x128xf32>
      %29 = arith.subf %18, %28 : vector<32x128xf32>
      %cst_18 = arith.constant 0.000000e+00 : f32
      %30 = vector.broadcast %cst_18 : f32 to vector<32x128xf32>
      %31 = arith.select %21, %29, %30 : vector<32x128xi1>, vector<32x128xf32>
      %32 = arith.mulf %31, %31 : vector<32x128xf32>
      %cst_19 = arith.constant dense<0.000000e+00> : vector<32xf32>
      %33 = vector.multi_reduction <add>, %32, %cst_19 [1] : vector<32x128xf32> to vector<32xf32>
      %34 = vector.shape_cast %33 : vector<32xf32> to vector<32x1xf32>
      %cst_20 = arith.constant 3.125000e-02 : f32
      %35 = vector.broadcast %cst_20 : f32 to vector<32x1xf32>
      %36 = arith.mulf %34, %35 : vector<32x1xf32>
      %cst_21 = arith.constant 9.99999974E-6 : f32
      %37 = vector.broadcast %cst_21 : f32 to vector<32x1xf32>
      %38 = arith.addf %36, %37 : vector<32x1xf32>
      %39 = math.rsqrt %38 : vector<32x1xf32>
      %40 = vector.broadcast %39 : vector<32x1xf32> to vector<32x128xf32>
      %41 = arith.mulf %31, %40 : vector<32x128xf32>
      %c0_22 = arith.constant 0 : index
      %c0_23 = arith.constant 0 : index
      %42 = vector.load %arg7[%c0_22, %c0_23] : memref<1x128xf32, #tpu.memory_space<vmem>>, vector<1x128xf32>
      %43 = vector.broadcast %42 : vector<1x128xf32> to vector<32x128xf32>
      %44 = arith.mulf %41, %43 : vector<32x128xf32>
      %c0_24 = arith.constant 0 : index
      %c0_25 = arith.constant 0 : index
      %45 = vector.load %arg8[%c0_24, %c0_25] : memref<1x128xf32, #tpu.memory_space<vmem>>, vector<1x128xf32>
      %46 = vector.broadcast %45 : vector<1x128xf32> to vector<32x128xf32>
      %47 = arith.addf %44, %46 : vector<32x128xf32>
      %48 = arith.truncf %47 : vector<32x128xf32> to vector<32x128xbf16>
      %c0_26 = arith.constant 0 : index
      %c0_27 = arith.constant 0 : index
      %49 = vector.load %arg9[%c0_26, %c0_27] : memref<32x128xbf16, #tpu.memory_space<vmem>>, vector<32x128xbf16>
      tpu.vector_store %arg9[%c0_26, %c0_27], %48 {strides = array<i32>} : memref<32x128xbf16, #tpu.memory_space<vmem>>, vector<32x128xbf16>,
    } else {
    }
    return
  }
  func.func @transform_0(%arg0: i32, %arg1: i32, %arg2: i32) -> (i32, i32) {
    %c0_i32 = arith.constant 0 : i32
    return %arg0, %arg2 : i32, i32
  }
  func.func @transform_1(%arg0: i32, %arg1: i32, %arg2: i32) -> (i32, i32) {
    %c0_i32 = arith.constant 0 : i32
    return %arg2, %arg1 : i32, i32
  }
  func.func @transform_2(%arg0: i32, %arg1: i32, %arg2: i32) -> (i32, i32) {
    %c0_i32 = arith.constant 0 : i32
    %c0_i32_0 = arith.constant 0 : i32
    return %c0_i32, %arg1 : i32, i32
  }
  func.func @transform_3(%arg0: i32, %arg1: i32, %arg2: i32) -> (i32, i32) {
    %c0_i32 = arith.constant 0 : i32
    return %arg0, %arg1 : i32, i32
  }
  func.func @transform_4(%arg0: i32, %arg1: i32, %arg2: i32) -> (i32, i32) {
    %c0_i32 = arith.constant 0 : i32
    %c0_i32_0 = arith.constant 0 : i32
    return %c0_i32, %arg1 : i32, i32
  }
  func.func @transform_5(%arg0: i32, %arg1: i32, %arg2: i32) -> (i32, i32) {
    %c0_i32 = arith.constant 0 : i32
    %c0_i32_0 = arith.constant 0 : i32
    return %c0_i32, %arg1 : i32, i32
  }
  func.func @transform_6(%arg0: i32, %arg1: i32, %arg2: i32) -> (i32, i32) {
    %c0_i32 = arith.constant 0 : i32
    return %arg0, %arg1 : i32, i32
  }
}

module attributes {stable_mosaic.version = 11 : i64} {
  func.func @_mha_kernel(%arg0: i32, %arg1: i32, %arg2: memref<1x16x384xbf16, #tpu.memory_space<vmem>>, %arg3: memref<1x16x128xbf16, #tpu.memory_space<vmem>>) attributes {dimension_semantics = [#tpu.dimension_semantics<parallel>, #tpu.dimension_semantics<parallel>], iteration_bounds = array<i64: 2, 4>, scalar_prefetch = 0 : i64, scratch_operands = 0 : i64, tpu.core_type = #tpu.core_type<tc>, window_params = [{transform_indices = @transform_0, window_bounds = array<i64: 1, 16, 384>}, {transform_indices = @transform_1, window_bounds = array<i64: 1, 16, 128>}]} {
    %c0 = arith.constant 0 : index
    %c0_0 = arith.constant 0 : index
    %c0_1 = arith.constant 0 : index
    %0 = vector.load %arg2[%c0, %c0_0, %c0_1] : memref<1x16x384xbf16, #tpu.memory_space<vmem>>, vector<1x16x384xbf16>
    %1 = vector.extract_strided_slice %0 {offsets = [0, 0, 0], sizes = [1, 16, 128], strides = [1, 1, 1]} : vector<1x16x384xbf16> to vector<1x16x128xbf16>
    %2 = vector.shape_cast %1 : vector<1x16x128xbf16> to vector<16x128xbf16>
    %3 = vector.extract_strided_slice %0 {offsets = [0, 0, 128], sizes = [1, 16, 128], strides = [1, 1, 1]} : vector<1x16x384xbf16> to vector<1x16x128xbf16>
    %4 = vector.shape_cast %3 : vector<1x16x128xbf16> to vector<16x128xbf16>
    %5 = vector.extract_strided_slice %0 {offsets = [0, 0, 256], sizes = [1, 16, 128], strides = [1, 1, 1]} : vector<1x16x384xbf16> to vector<1x16x128xbf16>
    %6 = vector.shape_cast %5 : vector<1x16x128xbf16> to vector<16x128xbf16>
    %cst = arith.constant dense<0.000000e+00> : vector<16x16xf32>
    %7 = tpu.matmul %2, %4, %cst {dimension_numbers = #tpu.dot_dimension_numbers<[1], [1], [0], [0], [0, 0, 1, 0], [], []>} : vector<16x128xbf16>, vector<16x128xbf16>, vector<16x16xf32> -> vector<16x16xf32>
    %8 = tpu.iota {dimensions = array<i32: 1>} : vector<16x16xi32>
    %c9_i32 = arith.constant 9 : i32
    %9 = vector.broadcast %c9_i32 : i32 to vector<16x16xi32>
    %10 = arith.cmpi sge, %8, %9 : vector<16x16xi32>
    %cst_2 = arith.constant -1.000000e+09 : f32
    %11 = vector.broadcast %cst_2 : f32 to vector<16x16xf32>
    %12 = arith.select %10, %11, %7 : vector<16x16xi1>, vector<16x16xf32>
    %cst_3 = arith.constant dense<0xFF800000> : vector<16xf32>
    %13 = vector.multi_reduction <maximumf>, %12, %cst_3 [1] : vector<16x16xf32> to vector<16xf32>
    %14 = vector.shape_cast %13 : vector<16xf32> to vector<16x1xf32>
    %15 = vector.broadcast %14 : vector<16x1xf32> to vector<16x16xf32>
    %16 = arith.subf %12, %15 : vector<16x16xf32>
    %17 = math.exp %16 : vector<16x16xf32>
    %cst_4 = arith.constant dense<0.000000e+00> : vector<16xf32>
    %18 = vector.multi_reduction <add>, %17, %cst_4 [1] : vector<16x16xf32> to vector<16xf32>
    %19 = vector.shape_cast %18 : vector<16xf32> to vector<16x1xf32>
    %20 = tpu.reciprocal %19 {approx = true} : vector<16x1xf32> -> vector<16x1xf32>
    %21 = vector.broadcast %20 : vector<16x1xf32> to vector<16x16xf32>
    %22 = arith.mulf %17, %21 : vector<16x16xf32>
    %23 = arith.truncf %22 : vector<16x16xf32> to vector<16x16xbf16>
    %cst_5 = arith.constant dense<0.000000e+00> : vector<16x128xf32>
    %24 = tpu.matmul %23, %6, %cst_5 {dimension_numbers = #tpu.dot_dimension_numbers<[1], [0], [0], [1], [0, 0, 1, 1], [], []>} : vector<16x16xbf16>, vector<16x128xbf16>, vector<16x128xf32> -> vector<16x128xf32>
    %25 = vector.shape_cast %24 : vector<16x128xf32> to vector<1x16x128xf32>
    %26 = arith.truncf %25 : vector<1x16x128xf32> to vector<1x16x128xbf16>
    %c0_6 = arith.constant 0 : index
    %c0_7 = arith.constant 0 : index
    %c0_8 = arith.constant 0 : index
    %27 = vector.load %arg3[%c0_6, %c0_7, %c0_8] : memref<1x16x128xbf16, #tpu.memory_space<vmem>>, vector<1x16x128xbf16>
    tpu.vector_store %arg3[%c0_6, %c0_7, %c0_8], %26 {strides = array<i32>} : memref<1x16x128xbf16, #tpu.memory_space<vmem>>, vector<1x16x128xbf16>,
    return
  }
  func.func @transform_0(%arg0: i32, %arg1: i32) -> (i32, i32, i32) {
    %c0_i32 = arith.constant 0 : i32
    %c0_i32_0 = arith.constant 0 : i32
    return %arg0, %c0_i32, %arg1 : i32, i32, i32
  }
  func.func @transform_1(%arg0: i32, %arg1: i32) -> (i32, i32, i32) {
    %c0_i32 = arith.constant 0 : i32
    %c0_i32_0 = arith.constant 0 : i32
    return %arg0, %c0_i32, %arg1 : i32, i32, i32
  }
}

module attributes {stable_mosaic.version = 11 : i64} {
  func.func @_linear_kernel(%arg0: i32, %arg1: i32, %arg2: i32, %arg3: memref<32x128xbf16, #tpu.memory_space<vmem>>, %arg4: memref<128x128xbf16, #tpu.memory_space<vmem>>, %arg5: memref<1x128xf32, #tpu.memory_space<vmem>>, %arg6: memref<32x128xbf16, #tpu.memory_space<vmem>>, %arg7: memref<32x128xf32, #tpu.memory_space<vmem>>) attributes {dimension_semantics = [#tpu.dimension_semantics<parallel>, #tpu.dimension_semantics<parallel>, #tpu.dimension_semantics<arbitrary>], iteration_bounds = array<i64: 1, 1, 1>, scalar_prefetch = 0 : i64, scratch_operands = 1 : i64, tpu.core_type = #tpu.core_type<tc>, window_params = [{transform_indices = @transform_0, window_bounds = array<i64: 32, 128>}, {transform_indices = @transform_1, window_bounds = array<i64: 128, 128>}, {transform_indices = @transform_2, window_bounds = array<i64: 1, 128>}, {transform_indices = @transform_3, window_bounds = array<i64: 32, 128>}]} {
    %c0_i32 = arith.constant 0 : i32
    %0 = arith.cmpi eq, %arg2, %c0_i32 : i32
    %1 = arith.extui %0 : i1 to i32
    %c0_i32_0 = arith.constant 0 : i32
    %2 = arith.cmpi ne, %1, %c0_i32_0 : i32
    scf.if %2 {
      %cst_10 = arith.constant 0.000000e+00 : f32
      %12 = vector.broadcast %cst_10 : f32 to vector<32x128xf32>
      %c0_11 = arith.constant 0 : index
      %c0_12 = arith.constant 0 : index
      %13 = vector.load %arg7[%c0_11, %c0_12] : memref<32x128xf32, #tpu.memory_space<vmem>>, vector<32x128xf32>
      tpu.vector_store %arg7[%c0_11, %c0_12], %12 {strides = array<i32>} : memref<32x128xf32, #tpu.memory_space<vmem>>, vector<32x128xf32>,
    } else {
    }
    %c0 = arith.constant 0 : index
    %c0_1 = arith.constant 0 : index
    %3 = vector.load %arg7[%c0, %c0_1] : memref<32x128xf32, #tpu.memory_space<vmem>>, vector<32x128xf32>
    %c0_2 = arith.constant 0 : index
    %c0_3 = arith.constant 0 : index
    %4 = vector.load %arg3[%c0_2, %c0_3] : memref<32x128xbf16, #tpu.memory_space<vmem>>, vector<32x128xbf16>
    %c0_4 = arith.constant 0 : index
    %c0_5 = arith.constant 0 : index
    %5 = vector.load %arg4[%c0_4, %c0_5] : memref<128x128xbf16, #tpu.memory_space<vmem>>, vector<128x128xbf16>
    %cst = arith.constant dense<0.000000e+00> : vector<32x128xf32>
    %6 = tpu.matmul %4, %5, %cst {dimension_numbers = #tpu.dot_dimension_numbers<[1], [0], [0], [1], [0, 0, 1, 1], [], []>} : vector<32x128xbf16>, vector<128x128xbf16>, vector<32x128xf32> -> vector<32x128xf32>
    %7 = arith.addf %3, %6 : vector<32x128xf32>
    %c0_6 = arith.constant 0 : index
    %c0_7 = arith.constant 0 : index
    %8 = vector.load %arg7[%c0_6, %c0_7] : memref<32x128xf32, #tpu.memory_space<vmem>>, vector<32x128xf32>
    tpu.vector_store %arg7[%c0_6, %c0_7], %7 {strides = array<i32>} : memref<32x128xf32, #tpu.memory_space<vmem>>, vector<32x128xf32>,
    %c0_i32_8 = arith.constant 0 : i32
    %9 = arith.cmpi eq, %arg2, %c0_i32_8 : i32
    %10 = arith.extui %9 : i1 to i32
    %c0_i32_9 = arith.constant 0 : i32
    %11 = arith.cmpi ne, %10, %c0_i32_9 : i32
    scf.if %11 {
      %c0_10 = arith.constant 0 : index
      %c0_11 = arith.constant 0 : index
      %12 = vector.load %arg7[%c0_10, %c0_11] : memref<32x128xf32, #tpu.memory_space<vmem>>, vector<32x128xf32>
      %c0_12 = arith.constant 0 : index
      %c0_13 = arith.constant 0 : index
      %13 = vector.load %arg5[%c0_12, %c0_13] : memref<1x128xf32, #tpu.memory_space<vmem>>, vector<1x128xf32>
      %14 = vector.broadcast %13 : vector<1x128xf32> to vector<32x128xf32>
      %15 = arith.addf %12, %14 : vector<32x128xf32>
      %cst_14 = arith.constant 0.000000e+00 : f32
      %16 = vector.broadcast %cst_14 : f32 to vector<32x128xf32>
      %17 = arith.maximumf %15, %16 : vector<32x128xf32>
      %18 = arith.truncf %17 : vector<32x128xf32> to vector<32x128xbf16>
      %c0_15 = arith.constant 0 : index
      %c0_16 = arith.constant 0 : index
      %19 = vector.load %arg6[%c0_15, %c0_16] : memref<32x128xbf16, #tpu.memory_space<vmem>>, vector<32x128xbf16>
      tpu.vector_store %arg6[%c0_15, %c0_16], %18 {strides = array<i32>} : memref<32x128xbf16, #tpu.memory_space<vmem>>, vector<32x128xbf16>,
    } else {
    }
    return
  }
  func.func @transform_0(%arg0: i32, %arg1: i32, %arg2: i32) -> (i32, i32) {
    %c0_i32 = arith.constant 0 : i32
    return %arg0, %arg2 : i32, i32
  }
  func.func @transform_1(%arg0: i32, %arg1: i32, %arg2: i32) -> (i32, i32) {
    %c0_i32 = arith.constant 0 : i32
    return %arg2, %arg1 : i32, i32
  }
  func.func @transform_2(%arg0: i32, %arg1: i32, %arg2: i32) -> (i32, i32) {
    %c0_i32 = arith.constant 0 : i32
    %c0_i32_0 = arith.constant 0 : i32
    return %c0_i32, %arg1 : i32, i32
  }
  func.func @transform_3(%arg0: i32, %arg1: i32, %arg2: i32) -> (i32, i32) {
    %c0_i32 = arith.constant 0 : i32
    return %arg0, %arg1 : i32, i32
  }
}

module attributes {stable_mosaic.version = 11 : i64} {
  func.func @_linear_kernel(%arg0: i32, %arg1: i32, %arg2: i32, %arg3: memref<32x128xbf16, #tpu.memory_space<vmem>>, %arg4: memref<128x128xbf16, #tpu.memory_space<vmem>>, %arg5: memref<1x128xf32, #tpu.memory_space<vmem>>, %arg6: memref<32x128xbf16, #tpu.memory_space<vmem>>, %arg7: memref<1x128xf32, #tpu.memory_space<vmem>>, %arg8: memref<1x128xf32, #tpu.memory_space<vmem>>, %arg9: memref<32x128xbf16, #tpu.memory_space<vmem>>, %arg10: memref<32x128xf32, #tpu.memory_space<vmem>>) attributes {dimension_semantics = [#tpu.dimension_semantics<parallel>, #tpu.dimension_semantics<parallel>, #tpu.dimension_semantics<arbitrary>], iteration_bounds = array<i64: 1, 1, 1>, scalar_prefetch = 0 : i64, scratch_operands = 1 : i64, tpu.core_type = #tpu.core_type<tc>, window_params = [{transform_indices = @transform_0, window_bounds = array<i64: 32, 128>}, {transform_indices = @transform_1, window_bounds = array<i64: 128, 128>}, {transform_indices = @transform_2, window_bounds = array<i64: 1, 128>}, {transform_indices = @transform_3, window_bounds = array<i64: 32, 128>}, {transform_indices = @transform_4, window_bounds = array<i64: 1, 128>}, {transform_indices = @transform_5, window_bounds = array<i64: 1, 128>}, {transform_indices = @transform_6, window_bounds = array<i64: 32, 128>}]} {
    %c0_i32 = arith.constant 0 : i32
    %0 = arith.cmpi eq, %arg2, %c0_i32 : i32
    %1 = arith.extui %0 : i1 to i32
    %c0_i32_0 = arith.constant 0 : i32
    %2 = arith.cmpi ne, %1, %c0_i32_0 : i32
    scf.if %2 {
      %cst_10 = arith.constant 0.000000e+00 : f32
      %12 = vector.broadcast %cst_10 : f32 to vector<32x128xf32>
      %c0_11 = arith.constant 0 : index
      %c0_12 = arith.constant 0 : index
      %13 = vector.load %arg10[%c0_11, %c0_12] : memref<32x128xf32, #tpu.memory_space<vmem>>, vector<32x128xf32>
      tpu.vector_store %arg10[%c0_11, %c0_12], %12 {strides = array<i32>} : memref<32x128xf32, #tpu.memory_space<vmem>>, vector<32x128xf32>,
    } else {
    }
    %c0 = arith.constant 0 : index
    %c0_1 = arith.constant 0 : index
    %3 = vector.load %arg10[%c0, %c0_1] : memref<32x128xf32, #tpu.memory_space<vmem>>, vector<32x128xf32>
    %c0_2 = arith.constant 0 : index
    %c0_3 = arith.constant 0 : index
    %4 = vector.load %arg3[%c0_2, %c0_3] : memref<32x128xbf16, #tpu.memory_space<vmem>>, vector<32x128xbf16>
    %c0_4 = arith.constant 0 : index
    %c0_5 = arith.constant 0 : index
    %5 = vector.load %arg4[%c0_4, %c0_5] : memref<128x128xbf16, #tpu.memory_space<vmem>>, vector<128x128xbf16>
    %cst = arith.constant dense<0.000000e+00> : vector<32x128xf32>
    %6 = tpu.matmul %4, %5, %cst {dimension_numbers = #tpu.dot_dimension_numbers<[1], [0], [0], [1], [0, 0, 1, 1], [], []>} : vector<32x128xbf16>, vector<128x128xbf16>, vector<32x128xf32> -> vector<32x128xf32>
    %7 = arith.addf %3, %6 : vector<32x128xf32>
    %c0_6 = arith.constant 0 : index
    %c0_7 = arith.constant 0 : index
    %8 = vector.load %arg10[%c0_6, %c0_7] : memref<32x128xf32, #tpu.memory_space<vmem>>, vector<32x128xf32>
    tpu.vector_store %arg10[%c0_6, %c0_7], %7 {strides = array<i32>} : memref<32x128xf32, #tpu.memory_space<vmem>>, vector<32x128xf32>,
    %c0_i32_8 = arith.constant 0 : i32
    %9 = arith.cmpi eq, %arg2, %c0_i32_8 : i32
    %10 = arith.extui %9 : i1 to i32
    %c0_i32_9 = arith.constant 0 : i32
    %11 = arith.cmpi ne, %10, %c0_i32_9 : i32
    scf.if %11 {
      %c0_10 = arith.constant 0 : index
      %c0_11 = arith.constant 0 : index
      %12 = vector.load %arg10[%c0_10, %c0_11] : memref<32x128xf32, #tpu.memory_space<vmem>>, vector<32x128xf32>
      %c0_12 = arith.constant 0 : index
      %c0_13 = arith.constant 0 : index
      %13 = vector.load %arg5[%c0_12, %c0_13] : memref<1x128xf32, #tpu.memory_space<vmem>>, vector<1x128xf32>
      %14 = vector.broadcast %13 : vector<1x128xf32> to vector<32x128xf32>
      %15 = arith.addf %12, %14 : vector<32x128xf32>
      %c0_14 = arith.constant 0 : index
      %c0_15 = arith.constant 0 : index
      %16 = vector.load %arg6[%c0_14, %c0_15] : memref<32x128xbf16, #tpu.memory_space<vmem>>, vector<32x128xbf16>
      %17 = arith.extf %16 : vector<32x128xbf16> to vector<32x128xf32>
      %18 = arith.addf %15, %17 : vector<32x128xf32>
      %19 = tpu.iota {dimensions = array<i32: 1>} : vector<32x128xi32>
      %c32_i32 = arith.constant 32 : i32
      %20 = vector.broadcast %c32_i32 : i32 to vector<32x128xi32>
      %21 = arith.cmpi slt, %19, %20 : vector<32x128xi32>
      %cst_16 = arith.constant 0.000000e+00 : f32
      %22 = vector.broadcast %cst_16 : f32 to vector<32x128xf32>
      %23 = arith.select %21, %18, %22 : vector<32x128xi1>, vector<32x128xf32>
      %cst_17 = arith.constant dense<0.000000e+00> : vector<32xf32>
      %24 = vector.multi_reduction <add>, %23, %cst_17 [1] : vector<32x128xf32> to vector<32xf32>
      %25 = vector.shape_cast %24 : vector<32xf32> to vector<32x1xf32>
      %cst_18 = arith.constant 3.125000e-02 : f32
      %26 = vector.broadcast %cst_18 : f32 to vector<32x1xf32>
      %27 = arith.mulf %25, %26 : vector<32x1xf32>
      %28 = vector.broadcast %27 : vector<32x1xf32> to vector<32x128xf32>
      %29 = arith.subf %18, %28 : vector<32x128xf32>
      %cst_19 = arith.constant 0.000000e+00 : f32
      %30 = vector.broadcast %cst_19 : f32 to vector<32x128xf32>
      %31 = arith.select %21, %29, %30 : vector<32x128xi1>, vector<32x128xf32>
      %32 = arith.mulf %31, %31 : vector<32x128xf32>
      %cst_20 = arith.constant dense<0.000000e+00> : vector<32xf32>
      %33 = vector.multi_reduction <add>, %32, %cst_20 [1] : vector<32x128xf32> to vector<32xf32>
      %34 = vector.shape_cast %33 : vector<32xf32> to vector<32x1xf32>
      %cst_21 = arith.constant 3.125000e-02 : f32
      %35 = vector.broadcast %cst_21 : f32 to vector<32x1xf32>
      %36 = arith.mulf %34, %35 : vector<32x1xf32>
      %cst_22 = arith.constant 9.99999974E-6 : f32
      %37 = vector.broadcast %cst_22 : f32 to vector<32x1xf32>
      %38 = arith.addf %36, %37 : vector<32x1xf32>
      %39 = math.rsqrt %38 : vector<32x1xf32>
      %40 = vector.broadcast %39 : vector<32x1xf32> to vector<32x128xf32>
      %41 = arith.mulf %31, %40 : vector<32x128xf32>
      %c0_23 = arith.constant 0 : index
      %c0_24 = arith.constant 0 : index
      %42 = vector.load %arg7[%c0_23, %c0_24] : memref<1x128xf32, #tpu.memory_space<vmem>>, vector<1x128xf32>
      %43 = vector.broadcast %42 : vector<1x128xf32> to vector<32x128xf32>
      %44 = arith.mulf %41, %43 : vector<32x128xf32>
      %c0_25 = arith.constant 0 : index
      %c0_26 = arith.constant 0 : index
      %45 = vector.load %arg8[%c0_25, %c0_26] : memref<1x128xf32, #tpu.memory_space<vmem>>, vector<1x128xf32>
      %46 = vector.broadcast %45 : vector<1x128xf32> to vector<32x128xf32>
      %47 = arith.addf %44, %46 : vector<32x128xf32>
      %48 = arith.truncf %47 : vector<32x128xf32> to vector<32x128xbf16>
      %c0_27 = arith.constant 0 : index
      %c0_28 = arith.constant 0 : index
      %49 = vector.load %arg9[%c0_27, %c0_28] : memref<32x128xbf16, #tpu.memory_space<vmem>>, vector<32x128xbf16>
      tpu.vector_store %arg9[%c0_27, %c0_28], %48 {strides = array<i32>} : memref<32x128xbf16, #tpu.memory_space<vmem>>, vector<32x128xbf16>,
    } else {
    }
    return
  }
  func.func @transform_0(%arg0: i32, %arg1: i32, %arg2: i32) -> (i32, i32) {
    %c0_i32 = arith.constant 0 : i32
    return %arg0, %arg2 : i32, i32
  }
  func.func @transform_1(%arg0: i32, %arg1: i32, %arg2: i32) -> (i32, i32) {
    %c0_i32 = arith.constant 0 : i32
    return %arg2, %arg1 : i32, i32
  }
  func.func @transform_2(%arg0: i32, %arg1: i32, %arg2: i32) -> (i32, i32) {
    %c0_i32 = arith.constant 0 : i32
    %c0_i32_0 = arith.constant 0 : i32
    return %c0_i32, %arg1 : i32, i32
  }
  func.func @transform_3(%arg0: i32, %arg1: i32, %arg2: i32) -> (i32, i32) {
    %c0_i32 = arith.constant 0 : i32
    return %arg0, %arg1 : i32, i32
  }
  func.func @transform_4(%arg0: i32, %arg1: i32, %arg2: i32) -> (i32, i32) {
    %c0_i32 = arith.constant 0 : i32
    %c0_i32_0 = arith.constant 0 : i32
    return %c0_i32, %arg1 : i32, i32
  }
  func.func @transform_5(%arg0: i32, %arg1: i32, %arg2: i32) -> (i32, i32) {
    %c0_i32 = arith.constant 0 : i32
    %c0_i32_0 = arith.constant 0 : i32
    return %c0_i32, %arg1 : i32, i32
  }
  func.func @transform_6(%arg0: i32, %arg1: i32, %arg2: i32) -> (i32, i32) {
    %c0_i32 = arith.constant 0 : i32
    return %arg0, %arg1 : i32, i32
  }
}

module attributes {stable_mosaic.version = 11 : i64} {
  func.func @_linear_kernel(%arg0: i32, %arg1: i32, %arg2: i32, %arg3: memref<8x128xbf16, #tpu.memory_space<vmem>>, %arg4: memref<128x128xbf16, #tpu.memory_space<vmem>>, %arg5: memref<1x128xf32, #tpu.memory_space<vmem>>, %arg6: memref<8x128xf32, #tpu.memory_space<vmem>>, %arg7: memref<8x128xf32, #tpu.memory_space<vmem>>) attributes {dimension_semantics = [#tpu.dimension_semantics<parallel>, #tpu.dimension_semantics<parallel>, #tpu.dimension_semantics<arbitrary>], iteration_bounds = array<i64: 1, 1, 1>, scalar_prefetch = 0 : i64, scratch_operands = 1 : i64, tpu.core_type = #tpu.core_type<tc>, window_params = [{transform_indices = @transform_0, window_bounds = array<i64: 8, 128>}, {transform_indices = @transform_1, window_bounds = array<i64: 128, 128>}, {transform_indices = @transform_2, window_bounds = array<i64: 1, 128>}, {transform_indices = @transform_3, window_bounds = array<i64: 8, 128>}]} {
    %c0_i32 = arith.constant 0 : i32
    %0 = arith.cmpi eq, %arg2, %c0_i32 : i32
    %1 = arith.extui %0 : i1 to i32
    %c0_i32_0 = arith.constant 0 : i32
    %2 = arith.cmpi ne, %1, %c0_i32_0 : i32
    scf.if %2 {
      %cst_10 = arith.constant 0.000000e+00 : f32
      %12 = vector.broadcast %cst_10 : f32 to vector<8x128xf32>
      %c0_11 = arith.constant 0 : index
      %c0_12 = arith.constant 0 : index
      %13 = vector.load %arg7[%c0_11, %c0_12] : memref<8x128xf32, #tpu.memory_space<vmem>>, vector<8x128xf32>
      tpu.vector_store %arg7[%c0_11, %c0_12], %12 {strides = array<i32>} : memref<8x128xf32, #tpu.memory_space<vmem>>, vector<8x128xf32>,
    } else {
    }
    %c0 = arith.constant 0 : index
    %c0_1 = arith.constant 0 : index
    %3 = vector.load %arg7[%c0, %c0_1] : memref<8x128xf32, #tpu.memory_space<vmem>>, vector<8x128xf32>
    %c0_2 = arith.constant 0 : index
    %c0_3 = arith.constant 0 : index
    %4 = vector.load %arg3[%c0_2, %c0_3] : memref<8x128xbf16, #tpu.memory_space<vmem>>, vector<8x128xbf16>
    %c0_4 = arith.constant 0 : index
    %c0_5 = arith.constant 0 : index
    %5 = vector.load %arg4[%c0_4, %c0_5] : memref<128x128xbf16, #tpu.memory_space<vmem>>, vector<128x128xbf16>
    %cst = arith.constant dense<0.000000e+00> : vector<8x128xf32>
    %6 = tpu.matmul %4, %5, %cst {dimension_numbers = #tpu.dot_dimension_numbers<[1], [0], [0], [1], [0, 0, 1, 1], [], []>} : vector<8x128xbf16>, vector<128x128xbf16>, vector<8x128xf32> -> vector<8x128xf32>
    %7 = arith.addf %3, %6 : vector<8x128xf32>
    %c0_6 = arith.constant 0 : index
    %c0_7 = arith.constant 0 : index
    %8 = vector.load %arg7[%c0_6, %c0_7] : memref<8x128xf32, #tpu.memory_space<vmem>>, vector<8x128xf32>
    tpu.vector_store %arg7[%c0_6, %c0_7], %7 {strides = array<i32>} : memref<8x128xf32, #tpu.memory_space<vmem>>, vector<8x128xf32>,
    %c0_i32_8 = arith.constant 0 : i32
    %9 = arith.cmpi eq, %arg2, %c0_i32_8 : i32
    %10 = arith.extui %9 : i1 to i32
    %c0_i32_9 = arith.constant 0 : i32
    %11 = arith.cmpi ne, %10, %c0_i32_9 : i32
    scf.if %11 {
      %c0_10 = arith.constant 0 : index
      %c0_11 = arith.constant 0 : index
      %12 = vector.load %arg7[%c0_10, %c0_11] : memref<8x128xf32, #tpu.memory_space<vmem>>, vector<8x128xf32>
      %c0_12 = arith.constant 0 : index
      %c0_13 = arith.constant 0 : index
      %13 = vector.load %arg5[%c0_12, %c0_13] : memref<1x128xf32, #tpu.memory_space<vmem>>, vector<1x128xf32>
      %14 = vector.broadcast %13 : vector<1x128xf32> to vector<8x128xf32>
      %15 = arith.addf %12, %14 : vector<8x128xf32>
      %c0_14 = arith.constant 0 : index
      %c0_15 = arith.constant 0 : index
      %16 = vector.load %arg6[%c0_14, %c0_15] : memref<8x128xf32, #tpu.memory_space<vmem>>, vector<8x128xf32>
      tpu.vector_store %arg6[%c0_14, %c0_15], %15 {strides = array<i32>} : memref<8x128xf32, #tpu.memory_space<vmem>>, vector<8x128xf32>,
    } else {
    }
    return
  }
  func.func @transform_0(%arg0: i32, %arg1: i32, %arg2: i32) -> (i32, i32) {
    %c0_i32 = arith.constant 0 : i32
    return %arg0, %arg2 : i32, i32
  }
  func.func @transform_1(%arg0: i32, %arg1: i32, %arg2: i32) -> (i32, i32) {
    %c0_i32 = arith.constant 0 : i32
    return %arg2, %arg1 : i32, i32
  }
  func.func @transform_2(%arg0: i32, %arg1: i32, %arg2: i32) -> (i32, i32) {
    %c0_i32 = arith.constant 0 : i32
    %c0_i32_0 = arith.constant 0 : i32
    return %c0_i32, %arg1 : i32, i32
  }
  func.func @transform_3(%arg0: i32, %arg1: i32, %arg2: i32) -> (i32, i32) {
    %c0_i32 = arith.constant 0 : i32
    return %arg0, %arg1 : i32, i32
  }
}

module attributes {stable_mosaic.version = 11 : i64} {
  func.func @_linear_kernel(%arg0: i32, %arg1: i32, %arg2: i32, %arg3: memref<8x128xbf16, #tpu.memory_space<vmem>>, %arg4: memref<128x128xbf16, #tpu.memory_space<vmem>>, %arg5: memref<1x128xf32, #tpu.memory_space<vmem>>, %arg6: memref<8x128xbf16, #tpu.memory_space<vmem>>, %arg7: memref<8x128xf32, #tpu.memory_space<vmem>>) attributes {dimension_semantics = [#tpu.dimension_semantics<parallel>, #tpu.dimension_semantics<parallel>, #tpu.dimension_semantics<arbitrary>], iteration_bounds = array<i64: 1, 1, 1>, scalar_prefetch = 0 : i64, scratch_operands = 1 : i64, tpu.core_type = #tpu.core_type<tc>, window_params = [{transform_indices = @transform_0, window_bounds = array<i64: 8, 128>}, {transform_indices = @transform_1, window_bounds = array<i64: 128, 128>}, {transform_indices = @transform_2, window_bounds = array<i64: 1, 128>}, {transform_indices = @transform_3, window_bounds = array<i64: 8, 128>}]} {
    %c0_i32 = arith.constant 0 : i32
    %0 = arith.cmpi eq, %arg2, %c0_i32 : i32
    %1 = arith.extui %0 : i1 to i32
    %c0_i32_0 = arith.constant 0 : i32
    %2 = arith.cmpi ne, %1, %c0_i32_0 : i32
    scf.if %2 {
      %cst_10 = arith.constant 0.000000e+00 : f32
      %12 = vector.broadcast %cst_10 : f32 to vector<8x128xf32>
      %c0_11 = arith.constant 0 : index
      %c0_12 = arith.constant 0 : index
      %13 = vector.load %arg7[%c0_11, %c0_12] : memref<8x128xf32, #tpu.memory_space<vmem>>, vector<8x128xf32>
      tpu.vector_store %arg7[%c0_11, %c0_12], %12 {strides = array<i32>} : memref<8x128xf32, #tpu.memory_space<vmem>>, vector<8x128xf32>,
    } else {
    }
    %c0 = arith.constant 0 : index
    %c0_1 = arith.constant 0 : index
    %3 = vector.load %arg7[%c0, %c0_1] : memref<8x128xf32, #tpu.memory_space<vmem>>, vector<8x128xf32>
    %c0_2 = arith.constant 0 : index
    %c0_3 = arith.constant 0 : index
    %4 = vector.load %arg3[%c0_2, %c0_3] : memref<8x128xbf16, #tpu.memory_space<vmem>>, vector<8x128xbf16>
    %c0_4 = arith.constant 0 : index
    %c0_5 = arith.constant 0 : index
    %5 = vector.load %arg4[%c0_4, %c0_5] : memref<128x128xbf16, #tpu.memory_space<vmem>>, vector<128x128xbf16>
    %cst = arith.constant dense<0.000000e+00> : vector<8x128xf32>
    %6 = tpu.matmul %4, %5, %cst {dimension_numbers = #tpu.dot_dimension_numbers<[1], [0], [0], [1], [0, 0, 1, 1], [], []>} : vector<8x128xbf16>, vector<128x128xbf16>, vector<8x128xf32> -> vector<8x128xf32>
    %7 = arith.addf %3, %6 : vector<8x128xf32>
    %c0_6 = arith.constant 0 : index
    %c0_7 = arith.constant 0 : index
    %8 = vector.load %arg7[%c0_6, %c0_7] : memref<8x128xf32, #tpu.memory_space<vmem>>, vector<8x128xf32>
    tpu.vector_store %arg7[%c0_6, %c0_7], %7 {strides = array<i32>} : memref<8x128xf32, #tpu.memory_space<vmem>>, vector<8x128xf32>,
    %c0_i32_8 = arith.constant 0 : i32
    %9 = arith.cmpi eq, %arg2, %c0_i32_8 : i32
    %10 = arith.extui %9 : i1 to i32
    %c0_i32_9 = arith.constant 0 : i32
    %11 = arith.cmpi ne, %10, %c0_i32_9 : i32
    scf.if %11 {
      %c0_10 = arith.constant 0 : index
      %c0_11 = arith.constant 0 : index
      %12 = vector.load %arg7[%c0_10, %c0_11] : memref<8x128xf32, #tpu.memory_space<vmem>>, vector<8x128xf32>
      %c0_12 = arith.constant 0 : index
      %c0_13 = arith.constant 0 : index
      %13 = vector.load %arg5[%c0_12, %c0_13] : memref<1x128xf32, #tpu.memory_space<vmem>>, vector<1x128xf32>
      %14 = vector.broadcast %13 : vector<1x128xf32> to vector<8x128xf32>
      %15 = arith.addf %12, %14 : vector<8x128xf32>
      %16 = arith.truncf %15 : vector<8x128xf32> to vector<8x128xbf16>
      %c0_14 = arith.constant 0 : index
      %c0_15 = arith.constant 0 : index
      %17 = vector.load %arg6[%c0_14, %c0_15] : memref<8x128xbf16, #tpu.memory_space<vmem>>, vector<8x128xbf16>
      tpu.vector_store %arg6[%c0_14, %c0_15], %16 {strides = array<i32>} : memref<8x128xbf16, #tpu.memory_space<vmem>>, vector<8x128xbf16>,
    } else {
    }
    return
  }
  func.func @transform_0(%arg0: i32, %arg1: i32, %arg2: i32) -> (i32, i32) {
    %c0_i32 = arith.constant 0 : i32
    return %arg0, %arg2 : i32, i32
  }
  func.func @transform_1(%arg0: i32, %arg1: i32, %arg2: i32) -> (i32, i32) {
    %c0_i32 = arith.constant 0 : i32
    return %arg2, %arg1 : i32, i32
  }
  func.func @transform_2(%arg0: i32, %arg1: i32, %arg2: i32) -> (i32, i32) {
    %c0_i32 = arith.constant 0 : i32
    %c0_i32_0 = arith.constant 0 : i32
    return %c0_i32, %arg1 : i32, i32
  }
  func.func @transform_3(%arg0: i32, %arg1: i32, %arg2: i32) -> (i32, i32) {
    %c0_i32 = arith.constant 0 : i32
    return %arg0, %arg1 : i32, i32
  }
}

module attributes {stable_mosaic.version = 11 : i64} {
  func.func @_mha_kernel(%arg0: i32, %arg1: i32, %arg2: memref<1x8x384xbf16, #tpu.memory_space<vmem>>, %arg3: memref<1x8x128xbf16, #tpu.memory_space<vmem>>) attributes {dimension_semantics = [#tpu.dimension_semantics<parallel>, #tpu.dimension_semantics<parallel>], iteration_bounds = array<i64: 2, 4>, scalar_prefetch = 0 : i64, scratch_operands = 0 : i64, tpu.core_type = #tpu.core_type<tc>, window_params = [{transform_indices = @transform_0, window_bounds = array<i64: 1, 8, 384>}, {transform_indices = @transform_1, window_bounds = array<i64: 1, 8, 128>}]} {
    %c0 = arith.constant 0 : index
    %c0_0 = arith.constant 0 : index
    %c0_1 = arith.constant 0 : index
    %0 = vector.load %arg2[%c0, %c0_0, %c0_1] : memref<1x8x384xbf16, #tpu.memory_space<vmem>>, vector<1x8x384xbf16>
    %1 = vector.extract_strided_slice %0 {offsets = [0, 0, 0], sizes = [1, 8, 128], strides = [1, 1, 1]} : vector<1x8x384xbf16> to vector<1x8x128xbf16>
    %2 = vector.shape_cast %1 : vector<1x8x128xbf16> to vector<8x128xbf16>
    %3 = vector.extract_strided_slice %0 {offsets = [0, 0, 128], sizes = [1, 8, 128], strides = [1, 1, 1]} : vector<1x8x384xbf16> to vector<1x8x128xbf16>
    %4 = vector.shape_cast %3 : vector<1x8x128xbf16> to vector<8x128xbf16>
    %5 = vector.extract_strided_slice %0 {offsets = [0, 0, 256], sizes = [1, 8, 128], strides = [1, 1, 1]} : vector<1x8x384xbf16> to vector<1x8x128xbf16>
    %6 = vector.shape_cast %5 : vector<1x8x128xbf16> to vector<8x128xbf16>
    %cst = arith.constant dense<0.000000e+00> : vector<8x8xf32>
    %7 = tpu.matmul %2, %4, %cst {dimension_numbers = #tpu.dot_dimension_numbers<[1], [1], [0], [0], [0, 0, 1, 0], [], []>} : vector<8x128xbf16>, vector<8x128xbf16>, vector<8x8xf32> -> vector<8x8xf32>
    %8 = tpu.iota {dimensions = array<i32: 1>} : vector<8x8xi32>
    %c8_i32 = arith.constant 8 : i32
    %9 = vector.broadcast %c8_i32 : i32 to vector<8x8xi32>
    %10 = arith.cmpi sge, %8, %9 : vector<8x8xi32>
    %11 = tpu.iota {dimensions = array<i32: 0>} : vector<8x8xi32>
    %12 = arith.cmpi sgt, %8, %11 : vector<8x8xi32>
    %13 = arith.ori %10, %12 : vector<8x8xi1>
    %cst_2 = arith.constant -1.000000e+09 : f32
    %14 = vector.broadcast %cst_2 : f32 to vector<8x8xf32>
    %15 = arith.select %13, %14, %7 : vector<8x8xi1>, vector<8x8xf32>
    %cst_3 = arith.constant dense<0xFF800000> : vector<8xf32>
    %16 = vector.multi_reduction <maximumf>, %15, %cst_3 [1] : vector<8x8xf32> to vector<8xf32>
    %17 = vector.shape_cast %16 : vector<8xf32> to vector<8x1xf32>
    %18 = vector.broadcast %17 : vector<8x1xf32> to vector<8x8xf32>
    %19 = arith.subf %15, %18 : vector<8x8xf32>
    %20 = math.exp %19 : vector<8x8xf32>
    %cst_4 = arith.constant dense<0.000000e+00> : vector<8xf32>
    %21 = vector.multi_reduction <add>, %20, %cst_4 [1] : vector<8x8xf32> to vector<8xf32>
    %22 = vector.shape_cast %21 : vector<8xf32> to vector<8x1xf32>
    %23 = tpu.reciprocal %22 {approx = true} : vector<8x1xf32> -> vector<8x1xf32>
    %24 = vector.broadcast %23 : vector<8x1xf32> to vector<8x8xf32>
    %25 = arith.mulf %20, %24 : vector<8x8xf32>
    %26 = arith.truncf %25 : vector<8x8xf32> to vector<8x8xbf16>
    %cst_5 = arith.constant dense<0.000000e+00> : vector<8x128xf32>
    %27 = tpu.matmul %26, %6, %cst_5 {dimension_numbers = #tpu.dot_dimension_numbers<[1], [0], [0], [1], [0, 0, 1, 1], [], []>} : vector<8x8xbf16>, vector<8x128xbf16>, vector<8x128xf32> -> vector<8x128xf32>
    %28 = vector.shape_cast %27 : vector<8x128xf32> to vector<1x8x128xf32>
    %29 = arith.truncf %28 : vector<1x8x128xf32> to vector<1x8x128xbf16>
    %c0_6 = arith.constant 0 : index
    %c0_7 = arith.constant 0 : index
    %c0_8 = arith.constant 0 : index
    %30 = vector.load %arg3[%c0_6, %c0_7, %c0_8] : memref<1x8x128xbf16, #tpu.memory_space<vmem>>, vector<1x8x128xbf16>
    tpu.vector_store %arg3[%c0_6, %c0_7, %c0_8], %29 {strides = array<i32>} : memref<1x8x128xbf16, #tpu.memory_space<vmem>>, vector<1x8x128xbf16>,
    return
  }
  func.func @transform_0(%arg0: i32, %arg1: i32) -> (i32, i32, i32) {
    %c0_i32 = arith.constant 0 : i32
    %c0_i32_0 = arith.constant 0 : i32
    return %arg0, %c0_i32, %arg1 : i32, i32, i32
  }
  func.func @transform_1(%arg0: i32, %arg1: i32) -> (i32, i32, i32) {
    %c0_i32 = arith.constant 0 : i32
    %c0_i32_0 = arith.constant 0 : i32
    return %arg0, %c0_i32, %arg1 : i32, i32, i32
  }
}

module attributes {stable_mosaic.version = 11 : i64} {
  func.func @_linear_kernel(%arg0: i32, %arg1: i32, %arg2: i32, %arg3: memref<16x128xbf16, #tpu.memory_space<vmem>>, %arg4: memref<128x256xbf16, #tpu.memory_space<vmem>>, %arg5: memref<1x256xf32, #tpu.memory_space<vmem>>, %arg6: memref<16x256xbf16, #tpu.memory_space<vmem>>, %arg7: memref<16x256xf32, #tpu.memory_space<vmem>>) attributes {dimension_semantics = [#tpu.dimension_semantics<parallel>, #tpu.dimension_semantics<parallel>, #tpu.dimension_semantics<arbitrary>], iteration_bounds = array<i64: 1, 6, 1>, scalar_prefetch = 0 : i64, scratch_operands = 1 : i64, tpu.core_type = #tpu.core_type<tc>, window_params = [{transform_indices = @transform_0, window_bounds = array<i64: 16, 128>}, {transform_indices = @transform_1, window_bounds = array<i64: 128, 256>}, {transform_indices = @transform_2, window_bounds = array<i64: 1, 256>}, {transform_indices = @transform_3, window_bounds = array<i64: 16, 256>}]} {
    %c0_i32 = arith.constant 0 : i32
    %0 = arith.cmpi eq, %arg2, %c0_i32 : i32
    %1 = arith.extui %0 : i1 to i32
    %c0_i32_0 = arith.constant 0 : i32
    %2 = arith.cmpi ne, %1, %c0_i32_0 : i32
    scf.if %2 {
      %cst_10 = arith.constant 0.000000e+00 : f32
      %12 = vector.broadcast %cst_10 : f32 to vector<16x256xf32>
      %c0_11 = arith.constant 0 : index
      %c0_12 = arith.constant 0 : index
      %13 = vector.load %arg7[%c0_11, %c0_12] : memref<16x256xf32, #tpu.memory_space<vmem>>, vector<16x256xf32>
      tpu.vector_store %arg7[%c0_11, %c0_12], %12 {strides = array<i32>} : memref<16x256xf32, #tpu.memory_space<vmem>>, vector<16x256xf32>,
    } else {
    }
    %c0 = arith.constant 0 : index
    %c0_1 = arith.constant 0 : index
    %3 = vector.load %arg7[%c0, %c0_1] : memref<16x256xf32, #tpu.memory_space<vmem>>, vector<16x256xf32>
    %c0_2 = arith.constant 0 : index
    %c0_3 = arith.constant 0 : index
    %4 = vector.load %arg3[%c0_2, %c0_3] : memref<16x128xbf16, #tpu.memory_space<vmem>>, vector<16x128xbf16>
    %c0_4 = arith.constant 0 : index
    %c0_5 = arith.constant 0 : index
    %5 = vector.load %arg4[%c0_4, %c0_5] : memref<128x256xbf16, #tpu.memory_space<vmem>>, vector<128x256xbf16>
    %cst = arith.constant dense<0.000000e+00> : vector<16x256xf32>
    %6 = tpu.matmul %4, %5, %cst {dimension_numbers = #tpu.dot_dimension_numbers<[1], [0], [0], [1], [0, 0, 1, 1], [], []>} : vector<16x128xbf16>, vector<128x256xbf16>, vector<16x256xf32> -> vector<16x256xf32>
    %7 = arith.addf %3, %6 : vector<16x256xf32>
    %c0_6 = arith.constant 0 : index
    %c0_7 = arith.constant 0 : index
    %8 = vector.load %arg7[%c0_6, %c0_7] : memref<16x256xf32, #tpu.memory_space<vmem>>, vector<16x256xf32>
    tpu.vector_store %arg7[%c0_6, %c0_7], %7 {strides = array<i32>} : memref<16x256xf32, #tpu.memory_space<vmem>>, vector<16x256xf32>,
    %c0_i32_8 = arith.constant 0 : i32
    %9 = arith.cmpi eq, %arg2, %c0_i32_8 : i32
    %10 = arith.extui %9 : i1 to i32
    %c0_i32_9 = arith.constant 0 : i32
    %11 = arith.cmpi ne, %10, %c0_i32_9 : i32
    scf.if %11 {
      %c0_10 = arith.constant 0 : index
      %c0_11 = arith.constant 0 : index
      %12 = vector.load %arg7[%c0_10, %c0_11] : memref<16x256xf32, #tpu.memory_space<vmem>>, vector<16x256xf32>
      %c0_12 = arith.constant 0 : index
      %c0_13 = arith.constant 0 : index
      %13 = vector.load %arg5[%c0_12, %c0_13] : memref<1x256xf32, #tpu.memory_space<vmem>>, vector<1x256xf32>
      %14 = vector.broadcast %13 : vector<1x256xf32> to vector<16x256xf32>
      %15 = arith.addf %12, %14 : vector<16x256xf32>
      %16 = arith.truncf %15 : vector<16x256xf32> to vector<16x256xbf16>
      %c0_14 = arith.constant 0 : index
      %c0_15 = arith.constant 0 : index
      %17 = vector.load %arg6[%c0_14, %c0_15] : memref<16x256xbf16, #tpu.memory_space<vmem>>, vector<16x256xbf16>
      tpu.vector_store %arg6[%c0_14, %c0_15], %16 {strides = array<i32>} : memref<16x256xbf16, #tpu.memory_space<vmem>>, vector<16x256xbf16>,
    } else {
    }
    return
  }
  func.func @transform_0(%arg0: i32, %arg1: i32, %arg2: i32) -> (i32, i32) {
    %c0_i32 = arith.constant 0 : i32
    return %arg0, %arg2 : i32, i32
  }
  func.func @transform_1(%arg0: i32, %arg1: i32, %arg2: i32) -> (i32, i32) {
    %c0_i32 = arith.constant 0 : i32
    return %arg2, %arg1 : i32, i32
  }
  func.func @transform_2(%arg0: i32, %arg1: i32, %arg2: i32) -> (i32, i32) {
    %c0_i32 = arith.constant 0 : i32
    %c0_i32_0 = arith.constant 0 : i32
    return %c0_i32, %arg1 : i32, i32
  }
  func.func @transform_3(%arg0: i32, %arg1: i32, %arg2: i32) -> (i32, i32) {
    %c0_i32 = arith.constant 0 : i32
    return %arg0, %arg1 : i32, i32
  }
}

module attributes {stable_mosaic.version = 11 : i64} {
  func.func @_linear_kernel(%arg0: i32, %arg1: i32, %arg2: i32, %arg3: memref<16x256xbf16, #tpu.memory_space<vmem>>, %arg4: memref<256x128xbf16, #tpu.memory_space<vmem>>, %arg5: memref<1x128xf32, #tpu.memory_space<vmem>>, %arg6: memref<16x128xbf16, #tpu.memory_space<vmem>>, %arg7: memref<1x128xf32, #tpu.memory_space<vmem>>, %arg8: memref<1x128xf32, #tpu.memory_space<vmem>>, %arg9: memref<16x128xbf16, #tpu.memory_space<vmem>>, %arg10: memref<16x128xf32, #tpu.memory_space<vmem>>) attributes {dimension_semantics = [#tpu.dimension_semantics<parallel>, #tpu.dimension_semantics<parallel>, #tpu.dimension_semantics<arbitrary>], iteration_bounds = array<i64: 1, 1, 2>, scalar_prefetch = 0 : i64, scratch_operands = 1 : i64, tpu.core_type = #tpu.core_type<tc>, window_params = [{transform_indices = @transform_0, window_bounds = array<i64: 16, 256>}, {transform_indices = @transform_1, window_bounds = array<i64: 256, 128>}, {transform_indices = @transform_2, window_bounds = array<i64: 1, 128>}, {transform_indices = @transform_3, window_bounds = array<i64: 16, 128>}, {transform_indices = @transform_4, window_bounds = array<i64: 1, 128>}, {transform_indices = @transform_5, window_bounds = array<i64: 1, 128>}, {transform_indices = @transform_6, window_bounds = array<i64: 16, 128>}]} {
    %c0_i32 = arith.constant 0 : i32
    %0 = arith.cmpi eq, %arg2, %c0_i32 : i32
    %1 = arith.extui %0 : i1 to i32
    %c0_i32_0 = arith.constant 0 : i32
    %2 = arith.cmpi ne, %1, %c0_i32_0 : i32
    scf.if %2 {
      %cst_9 = arith.constant 0.000000e+00 : f32
      %12 = vector.broadcast %cst_9 : f32 to vector<16x128xf32>
      %c0_10 = arith.constant 0 : index
      %c0_11 = arith.constant 0 : index
      %13 = vector.load %arg10[%c0_10, %c0_11] : memref<16x128xf32, #tpu.memory_space<vmem>>, vector<16x128xf32>
      tpu.vector_store %arg10[%c0_10, %c0_11], %12 {strides = array<i32>} : memref<16x128xf32, #tpu.memory_space<vmem>>, vector<16x128xf32>,
    } else {
    }
    %c0 = arith.constant 0 : index
    %c0_1 = arith.constant 0 : index
    %3 = vector.load %arg10[%c0, %c0_1] : memref<16x128xf32, #tpu.memory_space<vmem>>, vector<16x128xf32>
    %c0_2 = arith.constant 0 : index
    %c0_3 = arith.constant 0 : index
    %4 = vector.load %arg3[%c0_2, %c0_3] : memref<16x256xbf16, #tpu.memory_space<vmem>>, vector<16x256xbf16>
    %c0_4 = arith.constant 0 : index
    %c0_5 = arith.constant 0 : index
    %5 = vector.load %arg4[%c0_4, %c0_5] : memref<256x128xbf16, #tpu.memory_space<vmem>>, vector<256x128xbf16>
    %cst = arith.constant dense<0.000000e+00> : vector<16x128xf32>
    %6 = tpu.matmul %4, %5, %cst {dimension_numbers = #tpu.dot_dimension_numbers<[1], [0], [0], [1], [0, 0, 1, 1], [], []>} : vector<16x256xbf16>, vector<256x128xbf16>, vector<16x128xf32> -> vector<16x128xf32>
    %7 = arith.addf %3, %6 : vector<16x128xf32>
    %c0_6 = arith.constant 0 : index
    %c0_7 = arith.constant 0 : index
    %8 = vector.load %arg10[%c0_6, %c0_7] : memref<16x128xf32, #tpu.memory_space<vmem>>, vector<16x128xf32>
    tpu.vector_store %arg10[%c0_6, %c0_7], %7 {strides = array<i32>} : memref<16x128xf32, #tpu.memory_space<vmem>>, vector<16x128xf32>,
    %c1_i32 = arith.constant 1 : i32
    %9 = arith.cmpi eq, %arg2, %c1_i32 : i32
    %10 = arith.extui %9 : i1 to i32
    %c0_i32_8 = arith.constant 0 : i32
    %11 = arith.cmpi ne, %10, %c0_i32_8 : i32
    scf.if %11 {
      %c0_9 = arith.constant 0 : index
      %c0_10 = arith.constant 0 : index
      %12 = vector.load %arg10[%c0_9, %c0_10] : memref<16x128xf32, #tpu.memory_space<vmem>>, vector<16x128xf32>
      %c0_11 = arith.constant 0 : index
      %c0_12 = arith.constant 0 : index
      %13 = vector.load %arg5[%c0_11, %c0_12] : memref<1x128xf32, #tpu.memory_space<vmem>>, vector<1x128xf32>
      %14 = vector.broadcast %13 : vector<1x128xf32> to vector<16x128xf32>
      %15 = arith.addf %12, %14 : vector<16x128xf32>
      %c0_13 = arith.constant 0 : index
      %c0_14 = arith.constant 0 : index
      %16 = vector.load %arg6[%c0_13, %c0_14] : memref<16x128xbf16, #tpu.memory_space<vmem>>, vector<16x128xbf16>
      %17 = arith.extf %16 : vector<16x128xbf16> to vector<16x128xf32>
      %18 = arith.addf %15, %17 : vector<16x128xf32>
      %19 = tpu.iota {dimensions = array<i32: 1>} : vector<16x128xi32>
      %c32_i32 = arith.constant 32 : i32
      %20 = vector.broadcast %c32_i32 : i32 to vector<16x128xi32>
      %21 = arith.cmpi slt, %19, %20 : vector<16x128xi32>
      %cst_15 = arith.constant 0.000000e+00 : f32
      %22 = vector.broadcast %cst_15 : f32 to vector<16x128xf32>
      %23 = arith.select %21, %18, %22 : vector<16x128xi1>, vector<16x128xf32>
      %cst_16 = arith.constant dense<0.000000e+00> : vector<16xf32>
      %24 = vector.multi_reduction <add>, %23, %cst_16 [1] : vector<16x128xf32> to vector<16xf32>
      %25 = vector.shape_cast %24 : vector<16xf32> to vector<16x1xf32>
      %cst_17 = arith.constant 3.125000e-02 : f32
      %26 = vector.broadcast %cst_17 : f32 to vector<16x1xf32>
      %27 = arith.mulf %25, %26 : vector<16x1xf32>
      %28 = vector.broadcast %27 : vector<16x1xf32> to vector<16x128xf32>
      %29 = arith.subf %18, %28 : vector<16x128xf32>
      %cst_18 = arith.constant 0.000000e+00 : f32
      %30 = vector.broadcast %cst_18 : f32 to vector<16x128xf32>
      %31 = arith.select %21, %29, %30 : vector<16x128xi1>, vector<16x128xf32>
      %32 = arith.mulf %31, %31 : vector<16x128xf32>
      %cst_19 = arith.constant dense<0.000000e+00> : vector<16xf32>
      %33 = vector.multi_reduction <add>, %32, %cst_19 [1] : vector<16x128xf32> to vector<16xf32>
      %34 = vector.shape_cast %33 : vector<16xf32> to vector<16x1xf32>
      %cst_20 = arith.constant 3.125000e-02 : f32
      %35 = vector.broadcast %cst_20 : f32 to vector<16x1xf32>
      %36 = arith.mulf %34, %35 : vector<16x1xf32>
      %cst_21 = arith.constant 9.99999974E-6 : f32
      %37 = vector.broadcast %cst_21 : f32 to vector<16x1xf32>
      %38 = arith.addf %36, %37 : vector<16x1xf32>
      %39 = math.rsqrt %38 : vector<16x1xf32>
      %40 = vector.broadcast %39 : vector<16x1xf32> to vector<16x128xf32>
      %41 = arith.mulf %31, %40 : vector<16x128xf32>
      %c0_22 = arith.constant 0 : index
      %c0_23 = arith.constant 0 : index
      %42 = vector.load %arg7[%c0_22, %c0_23] : memref<1x128xf32, #tpu.memory_space<vmem>>, vector<1x128xf32>
      %43 = vector.broadcast %42 : vector<1x128xf32> to vector<16x128xf32>
      %44 = arith.mulf %41, %43 : vector<16x128xf32>
      %c0_24 = arith.constant 0 : index
      %c0_25 = arith.constant 0 : index
      %45 = vector.load %arg8[%c0_24, %c0_25] : memref<1x128xf32, #tpu.memory_space<vmem>>, vector<1x128xf32>
      %46 = vector.broadcast %45 : vector<1x128xf32> to vector<16x128xf32>
      %47 = arith.addf %44, %46 : vector<16x128xf32>
      %48 = arith.truncf %47 : vector<16x128xf32> to vector<16x128xbf16>
      %c0_26 = arith.constant 0 : index
      %c0_27 = arith.constant 0 : index
      %49 = vector.load %arg9[%c0_26, %c0_27] : memref<16x128xbf16, #tpu.memory_space<vmem>>, vector<16x128xbf16>
      tpu.vector_store %arg9[%c0_26, %c0_27], %48 {strides = array<i32>} : memref<16x128xbf16, #tpu.memory_space<vmem>>, vector<16x128xbf16>,
    } else {
    }
    return
  }
  func.func @transform_0(%arg0: i32, %arg1: i32, %arg2: i32) -> (i32, i32) {
    %c0_i32 = arith.constant 0 : i32
    return %arg0, %arg2 : i32, i32
  }
  func.func @transform_1(%arg0: i32, %arg1: i32, %arg2: i32) -> (i32, i32) {
    %c0_i32 = arith.constant 0 : i32
    return %arg2, %arg1 : i32, i32
  }
  func.func @transform_2(%arg0: i32, %arg1: i32, %arg2: i32) -> (i32, i32) {
    %c0_i32 = arith.constant 0 : i32
    %c0_i32_0 = arith.constant 0 : i32
    return %c0_i32, %arg1 : i32, i32
  }
  func.func @transform_3(%arg0: i32, %arg1: i32, %arg2: i32) -> (i32, i32) {
    %c0_i32 = arith.constant 0 : i32
    return %arg0, %arg1 : i32, i32
  }
  func.func @transform_4(%arg0: i32, %arg1: i32, %arg2: i32) -> (i32, i32) {
    %c0_i32 = arith.constant 0 : i32
    %c0_i32_0 = arith.constant 0 : i32
    return %c0_i32, %arg1 : i32, i32
  }
  func.func @transform_5(%arg0: i32, %arg1: i32, %arg2: i32) -> (i32, i32) {
    %c0_i32 = arith.constant 0 : i32
    %c0_i32_0 = arith.constant 0 : i32
    return %c0_i32, %arg1 : i32, i32
  }
  func.func @transform_6(%arg0: i32, %arg1: i32, %arg2: i32) -> (i32, i32) {
    %c0_i32 = arith.constant 0 : i32
    return %arg0, %arg1 : i32, i32
  }
}

module attributes {stable_mosaic.version = 11 : i64} {
  func.func @_add_ln_kernel(%arg0: i32, %arg1: memref<1x8x128xbf16, #tpu.memory_space<vmem>>, %arg2: memref<1x1x128xbf16, #tpu.memory_space<vmem>>, %arg3: memref<1x1x128xf32, #tpu.memory_space<vmem>>, %arg4: memref<1x1x128xf32, #tpu.memory_space<vmem>>, %arg5: memref<1x8x128xbf16, #tpu.memory_space<vmem>>) attributes {dimension_semantics = [#tpu.dimension_semantics<parallel>], iteration_bounds = array<i64: 2>, scalar_prefetch = 0 : i64, scratch_operands = 0 : i64, tpu.core_type = #tpu.core_type<tc>, window_params = [{transform_indices = @transform_0, window_bounds = array<i64: 1, 8, 128>}, {transform_indices = @transform_1, window_bounds = array<i64: 1, 1, 128>}, {pipeline_mode = #tpu.pipeline_mode<synchronous>, transform_indices = @transform_2, window_bounds = array<i64: 1, 1, 128>}, {pipeline_mode = #tpu.pipeline_mode<synchronous>, transform_indices = @transform_3, window_bounds = array<i64: 1, 1, 128>}, {transform_indices = @transform_4, window_bounds = array<i64: 1, 8, 128>}]} {
    %c0 = arith.constant 0 : index
    %c0_0 = arith.constant 0 : index
    %c0_1 = arith.constant 0 : index
    %0 = vector.load %arg1[%c0, %c0_0, %c0_1] : memref<1x8x128xbf16, #tpu.memory_space<vmem>>, vector<1x8x128xbf16>
    %1 = arith.extf %0 : vector<1x8x128xbf16> to vector<1x8x128xf32>
    %c0_2 = arith.constant 0 : index
    %c0_3 = arith.constant 0 : index
    %c0_4 = arith.constant 0 : index
    %2 = vector.load %arg2[%c0_2, %c0_3, %c0_4] : memref<1x1x128xbf16, #tpu.memory_space<vmem>>, vector<1x1x128xbf16>
    %3 = arith.extf %2 : vector<1x1x128xbf16> to vector<1x1x128xf32>
    %4 = vector.broadcast %3 : vector<1x1x128xf32> to vector<1x8x128xf32>
    %5 = arith.addf %1, %4 : vector<1x8x128xf32>
    %6 = tpu.iota {dimensions = array<i32: 2>} : vector<1x8x128xi32>
    %c32_i32 = arith.constant 32 : i32
    %7 = vector.broadcast %c32_i32 : i32 to vector<1x8x128xi32>
    %8 = arith.cmpi slt, %6, %7 : vector<1x8x128xi32>
    %cst = arith.constant 0.000000e+00 : f32
    %9 = vector.broadcast %cst : f32 to vector<1x8x128xf32>
    %10 = arith.select %8, %5, %9 : vector<1x8x128xi1>, vector<1x8x128xf32>
    %cst_5 = arith.constant dense<0.000000e+00> : vector<1x8xf32>
    %11 = vector.multi_reduction <add>, %10, %cst_5 [2] : vector<1x8x128xf32> to vector<1x8xf32>
    %12 = vector.shape_cast %11 : vector<1x8xf32> to vector<1x8x1xf32>
    %cst_6 = arith.constant 3.125000e-02 : f32
    %13 = vector.broadcast %cst_6 : f32 to vector<1x8x1xf32>
    %14 = arith.mulf %12, %13 : vector<1x8x1xf32>
    %15 = vector.broadcast %14 : vector<1x8x1xf32> to vector<1x8x128xf32>
    %16 = arith.subf %5, %15 : vector<1x8x128xf32>
    %cst_7 = arith.constant 0.000000e+00 : f32
    %17 = vector.broadcast %cst_7 : f32 to vector<1x8x128xf32>
    %18 = arith.select %8, %16, %17 : vector<1x8x128xi1>, vector<1x8x128xf32>
    %19 = arith.mulf %18, %18 : vector<1x8x128xf32>
    %cst_8 = arith.constant dense<0.000000e+00> : vector<1x8xf32>
    %20 = vector.multi_reduction <add>, %19, %cst_8 [2] : vector<1x8x128xf32> to vector<1x8xf32>
    %21 = vector.shape_cast %20 : vector<1x8xf32> to vector<1x8x1xf32>
    %cst_9 = arith.constant 3.125000e-02 : f32
    %22 = vector.broadcast %cst_9 : f32 to vector<1x8x1xf32>
    %23 = arith.mulf %21, %22 : vector<1x8x1xf32>
    %cst_10 = arith.constant 9.99999974E-6 : f32
    %24 = vector.broadcast %cst_10 : f32 to vector<1x8x1xf32>
    %25 = arith.addf %23, %24 : vector<1x8x1xf32>
    %26 = math.rsqrt %25 : vector<1x8x1xf32>
    %27 = vector.broadcast %26 : vector<1x8x1xf32> to vector<1x8x128xf32>
    %28 = arith.mulf %18, %27 : vector<1x8x128xf32>
    %c0_11 = arith.constant 0 : index
    %c0_12 = arith.constant 0 : index
    %c0_13 = arith.constant 0 : index
    %29 = vector.load %arg3[%c0_11, %c0_12, %c0_13] : memref<1x1x128xf32, #tpu.memory_space<vmem>>, vector<1x1x128xf32>
    %30 = vector.broadcast %29 : vector<1x1x128xf32> to vector<1x8x128xf32>
    %31 = arith.mulf %28, %30 : vector<1x8x128xf32>
    %c0_14 = arith.constant 0 : index
    %c0_15 = arith.constant 0 : index
    %c0_16 = arith.constant 0 : index
    %32 = vector.load %arg4[%c0_14, %c0_15, %c0_16] : memref<1x1x128xf32, #tpu.memory_space<vmem>>, vector<1x1x128xf32>
    %33 = vector.broadcast %32 : vector<1x1x128xf32> to vector<1x8x128xf32>
    %34 = arith.addf %31, %33 : vector<1x8x128xf32>
    %35 = arith.truncf %34 : vector<1x8x128xf32> to vector<1x8x128xbf16>
    %c0_17 = arith.constant 0 : index
    %c0_18 = arith.constant 0 : index
    %c0_19 = arith.constant 0 : index
    %36 = vector.load %arg5[%c0_17, %c0_18, %c0_19] : memref<1x8x128xbf16, #tpu.memory_space<vmem>>, vector<1x8x128xbf16>
    tpu.vector_store %arg5[%c0_17, %c0_18, %c0_19], %35 {strides = array<i32>} : memref<1x8x128xbf16, #tpu.memory_space<vmem>>, vector<1x8x128xbf16>,
    return
  }
  func.func @transform_0(%arg0: i32) -> (i32, i32, i32) {
    %c0_i32 = arith.constant 0 : i32
    %c0_i32_0 = arith.constant 0 : i32
    %c0_i32_1 = arith.constant 0 : i32
    return %arg0, %c0_i32, %c0_i32_0 : i32, i32, i32
  }
  func.func @transform_1(%arg0: i32) -> (i32, i32, i32) {
    %c0_i32 = arith.constant 0 : i32
    %c0_i32_0 = arith.constant 0 : i32
    %c0_i32_1 = arith.constant 0 : i32
    return %arg0, %c0_i32, %c0_i32_0 : i32, i32, i32
  }
  func.func @transform_2(%arg0: i32) -> (i32, i32, i32) {
    %c0_i32 = arith.constant 0 : i32
    %c0_i32_0 = arith.constant 0 : i32
    %c0_i32_1 = arith.constant 0 : i32
    %c0_i32_2 = arith.constant 0 : i32
    return %c0_i32, %c0_i32_0, %c0_i32_1 : i32, i32, i32
  }
  func.func @transform_3(%arg0: i32) -> (i32, i32, i32) {
    %c0_i32 = arith.constant 0 : i32
    %c0_i32_0 = arith.constant 0 : i32
    %c0_i32_1 = arith.constant 0 : i32
    %c0_i32_2 = arith.constant 0 : i32
    return %c0_i32, %c0_i32_0, %c0_i32_1 : i32, i32, i32
  }
  func.func @transform_4(%arg0: i32) -> (i32, i32, i32) {
    %c0_i32 = arith.constant 0 : i32
    %c0_i32_0 = arith.constant 0 : i32
    %c0_i32_1 = arith.constant 0 : i32
    return %arg0, %c0_i32, %c0_i32_0 : i32, i32, i32
  }
}

module attributes {stable_mosaic.version = 11 : i64} {
  func.func @_linear_kernel(%arg0: i32, %arg1: i32, %arg2: i32, %arg3: memref<16x128xbf16, #tpu.memory_space<vmem>>, %arg4: memref<128x128xbf16, #tpu.memory_space<vmem>>, %arg5: memref<1x128xf32, #tpu.memory_space<vmem>>, %arg6: memref<16x128xbf16, #tpu.memory_space<vmem>>, %arg7: memref<16x128xf32, #tpu.memory_space<vmem>>) attributes {dimension_semantics = [#tpu.dimension_semantics<parallel>, #tpu.dimension_semantics<parallel>, #tpu.dimension_semantics<arbitrary>], iteration_bounds = array<i64: 1, 1, 1>, scalar_prefetch = 0 : i64, scratch_operands = 1 : i64, tpu.core_type = #tpu.core_type<tc>, window_params = [{transform_indices = @transform_0, window_bounds = array<i64: 16, 128>}, {transform_indices = @transform_1, window_bounds = array<i64: 128, 128>}, {transform_indices = @transform_2, window_bounds = array<i64: 1, 128>}, {transform_indices = @transform_3, window_bounds = array<i64: 16, 128>}]} {
    %c0_i32 = arith.constant 0 : i32
    %0 = arith.cmpi eq, %arg2, %c0_i32 : i32
    %1 = arith.extui %0 : i1 to i32
    %c0_i32_0 = arith.constant 0 : i32
    %2 = arith.cmpi ne, %1, %c0_i32_0 : i32
    scf.if %2 {
      %cst_10 = arith.constant 0.000000e+00 : f32
      %12 = vector.broadcast %cst_10 : f32 to vector<16x128xf32>
      %c0_11 = arith.constant 0 : index
      %c0_12 = arith.constant 0 : index
      %13 = vector.load %arg7[%c0_11, %c0_12] : memref<16x128xf32, #tpu.memory_space<vmem>>, vector<16x128xf32>
      tpu.vector_store %arg7[%c0_11, %c0_12], %12 {strides = array<i32>} : memref<16x128xf32, #tpu.memory_space<vmem>>, vector<16x128xf32>,
    } else {
    }
    %c0 = arith.constant 0 : index
    %c0_1 = arith.constant 0 : index
    %3 = vector.load %arg7[%c0, %c0_1] : memref<16x128xf32, #tpu.memory_space<vmem>>, vector<16x128xf32>
    %c0_2 = arith.constant 0 : index
    %c0_3 = arith.constant 0 : index
    %4 = vector.load %arg3[%c0_2, %c0_3] : memref<16x128xbf16, #tpu.memory_space<vmem>>, vector<16x128xbf16>
    %c0_4 = arith.constant 0 : index
    %c0_5 = arith.constant 0 : index
    %5 = vector.load %arg4[%c0_4, %c0_5] : memref<128x128xbf16, #tpu.memory_space<vmem>>, vector<128x128xbf16>
    %cst = arith.constant dense<0.000000e+00> : vector<16x128xf32>
    %6 = tpu.matmul %4, %5, %cst {dimension_numbers = #tpu.dot_dimension_numbers<[1], [0], [0], [1], [0, 0, 1, 1], [], []>} : vector<16x128xbf16>, vector<128x128xbf16>, vector<16x128xf32> -> vector<16x128xf32>
    %7 = arith.addf %3, %6 : vector<16x128xf32>
    %c0_6 = arith.constant 0 : index
    %c0_7 = arith.constant 0 : index
    %8 = vector.load %arg7[%c0_6, %c0_7] : memref<16x128xf32, #tpu.memory_space<vmem>>, vector<16x128xf32>
    tpu.vector_store %arg7[%c0_6, %c0_7], %7 {strides = array<i32>} : memref<16x128xf32, #tpu.memory_space<vmem>>, vector<16x128xf32>,
    %c0_i32_8 = arith.constant 0 : i32
    %9 = arith.cmpi eq, %arg2, %c0_i32_8 : i32
    %10 = arith.extui %9 : i1 to i32
    %c0_i32_9 = arith.constant 0 : i32
    %11 = arith.cmpi ne, %10, %c0_i32_9 : i32
    scf.if %11 {
      %c0_10 = arith.constant 0 : index
      %c0_11 = arith.constant 0 : index
      %12 = vector.load %arg7[%c0_10, %c0_11] : memref<16x128xf32, #tpu.memory_space<vmem>>, vector<16x128xf32>
      %c0_12 = arith.constant 0 : index
      %c0_13 = arith.constant 0 : index
      %13 = vector.load %arg5[%c0_12, %c0_13] : memref<1x128xf32, #tpu.memory_space<vmem>>, vector<1x128xf32>
      %14 = vector.broadcast %13 : vector<1x128xf32> to vector<16x128xf32>
      %15 = arith.addf %12, %14 : vector<16x128xf32>
      %cst_14 = arith.constant 0.000000e+00 : f32
      %16 = vector.broadcast %cst_14 : f32 to vector<16x128xf32>
      %17 = arith.maximumf %15, %16 : vector<16x128xf32>
      %18 = arith.truncf %17 : vector<16x128xf32> to vector<16x128xbf16>
      %c0_15 = arith.constant 0 : index
      %c0_16 = arith.constant 0 : index
      %19 = vector.load %arg6[%c0_15, %c0_16] : memref<16x128xbf16, #tpu.memory_space<vmem>>, vector<16x128xbf16>
      tpu.vector_store %arg6[%c0_15, %c0_16], %18 {strides = array<i32>} : memref<16x128xbf16, #tpu.memory_space<vmem>>, vector<16x128xbf16>,
    } else {
    }
    return
  }
  func.func @transform_0(%arg0: i32, %arg1: i32, %arg2: i32) -> (i32, i32) {
    %c0_i32 = arith.constant 0 : i32
    return %arg0, %arg2 : i32, i32
  }
  func.func @transform_1(%arg0: i32, %arg1: i32, %arg2: i32) -> (i32, i32) {
    %c0_i32 = arith.constant 0 : i32
    return %arg2, %arg1 : i32, i32
  }
  func.func @transform_2(%arg0: i32, %arg1: i32, %arg2: i32) -> (i32, i32) {
    %c0_i32 = arith.constant 0 : i32
    %c0_i32_0 = arith.constant 0 : i32
    return %c0_i32, %arg1 : i32, i32
  }
  func.func @transform_3(%arg0: i32, %arg1: i32, %arg2: i32) -> (i32, i32) {
    %c0_i32 = arith.constant 0 : i32
    return %arg0, %arg1 : i32, i32
  }
}

module attributes {stable_mosaic.version = 11 : i64} {
  func.func @_linear_kernel(%arg0: i32, %arg1: i32, %arg2: i32, %arg3: memref<16x128xbf16, #tpu.memory_space<vmem>>, %arg4: memref<128x128xbf16, #tpu.memory_space<vmem>>, %arg5: memref<1x128xf32, #tpu.memory_space<vmem>>, %arg6: memref<16x128xbf16, #tpu.memory_space<vmem>>, %arg7: memref<1x128xf32, #tpu.memory_space<vmem>>, %arg8: memref<1x128xf32, #tpu.memory_space<vmem>>, %arg9: memref<16x128xbf16, #tpu.memory_space<vmem>>, %arg10: memref<16x128xf32, #tpu.memory_space<vmem>>) attributes {dimension_semantics = [#tpu.dimension_semantics<parallel>, #tpu.dimension_semantics<parallel>, #tpu.dimension_semantics<arbitrary>], iteration_bounds = array<i64: 1, 1, 1>, scalar_prefetch = 0 : i64, scratch_operands = 1 : i64, tpu.core_type = #tpu.core_type<tc>, window_params = [{transform_indices = @transform_0, window_bounds = array<i64: 16, 128>}, {transform_indices = @transform_1, window_bounds = array<i64: 128, 128>}, {transform_indices = @transform_2, window_bounds = array<i64: 1, 128>}, {transform_indices = @transform_3, window_bounds = array<i64: 16, 128>}, {transform_indices = @transform_4, window_bounds = array<i64: 1, 128>}, {transform_indices = @transform_5, window_bounds = array<i64: 1, 128>}, {transform_indices = @transform_6, window_bounds = array<i64: 16, 128>}]} {
    %c0_i32 = arith.constant 0 : i32
    %0 = arith.cmpi eq, %arg2, %c0_i32 : i32
    %1 = arith.extui %0 : i1 to i32
    %c0_i32_0 = arith.constant 0 : i32
    %2 = arith.cmpi ne, %1, %c0_i32_0 : i32
    scf.if %2 {
      %cst_10 = arith.constant 0.000000e+00 : f32
      %12 = vector.broadcast %cst_10 : f32 to vector<16x128xf32>
      %c0_11 = arith.constant 0 : index
      %c0_12 = arith.constant 0 : index
      %13 = vector.load %arg10[%c0_11, %c0_12] : memref<16x128xf32, #tpu.memory_space<vmem>>, vector<16x128xf32>
      tpu.vector_store %arg10[%c0_11, %c0_12], %12 {strides = array<i32>} : memref<16x128xf32, #tpu.memory_space<vmem>>, vector<16x128xf32>,
    } else {
    }
    %c0 = arith.constant 0 : index
    %c0_1 = arith.constant 0 : index
    %3 = vector.load %arg10[%c0, %c0_1] : memref<16x128xf32, #tpu.memory_space<vmem>>, vector<16x128xf32>
    %c0_2 = arith.constant 0 : index
    %c0_3 = arith.constant 0 : index
    %4 = vector.load %arg3[%c0_2, %c0_3] : memref<16x128xbf16, #tpu.memory_space<vmem>>, vector<16x128xbf16>
    %c0_4 = arith.constant 0 : index
    %c0_5 = arith.constant 0 : index
    %5 = vector.load %arg4[%c0_4, %c0_5] : memref<128x128xbf16, #tpu.memory_space<vmem>>, vector<128x128xbf16>
    %cst = arith.constant dense<0.000000e+00> : vector<16x128xf32>
    %6 = tpu.matmul %4, %5, %cst {dimension_numbers = #tpu.dot_dimension_numbers<[1], [0], [0], [1], [0, 0, 1, 1], [], []>} : vector<16x128xbf16>, vector<128x128xbf16>, vector<16x128xf32> -> vector<16x128xf32>
    %7 = arith.addf %3, %6 : vector<16x128xf32>
    %c0_6 = arith.constant 0 : index
    %c0_7 = arith.constant 0 : index
    %8 = vector.load %arg10[%c0_6, %c0_7] : memref<16x128xf32, #tpu.memory_space<vmem>>, vector<16x128xf32>
    tpu.vector_store %arg10[%c0_6, %c0_7], %7 {strides = array<i32>} : memref<16x128xf32, #tpu.memory_space<vmem>>, vector<16x128xf32>,
    %c0_i32_8 = arith.constant 0 : i32
    %9 = arith.cmpi eq, %arg2, %c0_i32_8 : i32
    %10 = arith.extui %9 : i1 to i32
    %c0_i32_9 = arith.constant 0 : i32
    %11 = arith.cmpi ne, %10, %c0_i32_9 : i32
    scf.if %11 {
      %c0_10 = arith.constant 0 : index
      %c0_11 = arith.constant 0 : index
      %12 = vector.load %arg10[%c0_10, %c0_11] : memref<16x128xf32, #tpu.memory_space<vmem>>, vector<16x128xf32>
      %c0_12 = arith.constant 0 : index
      %c0_13 = arith.constant 0 : index
      %13 = vector.load %arg5[%c0_12, %c0_13] : memref<1x128xf32, #tpu.memory_space<vmem>>, vector<1x128xf32>
      %14 = vector.broadcast %13 : vector<1x128xf32> to vector<16x128xf32>
      %15 = arith.addf %12, %14 : vector<16x128xf32>
      %c0_14 = arith.constant 0 : index
      %c0_15 = arith.constant 0 : index
      %16 = vector.load %arg6[%c0_14, %c0_15] : memref<16x128xbf16, #tpu.memory_space<vmem>>, vector<16x128xbf16>
      %17 = arith.extf %16 : vector<16x128xbf16> to vector<16x128xf32>
      %18 = arith.addf %15, %17 : vector<16x128xf32>
      %19 = tpu.iota {dimensions = array<i32: 1>} : vector<16x128xi32>
      %c32_i32 = arith.constant 32 : i32
      %20 = vector.broadcast %c32_i32 : i32 to vector<16x128xi32>
      %21 = arith.cmpi slt, %19, %20 : vector<16x128xi32>
      %cst_16 = arith.constant 0.000000e+00 : f32
      %22 = vector.broadcast %cst_16 : f32 to vector<16x128xf32>
      %23 = arith.select %21, %18, %22 : vector<16x128xi1>, vector<16x128xf32>
      %cst_17 = arith.constant dense<0.000000e+00> : vector<16xf32>
      %24 = vector.multi_reduction <add>, %23, %cst_17 [1] : vector<16x128xf32> to vector<16xf32>
      %25 = vector.shape_cast %24 : vector<16xf32> to vector<16x1xf32>
      %cst_18 = arith.constant 3.125000e-02 : f32
      %26 = vector.broadcast %cst_18 : f32 to vector<16x1xf32>
      %27 = arith.mulf %25, %26 : vector<16x1xf32>
      %28 = vector.broadcast %27 : vector<16x1xf32> to vector<16x128xf32>
      %29 = arith.subf %18, %28 : vector<16x128xf32>
      %cst_19 = arith.constant 0.000000e+00 : f32
      %30 = vector.broadcast %cst_19 : f32 to vector<16x128xf32>
      %31 = arith.select %21, %29, %30 : vector<16x128xi1>, vector<16x128xf32>
      %32 = arith.mulf %31, %31 : vector<16x128xf32>
      %cst_20 = arith.constant dense<0.000000e+00> : vector<16xf32>
      %33 = vector.multi_reduction <add>, %32, %cst_20 [1] : vector<16x128xf32> to vector<16xf32>
      %34 = vector.shape_cast %33 : vector<16xf32> to vector<16x1xf32>
      %cst_21 = arith.constant 3.125000e-02 : f32
      %35 = vector.broadcast %cst_21 : f32 to vector<16x1xf32>
      %36 = arith.mulf %34, %35 : vector<16x1xf32>
      %cst_22 = arith.constant 9.99999974E-6 : f32
      %37 = vector.broadcast %cst_22 : f32 to vector<16x1xf32>
      %38 = arith.addf %36, %37 : vector<16x1xf32>
      %39 = math.rsqrt %38 : vector<16x1xf32>
      %40 = vector.broadcast %39 : vector<16x1xf32> to vector<16x128xf32>
      %41 = arith.mulf %31, %40 : vector<16x128xf32>
      %c0_23 = arith.constant 0 : index
      %c0_24 = arith.constant 0 : index
      %42 = vector.load %arg7[%c0_23, %c0_24] : memref<1x128xf32, #tpu.memory_space<vmem>>, vector<1x128xf32>
      %43 = vector.broadcast %42 : vector<1x128xf32> to vector<16x128xf32>
      %44 = arith.mulf %41, %43 : vector<16x128xf32>
      %c0_25 = arith.constant 0 : index
      %c0_26 = arith.constant 0 : index
      %45 = vector.load %arg8[%c0_25, %c0_26] : memref<1x128xf32, #tpu.memory_space<vmem>>, vector<1x128xf32>
      %46 = vector.broadcast %45 : vector<1x128xf32> to vector<16x128xf32>
      %47 = arith.addf %44, %46 : vector<16x128xf32>
      %48 = arith.truncf %47 : vector<16x128xf32> to vector<16x128xbf16>
      %c0_27 = arith.constant 0 : index
      %c0_28 = arith.constant 0 : index
      %49 = vector.load %arg9[%c0_27, %c0_28] : memref<16x128xbf16, #tpu.memory_space<vmem>>, vector<16x128xbf16>
      tpu.vector_store %arg9[%c0_27, %c0_28], %48 {strides = array<i32>} : memref<16x128xbf16, #tpu.memory_space<vmem>>, vector<16x128xbf16>,
    } else {
    }
    return
  }
  func.func @transform_0(%arg0: i32, %arg1: i32, %arg2: i32) -> (i32, i32) {
    %c0_i32 = arith.constant 0 : i32
    return %arg0, %arg2 : i32, i32
  }
  func.func @transform_1(%arg0: i32, %arg1: i32, %arg2: i32) -> (i32, i32) {
    %c0_i32 = arith.constant 0 : i32
    return %arg2, %arg1 : i32, i32
  }
  func.func @transform_2(%arg0: i32, %arg1: i32, %arg2: i32) -> (i32, i32) {
    %c0_i32 = arith.constant 0 : i32
    %c0_i32_0 = arith.constant 0 : i32
    return %c0_i32, %arg1 : i32, i32
  }
  func.func @transform_3(%arg0: i32, %arg1: i32, %arg2: i32) -> (i32, i32) {
    %c0_i32 = arith.constant 0 : i32
    return %arg0, %arg1 : i32, i32
  }
  func.func @transform_4(%arg0: i32, %arg1: i32, %arg2: i32) -> (i32, i32) {
    %c0_i32 = arith.constant 0 : i32
    %c0_i32_0 = arith.constant 0 : i32
    return %c0_i32, %arg1 : i32, i32
  }
  func.func @transform_5(%arg0: i32, %arg1: i32, %arg2: i32) -> (i32, i32) {
    %c0_i32 = arith.constant 0 : i32
    %c0_i32_0 = arith.constant 0 : i32
    return %c0_i32, %arg1 : i32, i32
  }
  func.func @transform_6(%arg0: i32, %arg1: i32, %arg2: i32) -> (i32, i32) {
    %c0_i32 = arith.constant 0 : i32
    return %arg0, %arg1 : i32, i32
  }
}

module attributes {stable_mosaic.version = 11 : i64} {
  func.func @_linear_kernel(%arg0: i32, %arg1: i32, %arg2: i32, %arg3: memref<16x256xbf16, #tpu.memory_space<vmem>>, %arg4: memref<256x128xbf16, #tpu.memory_space<vmem>>, %arg5: memref<1x128xf32, #tpu.memory_space<vmem>>, %arg6: memref<16x128xbf16, #tpu.memory_space<vmem>>, %arg7: memref<1x128xf32, #tpu.memory_space<vmem>>, %arg8: memref<1x128xf32, #tpu.memory_space<vmem>>, %arg9: memref<16x128xbf16, #tpu.memory_space<vmem>>, %arg10: memref<16x128xf32, #tpu.memory_space<vmem>>) attributes {dimension_semantics = [#tpu.dimension_semantics<parallel>, #tpu.dimension_semantics<parallel>, #tpu.dimension_semantics<arbitrary>], iteration_bounds = array<i64: 1, 1, 2>, scalar_prefetch = 0 : i64, scratch_operands = 1 : i64, tpu.core_type = #tpu.core_type<tc>, window_params = [{transform_indices = @transform_0, window_bounds = array<i64: 16, 256>}, {transform_indices = @transform_1, window_bounds = array<i64: 256, 128>}, {transform_indices = @transform_2, window_bounds = array<i64: 1, 128>}, {transform_indices = @transform_3, window_bounds = array<i64: 16, 128>}, {transform_indices = @transform_4, window_bounds = array<i64: 1, 128>}, {transform_indices = @transform_5, window_bounds = array<i64: 1, 128>}, {transform_indices = @transform_6, window_bounds = array<i64: 16, 128>}]} {
    %c0_i32 = arith.constant 0 : i32
    %0 = arith.cmpi eq, %arg2, %c0_i32 : i32
    %1 = arith.extui %0 : i1 to i32
    %c0_i32_0 = arith.constant 0 : i32
    %2 = arith.cmpi ne, %1, %c0_i32_0 : i32
    scf.if %2 {
      %cst_9 = arith.constant 0.000000e+00 : f32
      %12 = vector.broadcast %cst_9 : f32 to vector<16x128xf32>
      %c0_10 = arith.constant 0 : index
      %c0_11 = arith.constant 0 : index
      %13 = vector.load %arg10[%c0_10, %c0_11] : memref<16x128xf32, #tpu.memory_space<vmem>>, vector<16x128xf32>
      tpu.vector_store %arg10[%c0_10, %c0_11], %12 {strides = array<i32>} : memref<16x128xf32, #tpu.memory_space<vmem>>, vector<16x128xf32>,
    } else {
    }
    %c0 = arith.constant 0 : index
    %c0_1 = arith.constant 0 : index
    %3 = vector.load %arg10[%c0, %c0_1] : memref<16x128xf32, #tpu.memory_space<vmem>>, vector<16x128xf32>
    %c0_2 = arith.constant 0 : index
    %c0_3 = arith.constant 0 : index
    %4 = vector.load %arg3[%c0_2, %c0_3] : memref<16x256xbf16, #tpu.memory_space<vmem>>, vector<16x256xbf16>
    %c0_4 = arith.constant 0 : index
    %c0_5 = arith.constant 0 : index
    %5 = vector.load %arg4[%c0_4, %c0_5] : memref<256x128xbf16, #tpu.memory_space<vmem>>, vector<256x128xbf16>
    %cst = arith.constant dense<0.000000e+00> : vector<16x128xf32>
    %6 = tpu.matmul %4, %5, %cst {dimension_numbers = #tpu.dot_dimension_numbers<[1], [0], [0], [1], [0, 0, 1, 1], [], []>} : vector<16x256xbf16>, vector<256x128xbf16>, vector<16x128xf32> -> vector<16x128xf32>
    %7 = arith.addf %3, %6 : vector<16x128xf32>
    %c0_6 = arith.constant 0 : index
    %c0_7 = arith.constant 0 : index
    %8 = vector.load %arg10[%c0_6, %c0_7] : memref<16x128xf32, #tpu.memory_space<vmem>>, vector<16x128xf32>
    tpu.vector_store %arg10[%c0_6, %c0_7], %7 {strides = array<i32>} : memref<16x128xf32, #tpu.memory_space<vmem>>, vector<16x128xf32>,
    %c1_i32 = arith.constant 1 : i32
    %9 = arith.cmpi eq, %arg2, %c1_i32 : i32
    %10 = arith.extui %9 : i1 to i32
    %c0_i32_8 = arith.constant 0 : i32
    %11 = arith.cmpi ne, %10, %c0_i32_8 : i32
    scf.if %11 {
      %c0_9 = arith.constant 0 : index
      %c0_10 = arith.constant 0 : index
      %12 = vector.load %arg10[%c0_9, %c0_10] : memref<16x128xf32, #tpu.memory_space<vmem>>, vector<16x128xf32>
      %c0_11 = arith.constant 0 : index
      %c0_12 = arith.constant 0 : index
      %13 = vector.load %arg5[%c0_11, %c0_12] : memref<1x128xf32, #tpu.memory_space<vmem>>, vector<1x128xf32>
      %14 = vector.broadcast %13 : vector<1x128xf32> to vector<16x128xf32>
      %15 = arith.addf %12, %14 : vector<16x128xf32>
      %c0_13 = arith.constant 0 : index
      %c0_14 = arith.constant 0 : index
      %16 = vector.load %arg6[%c0_13, %c0_14] : memref<16x128xbf16, #tpu.memory_space<vmem>>, vector<16x128xbf16>
      %17 = arith.extf %16 : vector<16x128xbf16> to vector<16x128xf32>
      %18 = arith.addf %15, %17 : vector<16x128xf32>
      %19 = tpu.iota {dimensions = array<i32: 1>} : vector<16x128xi32>
      %c32_i32 = arith.constant 32 : i32
      %20 = vector.broadcast %c32_i32 : i32 to vector<16x128xi32>
      %21 = arith.cmpi slt, %19, %20 : vector<16x128xi32>
      %cst_15 = arith.constant 0.000000e+00 : f32
      %22 = vector.broadcast %cst_15 : f32 to vector<16x128xf32>
      %23 = arith.select %21, %18, %22 : vector<16x128xi1>, vector<16x128xf32>
      %cst_16 = arith.constant dense<0.000000e+00> : vector<16xf32>
      %24 = vector.multi_reduction <add>, %23, %cst_16 [1] : vector<16x128xf32> to vector<16xf32>
      %25 = vector.shape_cast %24 : vector<16xf32> to vector<16x1xf32>
      %cst_17 = arith.constant 3.125000e-02 : f32
      %26 = vector.broadcast %cst_17 : f32 to vector<16x1xf32>
      %27 = arith.mulf %25, %26 : vector<16x1xf32>
      %28 = vector.broadcast %27 : vector<16x1xf32> to vector<16x128xf32>
      %29 = arith.subf %18, %28 : vector<16x128xf32>
      %cst_18 = arith.constant 0.000000e+00 : f32
      %30 = vector.broadcast %cst_18 : f32 to vector<16x128xf32>
      %31 = arith.select %21, %29, %30 : vector<16x128xi1>, vector<16x128xf32>
      %32 = arith.mulf %31, %31 : vector<16x128xf32>
      %cst_19 = arith.constant dense<0.000000e+00> : vector<16xf32>
      %33 = vector.multi_reduction <add>, %32, %cst_19 [1] : vector<16x128xf32> to vector<16xf32>
      %34 = vector.shape_cast %33 : vector<16xf32> to vector<16x1xf32>
      %cst_20 = arith.constant 3.125000e-02 : f32
      %35 = vector.broadcast %cst_20 : f32 to vector<16x1xf32>
      %36 = arith.mulf %34, %35 : vector<16x1xf32>
      %cst_21 = arith.constant 9.99999974E-6 : f32
      %37 = vector.broadcast %cst_21 : f32 to vector<16x1xf32>
      %38 = arith.addf %36, %37 : vector<16x1xf32>
      %39 = math.rsqrt %38 : vector<16x1xf32>
      %40 = vector.broadcast %39 : vector<16x1xf32> to vector<16x128xf32>
      %41 = arith.mulf %31, %40 : vector<16x128xf32>
      %c0_22 = arith.constant 0 : index
      %c0_23 = arith.constant 0 : index
      %42 = vector.load %arg7[%c0_22, %c0_23] : memref<1x128xf32, #tpu.memory_space<vmem>>, vector<1x128xf32>
      %43 = vector.broadcast %42 : vector<1x128xf32> to vector<16x128xf32>
      %44 = arith.mulf %41, %43 : vector<16x128xf32>
      %c0_24 = arith.constant 0 : index
      %c0_25 = arith.constant 0 : index
      %45 = vector.load %arg8[%c0_24, %c0_25] : memref<1x128xf32, #tpu.memory_space<vmem>>, vector<1x128xf32>
      %46 = vector.broadcast %45 : vector<1x128xf32> to vector<16x128xf32>
      %47 = arith.addf %44, %46 : vector<16x128xf32>
      %48 = arith.truncf %47 : vector<16x128xf32> to vector<16x128xbf16>
      %c0_26 = arith.constant 0 : index
      %c0_27 = arith.constant 0 : index
      %49 = vector.load %arg9[%c0_26, %c0_27] : memref<16x128xbf16, #tpu.memory_space<vmem>>, vector<16x128xbf16>
      tpu.vector_store %arg9[%c0_26, %c0_27], %48 {strides = array<i32>} : memref<16x128xbf16, #tpu.memory_space<vmem>>, vector<16x128xbf16>,
    } else {
    }
    return
  }
  func.func @transform_0(%arg0: i32, %arg1: i32, %arg2: i32) -> (i32, i32) {
    %c0_i32 = arith.constant 0 : i32
    return %arg0, %arg2 : i32, i32
  }
  func.func @transform_1(%arg0: i32, %arg1: i32, %arg2: i32) -> (i32, i32) {
    %c0_i32 = arith.constant 0 : i32
    return %arg2, %arg1 : i32, i32
  }
  func.func @transform_2(%arg0: i32, %arg1: i32, %arg2: i32) -> (i32, i32) {
    %c0_i32 = arith.constant 0 : i32
    %c0_i32_0 = arith.constant 0 : i32
    return %c0_i32, %arg1 : i32, i32
  }
  func.func @transform_3(%arg0: i32, %arg1: i32, %arg2: i32) -> (i32, i32) {
    %c0_i32 = arith.constant 0 : i32
    return %arg0, %arg1 : i32, i32
  }
  func.func @transform_4(%arg0: i32, %arg1: i32, %arg2: i32) -> (i32, i32) {
    %c0_i32 = arith.constant 0 : i32
    %c0_i32_0 = arith.constant 0 : i32
    return %c0_i32, %arg1 : i32, i32
  }
  func.func @transform_5(%arg0: i32, %arg1: i32, %arg2: i32) -> (i32, i32) {
    %c0_i32 = arith.constant 0 : i32
    %c0_i32_0 = arith.constant 0 : i32
    return %c0_i32, %arg1 : i32, i32
  }
  func.func @transform_6(%arg0: i32, %arg1: i32, %arg2: i32) -> (i32, i32) {
    %c0_i32 = arith.constant 0 : i32
    return %arg0, %arg1 : i32, i32
  }
}

module attributes {stable_mosaic.version = 11 : i64} {
  func.func @_linear_kernel(%arg0: i32, %arg1: i32, %arg2: i32, %arg3: memref<8x128xbf16, #tpu.memory_space<vmem>>, %arg4: memref<128x128xbf16, #tpu.memory_space<vmem>>, %arg5: memref<1x128xf32, #tpu.memory_space<vmem>>, %arg6: memref<8x128xbf16, #tpu.memory_space<vmem>>, %arg7: memref<8x128xf32, #tpu.memory_space<vmem>>) attributes {dimension_semantics = [#tpu.dimension_semantics<parallel>, #tpu.dimension_semantics<parallel>, #tpu.dimension_semantics<arbitrary>], iteration_bounds = array<i64: 1, 1, 1>, scalar_prefetch = 0 : i64, scratch_operands = 1 : i64, tpu.core_type = #tpu.core_type<tc>, window_params = [{transform_indices = @transform_0, window_bounds = array<i64: 8, 128>}, {transform_indices = @transform_1, window_bounds = array<i64: 128, 128>}, {transform_indices = @transform_2, window_bounds = array<i64: 1, 128>}, {transform_indices = @transform_3, window_bounds = array<i64: 8, 128>}]} {
    %c0_i32 = arith.constant 0 : i32
    %0 = arith.cmpi eq, %arg2, %c0_i32 : i32
    %1 = arith.extui %0 : i1 to i32
    %c0_i32_0 = arith.constant 0 : i32
    %2 = arith.cmpi ne, %1, %c0_i32_0 : i32
    scf.if %2 {
      %cst_10 = arith.constant 0.000000e+00 : f32
      %12 = vector.broadcast %cst_10 : f32 to vector<8x128xf32>
      %c0_11 = arith.constant 0 : index
      %c0_12 = arith.constant 0 : index
      %13 = vector.load %arg7[%c0_11, %c0_12] : memref<8x128xf32, #tpu.memory_space<vmem>>, vector<8x128xf32>
      tpu.vector_store %arg7[%c0_11, %c0_12], %12 {strides = array<i32>} : memref<8x128xf32, #tpu.memory_space<vmem>>, vector<8x128xf32>,
    } else {
    }
    %c0 = arith.constant 0 : index
    %c0_1 = arith.constant 0 : index
    %3 = vector.load %arg7[%c0, %c0_1] : memref<8x128xf32, #tpu.memory_space<vmem>>, vector<8x128xf32>
    %c0_2 = arith.constant 0 : index
    %c0_3 = arith.constant 0 : index
    %4 = vector.load %arg3[%c0_2, %c0_3] : memref<8x128xbf16, #tpu.memory_space<vmem>>, vector<8x128xbf16>
    %c0_4 = arith.constant 0 : index
    %c0_5 = arith.constant 0 : index
    %5 = vector.load %arg4[%c0_4, %c0_5] : memref<128x128xbf16, #tpu.memory_space<vmem>>, vector<128x128xbf16>
    %cst = arith.constant dense<0.000000e+00> : vector<8x128xf32>
    %6 = tpu.matmul %4, %5, %cst {dimension_numbers = #tpu.dot_dimension_numbers<[1], [0], [0], [1], [0, 0, 1, 1], [], []>} : vector<8x128xbf16>, vector<128x128xbf16>, vector<8x128xf32> -> vector<8x128xf32>
    %7 = arith.addf %3, %6 : vector<8x128xf32>
    %c0_6 = arith.constant 0 : index
    %c0_7 = arith.constant 0 : index
    %8 = vector.load %arg7[%c0_6, %c0_7] : memref<8x128xf32, #tpu.memory_space<vmem>>, vector<8x128xf32>
    tpu.vector_store %arg7[%c0_6, %c0_7], %7 {strides = array<i32>} : memref<8x128xf32, #tpu.memory_space<vmem>>, vector<8x128xf32>,
    %c0_i32_8 = arith.constant 0 : i32
    %9 = arith.cmpi eq, %arg2, %c0_i32_8 : i32
    %10 = arith.extui %9 : i1 to i32
    %c0_i32_9 = arith.constant 0 : i32
    %11 = arith.cmpi ne, %10, %c0_i32_9 : i32
    scf.if %11 {
      %c0_10 = arith.constant 0 : index
      %c0_11 = arith.constant 0 : index
      %12 = vector.load %arg7[%c0_10, %c0_11] : memref<8x128xf32, #tpu.memory_space<vmem>>, vector<8x128xf32>
      %c0_12 = arith.constant 0 : index
      %c0_13 = arith.constant 0 : index
      %13 = vector.load %arg5[%c0_12, %c0_13] : memref<1x128xf32, #tpu.memory_space<vmem>>, vector<1x128xf32>
      %14 = vector.broadcast %13 : vector<1x128xf32> to vector<8x128xf32>
      %15 = arith.addf %12, %14 : vector<8x128xf32>
      %16 = arith.truncf %15 : vector<8x128xf32> to vector<8x128xbf16>
      %c0_14 = arith.constant 0 : index
      %c0_15 = arith.constant 0 : index
      %17 = vector.load %arg6[%c0_14, %c0_15] : memref<8x128xbf16, #tpu.memory_space<vmem>>, vector<8x128xbf16>
      tpu.vector_store %arg6[%c0_14, %c0_15], %16 {strides = array<i32>} : memref<8x128xbf16, #tpu.memory_space<vmem>>, vector<8x128xbf16>,
    } else {
    }
    return
  }
  func.func @transform_0(%arg0: i32, %arg1: i32, %arg2: i32) -> (i32, i32) {
    %c0_i32 = arith.constant 0 : i32
    return %arg0, %arg2 : i32, i32
  }
  func.func @transform_1(%arg0: i32, %arg1: i32, %arg2: i32) -> (i32, i32) {
    %c0_i32 = arith.constant 0 : i32
    return %arg2, %arg1 : i32, i32
  }
  func.func @transform_2(%arg0: i32, %arg1: i32, %arg2: i32) -> (i32, i32) {
    %c0_i32 = arith.constant 0 : i32
    %c0_i32_0 = arith.constant 0 : i32
    return %c0_i32, %arg1 : i32, i32
  }
  func.func @transform_3(%arg0: i32, %arg1: i32, %arg2: i32) -> (i32, i32) {
    %c0_i32 = arith.constant 0 : i32
    return %arg0, %arg1 : i32, i32
  }
}

module attributes {stable_mosaic.version = 11 : i64} {
  func.func @_add_ln_kernel(%arg0: i32, %arg1: memref<1x8x128xbf16, #tpu.memory_space<vmem>>, %arg2: memref<1x1x128xbf16, #tpu.memory_space<vmem>>, %arg3: memref<1x1x128xf32, #tpu.memory_space<vmem>>, %arg4: memref<1x1x128xf32, #tpu.memory_space<vmem>>, %arg5: memref<1x8x128xbf16, #tpu.memory_space<vmem>>) attributes {dimension_semantics = [#tpu.dimension_semantics<parallel>], iteration_bounds = array<i64: 2>, scalar_prefetch = 0 : i64, scratch_operands = 0 : i64, tpu.core_type = #tpu.core_type<tc>, window_params = [{transform_indices = @transform_0, window_bounds = array<i64: 1, 8, 128>}, {transform_indices = @transform_1, window_bounds = array<i64: 1, 1, 128>}, {pipeline_mode = #tpu.pipeline_mode<synchronous>, transform_indices = @transform_2, window_bounds = array<i64: 1, 1, 128>}, {pipeline_mode = #tpu.pipeline_mode<synchronous>, transform_indices = @transform_3, window_bounds = array<i64: 1, 1, 128>}, {transform_indices = @transform_4, window_bounds = array<i64: 1, 8, 128>}]} {
    %c0 = arith.constant 0 : index
    %c0_0 = arith.constant 0 : index
    %c0_1 = arith.constant 0 : index
    %0 = vector.load %arg1[%c0, %c0_0, %c0_1] : memref<1x8x128xbf16, #tpu.memory_space<vmem>>, vector<1x8x128xbf16>
    %1 = arith.extf %0 : vector<1x8x128xbf16> to vector<1x8x128xf32>
    %c0_2 = arith.constant 0 : index
    %c0_3 = arith.constant 0 : index
    %c0_4 = arith.constant 0 : index
    %2 = vector.load %arg2[%c0_2, %c0_3, %c0_4] : memref<1x1x128xbf16, #tpu.memory_space<vmem>>, vector<1x1x128xbf16>
    %3 = arith.extf %2 : vector<1x1x128xbf16> to vector<1x1x128xf32>
    %4 = vector.broadcast %3 : vector<1x1x128xf32> to vector<1x8x128xf32>
    %5 = arith.addf %1, %4 : vector<1x8x128xf32>
    %6 = tpu.iota {dimensions = array<i32: 2>} : vector<1x8x128xi32>
    %c32_i32 = arith.constant 32 : i32
    %7 = vector.broadcast %c32_i32 : i32 to vector<1x8x128xi32>
    %8 = arith.cmpi slt, %6, %7 : vector<1x8x128xi32>
    %cst = arith.constant 0.000000e+00 : f32
    %9 = vector.broadcast %cst : f32 to vector<1x8x128xf32>
    %10 = arith.select %8, %5, %9 : vector<1x8x128xi1>, vector<1x8x128xf32>
    %cst_5 = arith.constant dense<0.000000e+00> : vector<1x8xf32>
    %11 = vector.multi_reduction <add>, %10, %cst_5 [2] : vector<1x8x128xf32> to vector<1x8xf32>
    %12 = vector.shape_cast %11 : vector<1x8xf32> to vector<1x8x1xf32>
    %cst_6 = arith.constant 3.125000e-02 : f32
    %13 = vector.broadcast %cst_6 : f32 to vector<1x8x1xf32>
    %14 = arith.mulf %12, %13 : vector<1x8x1xf32>
    %15 = vector.broadcast %14 : vector<1x8x1xf32> to vector<1x8x128xf32>
    %16 = arith.subf %5, %15 : vector<1x8x128xf32>
    %cst_7 = arith.constant 0.000000e+00 : f32
    %17 = vector.broadcast %cst_7 : f32 to vector<1x8x128xf32>
    %18 = arith.select %8, %16, %17 : vector<1x8x128xi1>, vector<1x8x128xf32>
    %19 = arith.mulf %18, %18 : vector<1x8x128xf32>
    %cst_8 = arith.constant dense<0.000000e+00> : vector<1x8xf32>
    %20 = vector.multi_reduction <add>, %19, %cst_8 [2] : vector<1x8x128xf32> to vector<1x8xf32>
    %21 = vector.shape_cast %20 : vector<1x8xf32> to vector<1x8x1xf32>
    %cst_9 = arith.constant 3.125000e-02 : f32
    %22 = vector.broadcast %cst_9 : f32 to vector<1x8x1xf32>
    %23 = arith.mulf %21, %22 : vector<1x8x1xf32>
    %cst_10 = arith.constant 9.99999974E-6 : f32
    %24 = vector.broadcast %cst_10 : f32 to vector<1x8x1xf32>
    %25 = arith.addf %23, %24 : vector<1x8x1xf32>
    %26 = math.rsqrt %25 : vector<1x8x1xf32>
    %27 = vector.broadcast %26 : vector<1x8x1xf32> to vector<1x8x128xf32>
    %28 = arith.mulf %18, %27 : vector<1x8x128xf32>
    %c0_11 = arith.constant 0 : index
    %c0_12 = arith.constant 0 : index
    %c0_13 = arith.constant 0 : index
    %29 = vector.load %arg3[%c0_11, %c0_12, %c0_13] : memref<1x1x128xf32, #tpu.memory_space<vmem>>, vector<1x1x128xf32>
    %30 = vector.broadcast %29 : vector<1x1x128xf32> to vector<1x8x128xf32>
    %31 = arith.mulf %28, %30 : vector<1x8x128xf32>
    %c0_14 = arith.constant 0 : index
    %c0_15 = arith.constant 0 : index
    %c0_16 = arith.constant 0 : index
    %32 = vector.load %arg4[%c0_14, %c0_15, %c0_16] : memref<1x1x128xf32, #tpu.memory_space<vmem>>, vector<1x1x128xf32>
    %33 = vector.broadcast %32 : vector<1x1x128xf32> to vector<1x8x128xf32>
    %34 = arith.addf %31, %33 : vector<1x8x128xf32>
    %35 = arith.truncf %34 : vector<1x8x128xf32> to vector<1x8x128xbf16>
    %c0_17 = arith.constant 0 : index
    %c0_18 = arith.constant 0 : index
    %c0_19 = arith.constant 0 : index
    %36 = vector.load %arg5[%c0_17, %c0_18, %c0_19] : memref<1x8x128xbf16, #tpu.memory_space<vmem>>, vector<1x8x128xbf16>
    tpu.vector_store %arg5[%c0_17, %c0_18, %c0_19], %35 {strides = array<i32>} : memref<1x8x128xbf16, #tpu.memory_space<vmem>>, vector<1x8x128xbf16>,
    return
  }
  func.func @transform_0(%arg0: i32) -> (i32, i32, i32) {
    %c0_i32 = arith.constant 0 : i32
    %c0_i32_0 = arith.constant 0 : i32
    %c0_i32_1 = arith.constant 0 : i32
    return %arg0, %c0_i32, %c0_i32_0 : i32, i32, i32
  }
  func.func @transform_1(%arg0: i32) -> (i32, i32, i32) {
    %c0_i32 = arith.constant 0 : i32
    %c0_i32_0 = arith.constant 0 : i32
    %c0_i32_1 = arith.constant 0 : i32
    return %arg0, %c0_i32, %c0_i32_0 : i32, i32, i32
  }
  func.func @transform_2(%arg0: i32) -> (i32, i32, i32) {
    %c0_i32 = arith.constant 0 : i32
    %c0_i32_0 = arith.constant 0 : i32
    %c0_i32_1 = arith.constant 0 : i32
    %c0_i32_2 = arith.constant 0 : i32
    return %c0_i32, %c0_i32_0, %c0_i32_1 : i32, i32, i32
  }
  func.func @transform_3(%arg0: i32) -> (i32, i32, i32) {
    %c0_i32 = arith.constant 0 : i32
    %c0_i32_0 = arith.constant 0 : i32
    %c0_i32_1 = arith.constant 0 : i32
    %c0_i32_2 = arith.constant 0 : i32
    return %c0_i32, %c0_i32_0, %c0_i32_1 : i32, i32, i32
  }
  func.func @transform_4(%arg0: i32) -> (i32, i32, i32) {
    %c0_i32 = arith.constant 0 : i32
    %c0_i32_0 = arith.constant 0 : i32
    %c0_i32_1 = arith.constant 0 : i32
    return %arg0, %c0_i32, %c0_i32_0 : i32, i32, i32
  }
}

module attributes {stable_mosaic.version = 11 : i64} {
  func.func @_linear_kernel(%arg0: i32, %arg1: i32, %arg2: i32, %arg3: memref<16x128xbf16, #tpu.memory_space<vmem>>, %arg4: memref<128x128xbf16, #tpu.memory_space<vmem>>, %arg5: memref<1x128xf32, #tpu.memory_space<vmem>>, %arg6: memref<16x128xbf16, #tpu.memory_space<vmem>>, %arg7: memref<16x128xf32, #tpu.memory_space<vmem>>) attributes {dimension_semantics = [#tpu.dimension_semantics<parallel>, #tpu.dimension_semantics<parallel>, #tpu.dimension_semantics<arbitrary>], iteration_bounds = array<i64: 1, 1, 1>, scalar_prefetch = 0 : i64, scratch_operands = 1 : i64, tpu.core_type = #tpu.core_type<tc>, window_params = [{transform_indices = @transform_0, window_bounds = array<i64: 16, 128>}, {transform_indices = @transform_1, window_bounds = array<i64: 128, 128>}, {transform_indices = @transform_2, window_bounds = array<i64: 1, 128>}, {transform_indices = @transform_3, window_bounds = array<i64: 16, 128>}]} {
    %c0_i32 = arith.constant 0 : i32
    %0 = arith.cmpi eq, %arg2, %c0_i32 : i32
    %1 = arith.extui %0 : i1 to i32
    %c0_i32_0 = arith.constant 0 : i32
    %2 = arith.cmpi ne, %1, %c0_i32_0 : i32
    scf.if %2 {
      %cst_10 = arith.constant 0.000000e+00 : f32
      %12 = vector.broadcast %cst_10 : f32 to vector<16x128xf32>
      %c0_11 = arith.constant 0 : index
      %c0_12 = arith.constant 0 : index
      %13 = vector.load %arg7[%c0_11, %c0_12] : memref<16x128xf32, #tpu.memory_space<vmem>>, vector<16x128xf32>
      tpu.vector_store %arg7[%c0_11, %c0_12], %12 {strides = array<i32>} : memref<16x128xf32, #tpu.memory_space<vmem>>, vector<16x128xf32>,
    } else {
    }
    %c0 = arith.constant 0 : index
    %c0_1 = arith.constant 0 : index
    %3 = vector.load %arg7[%c0, %c0_1] : memref<16x128xf32, #tpu.memory_space<vmem>>, vector<16x128xf32>
    %c0_2 = arith.constant 0 : index
    %c0_3 = arith.constant 0 : index
    %4 = vector.load %arg3[%c0_2, %c0_3] : memref<16x128xbf16, #tpu.memory_space<vmem>>, vector<16x128xbf16>
    %c0_4 = arith.constant 0 : index
    %c0_5 = arith.constant 0 : index
    %5 = vector.load %arg4[%c0_4, %c0_5] : memref<128x128xbf16, #tpu.memory_space<vmem>>, vector<128x128xbf16>
    %cst = arith.constant dense<0.000000e+00> : vector<16x128xf32>
    %6 = tpu.matmul %4, %5, %cst {dimension_numbers = #tpu.dot_dimension_numbers<[1], [0], [0], [1], [0, 0, 1, 1], [], []>} : vector<16x128xbf16>, vector<128x128xbf16>, vector<16x128xf32> -> vector<16x128xf32>
    %7 = arith.addf %3, %6 : vector<16x128xf32>
    %c0_6 = arith.constant 0 : index
    %c0_7 = arith.constant 0 : index
    %8 = vector.load %arg7[%c0_6, %c0_7] : memref<16x128xf32, #tpu.memory_space<vmem>>, vector<16x128xf32>
    tpu.vector_store %arg7[%c0_6, %c0_7], %7 {strides = array<i32>} : memref<16x128xf32, #tpu.memory_space<vmem>>, vector<16x128xf32>,
    %c0_i32_8 = arith.constant 0 : i32
    %9 = arith.cmpi eq, %arg2, %c0_i32_8 : i32
    %10 = arith.extui %9 : i1 to i32
    %c0_i32_9 = arith.constant 0 : i32
    %11 = arith.cmpi ne, %10, %c0_i32_9 : i32
    scf.if %11 {
      %c0_10 = arith.constant 0 : index
      %c0_11 = arith.constant 0 : index
      %12 = vector.load %arg7[%c0_10, %c0_11] : memref<16x128xf32, #tpu.memory_space<vmem>>, vector<16x128xf32>
      %c0_12 = arith.constant 0 : index
      %c0_13 = arith.constant 0 : index
      %13 = vector.load %arg5[%c0_12, %c0_13] : memref<1x128xf32, #tpu.memory_space<vmem>>, vector<1x128xf32>
      %14 = vector.broadcast %13 : vector<1x128xf32> to vector<16x128xf32>
      %15 = arith.addf %12, %14 : vector<16x128xf32>
      %cst_14 = arith.constant 0.000000e+00 : f32
      %16 = vector.broadcast %cst_14 : f32 to vector<16x128xf32>
      %17 = arith.maximumf %15, %16 : vector<16x128xf32>
      %18 = arith.truncf %17 : vector<16x128xf32> to vector<16x128xbf16>
      %c0_15 = arith.constant 0 : index
      %c0_16 = arith.constant 0 : index
      %19 = vector.load %arg6[%c0_15, %c0_16] : memref<16x128xbf16, #tpu.memory_space<vmem>>, vector<16x128xbf16>
      tpu.vector_store %arg6[%c0_15, %c0_16], %18 {strides = array<i32>} : memref<16x128xbf16, #tpu.memory_space<vmem>>, vector<16x128xbf16>,
    } else {
    }
    return
  }
  func.func @transform_0(%arg0: i32, %arg1: i32, %arg2: i32) -> (i32, i32) {
    %c0_i32 = arith.constant 0 : i32
    return %arg0, %arg2 : i32, i32
  }
  func.func @transform_1(%arg0: i32, %arg1: i32, %arg2: i32) -> (i32, i32) {
    %c0_i32 = arith.constant 0 : i32
    return %arg2, %arg1 : i32, i32
  }
  func.func @transform_2(%arg0: i32, %arg1: i32, %arg2: i32) -> (i32, i32) {
    %c0_i32 = arith.constant 0 : i32
    %c0_i32_0 = arith.constant 0 : i32
    return %c0_i32, %arg1 : i32, i32
  }
  func.func @transform_3(%arg0: i32, %arg1: i32, %arg2: i32) -> (i32, i32) {
    %c0_i32 = arith.constant 0 : i32
    return %arg0, %arg1 : i32, i32
  }
}

module attributes {stable_mosaic.version = 11 : i64} {
  func.func @_linear_kernel(%arg0: i32, %arg1: i32, %arg2: i32, %arg3: memref<16x128xbf16, #tpu.memory_space<vmem>>, %arg4: memref<128x128xbf16, #tpu.memory_space<vmem>>, %arg5: memref<1x128xf32, #tpu.memory_space<vmem>>, %arg6: memref<16x128xbf16, #tpu.memory_space<vmem>>, %arg7: memref<1x128xf32, #tpu.memory_space<vmem>>, %arg8: memref<1x128xf32, #tpu.memory_space<vmem>>, %arg9: memref<16x128xbf16, #tpu.memory_space<vmem>>, %arg10: memref<16x128xf32, #tpu.memory_space<vmem>>) attributes {dimension_semantics = [#tpu.dimension_semantics<parallel>, #tpu.dimension_semantics<parallel>, #tpu.dimension_semantics<arbitrary>], iteration_bounds = array<i64: 1, 1, 1>, scalar_prefetch = 0 : i64, scratch_operands = 1 : i64, tpu.core_type = #tpu.core_type<tc>, window_params = [{transform_indices = @transform_0, window_bounds = array<i64: 16, 128>}, {transform_indices = @transform_1, window_bounds = array<i64: 128, 128>}, {transform_indices = @transform_2, window_bounds = array<i64: 1, 128>}, {transform_indices = @transform_3, window_bounds = array<i64: 16, 128>}, {transform_indices = @transform_4, window_bounds = array<i64: 1, 128>}, {transform_indices = @transform_5, window_bounds = array<i64: 1, 128>}, {transform_indices = @transform_6, window_bounds = array<i64: 16, 128>}]} {
    %c0_i32 = arith.constant 0 : i32
    %0 = arith.cmpi eq, %arg2, %c0_i32 : i32
    %1 = arith.extui %0 : i1 to i32
    %c0_i32_0 = arith.constant 0 : i32
    %2 = arith.cmpi ne, %1, %c0_i32_0 : i32
    scf.if %2 {
      %cst_10 = arith.constant 0.000000e+00 : f32
      %12 = vector.broadcast %cst_10 : f32 to vector<16x128xf32>
      %c0_11 = arith.constant 0 : index
      %c0_12 = arith.constant 0 : index
      %13 = vector.load %arg10[%c0_11, %c0_12] : memref<16x128xf32, #tpu.memory_space<vmem>>, vector<16x128xf32>
      tpu.vector_store %arg10[%c0_11, %c0_12], %12 {strides = array<i32>} : memref<16x128xf32, #tpu.memory_space<vmem>>, vector<16x128xf32>,
    } else {
    }
    %c0 = arith.constant 0 : index
    %c0_1 = arith.constant 0 : index
    %3 = vector.load %arg10[%c0, %c0_1] : memref<16x128xf32, #tpu.memory_space<vmem>>, vector<16x128xf32>
    %c0_2 = arith.constant 0 : index
    %c0_3 = arith.constant 0 : index
    %4 = vector.load %arg3[%c0_2, %c0_3] : memref<16x128xbf16, #tpu.memory_space<vmem>>, vector<16x128xbf16>
    %c0_4 = arith.constant 0 : index
    %c0_5 = arith.constant 0 : index
    %5 = vector.load %arg4[%c0_4, %c0_5] : memref<128x128xbf16, #tpu.memory_space<vmem>>, vector<128x128xbf16>
    %cst = arith.constant dense<0.000000e+00> : vector<16x128xf32>
    %6 = tpu.matmul %4, %5, %cst {dimension_numbers = #tpu.dot_dimension_numbers<[1], [0], [0], [1], [0, 0, 1, 1], [], []>} : vector<16x128xbf16>, vector<128x128xbf16>, vector<16x128xf32> -> vector<16x128xf32>
    %7 = arith.addf %3, %6 : vector<16x128xf32>
    %c0_6 = arith.constant 0 : index
    %c0_7 = arith.constant 0 : index
    %8 = vector.load %arg10[%c0_6, %c0_7] : memref<16x128xf32, #tpu.memory_space<vmem>>, vector<16x128xf32>
    tpu.vector_store %arg10[%c0_6, %c0_7], %7 {strides = array<i32>} : memref<16x128xf32, #tpu.memory_space<vmem>>, vector<16x128xf32>,
    %c0_i32_8 = arith.constant 0 : i32
    %9 = arith.cmpi eq, %arg2, %c0_i32_8 : i32
    %10 = arith.extui %9 : i1 to i32
    %c0_i32_9 = arith.constant 0 : i32
    %11 = arith.cmpi ne, %10, %c0_i32_9 : i32
    scf.if %11 {
      %c0_10 = arith.constant 0 : index
      %c0_11 = arith.constant 0 : index
      %12 = vector.load %arg10[%c0_10, %c0_11] : memref<16x128xf32, #tpu.memory_space<vmem>>, vector<16x128xf32>
      %c0_12 = arith.constant 0 : index
      %c0_13 = arith.constant 0 : index
      %13 = vector.load %arg5[%c0_12, %c0_13] : memref<1x128xf32, #tpu.memory_space<vmem>>, vector<1x128xf32>
      %14 = vector.broadcast %13 : vector<1x128xf32> to vector<16x128xf32>
      %15 = arith.addf %12, %14 : vector<16x128xf32>
      %c0_14 = arith.constant 0 : index
      %c0_15 = arith.constant 0 : index
      %16 = vector.load %arg6[%c0_14, %c0_15] : memref<16x128xbf16, #tpu.memory_space<vmem>>, vector<16x128xbf16>
      %17 = arith.extf %16 : vector<16x128xbf16> to vector<16x128xf32>
      %18 = arith.addf %15, %17 : vector<16x128xf32>
      %19 = tpu.iota {dimensions = array<i32: 1>} : vector<16x128xi32>
      %c32_i32 = arith.constant 32 : i32
      %20 = vector.broadcast %c32_i32 : i32 to vector<16x128xi32>
      %21 = arith.cmpi slt, %19, %20 : vector<16x128xi32>
      %cst_16 = arith.constant 0.000000e+00 : f32
      %22 = vector.broadcast %cst_16 : f32 to vector<16x128xf32>
      %23 = arith.select %21, %18, %22 : vector<16x128xi1>, vector<16x128xf32>
      %cst_17 = arith.constant dense<0.000000e+00> : vector<16xf32>
      %24 = vector.multi_reduction <add>, %23, %cst_17 [1] : vector<16x128xf32> to vector<16xf32>
      %25 = vector.shape_cast %24 : vector<16xf32> to vector<16x1xf32>
      %cst_18 = arith.constant 3.125000e-02 : f32
      %26 = vector.broadcast %cst_18 : f32 to vector<16x1xf32>
      %27 = arith.mulf %25, %26 : vector<16x1xf32>
      %28 = vector.broadcast %27 : vector<16x1xf32> to vector<16x128xf32>
      %29 = arith.subf %18, %28 : vector<16x128xf32>
      %cst_19 = arith.constant 0.000000e+00 : f32
      %30 = vector.broadcast %cst_19 : f32 to vector<16x128xf32>
      %31 = arith.select %21, %29, %30 : vector<16x128xi1>, vector<16x128xf32>
      %32 = arith.mulf %31, %31 : vector<16x128xf32>
      %cst_20 = arith.constant dense<0.000000e+00> : vector<16xf32>
      %33 = vector.multi_reduction <add>, %32, %cst_20 [1] : vector<16x128xf32> to vector<16xf32>
      %34 = vector.shape_cast %33 : vector<16xf32> to vector<16x1xf32>
      %cst_21 = arith.constant 3.125000e-02 : f32
      %35 = vector.broadcast %cst_21 : f32 to vector<16x1xf32>
      %36 = arith.mulf %34, %35 : vector<16x1xf32>
      %cst_22 = arith.constant 9.99999974E-6 : f32
      %37 = vector.broadcast %cst_22 : f32 to vector<16x1xf32>
      %38 = arith.addf %36, %37 : vector<16x1xf32>
      %39 = math.rsqrt %38 : vector<16x1xf32>
      %40 = vector.broadcast %39 : vector<16x1xf32> to vector<16x128xf32>
      %41 = arith.mulf %31, %40 : vector<16x128xf32>
      %c0_23 = arith.constant 0 : index
      %c0_24 = arith.constant 0 : index
      %42 = vector.load %arg7[%c0_23, %c0_24] : memref<1x128xf32, #tpu.memory_space<vmem>>, vector<1x128xf32>
      %43 = vector.broadcast %42 : vector<1x128xf32> to vector<16x128xf32>
      %44 = arith.mulf %41, %43 : vector<16x128xf32>
      %c0_25 = arith.constant 0 : index
      %c0_26 = arith.constant 0 : index
      %45 = vector.load %arg8[%c0_25, %c0_26] : memref<1x128xf32, #tpu.memory_space<vmem>>, vector<1x128xf32>
      %46 = vector.broadcast %45 : vector<1x128xf32> to vector<16x128xf32>
      %47 = arith.addf %44, %46 : vector<16x128xf32>
      %48 = arith.truncf %47 : vector<16x128xf32> to vector<16x128xbf16>
      %c0_27 = arith.constant 0 : index
      %c0_28 = arith.constant 0 : index
      %49 = vector.load %arg9[%c0_27, %c0_28] : memref<16x128xbf16, #tpu.memory_space<vmem>>, vector<16x128xbf16>
      tpu.vector_store %arg9[%c0_27, %c0_28], %48 {strides = array<i32>} : memref<16x128xbf16, #tpu.memory_space<vmem>>, vector<16x128xbf16>,
    } else {
    }
    return
  }
  func.func @transform_0(%arg0: i32, %arg1: i32, %arg2: i32) -> (i32, i32) {
    %c0_i32 = arith.constant 0 : i32
    return %arg0, %arg2 : i32, i32
  }
  func.func @transform_1(%arg0: i32, %arg1: i32, %arg2: i32) -> (i32, i32) {
    %c0_i32 = arith.constant 0 : i32
    return %arg2, %arg1 : i32, i32
  }
  func.func @transform_2(%arg0: i32, %arg1: i32, %arg2: i32) -> (i32, i32) {
    %c0_i32 = arith.constant 0 : i32
    %c0_i32_0 = arith.constant 0 : i32
    return %c0_i32, %arg1 : i32, i32
  }
  func.func @transform_3(%arg0: i32, %arg1: i32, %arg2: i32) -> (i32, i32) {
    %c0_i32 = arith.constant 0 : i32
    return %arg0, %arg1 : i32, i32
  }
  func.func @transform_4(%arg0: i32, %arg1: i32, %arg2: i32) -> (i32, i32) {
    %c0_i32 = arith.constant 0 : i32
    %c0_i32_0 = arith.constant 0 : i32
    return %c0_i32, %arg1 : i32, i32
  }
  func.func @transform_5(%arg0: i32, %arg1: i32, %arg2: i32) -> (i32, i32) {
    %c0_i32 = arith.constant 0 : i32
    %c0_i32_0 = arith.constant 0 : i32
    return %c0_i32, %arg1 : i32, i32
  }
  func.func @transform_6(%arg0: i32, %arg1: i32, %arg2: i32) -> (i32, i32) {
    %c0_i32 = arith.constant 0 : i32
    return %arg0, %arg1 : i32, i32
  }
}

module attributes {stable_mosaic.version = 11 : i64} {
  func.func @_linear_kernel(%arg0: i32, %arg1: i32, %arg2: i32, %arg3: memref<16x128xbf16, #tpu.memory_space<vmem>>, %arg4: memref<128x128xbf16, #tpu.memory_space<vmem>>, %arg5: memref<1x128xf32, #tpu.memory_space<vmem>>, %arg6: memref<16x128xf32, #tpu.memory_space<vmem>>, %arg7: memref<16x128xf32, #tpu.memory_space<vmem>>) attributes {dimension_semantics = [#tpu.dimension_semantics<parallel>, #tpu.dimension_semantics<parallel>, #tpu.dimension_semantics<arbitrary>], iteration_bounds = array<i64: 1, 1, 1>, scalar_prefetch = 0 : i64, scratch_operands = 1 : i64, tpu.core_type = #tpu.core_type<tc>, window_params = [{transform_indices = @transform_0, window_bounds = array<i64: 16, 128>}, {transform_indices = @transform_1, window_bounds = array<i64: 128, 128>}, {transform_indices = @transform_2, window_bounds = array<i64: 1, 128>}, {transform_indices = @transform_3, window_bounds = array<i64: 16, 128>}]} {
    %c0_i32 = arith.constant 0 : i32
    %0 = arith.cmpi eq, %arg2, %c0_i32 : i32
    %1 = arith.extui %0 : i1 to i32
    %c0_i32_0 = arith.constant 0 : i32
    %2 = arith.cmpi ne, %1, %c0_i32_0 : i32
    scf.if %2 {
      %cst_10 = arith.constant 0.000000e+00 : f32
      %12 = vector.broadcast %cst_10 : f32 to vector<16x128xf32>
      %c0_11 = arith.constant 0 : index
      %c0_12 = arith.constant 0 : index
      %13 = vector.load %arg7[%c0_11, %c0_12] : memref<16x128xf32, #tpu.memory_space<vmem>>, vector<16x128xf32>
      tpu.vector_store %arg7[%c0_11, %c0_12], %12 {strides = array<i32>} : memref<16x128xf32, #tpu.memory_space<vmem>>, vector<16x128xf32>,
    } else {
    }
    %c0 = arith.constant 0 : index
    %c0_1 = arith.constant 0 : index
    %3 = vector.load %arg7[%c0, %c0_1] : memref<16x128xf32, #tpu.memory_space<vmem>>, vector<16x128xf32>
    %c0_2 = arith.constant 0 : index
    %c0_3 = arith.constant 0 : index
    %4 = vector.load %arg3[%c0_2, %c0_3] : memref<16x128xbf16, #tpu.memory_space<vmem>>, vector<16x128xbf16>
    %c0_4 = arith.constant 0 : index
    %c0_5 = arith.constant 0 : index
    %5 = vector.load %arg4[%c0_4, %c0_5] : memref<128x128xbf16, #tpu.memory_space<vmem>>, vector<128x128xbf16>
    %cst = arith.constant dense<0.000000e+00> : vector<16x128xf32>
    %6 = tpu.matmul %4, %5, %cst {dimension_numbers = #tpu.dot_dimension_numbers<[1], [0], [0], [1], [0, 0, 1, 1], [], []>} : vector<16x128xbf16>, vector<128x128xbf16>, vector<16x128xf32> -> vector<16x128xf32>
    %7 = arith.addf %3, %6 : vector<16x128xf32>
    %c0_6 = arith.constant 0 : index
    %c0_7 = arith.constant 0 : index
    %8 = vector.load %arg7[%c0_6, %c0_7] : memref<16x128xf32, #tpu.memory_space<vmem>>, vector<16x128xf32>
    tpu.vector_store %arg7[%c0_6, %c0_7], %7 {strides = array<i32>} : memref<16x128xf32, #tpu.memory_space<vmem>>, vector<16x128xf32>,
    %c0_i32_8 = arith.constant 0 : i32
    %9 = arith.cmpi eq, %arg2, %c0_i32_8 : i32
    %10 = arith.extui %9 : i1 to i32
    %c0_i32_9 = arith.constant 0 : i32
    %11 = arith.cmpi ne, %10, %c0_i32_9 : i32
    scf.if %11 {
      %c0_10 = arith.constant 0 : index
      %c0_11 = arith.constant 0 : index
      %12 = vector.load %arg7[%c0_10, %c0_11] : memref<16x128xf32, #tpu.memory_space<vmem>>, vector<16x128xf32>
      %c0_12 = arith.constant 0 : index
      %c0_13 = arith.constant 0 : index
      %13 = vector.load %arg5[%c0_12, %c0_13] : memref<1x128xf32, #tpu.memory_space<vmem>>, vector<1x128xf32>
      %14 = vector.broadcast %13 : vector<1x128xf32> to vector<16x128xf32>
      %15 = arith.addf %12, %14 : vector<16x128xf32>
      %c0_14 = arith.constant 0 : index
      %c0_15 = arith.constant 0 : index
      %16 = vector.load %arg6[%c0_14, %c0_15] : memref<16x128xf32, #tpu.memory_space<vmem>>, vector<16x128xf32>
      tpu.vector_store %arg6[%c0_14, %c0_15], %15 {strides = array<i32>} : memref<16x128xf32, #tpu.memory_space<vmem>>, vector<16x128xf32>,
    } else {
    }
    return
  }
  func.func @transform_0(%arg0: i32, %arg1: i32, %arg2: i32) -> (i32, i32) {
    %c0_i32 = arith.constant 0 : i32
    return %arg0, %arg2 : i32, i32
  }
  func.func @transform_1(%arg0: i32, %arg1: i32, %arg2: i32) -> (i32, i32) {
    %c0_i32 = arith.constant 0 : i32
    return %arg2, %arg1 : i32, i32
  }
  func.func @transform_2(%arg0: i32, %arg1: i32, %arg2: i32) -> (i32, i32) {
    %c0_i32 = arith.constant 0 : i32
    %c0_i32_0 = arith.constant 0 : i32
    return %c0_i32, %arg1 : i32, i32
  }
  func.func @transform_3(%arg0: i32, %arg1: i32, %arg2: i32) -> (i32, i32) {
    %c0_i32 = arith.constant 0 : i32
    return %arg0, %arg1 : i32, i32
  }
}

</mosaic_0001>

<llo_original>
// kernel: transformer_vae_forward.28
$region0: #{transformer_vae_forward.28}
  #allocation0 [shape = 'u32[]', space=smem, size = 0x4, offset = 0x4, fixed_abs, tag = 'smem constant byte address 0x4 - core index']
  #allocation1 [shape = 'u32[72,128]{1,0:T(1,128)}', space=vmem, size = 0x9000, scoped, tag = 'internal scratch']
  #allocation2 [shape = 'f32[16,128]{1,0:T(8,128)}', space=vmem, size = 0x2000, scoped, tag = 'scratch operand']
  %s0 = inlined_call_operand.vmem [shape: bf16[16,128], index: 0, kind: input, shape index: {}]
  %s1 = inlined_call_operand.vmem [shape: bf16[128,128], index: 1, kind: input, shape index: {}]
  %s2 = inlined_call_operand.vmem [shape: f32[1,128], index: 2, kind: input, shape index: {}]
  %s3 = inlined_call_operand.vmem [shape: bf16[16,128], index: 3, kind: output, shape index: {}]
  %s4 = sld [smem:[#allocation0]]
  $region30: #{transformer_vae_forward.28} parent=0
    _
  %s6 = ssub.s32 1, %s4
  %s7 = scalar_select 0, %s6, %s4
  // Predicated region
  $region2: #{transformer_vae_forward.28} parent=0 // pred_check
    _
  $region3: #{transformer_vae_forward.28} parent=0 // pred_check_branch
    %9 = sbr.rel (0) target = $region5
  $region4: #{transformer_vae_forward.28} parent=0 // pred_region
    _
  $region5: #{transformer_vae_forward.28} parent=0 // pred_fallthru
    _
  // Predicated region
  $region6: #{transformer_vae_forward.28} parent=0 // pred_check
    _
  $region7: #{transformer_vae_forward.28} parent=0 // pred_check_branch
    %11 = sbr.rel (0) target = $region9
  $region8: #{transformer_vae_forward.28} parent=0 // pred_region
    _
  $region9: #{transformer_vae_forward.28} parent=0 // pred_fallthru
    _
  // Predicated region
  $region10: #{transformer_vae_forward.28} parent=0 // pred_check
    _
  $region11: #{transformer_vae_forward.28} parent=0 // pred_check_branch
    %13 = sbr.rel (0) target = $region13
  $region12: #{transformer_vae_forward.28} parent=0 // pred_region
    _
  $region13: #{transformer_vae_forward.28} parent=0 // pred_fallthru
    _
  %p14 = scmp.eq.s32.totalorder 0, 0
  // Predicated region
  $region14: #{transformer_vae_forward.28} parent=0 // pred_check
    %p15 = pneg %p14
  $region15: #{transformer_vae_forward.28} parent=0 // pred_check_branch
    %17 = sbr.rel (%p15) target = $region17
  $region16: #{transformer_vae_forward.28} parent=0 // pred_region
    %18 = vst [vmem:[#allocation2] sm:$0xff] 0.0
    %19 = vst [vmem:[#allocation2 + $0x8] sm:$0xff] 0.0
  $region17: #{transformer_vae_forward.28} parent=0 // pred_fallthru
    _
  %v20 = vld [vmem:[#allocation2] sm:$0xff]
  %v21 = vld [vmem:[#allocation2 + $0x8] sm:$0xff]
  %v22 = vld [vmem:[%s0] sm:$0xf]
  %v23 = vld [vmem:[%s0 + $0x4] sm:$0xf]
  %v24 = vld [vmem:[%s1] sm:$0xf]
  %v25 = vld [vmem:[%s1 + $0x4] sm:$0xf]
  %v26 = vld [vmem:[%s1 + $0x8] sm:$0xf]
  %v27 = vld [vmem:[%s1 + $0xc] sm:$0xf]
  %v28 = vld [vmem:[%s1 + $0x10] sm:$0xf]
  %v29 = vld [vmem:[%s1 + $0x14] sm:$0xf]
  %v30 = vld [vmem:[%s1 + $0x18] sm:$0xf]
  %v31 = vld [vmem:[%s1 + $0x1c] sm:$0xf]
  %v32 = vld [vmem:[%s1 + $0x20] sm:$0xf]
  %v33 = vld [vmem:[%s1 + $0x24] sm:$0xf]
  %v34 = vld [vmem:[%s1 + $0x28] sm:$0xf]
  %v35 = vld [vmem:[%s1 + $0x2c] sm:$0xf]
  %v36 = vld [vmem:[%s1 + $0x30] sm:$0xf]
  %v37 = vld [vmem:[%s1 + $0x34] sm:$0xf]
  %v38 = vld [vmem:[%s1 + $0x38] sm:$0xf]
  %v39 = vld [vmem:[%s1 + $0x3c] sm:$0xf]
  %v42 = vunpack.c.l.b16 %v22
  %v43 = vunpack.c.l.b16 %v23
  %v44 = vpack.c.b16 %v43, %v42
  %v62 = vunpack.c.l.b16 %v24
  %v63 = vunpack.c.l.b16 %v25
  %v64 = vunpack.c.l.b16 %v26
  %v65 = vunpack.c.l.b16 %v27
  %v66 = vunpack.c.l.b16 %v28
  %v67 = vunpack.c.l.b16 %v29
  %v68 = vunpack.c.l.b16 %v30
  %v69 = vunpack.c.l.b16 %v31
  %v70 = vunpack.c.l.b16 %v32
  %v71 = vunpack.c.l.b16 %v33
  %v72 = vunpack.c.l.b16 %v34
  %v73 = vunpack.c.l.b16 %v35
  %v74 = vunpack.c.l.b16 %v36
  %v75 = vunpack.c.l.b16 %v37
  %v76 = vunpack.c.l.b16 %v38
  %v77 = vunpack.c.l.b16 %v39
  %v78 = vpack.c.b16 %v63, %v62
  %v79 = vpack.c.b16 %v65, %v64
  %v80 = vpack.c.b16 %v67, %v66
  %v81 = vpack.c.b16 %v69, %v68
  %v82 = vpack.c.b16 %v71, %v70
  %v83 = vpack.c.b16 %v73, %v72
  %v84 = vpack.c.b16 %v75, %v74
  %v85 = vpack.c.b16 %v77, %v76
  %94 = vmatpush.bf16.msra.mxu0 %v85
  %95 = vmatpush.bf16.msra.mxu0 %v84
  %96 = vmatpush.bf16.msra.mxu0 %v83
  %97 = vmatpush.bf16.msra.mxu0 %v82
  %98 = vmatpush.bf16.msra.mxu0 %v81
  %99 = vmatpush.bf16.msra.mxu0 %v80
  %100 = vmatpush.bf16.msra.mxu0 %v79
  %101 = vmatpush.bf16.msra.mxu0 %v78
  %102 = vmatmul.bf16.gmra.mxu0 %v44
  %v103 = vpop.f32.mrf.mxu0
  %v104 = vadd.f32 0.0, %v103
  %v105 = vpop.f32.mrf.mxu0
  %v106 = vadd.f32 0.0, %v105
  %107 = vdwg.mxu0
  %v108 = vadd.f32 %v20, %v104
  %v109 = vadd.f32 %v21, %v106
  %110 = vst [vmem:[#allocation2] sm:$0xff] %v108
  %111 = vst [vmem:[#allocation2 + $0x8] sm:$0xff] %v109
  // Predicated region
  $region18: #{transformer_vae_forward.28} parent=0 // pred_check
    %p112 = pneg %p14
  $region19: #{transformer_vae_forward.28} parent=0 // pred_check_branch
    %114 = sbr.rel (%p112) target = $region21
  $region20: #{transformer_vae_forward.28} parent=0 // pred_region
    %v115 = vld [vmem:[#allocation2] sm:$0xff]
    %v116 = vld [vmem:[#allocation2 + $0x8] sm:$0xff]
    %v117 = vld [vmem:[%s2] sm:$0x1]
    %v119 = vperm.slane %v117, 0
    %v121 = vadd.f32 %v115, %v119
    %v122 = vadd.f32 %v116, %v119
    %v123 = vpack.c.bf16 %v121, %v121
    %v124 = vpack.c.bf16 %v122, %v122
    %125 = vst [vmem:[%s3] sm:$0xf] %v123
    %126 = vst [vmem:[%s3 + $0x4] sm:$0xf] %v124
  $region21: #{transformer_vae_forward.28} parent=0 // pred_fallthru
    _
  // Predicated region
  $region22: #{transformer_vae_forward.28} parent=0 // pred_check
    _
  $region23: #{transformer_vae_forward.28} parent=0 // pred_check_branch
    %128 = sbr.rel (0) target = $region25
  $region24: #{transformer_vae_forward.28} parent=0 // pred_region
    _
  $region25: #{transformer_vae_forward.28} parent=0 // pred_fallthru
    _
  // Predicated region
  $region26: #{transformer_vae_forward.28} parent=0 // pred_check
    _
  $region27: #{transformer_vae_forward.28} parent=0 // pred_check_branch
    %130 = sbr.rel (0) target = $region29
  $region28: #{transformer_vae_forward.28} parent=0 // pred_region
    _
  $region29: #{transformer_vae_forward.28} parent=0 // pred_fallthru
    _

// kernel: transformer_vae_forward.32
$region0: #{transformer_vae_forward.32}
  #allocation0 [shape = 'u32[]', space=smem, size = 0x4, offset = 0x4, fixed_abs, tag = 'smem constant byte address 0x4 - core index']
  #allocation1 [shape = 'u32[72,128]{1,0:T(1,128)}', space=vmem, size = 0x9000, scoped, tag = 'internal scratch']
  #allocation2 [shape = 'f32[32,256]{1,0:T(8,128)}', space=vmem, size = 0x8000, scoped, tag = 'scratch operand']
  %s0 = inlined_call_operand.vmem [shape: bf16[32,128], index: 0, kind: input, shape index: {}]
  %s1 = inlined_call_operand.hbm [shape: bf16[128,1536], index: 1, kind: input, shape index: {}]
  %s2 = inlined_call_operand.vmem [shape: f32[1,1536], index: 2, kind: input, shape index: {}]
  %s3 = inlined_call_operand.vmem [shape: bf16[32,1536], index: 3, kind: output, shape index: {}]
  %s4 = sld [smem:[#allocation0]]
  $region91: #{transformer_vae_forward.32} parent=0
    _
  %s6 = ssub.s32 1, %s4
  %s7 = scalar_select 0, %s6, %s4
  $region1: #{transformer_vae_forward.32} parent=0
    #allocation3 [shape = 'u8[131072]{0}', space=vmem, size = 0x20000, scoped, tag = 'input window, operand 1']
    #allocation4 [shape = 's32[2]{0}', space=sflag, size = 0x8, scoped, tag = 'scoped memory for transformer_vae_forward.32']
    #allocation5 [shape = 'u8[32768]{0}', space=vmem, size = 0x8000, scoped, tag = 'output window, operand 0']
    %8 = vsyncpa [#allocation4], 0
    %s9 = scalar_lea.sflag [#allocation4], 1
    %10 = vsyncpa %s9, 0
    loop: start=0, step=1, limit=8
    $region2: #{transformer_vae_forward.32} parent=1 // loop_pre_header
      _
    $region3: #{transformer_vae_forward.32} parent=1 // loop_header
      %s12 = sphi 0, %s16
      %p13 = scmp.ge.s32.totalorder %s12, 8
      %s19 = sphi 0, %s38
      %s20 = sphi 0, %s34
      %s21 = sphi 0, %s30
      %s22 = sphi 0, %s19
      %s23 = sphi 0, %s20
      %s24 = sphi 0, %s21
      %s25 = sphi 0, %s22
      %s26 = sphi 0, %s23
      %s27 = sphi 0, %s24
      %s43 = sphi 0, %s45
      %s46 = sphi 0, %s43
      %s47 = sphi 0, %s46
      %s63 = sphi 0, %s47
      %s71 = sphi 0, %s73
      %s74 = sphi 0, %s71
      %s75 = sphi 0, %s74
      %s91 = sphi 0, %s75
      %s97 = sphi 0, %s99
      %s100 = sphi 0, %s97
      %s101 = sphi 0, %s100
      %s117 = sphi 0, %s101
      %s125 = sphi 0, %s127
      %s128 = sphi 0, %s125
      %s129 = sphi 0, %s128
      %s145 = sphi 0, %s129
    $region4: #{transformer_vae_forward.32} parent=1 // loop_header_branch
      %15 = sbr.rel (%p13) target = $region8
    $region5: #{transformer_vae_forward.32} parent=1 // loop_body
      %s17 = ssub.s32 %s12, 1
      %s18 = ssub.s32 %s12, 2
      %s28 = sadd.s32 1, %s21
      %p29 = scmp.ge.s32.totalorder %s28, 1
      %s30 = scalar_select %p29, 0, %s28
      %s31 = sadd.s32 1, %s20
      %s32 = scalar_select %p29, %s31, %s20
      %p33 = scmp.ge.s32.totalorder %s32, 6
      %s34 = scalar_select %p33, 0, %s32
      %s35 = sadd.s32 1, %s19
      %s36 = scalar_select %p33, %s35, %s19
      %p37 = scmp.ge.s32.totalorder %s36, 1
      %s38 = scalar_select %p37, 0, %s36
      %s39 = ssub.s32 %s19, %s38
      %s40 = ssub.s32 %s21, %s30
      %s41 = sor.u32 %s39, %s40
      %p42 = scmp.eq.s32.totalorder %s41, 0
      %s44 = sadd.s32 %s43, 1
      %s45 = scalar_select %p42, %s43, %s44
      %p48 = pneg %p42
      %p49 = scmp.eq.s32.totalorder %s12, 5
      %p50 = por %p48, %p49
      %p51 = scmp.ne.s32.totalorder %s43, %s46
      %p52 = scmp.eq.s32.totalorder %s12, 0
      %p53 = por %p51, %p52
      %p54 = scmp.ne.s32.totalorder %s43, %s46
      %p55 = scmp.eq.s32.totalorder %s17, 5
      %p56 = por %p54, %p55
      %p57 = scmp.ne.s32.totalorder %s46, %s47
      %p58 = scmp.eq.s32.totalorder %s17, 0
      %p59 = por %p57, %p58
      %p60 = scmp.ne.s32.totalorder %s46, %s47
      %p61 = scmp.eq.s32.totalorder %s18, 5
      %p62 = por %p60, %p61
      %p64 = scmp.ne.s32.totalorder %s47, %s63
      %p65 = scmp.eq.s32.totalorder %s18, 0
      %p66 = por %p64, %p65
      %s67 = ssub.s32 %s21, %s30
      %s68 = ssub.s32 %s20, %s34
      %s69 = sor.u32 %s67, %s68
      %p70 = scmp.eq.s32.totalorder %s69, 0
      %s72 = sadd.s32 %s71, 1
      %s73 = scalar_select %p70, %s71, %s72
      %p76 = pneg %p70
      %p77 = scmp.eq.s32.totalorder %s12, 5
      %p78 = por %p76, %p77
      %p79 = scmp.ne.s32.totalorder %s71, %s74
      %p80 = scmp.eq.s32.totalorder %s12, 0
      %p81 = por %p79, %p80
      %p82 = scmp.ne.s32.totalorder %s71, %s74
      %p83 = scmp.eq.s32.totalorder %s17, 5
      %p84 = por %p82, %p83
      %p85 = scmp.ne.s32.totalorder %s74, %s75
      %p86 = scmp.eq.s32.totalorder %s17, 0
      %p87 = por %p85, %p86
      %p88 = scmp.ne.s32.totalorder %s74, %s75
      %p89 = scmp.eq.s32.totalorder %s18, 5
      %p90 = por %p88, %p89
      %p92 = scmp.ne.s32.totalorder %s75, %s91
      %p93 = scmp.eq.s32.totalorder %s18, 0
      %p94 = por %p92, %p93
      %s95 = ssub.s32 %s20, %s34
      %p96 = scmp.eq.s32.totalorder %s95, 0
      %s98 = sadd.s32 %s97, 1
      %s99 = scalar_select %p96, %s97, %s98
      %p102 = pneg %p96
      %p103 = scmp.eq.s32.totalorder %s12, 5
      %p104 = por %p102, %p103
      %p105 = scmp.ne.s32.totalorder %s97, %s100
      %p106 = scmp.eq.s32.totalorder %s12, 0
      %p107 = por %p105, %p106
      %p108 = scmp.ne.s32.totalorder %s97, %s100
      %p109 = scmp.eq.s32.totalorder %s17, 5
      %p110 = por %p108, %p109
      %p111 = scmp.ne.s32.totalorder %s100, %s101
      %p112 = scmp.eq.s32.totalorder %s17, 0
      %p113 = por %p111, %p112
      %p114 = scmp.ne.s32.totalorder %s100, %s101
      %p115 = scmp.eq.s32.totalorder %s18, 5
      %p116 = por %p114, %p115
      %p118 = scmp.ne.s32.totalorder %s101, %s117
      %p119 = scmp.eq.s32.totalorder %s18, 0
      %p120 = por %p118, %p119
      %s121 = ssub.s32 %s19, %s38
      %s122 = ssub.s32 %s20, %s34
      %s123 = sor.u32 %s121, %s122
      %p124 = scmp.eq.s32.totalorder %s123, 0
      %s126 = sadd.s32 %s125, 1
      %s127 = scalar_select %p124, %s125, %s126
      %p130 = pneg %p124
      %p131 = scmp.eq.s32.totalorder %s12, 5
      %p132 = por %p130, %p131
      %p133 = scmp.ne.s32.totalorder %s125, %s128
      %p134 = scmp.eq.s32.totalorder %s12, 0
      %p135 = por %p133, %p134
      %p136 = scmp.ne.s32.totalorder %s125, %s128
      %p137 = scmp.eq.s32.totalorder %s17, 5
      %p138 = por %p136, %p137
      %p139 = scmp.ne.s32.totalorder %s128, %s129
      %p140 = scmp.eq.s32.totalorder %s17, 0
      %p141 = por %p139, %p140
      %p142 = scmp.ne.s32.totalorder %s128, %s129
      %p143 = scmp.eq.s32.totalorder %s18, 5
      %p144 = por %p142, %p143
      %p146 = scmp.ne.s32.totalorder %s129, %s145
      %p147 = scmp.eq.s32.totalorder %s18, 0
      %p148 = por %p146, %p147
      %p149 = scmp.le.s32.totalorder 1, %s12
      %p150 = scmp.lt.s32.totalorder %s12, 7
      %p151 = pnand %p149, %p150
      %p152 = pneg %p151
      // Predicated region
      $region9: #{transformer_vae_forward.32} parent=5 // pred_check
        _
      $region10: #{transformer_vae_forward.32} parent=5 // pred_check_branch
        %154 = sbr.rel (%p151) target = $region12
      $region11: #{transformer_vae_forward.32} parent=5 // pred_region
        %s155 = ssub.s32 %s12, 1
        // Predicated region
        $region13: #{transformer_vae_forward.32} parent=11 // pred_check
          %p156 = pneg %p59
        $region14: #{transformer_vae_forward.32} parent=11 // pred_check_branch
          %158 = sbr.rel (%p156) target = $region16
        $region15: #{transformer_vae_forward.32} parent=11 // pred_region
          %s159 = smul.u32 4, %s22
          %p160 = scmp.lt.s32.totalorder %s159, 3
          %s161 = scalar_select %p160, %s159, 3
          %p162 = scmp.lt.s32.totalorder %s24, 0
          %s163 = scalar_select %p162, %s24, 0
          %s164 = sadd.s32 %s163, %s161
          %s165 = smul.addr %s164, 4
          %s166 = scalar_lea.vmem %s0, %s165
          %s167 = smul.u32 4, %s22
        $region16: #{transformer_vae_forward.32} parent=11 // pred_fallthru
          _
      $region12: #{transformer_vae_forward.32} parent=5 // pred_fallthru
        _
      %p168 = scmp.lt.s32.totalorder %s12, 6
      // Predicated region
      $region17: #{transformer_vae_forward.32} parent=5 // pred_check
        %p169 = pneg %p168
      $region18: #{transformer_vae_forward.32} parent=5 // pred_check_branch
        %171 = sbr.rel (%p169) target = $region20
      $region19: #{transformer_vae_forward.32} parent=5 // pred_region
        // Predicated region
        $region21: #{transformer_vae_forward.32} parent=19 // pred_check
          %p172 = pneg %p81
        $region22: #{transformer_vae_forward.32} parent=19 // pred_check_branch
          %174 = sbr.rel (%p172) target = $region24
        $region23: #{transformer_vae_forward.32} parent=19 // pred_region
          %s175 = sand.u32 %s71, 1
          %s176 = scalar_lea.sflag [#allocation4], %s175
          %s177 = sand.u32 %s71, 1
          %s178 = smul.addr %s177, 128
          %s179 = scalar_lea.vmem [#allocation3], %s178
          %s180 = smul.u32 16, %s21
          %s181 = smul.u32 2, %s20
          %183 = vsyncadd %s176, 0
          %s184 = smul.addr %s180, 12
          %s185 = sadd.s32 %s181, %s184
          %s186 = smul.addr %s185, 4
          %s187 = scalar_lea.hbm %s1, %s186
          %s188 = sshll.u32 %s187, 4
          %s189 = int_to_ptr.hbm [resolvable:$true] %s188
          %s190 = sshll.u32 %s179, 4
          %s191 = int_to_ptr.vmem [resolvable:$true] %s190
          %196 = dma.hbm_to_vmem [thread:$0]  %s189, 2048, %s191, %s176, 768, 128, 8
        $region24: #{transformer_vae_forward.32} parent=19 // pred_fallthru
          _
        // Predicated region
        $region25: #{transformer_vae_forward.32} parent=19 // pred_check
          %p197 = pneg %p107
        $region26: #{transformer_vae_forward.32} parent=19 // pred_check_branch
          %199 = sbr.rel (%p197) target = $region28
        $region27: #{transformer_vae_forward.32} parent=19 // pred_region
          %s200 = smul.u32 2, %s20
          %p201 = scmp.lt.s32.totalorder %s200, 11
          %s202 = scalar_select %p201, %s200, 11
          %s203 = scalar_lea.vmem %s2, %s202
          %s204 = smul.u32 2, %s20
        $region28: #{transformer_vae_forward.32} parent=19 // pred_fallthru
          _
      $region20: #{transformer_vae_forward.32} parent=5 // pred_fallthru
        _
      %p205 = scmp.le.s32.totalorder 1, %s12
      %p206 = scmp.lt.s32.totalorder %s12, 7
      %p207 = pnand %p205, %p206
      %p208 = pneg %p207
      // Predicated region
      $region29: #{transformer_vae_forward.32} parent=5 // pred_check
        _
      $region30: #{transformer_vae_forward.32} parent=5 // pred_check_branch
        %210 = sbr.rel (%p207) target = $region32
      $region31: #{transformer_vae_forward.32} parent=5 // pred_region
        %s211 = ssub.s32 %s12, 1
        %s212 = sand.u32 %s74, 1
        %s213 = scalar_lea.sflag [#allocation4], %s212
        %s214 = sand.u32 %s74, 1
        %s215 = smul.addr %s214, 128
        %s216 = scalar_lea.vmem [#allocation3], %s215
        // Predicated region
        $region33: #{transformer_vae_forward.32} parent=31 // pred_check
          %p217 = pneg %p87
        $region34: #{transformer_vae_forward.32} parent=31 // pred_check_branch
          %219 = sbr.rel (%p217) target = $region36
        $region35: #{transformer_vae_forward.32} parent=31 // pred_region
          %221 = dma.done %s213, 2048
        $region36: #{transformer_vae_forward.32} parent=31 // pred_fallthru
          _
        %s222 = smul.u32 4, %s22
        %p223 = scmp.lt.s32.totalorder %s222, 3
        %s224 = scalar_select %p223, %s222, 3
        %p225 = scmp.lt.s32.totalorder %s24, 0
        %s226 = scalar_select %p225, %s24, 0
        %s227 = sadd.s32 %s226, %s224
        %s228 = smul.addr %s227, 4
        %s229 = scalar_lea.vmem %s0, %s228
        %p230 = pneg %p59
        %p231 = pneg %p56
        %s232 = sand.u32 %s74, 1
        %s233 = scalar_lea.sflag [#allocation4], %s232
        %s234 = sand.u32 %s74, 1
        %s235 = smul.addr %s234, 128
        %s236 = scalar_lea.vmem [#allocation3], %s235
        %p237 = pneg %p87
        %p238 = pneg %p84
        %s239 = smul.u32 2, %s23
        %p240 = scmp.lt.s32.totalorder %s239, 11
        %s241 = scalar_select %p240, %s239, 11
        %s242 = scalar_lea.vmem %s2, %s241
        %p243 = pneg %p113
        %p244 = pneg %p110
        %p245 = pneg %p141
        %p246 = pneg %p138
        %s247 = sand.u32 %s128, 1
        %s248 = sand.u32 %s128, 1
        %s249 = smul.addr %s248, 32
        %s250 = scalar_lea.vmem [#allocation5], %s249
        %s251 = smul.u32 4, %s22
        %p252 = scmp.lt.s32.totalorder %s251, 3
        %s253 = scalar_select %p252, %s251, 3
        %p254 = scmp.lt.s32.totalorder %s24, 0
        %s255 = scalar_select %p254, %s24, 0
        %s256 = sadd.s32 %s255, %s253
        %s257 = smul.addr %s256, 4
        %s258 = scalar_lea.vmem %s0, %s257
        %s259 = smul.u32 4, %s22
        %s260 = smul.u32 16, %s24
        %s261 = smul.u32 2, %s23
        %s262 = smul.u32 2, %s23
        %p263 = scmp.lt.s32.totalorder %s262, 11
        %s264 = scalar_select %p263, %s262, 11
        %s265 = scalar_lea.vmem %s2, %s264
        %s266 = smul.u32 2, %s23
        %s267 = smul.u32 4, %s22
        %s268 = smul.u32 2, %s23
        %p269 = scmp.eq.s32.totalorder %s24, 0
        // Predicated region
        $region37: #{transformer_vae_forward.32} parent=31 // pred_check
          %p270 = pneg %p269
        $region38: #{transformer_vae_forward.32} parent=31 // pred_check_branch
          %272 = sbr.rel (%p270) target = $region40
        $region39: #{transformer_vae_forward.32} parent=31 // pred_region
          %273 = vst [vmem:[#allocation2] sm:$0xff] 0.0
          %274 = vst [vmem:[#allocation2 + $0x8] sm:$0xff] 0.0
          %275 = vst [vmem:[#allocation2 + $0x10] sm:$0xff] 0.0
          %276 = vst [vmem:[#allocation2 + $0x18] sm:$0xff] 0.0
          %277 = vst [vmem:[#allocation2 + $0x20] sm:$0xff] 0.0
          %278 = vst [vmem:[#allocation2 + $0x28] sm:$0xff] 0.0
          %279 = vst [vmem:[#allocation2 + $0x30] sm:$0xff] 0.0
          %280 = vst [vmem:[#allocation2 + $0x38] sm:$0xff] 0.0
        $region40: #{transformer_vae_forward.32} parent=31 // pred_fallthru
          _
        %v281 = vld [vmem:[#allocation2] sm:$0xff]
        %v282 = vld [vmem:[#allocation2 + $0x8] sm:$0xff]
        %v283 = vld [vmem:[#allocation2 + $0x10] sm:$0xff]
        %v284 = vld [vmem:[#allocation2 + $0x18] sm:$0xff]
        %v285 = vld [vmem:[#allocation2 + $0x20] sm:$0xff]
        %v286 = vld [vmem:[#allocation2 + $0x28] sm:$0xff]
        %v287 = vld [vmem:[#allocation2 + $0x30] sm:$0xff]
        %v288 = vld [vmem:[#allocation2 + $0x38] sm:$0xff]
        %v289 = vld [vmem:[%s258] sm:$0xf]
        %v290 = vld [vmem:[%s258 + $0x4] sm:$0xf]
        %v291 = vld [vmem:[%s258 + $0x8] sm:$0xf]
        %v292 = vld [vmem:[%s258 + $0xc] sm:$0xf]
        %v293 = vld [vmem:[%s216] sm:$0xff]
        %v294 = vld [vmem:[%s216 + $0x8] sm:$0xff]
        %v295 = vld [vmem:[%s216 + $0x10] sm:$0xff]
        %v296 = vld [vmem:[%s216 + $0x18] sm:$0xff]
        %v297 = vld [vmem:[%s216 + $0x20] sm:$0xff]
        %v298 = vld [vmem:[%s216 + $0x28] sm:$0xff]
        %v299 = vld [vmem:[%s216 + $0x30] sm:$0xff]
        %v300 = vld [vmem:[%s216 + $0x38] sm:$0xff]
        %v301 = vld [vmem:[%s216 + $0x40] sm:$0xff]
        %v302 = vld [vmem:[%s216 + $0x48] sm:$0xff]
        %v303 = vld [vmem:[%s216 + $0x50] sm:$0xff]
        %v304 = vld [vmem:[%s216 + $0x58] sm:$0xff]
        %v305 = vld [vmem:[%s216 + $0x60] sm:$0xff]
        %v306 = vld [vmem:[%s216 + $0x68] sm:$0xff]
        %v307 = vld [vmem:[%s216 + $0x70] sm:$0xff]
        %v308 = vld [vmem:[%s216 + $0x78] sm:$0xff]
        %v313 = vunpack.c.l.b16 %v289
        %v314 = vunpack.c.l.b16 %v290
        %v315 = vunpack.c.l.b16 %v291
        %v316 = vunpack.c.l.b16 %v292
        %v317 = vpack.c.b16 %v314, %v313
        %v318 = vpack.c.b16 %v316, %v315
        %v337 = vunpack.c.l.b16 %v293
        %v338 = vunpack.c.h.b16 %v293
        %v339 = vunpack.c.l.b16 %v294
        %v340 = vunpack.c.h.b16 %v294
        %v341 = vunpack.c.l.b16 %v295
        %v342 = vunpack.c.h.b16 %v295
        %v343 = vunpack.c.l.b16 %v296
        %v344 = vunpack.c.h.b16 %v296
        %v345 = vunpack.c.l.b16 %v297
        %v346 = vunpack.c.h.b16 %v297
        %v347 = vunpack.c.l.b16 %v298
        %v348 = vunpack.c.h.b16 %v298
        %v349 = vunpack.c.l.b16 %v299
        %v350 = vunpack.c.h.b16 %v299
        %v351 = vunpack.c.l.b16 %v300
        %v352 = vunpack.c.h.b16 %v300
        %v353 = vunpack.c.l.b16 %v301
        %v354 = vunpack.c.h.b16 %v301
        %v355 = vunpack.c.l.b16 %v302
        %v356 = vunpack.c.h.b16 %v302
        %v357 = vunpack.c.l.b16 %v303
        %v358 = vunpack.c.h.b16 %v303
        %v359 = vunpack.c.l.b16 %v304
        %v360 = vunpack.c.h.b16 %v304
        %v361 = vunpack.c.l.b16 %v305
        %v362 = vunpack.c.h.b16 %v305
        %v363 = vunpack.c.l.b16 %v306
        %v364 = vunpack.c.h.b16 %v306
        %v365 = vunpack.c.l.b16 %v307
        %v366 = vunpack.c.h.b16 %v307
        %v367 = vunpack.c.l.b16 %v308
        %v368 = vunpack.c.h.b16 %v308
        %v369 = vpack.c.b16 %v339, %v337
        %v370 = vpack.c.b16 %v340, %v338
        %v371 = vpack.c.b16 %v343, %v341
        %v372 = vpack.c.b16 %v344, %v342
        %v373 = vpack.c.b16 %v347, %v345
        %v374 = vpack.c.b16 %v348, %v346
        %v375 = vpack.c.b16 %v351, %v349
        %v376 = vpack.c.b16 %v352, %v350
        %v377 = vpack.c.b16 %v355, %v353
        %v378 = vpack.c.b16 %v356, %v354
        %v379 = vpack.c.b16 %v359, %v357
        %v380 = vpack.c.b16 %v360, %v358
        %v381 = vpack.c.b16 %v363, %v361
        %v382 = vpack.c.b16 %v364, %v362
        %v383 = vpack.c.b16 %v367, %v365
        %v384 = vpack.c.b16 %v368, %v366
        %401 = vmatpush.bf16.msra.mxu0 %v383
        %402 = vmatpush.bf16.msra.mxu0 %v381
        %403 = vmatpush.bf16.msra.mxu0 %v379
        %404 = vmatpush.bf16.msra.mxu0 %v377
        %405 = vmatpush.bf16.msra.mxu0 %v375
        %406 = vmatpush.bf16.msra.mxu0 %v373
        %407 = vmatpush.bf16.msra.mxu0 %v371
        %408 = vmatpush.bf16.msra.mxu0 %v369
        %409 = vmatmul.bf16.gmra.mxu0 %v317
        %v410 = vpop.f32.mrf.mxu0
        %v411 = vadd.f32 0.0, %v410
        %v412 = vpop.f32.mrf.mxu0
        %v413 = vadd.f32 0.0, %v412
        %414 = vmatmul.bf16.gmra.mxu0 %v318
        %v415 = vpop.f32.mrf.mxu0
        %v416 = vadd.f32 0.0, %v415
        %v417 = vpop.f32.mrf.mxu0
        %v418 = vadd.f32 0.0, %v417
        %419 = vdwg.mxu0
        %420 = vmatpush.bf16.msra.mxu0 %v384
        %421 = vmatpush.bf16.msra.mxu0 %v382
        %422 = vmatpush.bf16.msra.mxu0 %v380
        %423 = vmatpush.bf16.msra.mxu0 %v378
        %424 = vmatpush.bf16.msra.mxu0 %v376
        %425 = vmatpush.bf16.msra.mxu0 %v374
        %426 = vmatpush.bf16.msra.mxu0 %v372
        %427 = vmatpush.bf16.msra.mxu0 %v370
        %428 = vmatmul.bf16.gmra.mxu0 %v317
        %v429 = vpop.f32.mrf.mxu0
        %v430 = vadd.f32 0.0, %v429
        %v431 = vpop.f32.mrf.mxu0
        %v432 = vadd.f32 0.0, %v431
        %433 = vmatmul.bf16.gmra.mxu0 %v318
        %v434 = vpop.f32.mrf.mxu0
        %v435 = vadd.f32 0.0, %v434
        %v436 = vpop.f32.mrf.mxu0
        %v437 = vadd.f32 0.0, %v436
        %438 = vdwg.mxu0
        %v439 = vadd.f32 %v281, %v411
        %v440 = vadd.f32 %v282, %v430
        %v441 = vadd.f32 %v283, %v413
        %v442 = vadd.f32 %v284, %v432
        %v443 = vadd.f32 %v285, %v416
        %v444 = vadd.f32 %v286, %v435
        %v445 = vadd.f32 %v287, %v418
        %v446 = vadd.f32 %v288, %v437
        %447 = vst [vmem:[#allocation2] sm:$0xff] %v439
        %448 = vst [vmem:[#allocation2 + $0x8] sm:$0xff] %v440
        %449 = vst [vmem:[#allocation2 + $0x10] sm:$0xff] %v441
        %450 = vst [vmem:[#allocation2 + $0x18] sm:$0xff] %v442
        %451 = vst [vmem:[#allocation2 + $0x20] sm:$0xff] %v443
        %452 = vst [vmem:[#allocation2 + $0x28] sm:$0xff] %v444
        %453 = vst [vmem:[#allocation2 + $0x30] sm:$0xff] %v445
        %454 = vst [vmem:[#allocation2 + $0x38] sm:$0xff] %v446
        // Predicated region
        $region41: #{transformer_vae_forward.32} parent=31 // pred_check
          %p455 = pneg %p269
        $region42: #{transformer_vae_forward.32} parent=31 // pred_check_branch
          %457 = sbr.rel (%p455) target = $region44
        $region43: #{transformer_vae_forward.32} parent=31 // pred_region
          %v458 = vld [vmem:[#allocation2] sm:$0xff]
          %v459 = vld [vmem:[#allocation2 + $0x8] sm:$0xff]
          %v460 = vld [vmem:[#allocation2 + $0x10] sm:$0xff]
          %v461 = vld [vmem:[#allocation2 + $0x18] sm:$0xff]
          %v462 = vld [vmem:[#allocation2 + $0x20] sm:$0xff]
          %v463 = vld [vmem:[#allocation2 + $0x28] sm:$0xff]
          %v464 = vld [vmem:[#allocation2 + $0x30] sm:$0xff]
          %v465 = vld [vmem:[#allocation2 + $0x38] sm:$0xff]
          %v466 = vld [vmem:[%s265] sm:$0x3]
          %v468 = vperm.slane %v466, 0
          %v469 = vperm.slane %v466, 1
          %v472 = vadd.f32 %v458, %v468
          %v473 = vadd.f32 %v459, %v469
          %v474 = vadd.f32 %v460, %v468
          %v475 = vadd.f32 %v461, %v469
          %v476 = vadd.f32 %v462, %v468
          %v477 = vadd.f32 %v463, %v469
          %v478 = vadd.f32 %v464, %v468
          %v479 = vadd.f32 %v465, %v469
          %v480 = vpack.c.bf16 %v473, %v472
          %v481 = vpack.c.bf16 %v475, %v474
          %v482 = vpack.c.bf16 %v477, %v476
          %v483 = vpack.c.bf16 %v479, %v478
          %484 = vst [vmem:[%s250] sm:$0xff] %v480
          %485 = vst [vmem:[%s250 + $0x8] sm:$0xff] %v481
          %486 = vst [vmem:[%s250 + $0x10] sm:$0xff] %v482
          %487 = vst [vmem:[%s250 + $0x18] sm:$0xff] %v483
        $region44: #{transformer_vae_forward.32} parent=31 // pred_fallthru
          _
        %s488 = sand.u32 %s128, 1
        %s489 = sand.u32 %s128, 1
        %s490 = smul.addr %s489, 32
        %s491 = scalar_lea.vmem [#allocation5], %s490
        // Predicated region
        $region45: #{transformer_vae_forward.32} parent=31 // pred_check
          %p492 = pneg %p138
        $region46: #{transformer_vae_forward.32} parent=31 // pred_check_branch
          %494 = sbr.rel (%p492) target = $region48
        $region47: #{transformer_vae_forward.32} parent=31 // pred_region
          %s495 = smul.u32 4, %s22
          %s496 = smul.u32 2, %s23
          %s497 = smul.addr %s495, 12
          %s498 = sadd.s32 %s496, %s497
          %s499 = smul.addr %s498, 4
          %s500 = scalar_lea.vmem %s3, %s499
          // Predicated region
          $region49: #{transformer_vae_forward.32} parent=47 // pred_check
            _
          $region50: #{transformer_vae_forward.32} parent=47 // pred_check_branch
            %502 = sbr.rel (0) target = $region52
          $region51: #{transformer_vae_forward.32} parent=47 // pred_region
            // Predicated region
            $region53: #{transformer_vae_forward.32} parent=51 // pred_check
              _
            $region54: #{transformer_vae_forward.32} parent=51 // pred_check_branch
              %504 = sbr.rel (0) target = $region56
            $region55: #{transformer_vae_forward.32} parent=51 // pred_region
              // Predicated region
              $region68: #{transformer_vae_forward.32} parent=55 // pred_check
                _
              $region69: #{transformer_vae_forward.32} parent=55 // pred_check_branch
                %526 = sbr.rel (0) target = $region71
              $region70: #{transformer_vae_forward.32} parent=55 // pred_region
                loop: start=0, step=1, limit=1
                $region72: #{transformer_vae_forward.32} parent=70 // loop_pre_header
                  _
                $region73: #{transformer_vae_forward.32} parent=70 // loop_header
                  %s528 = sphi 0, %s532
                  %p529 = scmp.ge.s32.totalorder %s528, 1
                  %s533 = sphi %s491, %s491
                  %s534 = sphi %s500, %s500
                $region74: #{transformer_vae_forward.32} parent=70 // loop_header_branch
                  %531 = sbr.rel (%p529) target = $region78
                $region75: #{transformer_vae_forward.32} parent=70 // loop_body
                  %v535 = vld [vmem:[%s533] sm:$0xff]
                  %536 = vst [vmem:[%s534] sm:$0xff] %v535
                  %v537 = vld [vmem:[%s533 + $0x8] sm:$0xff]
                  %538 = vst [vmem:[%s534 + $0x30] sm:$0xff] %v537
                  %v539 = vld [vmem:[%s533 + $0x10] sm:$0xff]
                  %540 = vst [vmem:[%s534 + $0x60] sm:$0xff] %v539
                  %v541 = vld [vmem:[%s533 + $0x18] sm:$0xff]
                  %542 = vst [vmem:[%s534 + $0x90] sm:$0xff] %v541
                $region76: #{transformer_vae_forward.32} parent=70 // loop_footer
                  %s532 = sadd.s32 1, %s528
                $region77: #{transformer_vae_forward.32} parent=70 // loop_footer_branch
                  %527 = sbr.rel target = $region73
                $region78: #{transformer_vae_forward.32} parent=70 // loop_exit
                  _
              $region71: #{transformer_vae_forward.32} parent=55 // pred_fallthru
                _
              // Predicated region
              $region79: #{transformer_vae_forward.32} parent=55 // pred_check
                _
              $region80: #{transformer_vae_forward.32} parent=55 // pred_check_branch
                %544 = sbr.rel target = $region82
              $region81: #{transformer_vae_forward.32} parent=55 // pred_region
                _
              $region82: #{transformer_vae_forward.32} parent=55 // pred_fallthru
                _
            $region56: #{transformer_vae_forward.32} parent=51 // pred_fallthru
              _
            // Predicated region
            $region57: #{transformer_vae_forward.32} parent=51 // pred_check
              _
            $region58: #{transformer_vae_forward.32} parent=51 // pred_check_branch
              %506 = sbr.rel target = $region60
            $region59: #{transformer_vae_forward.32} parent=51 // pred_region
              %s508 = ssub.s32 256, 1
              loop: start=0, step=1, limit=1
              $region61: #{transformer_vae_forward.32} parent=59 // loop_pre_header
                _
              $region62: #{transformer_vae_forward.32} parent=59 // loop_header
                %s510 = sphi 0, %s514
                %p511 = scmp.ge.s32.totalorder %s510, 1
                %s515 = sphi %s491, %s491
                %s516 = sphi %s500, %s500
              $region63: #{transformer_vae_forward.32} parent=59 // loop_header_branch
                %513 = sbr.rel (%p511) target = $region67
              $region64: #{transformer_vae_forward.32} parent=59 // loop_body
                %v517 = vld [vmem:[%s515] sm:%s508]
                %518 = vst [vmem:[%s516] sm:%s508] %v517
                %v519 = vld [vmem:[%s515 + $0x8] sm:%s508]
                %520 = vst [vmem:[%s516 + $0x30] sm:%s508] %v519
                %v521 = vld [vmem:[%s515 + $0x10] sm:%s508]
                %522 = vst [vmem:[%s516 + $0x60] sm:%s508] %v521
                %v523 = vld [vmem:[%s515 + $0x18] sm:%s508]
                %524 = vst [vmem:[%s516 + $0x90] sm:%s508] %v523
              $region65: #{transformer_vae_forward.32} parent=59 // loop_footer
                %s514 = sadd.s32 1, %s510
              $region66: #{transformer_vae_forward.32} parent=59 // loop_footer_branch
                %509 = sbr.rel target = $region62
              $region67: #{transformer_vae_forward.32} parent=59 // loop_exit
                _
            $region60: #{transformer_vae_forward.32} parent=51 // pred_fallthru
              _
          $region52: #{transformer_vae_forward.32} parent=47 // pred_fallthru
            _
          %545 = vnop
        $region48: #{transformer_vae_forward.32} parent=31 // pred_fallthru
          _
      $region32: #{transformer_vae_forward.32} parent=5 // pred_fallthru
        _
      %p546 = scmp.le.s32.totalorder 2, %s12
      // Predicated region
      $region83: #{transformer_vae_forward.32} parent=5 // pred_check
        %p547 = pneg %p546
      $region84: #{transformer_vae_forward.32} parent=5 // pred_check_branch
        %549 = sbr.rel (%p547) target = $region86
      $region85: #{transformer_vae_forward.32} parent=5 // pred_region
        %s550 = ssub.s32 %s12, 2
        // Predicated region
        $region87: #{transformer_vae_forward.32} parent=85 // pred_check
          %p551 = pneg %p144
        $region88: #{transformer_vae_forward.32} parent=85 // pred_check_branch
          %553 = sbr.rel (%p551) target = $region90
        $region89: #{transformer_vae_forward.32} parent=85 // pred_region
          %s554 = sand.u32 %s129, 1
          %s555 = sand.u32 %s129, 1
          %s556 = smul.addr %s555, 32
          %s557 = scalar_lea.vmem [#allocation5], %s556
        $region90: #{transformer_vae_forward.32} parent=85 // pred_fallthru
          _
      $region86: #{transformer_vae_forward.32} parent=5 // pred_fallthru
        _
    $region6: #{transformer_vae_forward.32} parent=1 // loop_footer
      %s16 = sadd.s32 1, %s12
    $region7: #{transformer_vae_forward.32} parent=1 // loop_footer_branch
      %11 = sbr.rel target = $region3
    $region8: #{transformer_vae_forward.32} parent=1 // loop_exit
      _
    %558 = vsyncpa [#allocation4], 1
    %s559 = scalar_lea.sflag [#allocation4], 1
    %560 = vsyncpa %s559, 1

// kernel: transformer_vae_forward.33
$region0: #{transformer_vae_forward.33}
  #allocation0 [shape = 'u32[]', space=smem, size = 0x4, offset = 0x4, fixed_abs, tag = 'smem constant byte address 0x4 - core index']
  #allocation1 [shape = 'u32[72,128]{1,0:T(1,128)}', space=vmem, size = 0x9000, scoped, tag = 'internal scratch']
  %s0 = inlined_call_operand.vmem [shape: bf16[2,16,1536], index: 0, kind: input, shape index: {}]
  %s1 = inlined_call_operand.vmem [shape: bf16[2,16,512], index: 1, kind: output, shape index: {}]
  %s2 = sld [smem:[#allocation0]]
  $region100: #{transformer_vae_forward.33} parent=0
    _
  %s4 = ssub.s32 1, %s2
  %s5 = scalar_select 0, %s4, %s2
  $region1: #{transformer_vae_forward.33} parent=0
    #allocation2 [shape = 'u8[24576]{0}', space=vmem, size = 0x6000, scoped, tag = 'input window, operand 0']
    #allocation3 [shape = 'u8[8192]{0}', space=vmem, size = 0x2000, scoped, tag = 'output window, operand 0']
    loop: start=0, step=1, limit=10
    $region2: #{transformer_vae_forward.33} parent=1 // loop_pre_header
      _
    $region3: #{transformer_vae_forward.33} parent=1 // loop_header
      %s7 = sphi 0, %s11
      %p8 = scmp.ge.s32.totalorder %s7, 10
      %s14 = sphi 0, %s26
      %s15 = sphi 0, %s22
      %s16 = sphi 0, %s14
      %s17 = sphi 0, %s15
      %s18 = sphi 0, %s16
      %s19 = sphi 0, %s17
      %s31 = sphi 0, %s33
      %s34 = sphi 0, %s31
      %s35 = sphi 0, %s34
      %s51 = sphi 0, %s35
      %s59 = sphi 0, %s61
      %s62 = sphi 0, %s59
      %s63 = sphi 0, %s62
      %s79 = sphi 0, %s63
    $region4: #{transformer_vae_forward.33} parent=1 // loop_header_branch
      %10 = sbr.rel (%p8) target = $region8
    $region5: #{transformer_vae_forward.33} parent=1 // loop_body
      %s12 = ssub.s32 %s7, 1
      %s13 = ssub.s32 %s7, 2
      %s20 = sadd.s32 1, %s15
      %p21 = scmp.ge.s32.totalorder %s20, 4
      %s22 = scalar_select %p21, 0, %s20
      %s23 = sadd.s32 1, %s14
      %s24 = scalar_select %p21, %s23, %s14
      %p25 = scmp.ge.s32.totalorder %s24, 2
      %s26 = scalar_select %p25, 0, %s24
      %s27 = ssub.s32 %s14, %s26
      %s28 = ssub.s32 %s15, %s22
      %s29 = sor.u32 %s27, %s28
      %p30 = scmp.eq.s32.totalorder %s29, 0
      %s32 = sadd.s32 %s31, 1
      %s33 = scalar_select %p30, %s31, %s32
      %p36 = pneg %p30
      %p37 = scmp.eq.s32.totalorder %s7, 7
      %p38 = por %p36, %p37
      %p39 = scmp.ne.s32.totalorder %s31, %s34
      %p40 = scmp.eq.s32.totalorder %s7, 0
      %p41 = por %p39, %p40
      %p42 = scmp.ne.s32.totalorder %s31, %s34
      %p43 = scmp.eq.s32.totalorder %s12, 7
      %p44 = por %p42, %p43
      %p45 = scmp.ne.s32.totalorder %s34, %s35
      %p46 = scmp.eq.s32.totalorder %s12, 0
      %p47 = por %p45, %p46
      %p48 = scmp.ne.s32.totalorder %s34, %s35
      %p49 = scmp.eq.s32.totalorder %s13, 7
      %p50 = por %p48, %p49
      %p52 = scmp.ne.s32.totalorder %s35, %s51
      %p53 = scmp.eq.s32.totalorder %s13, 0
      %p54 = por %p52, %p53
      %s55 = ssub.s32 %s14, %s26
      %s56 = ssub.s32 %s15, %s22
      %s57 = sor.u32 %s55, %s56
      %p58 = scmp.eq.s32.totalorder %s57, 0
      %s60 = sadd.s32 %s59, 1
      %s61 = scalar_select %p58, %s59, %s60
      %p64 = pneg %p58
      %p65 = scmp.eq.s32.totalorder %s7, 7
      %p66 = por %p64, %p65
      %p67 = scmp.ne.s32.totalorder %s59, %s62
      %p68 = scmp.eq.s32.totalorder %s7, 0
      %p69 = por %p67, %p68
      %p70 = scmp.ne.s32.totalorder %s59, %s62
      %p71 = scmp.eq.s32.totalorder %s12, 7
      %p72 = por %p70, %p71
      %p73 = scmp.ne.s32.totalorder %s62, %s63
      %p74 = scmp.eq.s32.totalorder %s12, 0
      %p75 = por %p73, %p74
      %p76 = scmp.ne.s32.totalorder %s62, %s63
      %p77 = scmp.eq.s32.totalorder %s13, 7
      %p78 = por %p76, %p77
      %p80 = scmp.ne.s32.totalorder %s63, %s79
      %p81 = scmp.eq.s32.totalorder %s13, 0
      %p82 = por %p80, %p81
      %p83 = scmp.le.s32.totalorder 1, %s7
      %p84 = scmp.lt.s32.totalorder %s7, 9
      %p85 = pnand %p83, %p84
      %p86 = pneg %p85
      // Predicated region
      $region9: #{transformer_vae_forward.33} parent=5 // pred_check
        _
      $region10: #{transformer_vae_forward.33} parent=5 // pred_check_branch
        %88 = sbr.rel (%p85) target = $region12
      $region11: #{transformer_vae_forward.33} parent=5 // pred_region
        %s89 = ssub.s32 %s7, 1
      $region12: #{transformer_vae_forward.33} parent=5 // pred_fallthru
        _
      %p90 = scmp.lt.s32.totalorder %s7, 8
      // Predicated region
      $region13: #{transformer_vae_forward.33} parent=5 // pred_check
        %p91 = pneg %p90
      $region14: #{transformer_vae_forward.33} parent=5 // pred_check_branch
        %93 = sbr.rel (%p91) target = $region16
      $region15: #{transformer_vae_forward.33} parent=5 // pred_region
        // Predicated region
        $region17: #{transformer_vae_forward.33} parent=15 // pred_check
          %p94 = pneg %p41
        $region18: #{transformer_vae_forward.33} parent=15 // pred_check_branch
          %96 = sbr.rel (%p94) target = $region20
        $region19: #{transformer_vae_forward.33} parent=15 // pred_region
          %s97 = sand.u32 %s31, 1
          %s98 = sand.u32 %s31, 1
          %s99 = smul.addr %s98, 24
          %s100 = scalar_lea.vmem [#allocation2], %s99
          %s101 = smul.u32 3, %s15
          %s102 = smul.addr %s14, 24
          %s103 = sadd.s32 %s101, %s102
          %s104 = smul.addr %s103, 4
          %s105 = scalar_lea.vmem %s0, %s104
          // Predicated region
          $region21: #{transformer_vae_forward.33} parent=19 // pred_check
            _
          $region22: #{transformer_vae_forward.33} parent=19 // pred_check_branch
            %107 = sbr.rel (0) target = $region24
          $region23: #{transformer_vae_forward.33} parent=19 // pred_region
            // Predicated region
            $region25: #{transformer_vae_forward.33} parent=23 // pred_check
              _
            $region26: #{transformer_vae_forward.33} parent=23 // pred_check_branch
              %109 = sbr.rel (0) target = $region28
            $region27: #{transformer_vae_forward.33} parent=23 // pred_region
              %s110 = scalar_lea.vmem %s105, 8
              %s111 = scalar_lea.vmem %s100, 8 [#allocation2]
              loop: start=0, step=1, limit=1
              $region29: #{transformer_vae_forward.33} parent=27 // loop_pre_header
                _
              $region30: #{transformer_vae_forward.33} parent=27 // loop_header
                %s113 = sphi 0, %s117
                %p114 = scmp.ge.s32.totalorder %s113, 1
                %s118 = sphi %s105, %s105
                %s119 = sphi %s100, %s100
              $region31: #{transformer_vae_forward.33} parent=27 // loop_header_branch
                %116 = sbr.rel (%p114) target = $region35
              $region32: #{transformer_vae_forward.33} parent=27 // loop_body
                %v120 = vld [vmem:[%s118] sm:$0xff]
                %121 = vst [vmem:[%s119] sm:$0xff] %v120
                %v122 = vld [vmem:[%s118 + $0x30] sm:$0xff]
                %123 = vst [vmem:[%s119 + $0xc] sm:$0xff] %v122
              $region33: #{transformer_vae_forward.33} parent=27 // loop_footer
                %s117 = sadd.s32 1, %s113
              $region34: #{transformer_vae_forward.33} parent=27 // loop_footer_branch
                %112 = sbr.rel target = $region30
              $region35: #{transformer_vae_forward.33} parent=27 // loop_exit
                _
              %s125 = ssub.s32 16, 1
              loop: start=0, step=1, limit=1
              $region36: #{transformer_vae_forward.33} parent=27 // loop_pre_header
                _
              $region37: #{transformer_vae_forward.33} parent=27 // loop_header
                %s127 = sphi 0, %s131
                %p128 = scmp.ge.s32.totalorder %s127, 1
                %s132 = sphi %s110, %s110
                %s133 = sphi %s111, %s111
              $region38: #{transformer_vae_forward.33} parent=27 // loop_header_branch
                %130 = sbr.rel (%p128) target = $region42
              $region39: #{transformer_vae_forward.33} parent=27 // loop_body
                %v134 = vld [vmem:[%s132] sm:%s125]
                %135 = vst [vmem:[%s133] sm:%s125] %v134
                %v136 = vld [vmem:[%s132 + $0x30] sm:%s125]
                %137 = vst [vmem:[%s133 + $0xc] sm:%s125] %v136
              $region40: #{transformer_vae_forward.33} parent=27 // loop_footer
                %s131 = sadd.s32 1, %s127
              $region41: #{transformer_vae_forward.33} parent=27 // loop_footer_branch
                %126 = sbr.rel target = $region37
              $region42: #{transformer_vae_forward.33} parent=27 // loop_exit
                _
            $region28: #{transformer_vae_forward.33} parent=23 // pred_fallthru
              _
          $region24: #{transformer_vae_forward.33} parent=19 // pred_fallthru
            _
          %138 = vnop
        $region20: #{transformer_vae_forward.33} parent=15 // pred_fallthru
          _
      $region16: #{transformer_vae_forward.33} parent=5 // pred_fallthru
        _
      %p139 = scmp.le.s32.totalorder 1, %s7
      %p140 = scmp.lt.s32.totalorder %s7, 9
      %p141 = pnand %p139, %p140
      %p142 = pneg %p141
      // Predicated region
      $region43: #{transformer_vae_forward.33} parent=5 // pred_check
        _
      $region44: #{transformer_vae_forward.33} parent=5 // pred_check_branch
        %144 = sbr.rel (%p141) target = $region46
      $region45: #{transformer_vae_forward.33} parent=5 // pred_region
        %s145 = ssub.s32 %s7, 1
        %s146 = sand.u32 %s34, 1
        %s147 = sand.u32 %s34, 1
        %s148 = smul.addr %s147, 24
        %s149 = scalar_lea.vmem [#allocation2], %s148
        // Predicated region
        $region47: #{transformer_vae_forward.33} parent=45 // pred_check
          %p150 = pneg %p47
        $region48: #{transformer_vae_forward.33} parent=45 // pred_check_branch
          %152 = sbr.rel (%p150) target = $region50
        $region49: #{transformer_vae_forward.33} parent=45 // pred_region
          _
        $region50: #{transformer_vae_forward.33} parent=45 // pred_fallthru
          _
        %s153 = sand.u32 %s34, 1
        %s154 = sand.u32 %s34, 1
        %s155 = smul.addr %s154, 24
        %s156 = scalar_lea.vmem [#allocation2], %s155
        %p157 = pneg %p47
        %p158 = pneg %p44
        %p159 = pneg %p75
        %p160 = pneg %p72
        %s161 = sand.u32 %s62, 1
        %s162 = sand.u32 %s62, 1
        %s163 = smul.addr %s162, 8
        %s164 = scalar_lea.vmem [#allocation3], %s163
        %s165 = smul.u32 3, %s17
        %v167 = vld [vmem:[%s149] sm:$0xff]
        %v168 = vld [vmem:[%s149 + $0x8] sm:$0xf]
        %v169 = vld [vmem:[%s149 + $0xc] sm:$0xff]
        %v170 = vld [vmem:[%s149 + $0x14] sm:$0xf]
        %v173 = vrot.slane %v167, 4
        %v174 = vrot.slane %v169, 4
        %v175 = vunpack.c.l.b16 %v167
        %v176 = vunpack.c.l.b16 %v169
        %v177 = vpack.c.b16 %v176, %v175
        %v179 = vunpack.c.l.b16 %v173
        %v180 = vunpack.c.l.b16 %v174
        %v181 = vpack.c.b16 %v180, %v179
        %183 = vmatpush.bf16.xpose.msra.mxu0 0
        %184 = vmatpush.bf16.xpose.msra.mxu0 0
        %185 = vmatpush.bf16.xpose.msra.mxu0 0
        %186 = vmatpush.bf16.xpose.msra.mxu0 0
        %187 = vmatpush.bf16.xpose.msra.mxu0 0
        %188 = vmatpush.bf16.xpose.msra.mxu0 0
        %189 = vmatpush.bf16.xpose.msra.mxu0 0
        %190 = vmatpush.bf16.xpose.msra.mxu0 %v181
        %191 = vmatmul.bf16.gmra.mxu0 %v177
        %v192 = vpop.f32.mrf.mxu0
        %v193 = vadd.f32 0.0, %v192
        %v194 = vpop.f32.mrf.mxu0
        %v195 = vadd.f32 0.0, %v194
        %196 = vdwg.mxu0
        %v197 = vlaneseq
        %v198 = vand.u32 %v197, 127
        %vm199 = vcmp.ge.s32.totalorder %v198, 9
        %v200 = vsel %vm199, -1e+09, %v193
        %v201 = vsel %vm199, -1e+09, %v195
        %vm202 = vcmask 130048
        %v203 = vsel %vm202, %v200, -inf
        %204 = vmax.xlane.f32.xlu0 %v203
        %v205 = vpop.xlane.xlu0 %204
        %v206 = vsel %vm202, %v201, -inf
        %207 = vmax.xlane.f32.xlu0 %v206
        %v208 = vpop.xlane.xlu0 %207
        %v209 = vsub.f32 %v200, %v205
        %v210 = vsub.f32 %v201, %v208
        %v211 = vmul.f32 %v209, 1.442695
        %v212 = vpow.pop %v211
        %v213 = vmul.f32 %v210, 1.442695
        %v214 = vpow.pop %v213
        %v215 = vsel %vm202, %v212, 0.0
        %216 = vadd.xlane.f32.xlu0 %v215
        %v217 = vpop.xlane.xlu0 %216
        %v218 = vsel %vm202, %v214, 0.0
        %219 = vadd.xlane.f32.xlu0 %v218
        %v220 = vpop.xlane.xlu0 %219
        %v221 = vrcp.pop %v217
        %v222 = vrcp.pop %v220
        %v223 = vmul.f32 %v212, %v221
        %v224 = vmul.f32 %v214, %v222
        %v225 = vpack.c.bf16 %v224, %v223
        %v228 = vunpack.c.l.b16 %v168
        %v229 = vunpack.c.l.b16 %v170
        %v230 = vpack.c.b16 %v229, %v228
        %v233 = vsel %vm202, %v225, 0
        %235 = vmatpush.bf16.msra.mxu0 0
        %236 = vmatpush.bf16.msra.mxu0 0
        %237 = vmatpush.bf16.msra.mxu0 0
        %238 = vmatpush.bf16.msra.mxu0 0
        %239 = vmatpush.bf16.msra.mxu0 0
        %240 = vmatpush.bf16.msra.mxu0 0
        %241 = vmatpush.bf16.msra.mxu0 0
        %242 = vmatpush.bf16.msra.mxu0 %v230
        %243 = vmatmul.bf16.gmra.mxu0 %v233
        %v244 = vpop.f32.mrf.mxu0
        %v245 = vadd.f32 0.0, %v244
        %v246 = vpop.f32.mrf.mxu0
        %v247 = vadd.f32 0.0, %v246
        %248 = vdwg.mxu0
        %v249 = vpack.c.bf16 %v245, %v245
        %v250 = vpack.c.bf16 %v247, %v247
        %251 = vst [vmem:[%s164] sm:$0xf] %v249
        %252 = vst [vmem:[%s164 + $0x4] sm:$0xf] %v250
        %s253 = sand.u32 %s62, 1
        %s254 = sand.u32 %s62, 1
        %s255 = smul.addr %s254, 8
        %s256 = scalar_lea.vmem [#allocation3], %s255
        // Predicated region
        $region51: #{transformer_vae_forward.33} parent=45 // pred_check
          %p257 = pneg %p72
        $region52: #{transformer_vae_forward.33} parent=45 // pred_check_branch
          %259 = sbr.rel (%p257) target = $region54
        $region53: #{transformer_vae_forward.33} parent=45 // pred_region
          %s260 = smul.addr %s16, 8
          %s261 = sadd.s32 %s17, %s260
          %s262 = smul.addr %s261, 4
          %s263 = scalar_lea.vmem %s1, %s262
          // Predicated region
          $region55: #{transformer_vae_forward.33} parent=53 // pred_check
            _
          $region56: #{transformer_vae_forward.33} parent=53 // pred_check_branch
            %265 = sbr.rel (0) target = $region58
          $region57: #{transformer_vae_forward.33} parent=53 // pred_region
            // Predicated region
            $region59: #{transformer_vae_forward.33} parent=57 // pred_check
              _
            $region60: #{transformer_vae_forward.33} parent=57 // pred_check_branch
              %267 = sbr.rel target = $region62
            $region61: #{transformer_vae_forward.33} parent=57 // pred_region
              // Predicated region
              $region74: #{transformer_vae_forward.33} parent=61 // pred_check
                _
              $region75: #{transformer_vae_forward.33} parent=61 // pred_check_branch
                %285 = sbr.rel (0) target = $region77
              $region76: #{transformer_vae_forward.33} parent=61 // pred_region
                loop: start=0, step=1, limit=1
                $region78: #{transformer_vae_forward.33} parent=76 // loop_pre_header
                  _
                $region79: #{transformer_vae_forward.33} parent=76 // loop_header
                  %s287 = sphi 0, %s291
                  %p288 = scmp.ge.s32.totalorder %s287, 1
                  %s292 = sphi %s256, %s256
                  %s293 = sphi %s263, %s263
                $region80: #{transformer_vae_forward.33} parent=76 // loop_header_branch
                  %290 = sbr.rel (%p288) target = $region84
                $region81: #{transformer_vae_forward.33} parent=76 // loop_body
                  _
                $region82: #{transformer_vae_forward.33} parent=76 // loop_footer
                  %s291 = sadd.s32 1, %s287
                $region83: #{transformer_vae_forward.33} parent=76 // loop_footer_branch
                  %286 = sbr.rel target = $region79
                $region84: #{transformer_vae_forward.33} parent=76 // loop_exit
                  _
                %s295 = ssub.s32 16, 1
                loop: start=0, step=1, limit=1
                $region85: #{transformer_vae_forward.33} parent=76 // loop_pre_header
                  _
                $region86: #{transformer_vae_forward.33} parent=76 // loop_header
                  %s297 = sphi 0, %s301
                  %p298 = scmp.ge.s32.totalorder %s297, 1
                  %s302 = sphi %s256, %s256
                  %s303 = sphi %s263, %s263
                $region87: #{transformer_vae_forward.33} parent=76 // loop_header_branch
                  %300 = sbr.rel (%p298) target = $region91
                $region88: #{transformer_vae_forward.33} parent=76 // loop_body
                  %v304 = vld [vmem:[%s302] sm:%s295]
                  %305 = vst [vmem:[%s303] sm:%s295] %v304
                  %v306 = vld [vmem:[%s302 + $0x4] sm:%s295]
                  %307 = vst [vmem:[%s303 + $0x10] sm:%s295] %v306
                $region89: #{transformer_vae_forward.33} parent=76 // loop_footer
                  %s301 = sadd.s32 1, %s297
                $region90: #{transformer_vae_forward.33} parent=76 // loop_footer_branch
                  %296 = sbr.rel target = $region86
                $region91: #{transformer_vae_forward.33} parent=76 // loop_exit
                  _
              $region77: #{transformer_vae_forward.33} parent=61 // pred_fallthru
                _
            $region62: #{transformer_vae_forward.33} parent=57 // pred_fallthru
              _
            // Predicated region
            $region63: #{transformer_vae_forward.33} parent=57 // pred_check
              _
            $region64: #{transformer_vae_forward.33} parent=57 // pred_check_branch
              %269 = sbr.rel (0) target = $region66
            $region65: #{transformer_vae_forward.33} parent=57 // pred_region
              %s271 = ssub.s32 16, 1
              loop: start=0, step=1, limit=1
              $region67: #{transformer_vae_forward.33} parent=65 // loop_pre_header
                _
              $region68: #{transformer_vae_forward.33} parent=65 // loop_header
                %s273 = sphi 0, %s277
                %p274 = scmp.ge.s32.totalorder %s273, 1
                %s278 = sphi %s256, %s256
                %s279 = sphi %s263, %s263
              $region69: #{transformer_vae_forward.33} parent=65 // loop_header_branch
                %276 = sbr.rel (%p274) target = $region73
              $region70: #{transformer_vae_forward.33} parent=65 // loop_body
                %v280 = vld [vmem:[%s278] sm:%s271]
                %281 = vst [vmem:[%s279] sm:%s271] %v280
                %v282 = vld [vmem:[%s278 + $0x4] sm:%s271]
                %283 = vst [vmem:[%s279 + $0x10] sm:%s271] %v282
              $region71: #{transformer_vae_forward.33} parent=65 // loop_footer
                %s277 = sadd.s32 1, %s273
              $region72: #{transformer_vae_forward.33} parent=65 // loop_footer_branch
                %272 = sbr.rel target = $region68
              $region73: #{transformer_vae_forward.33} parent=65 // loop_exit
                _
            $region66: #{transformer_vae_forward.33} parent=57 // pred_fallthru
              _
          $region58: #{transformer_vae_forward.33} parent=53 // pred_fallthru
            _
          %308 = vnop
        $region54: #{transformer_vae_forward.33} parent=45 // pred_fallthru
          _
      $region46: #{transformer_vae_forward.33} parent=5 // pred_fallthru
        _
      %p309 = scmp.le.s32.totalorder 2, %s7
      // Predicated region
      $region92: #{transformer_vae_forward.33} parent=5 // pred_check
        %p310 = pneg %p309
      $region93: #{transformer_vae_forward.33} parent=5 // pred_check_branch
        %312 = sbr.rel (%p310) target = $region95
      $region94: #{transformer_vae_forward.33} parent=5 // pred_region
        %s313 = ssub.s32 %s7, 2
        // Predicated region
        $region96: #{transformer_vae_forward.33} parent=94 // pred_check
          %p314 = pneg %p78
        $region97: #{transformer_vae_forward.33} parent=94 // pred_check_branch
          %316 = sbr.rel (%p314) target = $region99
        $region98: #{transformer_vae_forward.33} parent=94 // pred_region
          %s317 = sand.u32 %s63, 1
          %s318 = sand.u32 %s63, 1
          %s319 = smul.addr %s318, 8
          %s320 = scalar_lea.vmem [#allocation3], %s319
        $region99: #{transformer_vae_forward.33} parent=94 // pred_fallthru
          _
      $region95: #{transformer_vae_forward.33} parent=5 // pred_fallthru
        _
    $region6: #{transformer_vae_forward.33} parent=1 // loop_footer
      %s11 = sadd.s32 1, %s7
    $region7: #{transformer_vae_forward.33} parent=1 // loop_footer_branch
      %6 = sbr.rel target = $region3
    $region8: #{transformer_vae_forward.33} parent=1 // loop_exit
      _

// kernel: transformer_vae_forward.34
$region0: #{transformer_vae_forward.34}
  #allocation0 [shape = 'u32[]', space=smem, size = 0x4, offset = 0x4, fixed_abs, tag = 'smem constant byte address 0x4 - core index']
  #allocation1 [shape = 'u32[72,128]{1,0:T(1,128)}', space=vmem, size = 0x9000, scoped, tag = 'internal scratch']
  #allocation2 [shape = 'f32[32,128]{1,0:T(8,128)}', space=vmem, size = 0x4000, scoped, tag = 'scratch operand']
  %s0 = inlined_call_operand.vmem [shape: bf16[32,512], index: 0, kind: input, shape index: {}]
  %s1 = inlined_call_operand.hbm [shape: bf16[512,128], index: 1, kind: input, shape index: {}]
  %s2 = inlined_call_operand.vmem [shape: f32[1,128], index: 2, kind: input, shape index: {}]
  %s3 = inlined_call_operand.vmem [shape: bf16[32,128], index: 3, kind: input, shape index: {}]
  %s4 = inlined_call_operand.vmem [shape: f32[1,128], index: 4, kind: input, shape index: {}]
  %s5 = inlined_call_operand.vmem [shape: f32[1,128], index: 5, kind: input, shape index: {}]
  %s6 = inlined_call_operand.vmem [shape: bf16[32,128], index: 6, kind: output, shape index: {}]
  %s7 = sld [smem:[#allocation0]]
  $region107: #{transformer_vae_forward.34} parent=0
    _
  %s9 = ssub.s32 1, %s7
  %s10 = scalar_select 0, %s9, %s7
  $region1: #{transformer_vae_forward.34} parent=0
    #allocation3 [shape = 'u8[32768]{0}', space=vmem, size = 0x8000, scoped, tag = 'input window, operand 0']
    #allocation4 [shape = 'u8[131072]{0}', space=vmem, size = 0x20000, scoped, tag = 'input window, operand 1']
    #allocation5 [shape = 's32[2]{0}', space=sflag, size = 0x8, scoped, tag = 'scoped memory for transformer_vae_forward.34']
    %11 = vsyncpa [#allocation5], 0
    %s12 = scalar_lea.sflag [#allocation5], 1
    %13 = vsyncpa %s12, 0
    loop: start=0, step=1, limit=4
    $region2: #{transformer_vae_forward.34} parent=1 // loop_pre_header
      _
    $region3: #{transformer_vae_forward.34} parent=1 // loop_header
      %s15 = sphi 0, %s19
      %p16 = scmp.ge.s32.totalorder %s15, 4
      %s22 = sphi 0, %s41
      %s23 = sphi 0, %s37
      %s24 = sphi 0, %s33
      %s25 = sphi 0, %s22
      %s26 = sphi 0, %s23
      %s27 = sphi 0, %s24
      %s28 = sphi 0, %s25
      %s29 = sphi 0, %s26
      %s30 = sphi 0, %s27
      %s46 = sphi 0, %s48
      %s49 = sphi 0, %s46
      %s50 = sphi 0, %s49
      %s66 = sphi 0, %s50
      %s74 = sphi 0, %s76
      %s77 = sphi 0, %s74
      %s78 = sphi 0, %s77
      %s94 = sphi 0, %s78
      %s100 = sphi 0, %s102
      %s103 = sphi 0, %s100
      %s104 = sphi 0, %s103
      %s120 = sphi 0, %s104
      %s128 = sphi 0, %s130
      %s131 = sphi 0, %s128
      %s132 = sphi 0, %s131
      %s148 = sphi 0, %s132
      %s154 = sphi 0, %s156
      %s157 = sphi 0, %s154
      %s158 = sphi 0, %s157
      %s174 = sphi 0, %s158
      %s180 = sphi 0, %s182
      %s183 = sphi 0, %s180
      %s184 = sphi 0, %s183
      %s200 = sphi 0, %s184
      %s208 = sphi 0, %s210
      %s211 = sphi 0, %s208
      %s212 = sphi 0, %s211
      %s228 = sphi 0, %s212
    $region4: #{transformer_vae_forward.34} parent=1 // loop_header_branch
      %18 = sbr.rel (%p16) target = $region8
    $region5: #{transformer_vae_forward.34} parent=1 // loop_body
      %s20 = ssub.s32 %s15, 1
      %s21 = ssub.s32 %s15, 2
      %s31 = sadd.s32 1, %s24
      %p32 = scmp.ge.s32.totalorder %s31, 2
      %s33 = scalar_select %p32, 0, %s31
      %s34 = sadd.s32 1, %s23
      %s35 = scalar_select %p32, %s34, %s23
      %p36 = scmp.ge.s32.totalorder %s35, 1
      %s37 = scalar_select %p36, 0, %s35
      %s38 = sadd.s32 1, %s22
      %s39 = scalar_select %p36, %s38, %s22
      %p40 = scmp.ge.s32.totalorder %s39, 1
      %s41 = scalar_select %p40, 0, %s39
      %s42 = ssub.s32 %s22, %s41
      %s43 = ssub.s32 %s24, %s33
      %s44 = sor.u32 %s42, %s43
      %p45 = scmp.eq.s32.totalorder %s44, 0
      %s47 = sadd.s32 %s46, 1
      %s48 = scalar_select %p45, %s46, %s47
      %p51 = pneg %p45
      %p52 = scmp.eq.s32.totalorder %s15, 1
      %p53 = por %p51, %p52
      %p54 = scmp.ne.s32.totalorder %s46, %s49
      %p55 = scmp.eq.s32.totalorder %s15, 0
      %p56 = por %p54, %p55
      %p57 = scmp.ne.s32.totalorder %s46, %s49
      %p58 = scmp.eq.s32.totalorder %s20, 1
      %p59 = por %p57, %p58
      %p60 = scmp.ne.s32.totalorder %s49, %s50
      %p61 = scmp.eq.s32.totalorder %s20, 0
      %p62 = por %p60, %p61
      %p63 = scmp.ne.s32.totalorder %s49, %s50
      %p64 = scmp.eq.s32.totalorder %s21, 1
      %p65 = por %p63, %p64
      %p67 = scmp.ne.s32.totalorder %s50, %s66
      %p68 = scmp.eq.s32.totalorder %s21, 0
      %p69 = por %p67, %p68
      %s70 = ssub.s32 %s24, %s33
      %s71 = ssub.s32 %s23, %s37
      %s72 = sor.u32 %s70, %s71
      %p73 = scmp.eq.s32.totalorder %s72, 0
      %s75 = sadd.s32 %s74, 1
      %s76 = scalar_select %p73, %s74, %s75
      %p79 = pneg %p73
      %p80 = scmp.eq.s32.totalorder %s15, 1
      %p81 = por %p79, %p80
      %p82 = scmp.ne.s32.totalorder %s74, %s77
      %p83 = scmp.eq.s32.totalorder %s15, 0
      %p84 = por %p82, %p83
      %p85 = scmp.ne.s32.totalorder %s74, %s77
      %p86 = scmp.eq.s32.totalorder %s20, 1
      %p87 = por %p85, %p86
      %p88 = scmp.ne.s32.totalorder %s77, %s78
      %p89 = scmp.eq.s32.totalorder %s20, 0
      %p90 = por %p88, %p89
      %p91 = scmp.ne.s32.totalorder %s77, %s78
      %p92 = scmp.eq.s32.totalorder %s21, 1
      %p93 = por %p91, %p92
      %p95 = scmp.ne.s32.totalorder %s78, %s94
      %p96 = scmp.eq.s32.totalorder %s21, 0
      %p97 = por %p95, %p96
      %s98 = ssub.s32 %s23, %s37
      %p99 = scmp.eq.s32.totalorder %s98, 0
      %s101 = sadd.s32 %s100, 1
      %s102 = scalar_select %p99, %s100, %s101
      %p105 = pneg %p99
      %p106 = scmp.eq.s32.totalorder %s15, 1
      %p107 = por %p105, %p106
      %p108 = scmp.ne.s32.totalorder %s100, %s103
      %p109 = scmp.eq.s32.totalorder %s15, 0
      %p110 = por %p108, %p109
      %p111 = scmp.ne.s32.totalorder %s100, %s103
      %p112 = scmp.eq.s32.totalorder %s20, 1
      %p113 = por %p111, %p112
      %p114 = scmp.ne.s32.totalorder %s103, %s104
      %p115 = scmp.eq.s32.totalorder %s20, 0
      %p116 = por %p114, %p115
      %p117 = scmp.ne.s32.totalorder %s103, %s104
      %p118 = scmp.eq.s32.totalorder %s21, 1
      %p119 = por %p117, %p118
      %p121 = scmp.ne.s32.totalorder %s104, %s120
      %p122 = scmp.eq.s32.totalorder %s21, 0
      %p123 = por %p121, %p122
      %s124 = ssub.s32 %s22, %s41
      %s125 = ssub.s32 %s23, %s37
      %s126 = sor.u32 %s124, %s125
      %p127 = scmp.eq.s32.totalorder %s126, 0
      %s129 = sadd.s32 %s128, 1
      %s130 = scalar_select %p127, %s128, %s129
      %p133 = pneg %p127
      %p134 = scmp.eq.s32.totalorder %s15, 1
      %p135 = por %p133, %p134
      %p136 = scmp.ne.s32.totalorder %s128, %s131
      %p137 = scmp.eq.s32.totalorder %s15, 0
      %p138 = por %p136, %p137
      %p139 = scmp.ne.s32.totalorder %s128, %s131
      %p140 = scmp.eq.s32.totalorder %s20, 1
      %p141 = por %p139, %p140
      %p142 = scmp.ne.s32.totalorder %s131, %s132
      %p143 = scmp.eq.s32.totalorder %s20, 0
      %p144 = por %p142, %p143
      %p145 = scmp.ne.s32.totalorder %s131, %s132
      %p146 = scmp.eq.s32.totalorder %s21, 1
      %p147 = por %p145, %p146
      %p149 = scmp.ne.s32.totalorder %s132, %s148
      %p150 = scmp.eq.s32.totalorder %s21, 0
      %p151 = por %p149, %p150
      %s152 = ssub.s32 %s23, %s37
      %p153 = scmp.eq.s32.totalorder %s152, 0
      %s155 = sadd.s32 %s154, 1
      %s156 = scalar_select %p153, %s154, %s155
      %p159 = pneg %p153
      %p160 = scmp.eq.s32.totalorder %s15, 1
      %p161 = por %p159, %p160
      %p162 = scmp.ne.s32.totalorder %s154, %s157
      %p163 = scmp.eq.s32.totalorder %s15, 0
      %p164 = por %p162, %p163
      %p165 = scmp.ne.s32.totalorder %s154, %s157
      %p166 = scmp.eq.s32.totalorder %s20, 1
      %p167 = por %p165, %p166
      %p168 = scmp.ne.s32.totalorder %s157, %s158
      %p169 = scmp.eq.s32.totalorder %s20, 0
      %p170 = por %p168, %p169
      %p171 = scmp.ne.s32.totalorder %s157, %s158
      %p172 = scmp.eq.s32.totalorder %s21, 1
      %p173 = por %p171, %p172
      %p175 = scmp.ne.s32.totalorder %s158, %s174
      %p176 = scmp.eq.s32.totalorder %s21, 0
      %p177 = por %p175, %p176
      %s178 = ssub.s32 %s23, %s37
      %p179 = scmp.eq.s32.totalorder %s178, 0
      %s181 = sadd.s32 %s180, 1
      %s182 = scalar_select %p179, %s180, %s181
      %p185 = pneg %p179
      %p186 = scmp.eq.s32.totalorder %s15, 1
      %p187 = por %p185, %p186
      %p188 = scmp.ne.s32.totalorder %s180, %s183
      %p189 = scmp.eq.s32.totalorder %s15, 0
      %p190 = por %p188, %p189
      %p191 = scmp.ne.s32.totalorder %s180, %s183
      %p192 = scmp.eq.s32.totalorder %s20, 1
      %p193 = por %p191, %p192
      %p194 = scmp.ne.s32.totalorder %s183, %s184
      %p195 = scmp.eq.s32.totalorder %s20, 0
      %p196 = por %p194, %p195
      %p197 = scmp.ne.s32.totalorder %s183, %s184
      %p198 = scmp.eq.s32.totalorder %s21, 1
      %p199 = por %p197, %p198
      %p201 = scmp.ne.s32.totalorder %s184, %s200
      %p202 = scmp.eq.s32.totalorder %s21, 0
      %p203 = por %p201, %p202
      %s204 = ssub.s32 %s22, %s41
      %s205 = ssub.s32 %s23, %s37
      %s206 = sor.u32 %s204, %s205
      %p207 = scmp.eq.s32.totalorder %s206, 0
      %s209 = sadd.s32 %s208, 1
      %s210 = scalar_select %p207, %s208, %s209
      %p213 = pneg %p207
      %p214 = scmp.eq.s32.totalorder %s15, 1
      %p215 = por %p213, %p214
      %p216 = scmp.ne.s32.totalorder %s208, %s211
      %p217 = scmp.eq.s32.totalorder %s15, 0
      %p218 = por %p216, %p217
      %p219 = scmp.ne.s32.totalorder %s208, %s211
      %p220 = scmp.eq.s32.totalorder %s20, 1
      %p221 = por %p219, %p220
      %p222 = scmp.ne.s32.totalorder %s211, %s212
      %p223 = scmp.eq.s32.totalorder %s20, 0
      %p224 = por %p222, %p223
      %p225 = scmp.ne.s32.totalorder %s211, %s212
      %p226 = scmp.eq.s32.totalorder %s21, 1
      %p227 = por %p225, %p226
      %p229 = scmp.ne.s32.totalorder %s212, %s228
      %p230 = scmp.eq.s32.totalorder %s21, 0
      %p231 = por %p229, %p230
      %p232 = scmp.le.s32.totalorder 1, %s15
      %p233 = scmp.lt.s32.totalorder %s15, 3
      %p234 = pnand %p232, %p233
      %p235 = pneg %p234
      // Predicated region
      $region9: #{transformer_vae_forward.34} parent=5 // pred_check
        _
      $region10: #{transformer_vae_forward.34} parent=5 // pred_check_branch
        %237 = sbr.rel (%p234) target = $region12
      $region11: #{transformer_vae_forward.34} parent=5 // pred_region
        %s238 = ssub.s32 %s15, 1
        // Predicated region
        $region13: #{transformer_vae_forward.34} parent=11 // pred_check
          %p239 = pneg %p116
        $region14: #{transformer_vae_forward.34} parent=11 // pred_check_branch
          %241 = sbr.rel (%p239) target = $region16
        $region15: #{transformer_vae_forward.34} parent=11 // pred_region
          %p242 = scmp.lt.s32.totalorder %s26, 0
          %s243 = scalar_select %p242, %s26, 0
          %s244 = scalar_lea.vmem %s2, %s243
        $region16: #{transformer_vae_forward.34} parent=11 // pred_fallthru
          _
        // Predicated region
        $region17: #{transformer_vae_forward.34} parent=11 // pred_check
          %p245 = pneg %p144
        $region18: #{transformer_vae_forward.34} parent=11 // pred_check_branch
          %247 = sbr.rel (%p245) target = $region20
        $region19: #{transformer_vae_forward.34} parent=11 // pred_region
          %s248 = smul.u32 4, %s25
          %p249 = scmp.lt.s32.totalorder %s248, 3
          %s250 = scalar_select %p249, %s248, 3
          %p251 = scmp.lt.s32.totalorder %s26, 0
          %s252 = scalar_select %p251, %s26, 0
          %s253 = sadd.s32 %s252, %s250
          %s254 = smul.addr %s253, 4
          %s255 = scalar_lea.vmem %s3, %s254
          %s256 = smul.u32 4, %s25
        $region20: #{transformer_vae_forward.34} parent=11 // pred_fallthru
          _
        // Predicated region
        $region21: #{transformer_vae_forward.34} parent=11 // pred_check
          %p257 = pneg %p170
        $region22: #{transformer_vae_forward.34} parent=11 // pred_check_branch
          %259 = sbr.rel (%p257) target = $region24
        $region23: #{transformer_vae_forward.34} parent=11 // pred_region
          %p260 = scmp.lt.s32.totalorder %s26, 0
          %s261 = scalar_select %p260, %s26, 0
          %s262 = scalar_lea.vmem %s4, %s261
        $region24: #{transformer_vae_forward.34} parent=11 // pred_fallthru
          _
        // Predicated region
        $region25: #{transformer_vae_forward.34} parent=11 // pred_check
          %p263 = pneg %p196
        $region26: #{transformer_vae_forward.34} parent=11 // pred_check_branch
          %265 = sbr.rel (%p263) target = $region28
        $region27: #{transformer_vae_forward.34} parent=11 // pred_region
          %p266 = scmp.lt.s32.totalorder %s26, 0
          %s267 = scalar_select %p266, %s26, 0
          %s268 = scalar_lea.vmem %s5, %s267
        $region28: #{transformer_vae_forward.34} parent=11 // pred_fallthru
          _
      $region12: #{transformer_vae_forward.34} parent=5 // pred_fallthru
        _
      %p269 = scmp.lt.s32.totalorder %s15, 2
      // Predicated region
      $region29: #{transformer_vae_forward.34} parent=5 // pred_check
        %p270 = pneg %p269
      $region30: #{transformer_vae_forward.34} parent=5 // pred_check_branch
        %272 = sbr.rel (%p270) target = $region32
      $region31: #{transformer_vae_forward.34} parent=5 // pred_region
        // Predicated region
        $region33: #{transformer_vae_forward.34} parent=31 // pred_check
          %p273 = pneg %p56
        $region34: #{transformer_vae_forward.34} parent=31 // pred_check_branch
          %275 = sbr.rel (%p273) target = $region36
        $region35: #{transformer_vae_forward.34} parent=31 // pred_region
          %s276 = sand.u32 %s46, 1
          %s277 = sand.u32 %s46, 1
          %s278 = smul.addr %s277, 32
          %s279 = scalar_lea.vmem [#allocation3], %s278
          %s280 = smul.u32 4, %s22
          %s281 = smul.u32 2, %s24
          %s282 = smul.addr %s280, 4
          %s283 = sadd.s32 %s281, %s282
          %s284 = smul.addr %s283, 4
          %s285 = scalar_lea.vmem %s0, %s284
          // Predicated region
          $region37: #{transformer_vae_forward.34} parent=35 // pred_check
            _
          $region38: #{transformer_vae_forward.34} parent=35 // pred_check_branch
            %287 = sbr.rel (0) target = $region40
          $region39: #{transformer_vae_forward.34} parent=35 // pred_region
            // Predicated region
            $region41: #{transformer_vae_forward.34} parent=39 // pred_check
              _
            $region42: #{transformer_vae_forward.34} parent=39 // pred_check_branch
              %289 = sbr.rel (0) target = $region44
            $region43: #{transformer_vae_forward.34} parent=39 // pred_region
              // Predicated region
              $region56: #{transformer_vae_forward.34} parent=43 // pred_check
                _
              $region57: #{transformer_vae_forward.34} parent=43 // pred_check_branch
                %311 = sbr.rel (0) target = $region59
              $region58: #{transformer_vae_forward.34} parent=43 // pred_region
                loop: start=0, step=1, limit=1
                $region60: #{transformer_vae_forward.34} parent=58 // loop_pre_header
                  _
                $region61: #{transformer_vae_forward.34} parent=58 // loop_header
                  %s313 = sphi 0, %s317
                  %p314 = scmp.ge.s32.totalorder %s313, 1
                  %s318 = sphi %s285, %s285
                  %s319 = sphi %s279, %s279
                $region62: #{transformer_vae_forward.34} parent=58 // loop_header_branch
                  %316 = sbr.rel (%p314) target = $region66
                $region63: #{transformer_vae_forward.34} parent=58 // loop_body
                  %v320 = vld [vmem:[%s318] sm:$0xff]
                  %321 = vst [vmem:[%s319] sm:$0xff] %v320
                  %v322 = vld [vmem:[%s318 + $0x10] sm:$0xff]
                  %323 = vst [vmem:[%s319 + $0x8] sm:$0xff] %v322
                  %v324 = vld [vmem:[%s318 + $0x20] sm:$0xff]
                  %325 = vst [vmem:[%s319 + $0x10] sm:$0xff] %v324
                  %v326 = vld [vmem:[%s318 + $0x30] sm:$0xff]
                  %327 = vst [vmem:[%s319 + $0x18] sm:$0xff] %v326
                $region64: #{transformer_vae_forward.34} parent=58 // loop_footer
                  %s317 = sadd.s32 1, %s313
                $region65: #{transformer_vae_forward.34} parent=58 // loop_footer_branch
                  %312 = sbr.rel target = $region61
                $region66: #{transformer_vae_forward.34} parent=58 // loop_exit
                  _
              $region59: #{transformer_vae_forward.34} parent=43 // pred_fallthru
                _
              // Predicated region
              $region67: #{transformer_vae_forward.34} parent=43 // pred_check
                _
              $region68: #{transformer_vae_forward.34} parent=43 // pred_check_branch
                %329 = sbr.rel target = $region70
              $region69: #{transformer_vae_forward.34} parent=43 // pred_region
                _
              $region70: #{transformer_vae_forward.34} parent=43 // pred_fallthru
                _
            $region44: #{transformer_vae_forward.34} parent=39 // pred_fallthru
              _
            // Predicated region
            $region45: #{transformer_vae_forward.34} parent=39 // pred_check
              _
            $region46: #{transformer_vae_forward.34} parent=39 // pred_check_branch
              %291 = sbr.rel target = $region48
            $region47: #{transformer_vae_forward.34} parent=39 // pred_region
              %s293 = ssub.s32 256, 1
              loop: start=0, step=1, limit=1
              $region49: #{transformer_vae_forward.34} parent=47 // loop_pre_header
                _
              $region50: #{transformer_vae_forward.34} parent=47 // loop_header
                %s295 = sphi 0, %s299
                %p296 = scmp.ge.s32.totalorder %s295, 1
                %s300 = sphi %s285, %s285
                %s301 = sphi %s279, %s279
              $region51: #{transformer_vae_forward.34} parent=47 // loop_header_branch
                %298 = sbr.rel (%p296) target = $region55
              $region52: #{transformer_vae_forward.34} parent=47 // loop_body
                %v302 = vld [vmem:[%s300] sm:%s293]
                %303 = vst [vmem:[%s301] sm:%s293] %v302
                %v304 = vld [vmem:[%s300 + $0x10] sm:%s293]
                %305 = vst [vmem:[%s301 + $0x8] sm:%s293] %v304
                %v306 = vld [vmem:[%s300 + $0x20] sm:%s293]
                %307 = vst [vmem:[%s301 + $0x10] sm:%s293] %v306
                %v308 = vld [vmem:[%s300 + $0x30] sm:%s293]
                %309 = vst [vmem:[%s301 + $0x18] sm:%s293] %v308
              $region53: #{transformer_vae_forward.34} parent=47 // loop_footer
                %s299 = sadd.s32 1, %s295
              $region54: #{transformer_vae_forward.34} parent=47 // loop_footer_branch
                %294 = sbr.rel target = $region50
              $region55: #{transformer_vae_forward.34} parent=47 // loop_exit
                _
            $region48: #{transformer_vae_forward.34} parent=39 // pred_fallthru
              _
          $region40: #{transformer_vae_forward.34} parent=35 // pred_fallthru
            _
          %330 = vnop
        $region36: #{transformer_vae_forward.34} parent=31 // pred_fallthru
          _
        // Predicated region
        $region71: #{transformer_vae_forward.34} parent=31 // pred_check
          %p331 = pneg %p84
        $region72: #{transformer_vae_forward.34} parent=31 // pred_check_branch
          %333 = sbr.rel (%p331) target = $region74
        $region73: #{transformer_vae_forward.34} parent=31 // pred_region
          %s334 = sand.u32 %s74, 1
          %s335 = scalar_lea.sflag [#allocation5], %s334
          %s336 = sand.u32 %s74, 1
          %s337 = smul.addr %s336, 128
          %s338 = scalar_lea.vmem [#allocation4], %s337
          %s339 = smul.u32 32, %s24
          %341 = vsyncadd %s335, 0
          %s342 = sadd.s32 %s23, %s339
          %s343 = smul.addr %s342, 4
          %s344 = scalar_lea.hbm %s1, %s343
          %s345 = sshll.u32 %s344, 4
          %s346 = int_to_ptr.hbm [resolvable:$true] %s345
          %s347 = sshll.u32 %s338, 4
          %s348 = int_to_ptr.vmem [resolvable:$true] %s347
          %353 = dma.hbm_to_vmem [thread:$0]  %s346, 2048, %s348, %s335, 64, 64, 4
        $region74: #{transformer_vae_forward.34} parent=31 // pred_fallthru
          _
      $region32: #{transformer_vae_forward.34} parent=5 // pred_fallthru
        _
      %p354 = scmp.le.s32.totalorder 1, %s15
      %p355 = scmp.lt.s32.totalorder %s15, 3
      %p356 = pnand %p354, %p355
      %p357 = pneg %p356
      // Predicated region
      $region75: #{transformer_vae_forward.34} parent=5 // pred_check
        _
      $region76: #{transformer_vae_forward.34} parent=5 // pred_check_branch
        %359 = sbr.rel (%p356) target = $region78
      $region77: #{transformer_vae_forward.34} parent=5 // pred_region
        %s360 = ssub.s32 %s15, 1
        %s361 = sand.u32 %s49, 1
        %s362 = sand.u32 %s49, 1
        %s363 = smul.addr %s362, 32
        %s364 = scalar_lea.vmem [#allocation3], %s363
        // Predicated region
        $region79: #{transformer_vae_forward.34} parent=77 // pred_check
          %p365 = pneg %p62
        $region80: #{transformer_vae_forward.34} parent=77 // pred_check_branch
          %367 = sbr.rel (%p365) target = $region82
        $region81: #{transformer_vae_forward.34} parent=77 // pred_region
          _
        $region82: #{transformer_vae_forward.34} parent=77 // pred_fallthru
          _
        %s368 = sand.u32 %s77, 1
        %s369 = scalar_lea.sflag [#allocation5], %s368
        %s370 = sand.u32 %s77, 1
        %s371 = smul.addr %s370, 128
        %s372 = scalar_lea.vmem [#allocation4], %s371
        // Predicated region
        $region83: #{transformer_vae_forward.34} parent=77 // pred_check
          %p373 = pneg %p90
        $region84: #{transformer_vae_forward.34} parent=77 // pred_check_branch
          %375 = sbr.rel (%p373) target = $region86
        $region85: #{transformer_vae_forward.34} parent=77 // pred_region
          %377 = dma.done %s369, 2048
        $region86: #{transformer_vae_forward.34} parent=77 // pred_fallthru
          _
        %s378 = sand.u32 %s49, 1
        %s379 = sand.u32 %s49, 1
        %s380 = smul.addr %s379, 32
        %s381 = scalar_lea.vmem [#allocation3], %s380
        %p382 = pneg %p62
        %p383 = pneg %p59
        %s384 = sand.u32 %s77, 1
        %s385 = scalar_lea.sflag [#allocation5], %s384
        %s386 = sand.u32 %s77, 1
        %s387 = smul.addr %s386, 128
        %s388 = scalar_lea.vmem [#allocation4], %s387
        %p389 = pneg %p90
        %p390 = pneg %p87
        %p391 = scmp.lt.s32.totalorder %s26, 0
        %s392 = scalar_select %p391, %s26, 0
        %s393 = scalar_lea.vmem %s2, %s392
        %p394 = pneg %p116
        %p395 = pneg %p113
        %s396 = smul.u32 4, %s25
        %p397 = scmp.lt.s32.totalorder %s396, 3
        %s398 = scalar_select %p397, %s396, 3
        %p399 = scmp.lt.s32.totalorder %s26, 0
        %s400 = scalar_select %p399, %s26, 0
        %s401 = sadd.s32 %s400, %s398
        %s402 = smul.addr %s401, 4
        %s403 = scalar_lea.vmem %s3, %s402
        %p404 = pneg %p144
        %p405 = pneg %p141
        %p406 = scmp.lt.s32.totalorder %s26, 0
        %s407 = scalar_select %p406, %s26, 0
        %s408 = scalar_lea.vmem %s4, %s407
        %p409 = pneg %p170
        %p410 = pneg %p167
        %p411 = scmp.lt.s32.totalorder %s26, 0
        %s412 = scalar_select %p411, %s26, 0
        %s413 = scalar_lea.vmem %s5, %s412
        %p414 = pneg %p196
        %p415 = pneg %p193
        %p416 = pneg %p224
        %p417 = pneg %p221
        %s418 = smul.u32 4, %s25
        %p419 = scmp.lt.s32.totalorder %s418, 3
        %s420 = scalar_select %p419, %s418, 3
        %p421 = scmp.lt.s32.totalorder %s26, 0
        %s422 = scalar_select %p421, %s26, 0
        %s423 = sadd.s32 %s422, %s420
        %s424 = smul.addr %s423, 4
        %s425 = scalar_lea.vmem %s6, %s424
        %s426 = smul.u32 4, %s25
        %s427 = smul.u32 2, %s27
        %s428 = smul.u32 32, %s27
        %p429 = scmp.lt.s32.totalorder %s26, 0
        %s430 = scalar_select %p429, %s26, 0
        %s431 = scalar_lea.vmem %s2, %s430
        %s432 = smul.u32 4, %s25
        %p433 = scmp.lt.s32.totalorder %s432, 3
        %s434 = scalar_select %p433, %s432, 3
        %p435 = scmp.lt.s32.totalorder %s26, 0
        %s436 = scalar_select %p435, %s26, 0
        %s437 = sadd.s32 %s436, %s434
        %s438 = smul.addr %s437, 4
        %s439 = scalar_lea.vmem %s3, %s438
        %s440 = smul.u32 4, %s25
        %p441 = scmp.lt.s32.totalorder %s26, 0
        %s442 = scalar_select %p441, %s26, 0
        %s443 = scalar_lea.vmem %s4, %s442
        %p444 = scmp.lt.s32.totalorder %s26, 0
        %s445 = scalar_select %p444, %s26, 0
        %s446 = scalar_lea.vmem %s5, %s445
        %s447 = smul.u32 4, %s25
        %p448 = scmp.lt.s32.totalorder %s447, 3
        %s449 = scalar_select %p448, %s447, 3
        %p450 = scmp.lt.s32.totalorder %s26, 0
        %s451 = scalar_select %p450, %s26, 0
        %s452 = sadd.s32 %s451, %s449
        %s453 = smul.addr %s452, 4
        %s454 = scalar_lea.vmem %s6, %s453
        %s455 = smul.u32 4, %s25
        %p456 = scmp.eq.s32.totalorder %s27, 0
        // Predicated region
        $region87: #{transformer_vae_forward.34} parent=77 // pred_check
          %p457 = pneg %p456
        $region88: #{transformer_vae_forward.34} parent=77 // pred_check_branch
          %459 = sbr.rel (%p457) target = $region90
        $region89: #{transformer_vae_forward.34} parent=77 // pred_region
          %460 = vst [vmem:[#allocation2] sm:$0xff] 0.0
          %461 = vst [vmem:[#allocation2 + $0x8] sm:$0xff] 0.0
          %462 = vst [vmem:[#allocation2 + $0x10] sm:$0xff] 0.0
          %463 = vst [vmem:[#allocation2 + $0x18] sm:$0xff] 0.0
        $region90: #{transformer_vae_forward.34} parent=77 // pred_fallthru
          _
        %v464 = vld [vmem:[#allocation2] sm:$0xff]
        %v465 = vld [vmem:[#allocation2 + $0x8] sm:$0xff]
        %v466 = vld [vmem:[#allocation2 + $0x10] sm:$0xff]
        %v467 = vld [vmem:[#allocation2 + $0x18] sm:$0xff]
        %v468 = vld [vmem:[%s364] sm:$0xff]
        %v469 = vld [vmem:[%s364 + $0x8] sm:$0xff]
        %v470 = vld [vmem:[%s364 + $0x10] sm:$0xff]
        %v471 = vld [vmem:[%s364 + $0x18] sm:$0xff]
        %v472 = vld [vmem:[%s372] sm:$0xf]
        %v473 = vld [vmem:[%s372 + $0x4] sm:$0xf]
        %v474 = vld [vmem:[%s372 + $0x8] sm:$0xf]
        %v475 = vld [vmem:[%s372 + $0xc] sm:$0xf]
        %v476 = vld [vmem:[%s372 + $0x10] sm:$0xf]
        %v477 = vld [vmem:[%s372 + $0x14] sm:$0xf]
        %v478 = vld [vmem:[%s372 + $0x18] sm:$0xf]
        %v479 = vld [vmem:[%s372 + $0x1c] sm:$0xf]
        %v480 = vld [vmem:[%s372 + $0x20] sm:$0xf]
        %v481 = vld [vmem:[%s372 + $0x24] sm:$0xf]
        %v482 = vld [vmem:[%s372 + $0x28] sm:$0xf]
        %v483 = vld [vmem:[%s372 + $0x2c] sm:$0xf]
        %v484 = vld [vmem:[%s372 + $0x30] sm:$0xf]
        %v485 = vld [vmem:[%s372 + $0x34] sm:$0xf]
        %v486 = vld [vmem:[%s372 + $0x38] sm:$0xf]
        %v487 = vld [vmem:[%s372 + $0x3c] sm:$0xf]
        %v488 = vld [vmem:[%s372 + $0x40] sm:$0xf]
        %v489 = vld [vmem:[%s372 + $0x44] sm:$0xf]
        %v490 = vld [vmem:[%s372 + $0x48] sm:$0xf]
        %v491 = vld [vmem:[%s372 + $0x4c] sm:$0xf]
        %v492 = vld [vmem:[%s372 + $0x50] sm:$0xf]
        %v493 = vld [vmem:[%s372 + $0x54] sm:$0xf]
        %v494 = vld [vmem:[%s372 + $0x58] sm:$0xf]
        %v495 = vld [vmem:[%s372 + $0x5c] sm:$0xf]
        %v496 = vld [vmem:[%s372 + $0x60] sm:$0xf]
        %v497 = vld [vmem:[%s372 + $0x64] sm:$0xf]
        %v498 = vld [vmem:[%s372 + $0x68] sm:$0xf]
        %v499 = vld [vmem:[%s372 + $0x6c] sm:$0xf]
        %v500 = vld [vmem:[%s372 + $0x70] sm:$0xf]
        %v501 = vld [vmem:[%s372 + $0x74] sm:$0xf]
        %v502 = vld [vmem:[%s372 + $0x78] sm:$0xf]
        %v503 = vld [vmem:[%s372 + $0x7c] sm:$0xf]
        %v508 = vunpack.c.l.b16 %v468
        %v509 = vunpack.c.h.b16 %v468
        %v510 = vunpack.c.l.b16 %v469
        %v511 = vunpack.c.h.b16 %v469
        %v512 = vunpack.c.l.b16 %v470
        %v513 = vunpack.c.h.b16 %v470
        %v514 = vunpack.c.l.b16 %v471
        %v515 = vunpack.c.h.b16 %v471
        %v516 = vpack.c.b16 %v510, %v508
        %v517 = vpack.c.b16 %v511, %v509
        %v518 = vpack.c.b16 %v514, %v512
        %v519 = vpack.c.b16 %v515, %v513
        %v556 = vunpack.c.l.b16 %v472
        %v557 = vunpack.c.l.b16 %v473
        %v558 = vunpack.c.l.b16 %v474
        %v559 = vunpack.c.l.b16 %v475
        %v560 = vunpack.c.l.b16 %v476
        %v561 = vunpack.c.l.b16 %v477
        %v562 = vunpack.c.l.b16 %v478
        %v563 = vunpack.c.l.b16 %v479
        %v564 = vunpack.c.l.b16 %v480
        %v565 = vunpack.c.l.b16 %v481
        %v566 = vunpack.c.l.b16 %v482
        %v567 = vunpack.c.l.b16 %v483
        %v568 = vunpack.c.l.b16 %v484
        %v569 = vunpack.c.l.b16 %v485
        %v570 = vunpack.c.l.b16 %v486
        %v571 = vunpack.c.l.b16 %v487
        %v572 = vunpack.c.l.b16 %v488
        %v573 = vunpack.c.l.b16 %v489
        %v574 = vunpack.c.l.b16 %v490
        %v575 = vunpack.c.l.b16 %v491
        %v576 = vunpack.c.l.b16 %v492
        %v577 = vunpack.c.l.b16 %v493
        %v578 = vunpack.c.l.b16 %v494
        %v579 = vunpack.c.l.b16 %v495
        %v580 = vunpack.c.l.b16 %v496
        %v581 = vunpack.c.l.b16 %v497
        %v582 = vunpack.c.l.b16 %v498
        %v583 = vunpack.c.l.b16 %v499
        %v584 = vunpack.c.l.b16 %v500
        %v585 = vunpack.c.l.b16 %v501
        %v586 = vunpack.c.l.b16 %v502
        %v587 = vunpack.c.l.b16 %v503
        %v588 = vpack.c.b16 %v557, %v556
        %v589 = vpack.c.b16 %v559, %v558
        %v590 = vpack.c.b16 %v561, %v560
        %v591 = vpack.c.b16 %v563, %v562
        %v592 = vpack.c.b16 %v565, %v564
        %v593 = vpack.c.b16 %v567, %v566
        %v594 = vpack.c.b16 %v569, %v568
        %v595 = vpack.c.b16 %v571, %v570
        %v596 = vpack.c.b16 %v573, %v572
        %v597 = vpack.c.b16 %v575, %v574
        %v598 = vpack.c.b16 %v577, %v576
        %v599 = vpack.c.b16 %v579, %v578
        %v600 = vpack.c.b16 %v581, %v580
        %v601 = vpack.c.b16 %v583, %v582
        %v602 = vpack.c.b16 %v585, %v584
        %v603 = vpack.c.b16 %v587, %v586
        %620 = vmatpush.bf16.msra.mxu0 %v595
        %621 = vmatpush.bf16.msra.mxu0 %v594
        %622 = vmatpush.bf16.msra.mxu0 %v593
        %623 = vmatpush.bf16.msra.mxu0 %v592
        %624 = vmatpush.bf16.msra.mxu0 %v591
        %625 = vmatpush.bf16.msra.mxu0 %v590
        %626 = vmatpush.bf16.msra.mxu0 %v589
        %627 = vmatpush.bf16.msra.mxu0 %v588
        %628 = vmatmul.bf16.gmra.mxu0 %v516
        %v629 = vpop.f32.mrf.mxu0
        %v630 = vadd.f32 0.0, %v629
        %v631 = vpop.f32.mrf.mxu0
        %v632 = vadd.f32 0.0, %v631
        %633 = vmatmul.bf16.gmra.mxu0 %v518
        %v634 = vpop.f32.mrf.mxu0
        %v635 = vadd.f32 0.0, %v634
        %v636 = vpop.f32.mrf.mxu0
        %v637 = vadd.f32 0.0, %v636
        %638 = vdwg.mxu0
        %639 = vmatpush.bf16.msra.mxu0 %v603
        %640 = vmatpush.bf16.msra.mxu0 %v602
        %641 = vmatpush.bf16.msra.mxu0 %v601
        %642 = vmatpush.bf16.msra.mxu0 %v600
        %643 = vmatpush.bf16.msra.mxu0 %v599
        %644 = vmatpush.bf16.msra.mxu0 %v598
        %645 = vmatpush.bf16.msra.mxu0 %v597
        %646 = vmatpush.bf16.msra.mxu0 %v596
        %647 = vmatmul.bf16.gmra.mxu0 %v517
        %v648 = vpop.f32.mrf.mxu0
        %v649 = vadd.f32 %v630, %v648
        %v650 = vpop.f32.mrf.mxu0
        %v651 = vadd.f32 %v632, %v650
        %652 = vmatmul.bf16.gmra.mxu0 %v519
        %v653 = vpop.f32.mrf.mxu0
        %v654 = vadd.f32 %v635, %v653
        %v655 = vpop.f32.mrf.mxu0
        %v656 = vadd.f32 %v637, %v655
        %657 = vdwg.mxu0
        %v658 = vadd.f32 %v464, %v649
        %v659 = vadd.f32 %v465, %v651
        %v660 = vadd.f32 %v466, %v654
        %v661 = vadd.f32 %v467, %v656
        %662 = vst [vmem:[#allocation2] sm:$0xff] %v658
        %663 = vst [vmem:[#allocation2 + $0x8] sm:$0xff] %v659
        %664 = vst [vmem:[#allocation2 + $0x10] sm:$0xff] %v660
        %665 = vst [vmem:[#allocation2 + $0x18] sm:$0xff] %v661
        %p666 = scmp.eq.s32.totalorder %s27, 1
        // Predicated region
        $region91: #{transformer_vae_forward.34} parent=77 // pred_check
          %p667 = pneg %p666
        $region92: #{transformer_vae_forward.34} parent=77 // pred_check_branch
          %669 = sbr.rel (%p667) target = $region94
        $region93: #{transformer_vae_forward.34} parent=77 // pred_region
          %v670 = vld [vmem:[#allocation2] sm:$0xff]
          %v671 = vld [vmem:[#allocation2 + $0x8] sm:$0xff]
          %v672 = vld [vmem:[#allocation2 + $0x10] sm:$0xff]
          %v673 = vld [vmem:[#allocation2 + $0x18] sm:$0xff]
          %v674 = vld [vmem:[%s431] sm:$0x1]
          %v676 = vperm.slane %v674, 0
          %v678 = vadd.f32 %v670, %v676
          %v679 = vadd.f32 %v671, %v676
          %v680 = vadd.f32 %v672, %v676
          %v681 = vadd.f32 %v673, %v676
          %v682 = vld [vmem:[%s439] sm:$0xf]
          %v683 = vld [vmem:[%s439 + $0x4] sm:$0xf]
          %v684 = vld [vmem:[%s439 + $0x8] sm:$0xf]
          %v685 = vld [vmem:[%s439 + $0xc] sm:$0xf]
          %v686 = vunpack.c.l.bf16 %v682
          %v687 = vunpack.c.l.bf16 %v683
          %v688 = vunpack.c.l.bf16 %v684
          %v689 = vunpack.c.l.bf16 %v685
          %v690 = vadd.f32 %v678, %v686
          %v691 = vadd.f32 %v679, %v687
          %v692 = vadd.f32 %v680, %v688
          %v693 = vadd.f32 %v681, %v689
          %v694 = vlaneseq
          %v695 = vand.u32 %v694, 127
          %vm696 = vcmp.lt.s32.totalorder %v695, 32
          %v697 = vsel %vm696, %v690, 0.0
          %v698 = vsel %vm696, %v691, 0.0
          %v699 = vsel %vm696, %v692, 0.0
          %v700 = vsel %vm696, %v693, 0.0
          %701 = vadd.xlane.f32.xlu0 %v697
          %v702 = vpop.xlane.xlu0 %701
          %703 = vadd.xlane.f32.xlu0 %v698
          %v704 = vpop.xlane.xlu0 %703
          %705 = vadd.xlane.f32.xlu0 %v699
          %v706 = vpop.xlane.xlu0 %705
          %707 = vadd.xlane.f32.xlu0 %v700
          %v708 = vpop.xlane.xlu0 %707
          %v709 = vmul.f32 %v702, 0.03125
          %v710 = vmul.f32 %v704, 0.03125
          %v711 = vmul.f32 %v706, 0.03125
          %v712 = vmul.f32 %v708, 0.03125
          %v713 = vsub.f32 %v690, %v709
          %v714 = vsub.f32 %v691, %v710
          %v715 = vsub.f32 %v692, %v711
          %v716 = vsub.f32 %v693, %v712
          %v717 = vsel %vm696, %v713, 0.0
          %v718 = vsel %vm696, %v714, 0.0
          %v719 = vsel %vm696, %v715, 0.0
          %v720 = vsel %vm696, %v716, 0.0
          %v721 = vmul.f32 %v717, %v717
          %v722 = vmul.f32 %v718, %v718
          %v723 = vmul.f32 %v719, %v719
          %v724 = vmul.f32 %v720, %v720
          %725 = vadd.xlane.f32.xlu0 %v721
          %v726 = vpop.xlane.xlu0 %725
          %727 = vadd.xlane.f32.xlu0 %v722
          %v728 = vpop.xlane.xlu0 %727
          %729 = vadd.xlane.f32.xlu0 %v723
          %v730 = vpop.xlane.xlu0 %729
          %731 = vadd.xlane.f32.xlu0 %v724
          %v732 = vpop.xlane.xlu0 %731
          %v733 = vmul.f32 %v726, 0.03125
          %v734 = vmul.f32 %v728, 0.03125
          %v735 = vmul.f32 %v730, 0.03125
          %v736 = vmul.f32 %v732, 0.03125
          %v737 = vadd.f32 %v733, 1e-05
          %v738 = vadd.f32 %v734, 1e-05
          %v739 = vadd.f32 %v735, 1e-05
          %v740 = vadd.f32 %v736, 1e-05
          %v741 = vrsqrt.pop %v737
          %v742 = vmul.f32 %v741, %v737
          %v743 = vmul.f32 %v742, %v741
          %v744 = vmul.f32 0.5, %v743
          %v745 = vsub.f32 1.5, %v744
          %v746 = vmul.f32 %v741, %v745
          %vm747 = vweird.f32 %v737
          %vm748 = vweird.f32 %v741
          %vm749 = vmor %vm747, %vm748
          %v750 = vsel %vm749, %v741, %v746
          %v751 = vrsqrt.pop %v738
          %v752 = vmul.f32 %v751, %v738
          %v753 = vmul.f32 %v752, %v751
          %v754 = vmul.f32 0.5, %v753
          %v755 = vsub.f32 1.5, %v754
          %v756 = vmul.f32 %v751, %v755
          %vm757 = vweird.f32 %v738
          %vm758 = vweird.f32 %v751
          %vm759 = vmor %vm757, %vm758
          %v760 = vsel %vm759, %v751, %v756
          %v761 = vrsqrt.pop %v739
          %v762 = vmul.f32 %v761, %v739
          %v763 = vmul.f32 %v762, %v761
          %v764 = vmul.f32 0.5, %v763
          %v765 = vsub.f32 1.5, %v764
          %v766 = vmul.f32 %v761, %v765
          %vm767 = vweird.f32 %v739
          %vm768 = vweird.f32 %v761
          %vm769 = vmor %vm767, %vm768
          %v770 = vsel %vm769, %v761, %v766
          %v771 = vrsqrt.pop %v740
          %v772 = vmul.f32 %v771, %v740
          %v773 = vmul.f32 %v772, %v771
          %v774 = vmul.f32 0.5, %v773
          %v775 = vsub.f32 1.5, %v774
          %v776 = vmul.f32 %v771, %v775
          %vm777 = vweird.f32 %v740
          %vm778 = vweird.f32 %v771
          %vm779 = vmor %vm777, %vm778
          %v780 = vsel %vm779, %v771, %v776
          %v781 = vmul.f32 %v717, %v750
          %v782 = vmul.f32 %v718, %v760
          %v783 = vmul.f32 %v719, %v770
          %v784 = vmul.f32 %v720, %v780
          %v785 = vld [vmem:[%s443] sm:$0x1]
          %v787 = vperm.slane %v785, 0
          %v789 = vmul.f32 %v781, %v787
          %v790 = vmul.f32 %v782, %v787
          %v791 = vmul.f32 %v783, %v787
          %v792 = vmul.f32 %v784, %v787
          %v793 = vld [vmem:[%s446] sm:$0x1]
          %v795 = vperm.slane %v793, 0
          %v797 = vadd.f32 %v789, %v795
          %v798 = vadd.f32 %v790, %v795
          %v799 = vadd.f32 %v791, %v795
          %v800 = vadd.f32 %v792, %v795
          %v801 = vpack.c.bf16 %v797, %v797
          %v802 = vpack.c.bf16 %v798, %v798
          %v803 = vpack.c.bf16 %v799, %v799
          %v804 = vpack.c.bf16 %v800, %v800
          %805 = vst [vmem:[%s454] sm:$0xf] %v801
          %806 = vst [vmem:[%s454 + $0x4] sm:$0xf] %v802
          %807 = vst [vmem:[%s454 + $0x8] sm:$0xf] %v803
          %808 = vst [vmem:[%s454 + $0xc] sm:$0xf] %v804
        $region94: #{transformer_vae_forward.34} parent=77 // pred_fallthru
          _
        %s809 = smul.u32 4, %s25
        %p810 = scmp.lt.s32.totalorder %s809, 3
        %s811 = scalar_select %p810, %s809, 3
        %p812 = scmp.lt.s32.totalorder %s26, 0
        %s813 = scalar_select %p812, %s26, 0
        %s814 = sadd.s32 %s813, %s811
        %s815 = smul.addr %s814, 4
        %s816 = scalar_lea.vmem %s6, %s815
        // Predicated region
        $region95: #{transformer_vae_forward.34} parent=77 // pred_check
          %p817 = pneg %p221
        $region96: #{transformer_vae_forward.34} parent=77 // pred_check_branch
          %819 = sbr.rel (%p817) target = $region98
        $region97: #{transformer_vae_forward.34} parent=77 // pred_region
          %s820 = smul.u32 4, %s25
        $region98: #{transformer_vae_forward.34} parent=77 // pred_fallthru
          _
        // Predicated region
        $region99: #{transformer_vae_forward.34} parent=77 // pred_check
          %p821 = pneg %p221
        $region100: #{transformer_vae_forward.34} parent=77 // pred_check_branch
          %823 = sbr.rel (%p821) target = $region102
        $region101: #{transformer_vae_forward.34} parent=77 // pred_region
          %s824 = smul.u32 4, %s25
          %p825 = scmp.lt.s32.totalorder %s824, 3
          %s826 = scalar_select %p825, %s824, 3
          %p827 = scmp.lt.s32.totalorder %s26, 0
          %s828 = scalar_select %p827, %s26, 0
          %s829 = sadd.s32 %s828, %s826
          %s830 = smul.addr %s829, 4
          %s831 = scalar_lea.vmem %s6, %s830
        $region102: #{transformer_vae_forward.34} parent=77 // pred_fallthru
          _
      $region78: #{transformer_vae_forward.34} parent=5 // pred_fallthru
        _
      %p832 = scmp.le.s32.totalorder 2, %s15
      // Predicated region
      $region103: #{transformer_vae_forward.34} parent=5 // pred_check
        %p833 = pneg %p832
      $region104: #{transformer_vae_forward.34} parent=5 // pred_check_branch
        %835 = sbr.rel (%p833) target = $region106
      $region105: #{transformer_vae_forward.34} parent=5 // pred_region
        %s836 = ssub.s32 %s15, 2
      $region106: #{transformer_vae_forward.34} parent=5 // pred_fallthru
        _
    $region6: #{transformer_vae_forward.34} parent=1 // loop_footer
      %s19 = sadd.s32 1, %s15
    $region7: #{transformer_vae_forward.34} parent=1 // loop_footer_branch
      %14 = sbr.rel target = $region3
    $region8: #{transformer_vae_forward.34} parent=1 // loop_exit
      _
    %837 = vsyncpa [#allocation5], 1
    %s838 = scalar_lea.sflag [#allocation5], 1
    %839 = vsyncpa %s838, 1

// kernel: transformer_vae_forward.35
$region0: #{transformer_vae_forward.35}
  #allocation0 [shape = 'u32[]', space=smem, size = 0x4, offset = 0x4, fixed_abs, tag = 'smem constant byte address 0x4 - core index']
  #allocation1 [shape = 'u32[72,128]{1,0:T(1,128)}', space=vmem, size = 0x9000, scoped, tag = 'internal scratch']
  #allocation2 [shape = 'f32[32,128]{1,0:T(8,128)}', space=vmem, size = 0x4000, scoped, tag = 'scratch operand']
  %s0 = inlined_call_operand.vmem [shape: bf16[32,128], index: 0, kind: input, shape index: {}]
  %s1 = inlined_call_operand.hbm [shape: bf16[128,128], index: 1, kind: input, shape index: {}]
  %s2 = inlined_call_operand.vmem [shape: f32[1,128], index: 2, kind: input, shape index: {}]
  %s3 = inlined_call_operand.vmem [shape: bf16[32,128], index: 3, kind: output, shape index: {}]
  %s4 = sld [smem:[#allocation0]]
  $region34: #{transformer_vae_forward.35} parent=0
    _
  %s6 = ssub.s32 1, %s4
  %s7 = scalar_select 0, %s6, %s4
  $region1: #{transformer_vae_forward.35} parent=0
    #allocation3 [shape = 'u8[32768]{0}', space=vmem, size = 0x8000, scoped, tag = 'input window, operand 1, single buffered']
    #allocation4 [shape = 's32[1]{0}', space=sflag, size = 0x4, scoped, tag = 'scoped memory for transformer_vae_forward.35']
    %8 = vsyncpa [#allocation4], 0
    // Predicated region
    $region2: #{transformer_vae_forward.35} parent=1 // pred_check
      _
    $region3: #{transformer_vae_forward.35} parent=1 // pred_check_branch
      %10 = sbr.rel (0) target = $region5
    $region4: #{transformer_vae_forward.35} parent=1 // pred_region
      _
    $region5: #{transformer_vae_forward.35} parent=1 // pred_fallthru
      _
    // Predicated region
    $region6: #{transformer_vae_forward.35} parent=1 // pred_check
      _
    $region7: #{transformer_vae_forward.35} parent=1 // pred_check_branch
      %12 = sbr.rel (0) target = $region9
    $region8: #{transformer_vae_forward.35} parent=1 // pred_region
      %14 = vsyncadd [#allocation4], 0
      %s15 = sshll.u32 %s1, 4
      %s16 = int_to_ptr.hbm [resolvable:$true] %s15
      %s17 = sshll.u32 [#allocation3], 4
      %s18 = int_to_ptr.vmem [resolvable:$true] %s17
      %23 = dma.hbm_to_vmem [thread:$0]  %s16, 1024, %s18, [#allocation4], 64, 64, 4
    $region9: #{transformer_vae_forward.35} parent=1 // pred_fallthru
      _
    // Predicated region
    $region10: #{transformer_vae_forward.35} parent=1 // pred_check
      _
    $region11: #{transformer_vae_forward.35} parent=1 // pred_check_branch
      %25 = sbr.rel (0) target = $region13
    $region12: #{transformer_vae_forward.35} parent=1 // pred_region
      _
    $region13: #{transformer_vae_forward.35} parent=1 // pred_fallthru
      _
    // Predicated region
    $region14: #{transformer_vae_forward.35} parent=1 // pred_check
      _
    $region15: #{transformer_vae_forward.35} parent=1 // pred_check_branch
      %27 = sbr.rel (0) target = $region17
    $region16: #{transformer_vae_forward.35} parent=1 // pred_region
      %29 = dma.done [#allocation4], 1024
    $region17: #{transformer_vae_forward.35} parent=1 // pred_fallthru
      _
    %p30 = scmp.eq.s32.totalorder 0, 0
    // Predicated region
    $region18: #{transformer_vae_forward.35} parent=1 // pred_check
      %p31 = pneg %p30
    $region19: #{transformer_vae_forward.35} parent=1 // pred_check_branch
      %33 = sbr.rel (%p31) target = $region21
    $region20: #{transformer_vae_forward.35} parent=1 // pred_region
      %34 = vst [vmem:[#allocation2] sm:$0xff] 0.0
      %35 = vst [vmem:[#allocation2 + $0x8] sm:$0xff] 0.0
      %36 = vst [vmem:[#allocation2 + $0x10] sm:$0xff] 0.0
      %37 = vst [vmem:[#allocation2 + $0x18] sm:$0xff] 0.0
    $region21: #{transformer_vae_forward.35} parent=1 // pred_fallthru
      _
    %v38 = vld [vmem:[#allocation2] sm:$0xff]
    %v39 = vld [vmem:[#allocation2 + $0x8] sm:$0xff]
    %v40 = vld [vmem:[#allocation2 + $0x10] sm:$0xff]
    %v41 = vld [vmem:[#allocation2 + $0x18] sm:$0xff]
    %v42 = vld [vmem:[%s0] sm:$0xf]
    %v43 = vld [vmem:[%s0 + $0x4] sm:$0xf]
    %v44 = vld [vmem:[%s0 + $0x8] sm:$0xf]
    %v45 = vld [vmem:[%s0 + $0xc] sm:$0xf]
    %v46 = vld [vmem:[#allocation3] sm:$0xf]
    %v47 = vld [vmem:[#allocation3 + $0x4] sm:$0xf]
    %v48 = vld [vmem:[#allocation3 + $0x8] sm:$0xf]
    %v49 = vld [vmem:[#allocation3 + $0xc] sm:$0xf]
    %v50 = vld [vmem:[#allocation3 + $0x10] sm:$0xf]
    %v51 = vld [vmem:[#allocation3 + $0x14] sm:$0xf]
    %v52 = vld [vmem:[#allocation3 + $0x18] sm:$0xf]
    %v53 = vld [vmem:[#allocation3 + $0x1c] sm:$0xf]
    %v54 = vld [vmem:[#allocation3 + $0x20] sm:$0xf]
    %v55 = vld [vmem:[#allocation3 + $0x24] sm:$0xf]
    %v56 = vld [vmem:[#allocation3 + $0x28] sm:$0xf]
    %v57 = vld [vmem:[#allocation3 + $0x2c] sm:$0xf]
    %v58 = vld [vmem:[#allocation3 + $0x30] sm:$0xf]
    %v59 = vld [vmem:[#allocation3 + $0x34] sm:$0xf]
    %v60 = vld [vmem:[#allocation3 + $0x38] sm:$0xf]
    %v61 = vld [vmem:[#allocation3 + $0x3c] sm:$0xf]
    %v66 = vunpack.c.l.b16 %v42
    %v67 = vunpack.c.l.b16 %v43
    %v68 = vunpack.c.l.b16 %v44
    %v69 = vunpack.c.l.b16 %v45
    %v70 = vpack.c.b16 %v67, %v66
    %v71 = vpack.c.b16 %v69, %v68
    %v90 = vunpack.c.l.b16 %v46
    %v91 = vunpack.c.l.b16 %v47
    %v92 = vunpack.c.l.b16 %v48
    %v93 = vunpack.c.l.b16 %v49
    %v94 = vunpack.c.l.b16 %v50
    %v95 = vunpack.c.l.b16 %v51
    %v96 = vunpack.c.l.b16 %v52
    %v97 = vunpack.c.l.b16 %v53
    %v98 = vunpack.c.l.b16 %v54
    %v99 = vunpack.c.l.b16 %v55
    %v100 = vunpack.c.l.b16 %v56
    %v101 = vunpack.c.l.b16 %v57
    %v102 = vunpack.c.l.b16 %v58
    %v103 = vunpack.c.l.b16 %v59
    %v104 = vunpack.c.l.b16 %v60
    %v105 = vunpack.c.l.b16 %v61
    %v106 = vpack.c.b16 %v91, %v90
    %v107 = vpack.c.b16 %v93, %v92
    %v108 = vpack.c.b16 %v95, %v94
    %v109 = vpack.c.b16 %v97, %v96
    %v110 = vpack.c.b16 %v99, %v98
    %v111 = vpack.c.b16 %v101, %v100
    %v112 = vpack.c.b16 %v103, %v102
    %v113 = vpack.c.b16 %v105, %v104
    %122 = vmatpush.bf16.msra.mxu0 %v113
    %123 = vmatpush.bf16.msra.mxu0 %v112
    %124 = vmatpush.bf16.msra.mxu0 %v111
    %125 = vmatpush.bf16.msra.mxu0 %v110
    %126 = vmatpush.bf16.msra.mxu0 %v109
    %127 = vmatpush.bf16.msra.mxu0 %v108
    %128 = vmatpush.bf16.msra.mxu0 %v107
    %129 = vmatpush.bf16.msra.mxu0 %v106
    %130 = vmatmul.bf16.gmra.mxu0 %v70
    %v131 = vpop.f32.mrf.mxu0
    %v132 = vadd.f32 0.0, %v131
    %v133 = vpop.f32.mrf.mxu0
    %v134 = vadd.f32 0.0, %v133
    %135 = vmatmul.bf16.gmra.mxu0 %v71
    %v136 = vpop.f32.mrf.mxu0
    %v137 = vadd.f32 0.0, %v136
    %v138 = vpop.f32.mrf.mxu0
    %v139 = vadd.f32 0.0, %v138
    %140 = vdwg.mxu0
    %v141 = vadd.f32 %v38, %v132
    %v142 = vadd.f32 %v39, %v134
    %v143 = vadd.f32 %v40, %v137
    %v144 = vadd.f32 %v41, %v139
    %145 = vst [vmem:[#allocation2] sm:$0xff] %v141
    %146 = vst [vmem:[#allocation2 + $0x8] sm:$0xff] %v142
    %147 = vst [vmem:[#allocation2 + $0x10] sm:$0xff] %v143
    %148 = vst [vmem:[#allocation2 + $0x18] sm:$0xff] %v144
    // Predicated region
    $region22: #{transformer_vae_forward.35} parent=1 // pred_check
      %p149 = pneg %p30
    $region23: #{transformer_vae_forward.35} parent=1 // pred_check_branch
      %151 = sbr.rel (%p149) target = $region25
    $region24: #{transformer_vae_forward.35} parent=1 // pred_region
      %v152 = vld [vmem:[#allocation2] sm:$0xff]
      %v153 = vld [vmem:[#allocation2 + $0x8] sm:$0xff]
      %v154 = vld [vmem:[#allocation2 + $0x10] sm:$0xff]
      %v155 = vld [vmem:[#allocation2 + $0x18] sm:$0xff]
      %v156 = vld [vmem:[%s2] sm:$0x1]
      %v158 = vperm.slane %v156, 0
      %v160 = vadd.f32 %v152, %v158
      %v161 = vadd.f32 %v153, %v158
      %v162 = vadd.f32 %v154, %v158
      %v163 = vadd.f32 %v155, %v158
      %v164 = vmax.f32 %v160, 0.0
      %v165 = vmax.f32 %v161, 0.0
      %v166 = vmax.f32 %v162, 0.0
      %v167 = vmax.f32 %v163, 0.0
      %v168 = vpack.c.bf16 %v164, %v164
      %v169 = vpack.c.bf16 %v165, %v165
      %v170 = vpack.c.bf16 %v166, %v166
      %v171 = vpack.c.bf16 %v167, %v167
      %172 = vst [vmem:[%s3] sm:$0xf] %v168
      %173 = vst [vmem:[%s3 + $0x4] sm:$0xf] %v169
      %174 = vst [vmem:[%s3 + $0x8] sm:$0xf] %v170
      %175 = vst [vmem:[%s3 + $0xc] sm:$0xf] %v171
    $region25: #{transformer_vae_forward.35} parent=1 // pred_fallthru
      _
    // Predicated region
    $region26: #{transformer_vae_forward.35} parent=1 // pred_check
      _
    $region27: #{transformer_vae_forward.35} parent=1 // pred_check_branch
      %177 = sbr.rel (0) target = $region29
    $region28: #{transformer_vae_forward.35} parent=1 // pred_region
      _
    $region29: #{transformer_vae_forward.35} parent=1 // pred_fallthru
      _
    // Predicated region
    $region30: #{transformer_vae_forward.35} parent=1 // pred_check
      _
    $region31: #{transformer_vae_forward.35} parent=1 // pred_check_branch
      %179 = sbr.rel (0) target = $region33
    $region32: #{transformer_vae_forward.35} parent=1 // pred_region
      _
    $region33: #{transformer_vae_forward.35} parent=1 // pred_fallthru
      _
    %180 = vsyncpa [#allocation4], 1

// kernel: transformer_vae_forward.36
$region0: #{transformer_vae_forward.36}
  #allocation0 [shape = 'u32[]', space=smem, size = 0x4, offset = 0x4, fixed_abs, tag = 'smem constant byte address 0x4 - core index']
  #allocation1 [shape = 'u32[72,128]{1,0:T(1,128)}', space=vmem, size = 0x9000, scoped, tag = 'internal scratch']
  #allocation2 [shape = 'f32[32,128]{1,0:T(8,128)}', space=vmem, size = 0x4000, scoped, tag = 'scratch operand']
  %s0 = inlined_call_operand.vmem [shape: bf16[32,128], index: 0, kind: input, shape index: {}]
  %s1 = inlined_call_operand.hbm [shape: bf16[128,128], index: 1, kind: input, shape index: {}]
  %s2 = inlined_call_operand.vmem [shape: f32[1,128], index: 2, kind: input, shape index: {}]
  %s3 = inlined_call_operand.vmem [shape: bf16[32,128], index: 3, kind: input, shape index: {}]
  %s4 = inlined_call_operand.vmem [shape: f32[1,128], index: 4, kind: input, shape index: {}]
  %s5 = inlined_call_operand.vmem [shape: f32[1,128], index: 5, kind: input, shape index: {}]
  %s6 = inlined_call_operand.vmem [shape: bf16[32,128], index: 6, kind: output, shape index: {}]
  %s7 = sld [smem:[#allocation0]]
  $region46: #{transformer_vae_forward.36} parent=0
    _
  %s9 = ssub.s32 1, %s7
  %s10 = scalar_select 0, %s9, %s7
  $region1: #{transformer_vae_forward.36} parent=0
    #allocation3 [shape = 'u8[32768]{0}', space=vmem, size = 0x8000, scoped, tag = 'input window, operand 1, single buffered']
    #allocation4 [shape = 's32[1]{0}', space=sflag, size = 0x4, scoped, tag = 'scoped memory for transformer_vae_forward.36']
    %11 = vsyncpa [#allocation4], 0
    // Predicated region
    $region2: #{transformer_vae_forward.36} parent=1 // pred_check
      _
    $region3: #{transformer_vae_forward.36} parent=1 // pred_check_branch
      %13 = sbr.rel (0) target = $region5
    $region4: #{transformer_vae_forward.36} parent=1 // pred_region
      _
    $region5: #{transformer_vae_forward.36} parent=1 // pred_fallthru
      _
    // Predicated region
    $region6: #{transformer_vae_forward.36} parent=1 // pred_check
      _
    $region7: #{transformer_vae_forward.36} parent=1 // pred_check_branch
      %15 = sbr.rel (0) target = $region9
    $region8: #{transformer_vae_forward.36} parent=1 // pred_region
      %17 = vsyncadd [#allocation4], 0
      %s18 = sshll.u32 %s1, 4
      %s19 = int_to_ptr.hbm [resolvable:$true] %s18
      %s20 = sshll.u32 [#allocation3], 4
      %s21 = int_to_ptr.vmem [resolvable:$true] %s20
      %26 = dma.hbm_to_vmem [thread:$0]  %s19, 1024, %s21, [#allocation4], 64, 64, 4
    $region9: #{transformer_vae_forward.36} parent=1 // pred_fallthru
      _
    // Predicated region
    $region10: #{transformer_vae_forward.36} parent=1 // pred_check
      _
    $region11: #{transformer_vae_forward.36} parent=1 // pred_check_branch
      %28 = sbr.rel (0) target = $region13
    $region12: #{transformer_vae_forward.36} parent=1 // pred_region
      _
    $region13: #{transformer_vae_forward.36} parent=1 // pred_fallthru
      _
    // Predicated region
    $region14: #{transformer_vae_forward.36} parent=1 // pred_check
      _
    $region15: #{transformer_vae_forward.36} parent=1 // pred_check_branch
      %30 = sbr.rel (0) target = $region17
    $region16: #{transformer_vae_forward.36} parent=1 // pred_region
      _
    $region17: #{transformer_vae_forward.36} parent=1 // pred_fallthru
      _
    // Predicated region
    $region18: #{transformer_vae_forward.36} parent=1 // pred_check
      _
    $region19: #{transformer_vae_forward.36} parent=1 // pred_check_branch
      %32 = sbr.rel (0) target = $region21
    $region20: #{transformer_vae_forward.36} parent=1 // pred_region
      _
    $region21: #{transformer_vae_forward.36} parent=1 // pred_fallthru
      _
    // Predicated region
    $region22: #{transformer_vae_forward.36} parent=1 // pred_check
      _
    $region23: #{transformer_vae_forward.36} parent=1 // pred_check_branch
      %34 = sbr.rel (0) target = $region25
    $region24: #{transformer_vae_forward.36} parent=1 // pred_region
      _
    $region25: #{transformer_vae_forward.36} parent=1 // pred_fallthru
      _
    // Predicated region
    $region26: #{transformer_vae_forward.36} parent=1 // pred_check
      _
    $region27: #{transformer_vae_forward.36} parent=1 // pred_check_branch
      %36 = sbr.rel (0) target = $region29
    $region28: #{transformer_vae_forward.36} parent=1 // pred_region
      %38 = dma.done [#allocation4], 1024
    $region29: #{transformer_vae_forward.36} parent=1 // pred_fallthru
      _
    %p39 = scmp.eq.s32.totalorder 0, 0
    // Predicated region
    $region30: #{transformer_vae_forward.36} parent=1 // pred_check
      %p40 = pneg %p39
    $region31: #{transformer_vae_forward.36} parent=1 // pred_check_branch
      %42 = sbr.rel (%p40) target = $region33
    $region32: #{transformer_vae_forward.36} parent=1 // pred_region
      %43 = vst [vmem:[#allocation2] sm:$0xff] 0.0
      %44 = vst [vmem:[#allocation2 + $0x8] sm:$0xff] 0.0
      %45 = vst [vmem:[#allocation2 + $0x10] sm:$0xff] 0.0
      %46 = vst [vmem:[#allocation2 + $0x18] sm:$0xff] 0.0
    $region33: #{transformer_vae_forward.36} parent=1 // pred_fallthru
      _
    %v47 = vld [vmem:[#allocation2] sm:$0xff]
    %v48 = vld [vmem:[#allocation2 + $0x8] sm:$0xff]
    %v49 = vld [vmem:[#allocation2 + $0x10] sm:$0xff]
    %v50 = vld [vmem:[#allocation2 + $0x18] sm:$0xff]
    %v51 = vld [vmem:[%s0] sm:$0xf]
    %v52 = vld [vmem:[%s0 + $0x4] sm:$0xf]
    %v53 = vld [vmem:[%s0 + $0x8] sm:$0xf]
    %v54 = vld [vmem:[%s0 + $0xc] sm:$0xf]
    %v55 = vld [vmem:[#allocation3] sm:$0xf]
    %v56 = vld [vmem:[#allocation3 + $0x4] sm:$0xf]
    %v57 = vld [vmem:[#allocation3 + $0x8] sm:$0xf]
    %v58 = vld [vmem:[#allocation3 + $0xc] sm:$0xf]
    %v59 = vld [vmem:[#allocation3 + $0x10] sm:$0xf]
    %v60 = vld [vmem:[#allocation3 + $0x14] sm:$0xf]
    %v61 = vld [vmem:[#allocation3 + $0x18] sm:$0xf]
    %v62 = vld [vmem:[#allocation3 + $0x1c] sm:$0xf]
    %v63 = vld [vmem:[#allocation3 + $0x20] sm:$0xf]
    %v64 = vld [vmem:[#allocation3 + $0x24] sm:$0xf]
    %v65 = vld [vmem:[#allocation3 + $0x28] sm:$0xf]
    %v66 = vld [vmem:[#allocation3 + $0x2c] sm:$0xf]
    %v67 = vld [vmem:[#allocation3 + $0x30] sm:$0xf]
    %v68 = vld [vmem:[#allocation3 + $0x34] sm:$0xf]
    %v69 = vld [vmem:[#allocation3 + $0x38] sm:$0xf]
    %v70 = vld [vmem:[#allocation3 + $0x3c] sm:$0xf]
    %v75 = vunpack.c.l.b16 %v51
    %v76 = vunpack.c.l.b16 %v52
    %v77 = vunpack.c.l.b16 %v53
    %v78 = vunpack.c.l.b16 %v54
    %v79 = vpack.c.b16 %v76, %v75
    %v80 = vpack.c.b16 %v78, %v77
    %v99 = vunpack.c.l.b16 %v55
    %v100 = vunpack.c.l.b16 %v56
    %v101 = vunpack.c.l.b16 %v57
    %v102 = vunpack.c.l.b16 %v58
    %v103 = vunpack.c.l.b16 %v59
    %v104 = vunpack.c.l.b16 %v60
    %v105 = vunpack.c.l.b16 %v61
    %v106 = vunpack.c.l.b16 %v62
    %v107 = vunpack.c.l.b16 %v63
    %v108 = vunpack.c.l.b16 %v64
    %v109 = vunpack.c.l.b16 %v65
    %v110 = vunpack.c.l.b16 %v66
    %v111 = vunpack.c.l.b16 %v67
    %v112 = vunpack.c.l.b16 %v68
    %v113 = vunpack.c.l.b16 %v69
    %v114 = vunpack.c.l.b16 %v70
    %v115 = vpack.c.b16 %v100, %v99
    %v116 = vpack.c.b16 %v102, %v101
    %v117 = vpack.c.b16 %v104, %v103
    %v118 = vpack.c.b16 %v106, %v105
    %v119 = vpack.c.b16 %v108, %v107
    %v120 = vpack.c.b16 %v110, %v109
    %v121 = vpack.c.b16 %v112, %v111
    %v122 = vpack.c.b16 %v114, %v113
    %131 = vmatpush.bf16.msra.mxu0 %v122
    %132 = vmatpush.bf16.msra.mxu0 %v121
    %133 = vmatpush.bf16.msra.mxu0 %v120
    %134 = vmatpush.bf16.msra.mxu0 %v119
    %135 = vmatpush.bf16.msra.mxu0 %v118
    %136 = vmatpush.bf16.msra.mxu0 %v117
    %137 = vmatpush.bf16.msra.mxu0 %v116
    %138 = vmatpush.bf16.msra.mxu0 %v115
    %139 = vmatmul.bf16.gmra.mxu0 %v79
    %v140 = vpop.f32.mrf.mxu0
    %v141 = vadd.f32 0.0, %v140
    %v142 = vpop.f32.mrf.mxu0
    %v143 = vadd.f32 0.0, %v142
    %144 = vmatmul.bf16.gmra.mxu0 %v80
    %v145 = vpop.f32.mrf.mxu0
    %v146 = vadd.f32 0.0, %v145
    %v147 = vpop.f32.mrf.mxu0
    %v148 = vadd.f32 0.0, %v147
    %149 = vdwg.mxu0
    %v150 = vadd.f32 %v47, %v141
    %v151 = vadd.f32 %v48, %v143
    %v152 = vadd.f32 %v49, %v146
    %v153 = vadd.f32 %v50, %v148
    %154 = vst [vmem:[#allocation2] sm:$0xff] %v150
    %155 = vst [vmem:[#allocation2 + $0x8] sm:$0xff] %v151
    %156 = vst [vmem:[#allocation2 + $0x10] sm:$0xff] %v152
    %157 = vst [vmem:[#allocation2 + $0x18] sm:$0xff] %v153
    // Predicated region
    $region34: #{transformer_vae_forward.36} parent=1 // pred_check
      %p158 = pneg %p39
    $region35: #{transformer_vae_forward.36} parent=1 // pred_check_branch
      %160 = sbr.rel (%p158) target = $region37
    $region36: #{transformer_vae_forward.36} parent=1 // pred_region
      %v161 = vld [vmem:[#allocation2] sm:$0xff]
      %v162 = vld [vmem:[#allocation2 + $0x8] sm:$0xff]
      %v163 = vld [vmem:[#allocation2 + $0x10] sm:$0xff]
      %v164 = vld [vmem:[#allocation2 + $0x18] sm:$0xff]
      %v165 = vld [vmem:[%s2] sm:$0x1]
      %v167 = vperm.slane %v165, 0
      %v169 = vadd.f32 %v161, %v167
      %v170 = vadd.f32 %v162, %v167
      %v171 = vadd.f32 %v163, %v167
      %v172 = vadd.f32 %v164, %v167
      %v173 = vld [vmem:[%s3] sm:$0xf]
      %v174 = vld [vmem:[%s3 + $0x4] sm:$0xf]
      %v175 = vld [vmem:[%s3 + $0x8] sm:$0xf]
      %v176 = vld [vmem:[%s3 + $0xc] sm:$0xf]
      %v177 = vunpack.c.l.bf16 %v173
      %v178 = vunpack.c.l.bf16 %v174
      %v179 = vunpack.c.l.bf16 %v175
      %v180 = vunpack.c.l.bf16 %v176
      %v181 = vadd.f32 %v169, %v177
      %v182 = vadd.f32 %v170, %v178
      %v183 = vadd.f32 %v171, %v179
      %v184 = vadd.f32 %v172, %v180
      %v185 = vlaneseq
      %v186 = vand.u32 %v185, 127
      %vm187 = vcmp.lt.s32.totalorder %v186, 32
      %v188 = vsel %vm187, %v181, 0.0
      %v189 = vsel %vm187, %v182, 0.0
      %v190 = vsel %vm187, %v183, 0.0
      %v191 = vsel %vm187, %v184, 0.0
      %192 = vadd.xlane.f32.xlu0 %v188
      %v193 = vpop.xlane.xlu0 %192
      %194 = vadd.xlane.f32.xlu0 %v189
      %v195 = vpop.xlane.xlu0 %194
      %196 = vadd.xlane.f32.xlu0 %v190
      %v197 = vpop.xlane.xlu0 %196
      %198 = vadd.xlane.f32.xlu0 %v191
      %v199 = vpop.xlane.xlu0 %198
      %v200 = vmul.f32 %v193, 0.03125
      %v201 = vmul.f32 %v195, 0.03125
      %v202 = vmul.f32 %v197, 0.03125
      %v203 = vmul.f32 %v199, 0.03125
      %v204 = vsub.f32 %v181, %v200
      %v205 = vsub.f32 %v182, %v201
      %v206 = vsub.f32 %v183, %v202
      %v207 = vsub.f32 %v184, %v203
      %v208 = vsel %vm187, %v204, 0.0
      %v209 = vsel %vm187, %v205, 0.0
      %v210 = vsel %vm187, %v206, 0.0
      %v211 = vsel %vm187, %v207, 0.0
      %v212 = vmul.f32 %v208, %v208
      %v213 = vmul.f32 %v209, %v209
      %v214 = vmul.f32 %v210, %v210
      %v215 = vmul.f32 %v211, %v211
      %216 = vadd.xlane.f32.xlu0 %v212
      %v217 = vpop.xlane.xlu0 %216
      %218 = vadd.xlane.f32.xlu0 %v213
      %v219 = vpop.xlane.xlu0 %218
      %220 = vadd.xlane.f32.xlu0 %v214
      %v221 = vpop.xlane.xlu0 %220
      %222 = vadd.xlane.f32.xlu0 %v215
      %v223 = vpop.xlane.xlu0 %222
      %v224 = vmul.f32 %v217, 0.03125
      %v225 = vmul.f32 %v219, 0.03125
      %v226 = vmul.f32 %v221, 0.03125
      %v227 = vmul.f32 %v223, 0.03125
      %v228 = vadd.f32 %v224, 1e-05
      %v229 = vadd.f32 %v225, 1e-05
      %v230 = vadd.f32 %v226, 1e-05
      %v231 = vadd.f32 %v227, 1e-05
      %v232 = vrsqrt.pop %v228
      %v233 = vmul.f32 %v232, %v228
      %v234 = vmul.f32 %v233, %v232
      %v235 = vmul.f32 0.5, %v234
      %v236 = vsub.f32 1.5, %v235
      %v237 = vmul.f32 %v232, %v236
      %vm238 = vweird.f32 %v228
      %vm239 = vweird.f32 %v232
      %vm240 = vmor %vm238, %vm239
      %v241 = vsel %vm240, %v232, %v237
      %v242 = vrsqrt.pop %v229
      %v243 = vmul.f32 %v242, %v229
      %v244 = vmul.f32 %v243, %v242
      %v245 = vmul.f32 0.5, %v244
      %v246 = vsub.f32 1.5, %v245
      %v247 = vmul.f32 %v242, %v246
      %vm248 = vweird.f32 %v229
      %vm249 = vweird.f32 %v242
      %vm250 = vmor %vm248, %vm249
      %v251 = vsel %vm250, %v242, %v247
      %v252 = vrsqrt.pop %v230
      %v253 = vmul.f32 %v252, %v230
      %v254 = vmul.f32 %v253, %v252
      %v255 = vmul.f32 0.5, %v254
      %v256 = vsub.f32 1.5, %v255
      %v257 = vmul.f32 %v252, %v256
      %vm258 = vweird.f32 %v230
      %vm259 = vweird.f32 %v252
      %vm260 = vmor %vm258, %vm259
      %v261 = vsel %vm260, %v252, %v257
      %v262 = vrsqrt.pop %v231
      %v263 = vmul.f32 %v262, %v231
      %v264 = vmul.f32 %v263, %v262
      %v265 = vmul.f32 0.5, %v264
      %v266 = vsub.f32 1.5, %v265
      %v267 = vmul.f32 %v262, %v266
      %vm268 = vweird.f32 %v231
      %vm269 = vweird.f32 %v262
      %vm270 = vmor %vm268, %vm269
      %v271 = vsel %vm270, %v262, %v267
      %v272 = vmul.f32 %v208, %v241
      %v273 = vmul.f32 %v209, %v251
      %v274 = vmul.f32 %v210, %v261
      %v275 = vmul.f32 %v211, %v271
      %v276 = vld [vmem:[%s4] sm:$0x1]
      %v278 = vperm.slane %v276, 0
      %v280 = vmul.f32 %v272, %v278
      %v281 = vmul.f32 %v273, %v278
      %v282 = vmul.f32 %v274, %v278
      %v283 = vmul.f32 %v275, %v278
      %v284 = vld [vmem:[%s5] sm:$0x1]
      %v286 = vperm.slane %v284, 0
      %v288 = vadd.f32 %v280, %v286
      %v289 = vadd.f32 %v281, %v286
      %v290 = vadd.f32 %v282, %v286
      %v291 = vadd.f32 %v283, %v286
      %v292 = vpack.c.bf16 %v288, %v288
      %v293 = vpack.c.bf16 %v289, %v289
      %v294 = vpack.c.bf16 %v290, %v290
      %v295 = vpack.c.bf16 %v291, %v291
      %296 = vst [vmem:[%s6] sm:$0xf] %v292
      %297 = vst [vmem:[%s6 + $0x4] sm:$0xf] %v293
      %298 = vst [vmem:[%s6 + $0x8] sm:$0xf] %v294
      %299 = vst [vmem:[%s6 + $0xc] sm:$0xf] %v295
    $region37: #{transformer_vae_forward.36} parent=1 // pred_fallthru
      _
    // Predicated region
    $region38: #{transformer_vae_forward.36} parent=1 // pred_check
      _
    $region39: #{transformer_vae_forward.36} parent=1 // pred_check_branch
      %301 = sbr.rel (0) target = $region41
    $region40: #{transformer_vae_forward.36} parent=1 // pred_region
      _
    $region41: #{transformer_vae_forward.36} parent=1 // pred_fallthru
      _
    // Predicated region
    $region42: #{transformer_vae_forward.36} parent=1 // pred_check
      _
    $region43: #{transformer_vae_forward.36} parent=1 // pred_check_branch
      %303 = sbr.rel (0) target = $region45
    $region44: #{transformer_vae_forward.36} parent=1 // pred_region
      _
    $region45: #{transformer_vae_forward.36} parent=1 // pred_fallthru
      _
    %304 = vsyncpa [#allocation4], 1

// kernel: transformer_vae_forward.42
$region0: #{transformer_vae_forward.42}
  #allocation0 [shape = 'u32[]', space=smem, size = 0x4, offset = 0x4, fixed_abs, tag = 'smem constant byte address 0x4 - core index']
  #allocation1 [shape = 'u32[72,128]{1,0:T(1,128)}', space=vmem, size = 0x9000, scoped, tag = 'internal scratch']
  #allocation2 [shape = 'f32[8,128]{1,0:T(8,128)}', space=vmem, size = 0x1000, scoped, tag = 'scratch operand']
  %s0 = inlined_call_operand.vmem [shape: bf16[8,128], index: 0, kind: input, shape index: {}]
  %s1 = inlined_call_operand.vmem [shape: bf16[128,128], index: 1, kind: input, shape index: {}]
  %s2 = inlined_call_operand.vmem [shape: f32[1,128], index: 2, kind: input, shape index: {}]
  %s3 = inlined_call_operand.vmem [shape: f32[8,128], index: 3, kind: output, shape index: {}]
  %s4 = sld [smem:[#allocation0]]
  $region30: #{transformer_vae_forward.42} parent=0
    _
  %s6 = ssub.s32 1, %s4
  %s7 = scalar_select 0, %s6, %s4
  // Predicated region
  $region2: #{transformer_vae_forward.42} parent=0 // pred_check
    _
  $region3: #{transformer_vae_forward.42} parent=0 // pred_check_branch
    %9 = sbr.rel (0) target = $region5
  $region4: #{transformer_vae_forward.42} parent=0 // pred_region
    _
  $region5: #{transformer_vae_forward.42} parent=0 // pred_fallthru
    _
  // Predicated region
  $region6: #{transformer_vae_forward.42} parent=0 // pred_check
    _
  $region7: #{transformer_vae_forward.42} parent=0 // pred_check_branch
    %11 = sbr.rel (0) target = $region9
  $region8: #{transformer_vae_forward.42} parent=0 // pred_region
    _
  $region9: #{transformer_vae_forward.42} parent=0 // pred_fallthru
    _
  // Predicated region
  $region10: #{transformer_vae_forward.42} parent=0 // pred_check
    _
  $region11: #{transformer_vae_forward.42} parent=0 // pred_check_branch
    %13 = sbr.rel (0) target = $region13
  $region12: #{transformer_vae_forward.42} parent=0 // pred_region
    _
  $region13: #{transformer_vae_forward.42} parent=0 // pred_fallthru
    _
  %p14 = scmp.eq.s32.totalorder 0, 0
  // Predicated region
  $region14: #{transformer_vae_forward.42} parent=0 // pred_check
    %p15 = pneg %p14
  $region15: #{transformer_vae_forward.42} parent=0 // pred_check_branch
    %17 = sbr.rel (%p15) target = $region17
  $region16: #{transformer_vae_forward.42} parent=0 // pred_region
    %18 = vst [vmem:[#allocation2] sm:$0xff] 0.0
  $region17: #{transformer_vae_forward.42} parent=0 // pred_fallthru
    _
  %v19 = vld [vmem:[#allocation2] sm:$0xff]
  %v20 = vld [vmem:[%s0] sm:$0xf]
  %v21 = vld [vmem:[%s1] sm:$0xf]
  %v22 = vld [vmem:[%s1 + $0x4] sm:$0xf]
  %v23 = vld [vmem:[%s1 + $0x8] sm:$0xf]
  %v24 = vld [vmem:[%s1 + $0xc] sm:$0xf]
  %v25 = vld [vmem:[%s1 + $0x10] sm:$0xf]
  %v26 = vld [vmem:[%s1 + $0x14] sm:$0xf]
  %v27 = vld [vmem:[%s1 + $0x18] sm:$0xf]
  %v28 = vld [vmem:[%s1 + $0x1c] sm:$0xf]
  %v29 = vld [vmem:[%s1 + $0x20] sm:$0xf]
  %v30 = vld [vmem:[%s1 + $0x24] sm:$0xf]
  %v31 = vld [vmem:[%s1 + $0x28] sm:$0xf]
  %v32 = vld [vmem:[%s1 + $0x2c] sm:$0xf]
  %v33 = vld [vmem:[%s1 + $0x30] sm:$0xf]
  %v34 = vld [vmem:[%s1 + $0x34] sm:$0xf]
  %v35 = vld [vmem:[%s1 + $0x38] sm:$0xf]
  %v36 = vld [vmem:[%s1 + $0x3c] sm:$0xf]
  %v53 = vunpack.c.l.b16 %v21
  %v54 = vunpack.c.l.b16 %v22
  %v55 = vunpack.c.l.b16 %v23
  %v56 = vunpack.c.l.b16 %v24
  %v57 = vunpack.c.l.b16 %v25
  %v58 = vunpack.c.l.b16 %v26
  %v59 = vunpack.c.l.b16 %v27
  %v60 = vunpack.c.l.b16 %v28
  %v61 = vunpack.c.l.b16 %v29
  %v62 = vunpack.c.l.b16 %v30
  %v63 = vunpack.c.l.b16 %v31
  %v64 = vunpack.c.l.b16 %v32
  %v65 = vunpack.c.l.b16 %v33
  %v66 = vunpack.c.l.b16 %v34
  %v67 = vunpack.c.l.b16 %v35
  %v68 = vunpack.c.l.b16 %v36
  %v69 = vpack.c.b16 %v54, %v53
  %v70 = vpack.c.b16 %v56, %v55
  %v71 = vpack.c.b16 %v58, %v57
  %v72 = vpack.c.b16 %v60, %v59
  %v73 = vpack.c.b16 %v62, %v61
  %v74 = vpack.c.b16 %v64, %v63
  %v75 = vpack.c.b16 %v66, %v65
  %v76 = vpack.c.b16 %v68, %v67
  %85 = vmatpush.bf16.msra.mxu0 %v76
  %86 = vmatpush.bf16.msra.mxu0 %v75
  %87 = vmatpush.bf16.msra.mxu0 %v74
  %88 = vmatpush.bf16.msra.mxu0 %v73
  %89 = vmatpush.bf16.msra.mxu0 %v72
  %90 = vmatpush.bf16.msra.mxu0 %v71
  %91 = vmatpush.bf16.msra.mxu0 %v70
  %92 = vmatpush.bf16.msra.mxu0 %v69
  %93 = vmatmul.bf16.gmra.mxu0 %v20
  %v94 = vpop.f32.mrf.mxu0
  %v95 = vadd.f32 0.0, %v94
  %v96 = vpop.f32.mrf.mxu0
  %97 = vdwg.mxu0
  %v98 = vadd.f32 %v19, %v95
  %99 = vst [vmem:[#allocation2] sm:$0xff] %v98
  // Predicated region
  $region18: #{transformer_vae_forward.42} parent=0 // pred_check
    %p100 = pneg %p14
  $region19: #{transformer_vae_forward.42} parent=0 // pred_check_branch
    %102 = sbr.rel (%p100) target = $region21
  $region20: #{transformer_vae_forward.42} parent=0 // pred_region
    %v103 = vld [vmem:[#allocation2] sm:$0xff]
    %v104 = vld [vmem:[%s2] sm:$0x1]
    %v106 = vperm.slane %v104, 0
    %v108 = vadd.f32 %v103, %v106
    %109 = vst [vmem:[%s3] sm:$0xff] %v108
  $region21: #{transformer_vae_forward.42} parent=0 // pred_fallthru
    _
  // Predicated region
  $region22: #{transformer_vae_forward.42} parent=0 // pred_check
    _
  $region23: #{transformer_vae_forward.42} parent=0 // pred_check_branch
    %111 = sbr.rel (0) target = $region25
  $region24: #{transformer_vae_forward.42} parent=0 // pred_region
    _
  $region25: #{transformer_vae_forward.42} parent=0 // pred_fallthru
    _
  // Predicated region
  $region26: #{transformer_vae_forward.42} parent=0 // pred_check
    _
  $region27: #{transformer_vae_forward.42} parent=0 // pred_check_branch
    %113 = sbr.rel (0) target = $region29
  $region28: #{transformer_vae_forward.42} parent=0 // pred_region
    _
  $region29: #{transformer_vae_forward.42} parent=0 // pred_fallthru
    _

// kernel: transformer_vae_forward.43
$region0: #{transformer_vae_forward.43}
  #allocation0 [shape = 'u32[]', space=smem, size = 0x4, offset = 0x4, fixed_abs, tag = 'smem constant byte address 0x4 - core index']
  #allocation1 [shape = 'u32[72,128]{1,0:T(1,128)}', space=vmem, size = 0x9000, scoped, tag = 'internal scratch']
  #allocation2 [shape = 'f32[8,128]{1,0:T(8,128)}', space=vmem, size = 0x1000, scoped, tag = 'scratch operand']
  %s0 = inlined_call_operand.vmem [shape: bf16[8,128], index: 0, kind: input, shape index: {}]
  %s1 = inlined_call_operand.hbm [shape: bf16[128,128], index: 1, kind: input, shape index: {}]
  %s2 = inlined_call_operand.vmem [shape: f32[1,128], index: 2, kind: input, shape index: {}]
  %s3 = inlined_call_operand.vmem [shape: bf16[8,128], index: 3, kind: output, shape index: {}]
  %s4 = sld [smem:[#allocation0]]
  $region34: #{transformer_vae_forward.43} parent=0
    _
  %s6 = ssub.s32 1, %s4
  %s7 = scalar_select 0, %s6, %s4
  $region1: #{transformer_vae_forward.43} parent=0
    #allocation3 [shape = 'u8[32768]{0}', space=vmem, size = 0x8000, scoped, tag = 'input window, operand 1, single buffered']
    #allocation4 [shape = 's32[1]{0}', space=sflag, size = 0x4, scoped, tag = 'scoped memory for transformer_vae_forward.43']
    %8 = vsyncpa [#allocation4], 0
    // Predicated region
    $region2: #{transformer_vae_forward.43} parent=1 // pred_check
      _
    $region3: #{transformer_vae_forward.43} parent=1 // pred_check_branch
      %10 = sbr.rel (0) target = $region5
    $region4: #{transformer_vae_forward.43} parent=1 // pred_region
      _
    $region5: #{transformer_vae_forward.43} parent=1 // pred_fallthru
      _
    // Predicated region
    $region6: #{transformer_vae_forward.43} parent=1 // pred_check
      _
    $region7: #{transformer_vae_forward.43} parent=1 // pred_check_branch
      %12 = sbr.rel (0) target = $region9
    $region8: #{transformer_vae_forward.43} parent=1 // pred_region
      %14 = vsyncadd [#allocation4], 0
      %s15 = sshll.u32 %s1, 4
      %s16 = int_to_ptr.hbm [resolvable:$true] %s15
      %s17 = sshll.u32 [#allocation3], 4
      %s18 = int_to_ptr.vmem [resolvable:$true] %s17
      %23 = dma.hbm_to_vmem [thread:$0]  %s16, 1024, %s18, [#allocation4], 64, 64, 4
    $region9: #{transformer_vae_forward.43} parent=1 // pred_fallthru
      _
    // Predicated region
    $region10: #{transformer_vae_forward.43} parent=1 // pred_check
      _
    $region11: #{transformer_vae_forward.43} parent=1 // pred_check_branch
      %25 = sbr.rel (0) target = $region13
    $region12: #{transformer_vae_forward.43} parent=1 // pred_region
      _
    $region13: #{transformer_vae_forward.43} parent=1 // pred_fallthru
      _
    // Predicated region
    $region14: #{transformer_vae_forward.43} parent=1 // pred_check
      _
    $region15: #{transformer_vae_forward.43} parent=1 // pred_check_branch
      %27 = sbr.rel (0) target = $region17
    $region16: #{transformer_vae_forward.43} parent=1 // pred_region
      %29 = dma.done [#allocation4], 1024
    $region17: #{transformer_vae_forward.43} parent=1 // pred_fallthru
      _
    %p30 = scmp.eq.s32.totalorder 0, 0
    // Predicated region
    $region18: #{transformer_vae_forward.43} parent=1 // pred_check
      %p31 = pneg %p30
    $region19: #{transformer_vae_forward.43} parent=1 // pred_check_branch
      %33 = sbr.rel (%p31) target = $region21
    $region20: #{transformer_vae_forward.43} parent=1 // pred_region
      %34 = vst [vmem:[#allocation2] sm:$0xff] 0.0
    $region21: #{transformer_vae_forward.43} parent=1 // pred_fallthru
      _
    %v35 = vld [vmem:[#allocation2] sm:$0xff]
    %v36 = vld [vmem:[%s0] sm:$0xf]
    %v37 = vld [vmem:[#allocation3] sm:$0xf]
    %v38 = vld [vmem:[#allocation3 + $0x4] sm:$0xf]
    %v39 = vld [vmem:[#allocation3 + $0x8] sm:$0xf]
    %v40 = vld [vmem:[#allocation3 + $0xc] sm:$0xf]
    %v41 = vld [vmem:[#allocation3 + $0x10] sm:$0xf]
    %v42 = vld [vmem:[#allocation3 + $0x14] sm:$0xf]
    %v43 = vld [vmem:[#allocation3 + $0x18] sm:$0xf]
    %v44 = vld [vmem:[#allocation3 + $0x1c] sm:$0xf]
    %v45 = vld [vmem:[#allocation3 + $0x20] sm:$0xf]
    %v46 = vld [vmem:[#allocation3 + $0x24] sm:$0xf]
    %v47 = vld [vmem:[#allocation3 + $0x28] sm:$0xf]
    %v48 = vld [vmem:[#allocation3 + $0x2c] sm:$0xf]
    %v49 = vld [vmem:[#allocation3 + $0x30] sm:$0xf]
    %v50 = vld [vmem:[#allocation3 + $0x34] sm:$0xf]
    %v51 = vld [vmem:[#allocation3 + $0x38] sm:$0xf]
    %v52 = vld [vmem:[#allocation3 + $0x3c] sm:$0xf]
    %v69 = vunpack.c.l.b16 %v37
    %v70 = vunpack.c.l.b16 %v38
    %v71 = vunpack.c.l.b16 %v39
    %v72 = vunpack.c.l.b16 %v40
    %v73 = vunpack.c.l.b16 %v41
    %v74 = vunpack.c.l.b16 %v42
    %v75 = vunpack.c.l.b16 %v43
    %v76 = vunpack.c.l.b16 %v44
    %v77 = vunpack.c.l.b16 %v45
    %v78 = vunpack.c.l.b16 %v46
    %v79 = vunpack.c.l.b16 %v47
    %v80 = vunpack.c.l.b16 %v48
    %v81 = vunpack.c.l.b16 %v49
    %v82 = vunpack.c.l.b16 %v50
    %v83 = vunpack.c.l.b16 %v51
    %v84 = vunpack.c.l.b16 %v52
    %v85 = vpack.c.b16 %v70, %v69
    %v86 = vpack.c.b16 %v72, %v71
    %v87 = vpack.c.b16 %v74, %v73
    %v88 = vpack.c.b16 %v76, %v75
    %v89 = vpack.c.b16 %v78, %v77
    %v90 = vpack.c.b16 %v80, %v79
    %v91 = vpack.c.b16 %v82, %v81
    %v92 = vpack.c.b16 %v84, %v83
    %101 = vmatpush.bf16.msra.mxu0 %v92
    %102 = vmatpush.bf16.msra.mxu0 %v91
    %103 = vmatpush.bf16.msra.mxu0 %v90
    %104 = vmatpush.bf16.msra.mxu0 %v89
    %105 = vmatpush.bf16.msra.mxu0 %v88
    %106 = vmatpush.bf16.msra.mxu0 %v87
    %107 = vmatpush.bf16.msra.mxu0 %v86
    %108 = vmatpush.bf16.msra.mxu0 %v85
    %109 = vmatmul.bf16.gmra.mxu0 %v36
    %v110 = vpop.f32.mrf.mxu0
    %v111 = vadd.f32 0.0, %v110
    %v112 = vpop.f32.mrf.mxu0
    %113 = vdwg.mxu0
    %v114 = vadd.f32 %v35, %v111
    %115 = vst [vmem:[#allocation2] sm:$0xff] %v114
    // Predicated region
    $region22: #{transformer_vae_forward.43} parent=1 // pred_check
      %p116 = pneg %p30
    $region23: #{transformer_vae_forward.43} parent=1 // pred_check_branch
      %118 = sbr.rel (%p116) target = $region25
    $region24: #{transformer_vae_forward.43} parent=1 // pred_region
      %v119 = vld [vmem:[#allocation2] sm:$0xff]
      %v120 = vld [vmem:[%s2] sm:$0x1]
      %v122 = vperm.slane %v120, 0
      %v124 = vadd.f32 %v119, %v122
      %v125 = vpack.c.bf16 %v124, %v124
      %126 = vst [vmem:[%s3] sm:$0xf] %v125
    $region25: #{transformer_vae_forward.43} parent=1 // pred_fallthru
      _
    // Predicated region
    $region26: #{transformer_vae_forward.43} parent=1 // pred_check
      _
    $region27: #{transformer_vae_forward.43} parent=1 // pred_check_branch
      %128 = sbr.rel (0) target = $region29
    $region28: #{transformer_vae_forward.43} parent=1 // pred_region
      _
    $region29: #{transformer_vae_forward.43} parent=1 // pred_fallthru
      _
    // Predicated region
    $region30: #{transformer_vae_forward.43} parent=1 // pred_check
      _
    $region31: #{transformer_vae_forward.43} parent=1 // pred_check_branch
      %130 = sbr.rel (0) target = $region33
    $region32: #{transformer_vae_forward.43} parent=1 // pred_region
      _
    $region33: #{transformer_vae_forward.43} parent=1 // pred_fallthru
      _
    %131 = vsyncpa [#allocation4], 1

// kernel: transformer_vae_forward.30
$region0: #{transformer_vae_forward.30}
  #allocation0 [shape = 'u32[]', space=smem, size = 0x4, offset = 0x4, fixed_abs, tag = 'smem constant byte address 0x4 - core index']
  #allocation1 [shape = 'u32[72,128]{1,0:T(1,128)}', space=vmem, size = 0x9000, scoped, tag = 'internal scratch']
  %s0 = inlined_call_operand.vmem [shape: bf16[2,8,1536], index: 0, kind: input, shape index: {}]
  %s1 = inlined_call_operand.vmem [shape: bf16[2,8,512], index: 1, kind: output, shape index: {}]
  %s2 = sld [smem:[#allocation0]]
  $region37: #{transformer_vae_forward.30} parent=0
    _
  %s4 = ssub.s32 1, %s2
  %s5 = scalar_select 0, %s4, %s2
  loop: start=0, step=1, limit=10
  $region2: #{transformer_vae_forward.30} parent=0 // loop_pre_header
    _
  $region3: #{transformer_vae_forward.30} parent=0 // loop_header
    %s7 = sphi 0, %s11
    %p8 = scmp.ge.s32.totalorder %s7, 10
    %s14 = sphi 0, %s26
    %s15 = sphi 0, %s22
    %s16 = sphi 0, %s14
    %s17 = sphi 0, %s15
    %s18 = sphi 0, %s16
    %s19 = sphi 0, %s17
    %s31 = sphi 0, %s33
    %s34 = sphi 0, %s31
    %s35 = sphi 0, %s34
    %s51 = sphi 0, %s35
    %s59 = sphi 0, %s61
    %s62 = sphi 0, %s59
    %s63 = sphi 0, %s62
    %s79 = sphi 0, %s63
  $region4: #{transformer_vae_forward.30} parent=0 // loop_header_branch
    %10 = sbr.rel (%p8) target = $region8
  $region5: #{transformer_vae_forward.30} parent=0 // loop_body
    %s12 = ssub.s32 %s7, 1
    %s13 = ssub.s32 %s7, 2
    %s20 = sadd.s32 1, %s15
    %p21 = scmp.ge.s32.totalorder %s20, 4
    %s22 = scalar_select %p21, 0, %s20
    %s23 = sadd.s32 1, %s14
    %s24 = scalar_select %p21, %s23, %s14
    %p25 = scmp.ge.s32.totalorder %s24, 2
    %s26 = scalar_select %p25, 0, %s24
    %s27 = ssub.s32 %s14, %s26
    %s28 = ssub.s32 %s15, %s22
    %s29 = sor.u32 %s27, %s28
    %p30 = scmp.eq.s32.totalorder %s29, 0
    %s32 = sadd.s32 %s31, 1
    %s33 = scalar_select %p30, %s31, %s32
    %p36 = pneg %p30
    %p37 = scmp.eq.s32.totalorder %s7, 7
    %p38 = por %p36, %p37
    %p39 = scmp.ne.s32.totalorder %s31, %s34
    %p40 = scmp.eq.s32.totalorder %s7, 0
    %p41 = por %p39, %p40
    %p42 = scmp.ne.s32.totalorder %s31, %s34
    %p43 = scmp.eq.s32.totalorder %s12, 7
    %p44 = por %p42, %p43
    %p45 = scmp.ne.s32.totalorder %s34, %s35
    %p46 = scmp.eq.s32.totalorder %s12, 0
    %p47 = por %p45, %p46
    %p48 = scmp.ne.s32.totalorder %s34, %s35
    %p49 = scmp.eq.s32.totalorder %s13, 7
    %p50 = por %p48, %p49
    %p52 = scmp.ne.s32.totalorder %s35, %s51
    %p53 = scmp.eq.s32.totalorder %s13, 0
    %p54 = por %p52, %p53
    %s55 = ssub.s32 %s14, %s26
    %s56 = ssub.s32 %s15, %s22
    %s57 = sor.u32 %s55, %s56
    %p58 = scmp.eq.s32.totalorder %s57, 0
    %s60 = sadd.s32 %s59, 1
    %s61 = scalar_select %p58, %s59, %s60
    %p64 = pneg %p58
    %p65 = scmp.eq.s32.totalorder %s7, 7
    %p66 = por %p64, %p65
    %p67 = scmp.ne.s32.totalorder %s59, %s62
    %p68 = scmp.eq.s32.totalorder %s7, 0
    %p69 = por %p67, %p68
    %p70 = scmp.ne.s32.totalorder %s59, %s62
    %p71 = scmp.eq.s32.totalorder %s12, 7
    %p72 = por %p70, %p71
    %p73 = scmp.ne.s32.totalorder %s62, %s63
    %p74 = scmp.eq.s32.totalorder %s12, 0
    %p75 = por %p73, %p74
    %p76 = scmp.ne.s32.totalorder %s62, %s63
    %p77 = scmp.eq.s32.totalorder %s13, 7
    %p78 = por %p76, %p77
    %p80 = scmp.ne.s32.totalorder %s63, %s79
    %p81 = scmp.eq.s32.totalorder %s13, 0
    %p82 = por %p80, %p81
    %p83 = scmp.le.s32.totalorder 1, %s7
    %p84 = scmp.lt.s32.totalorder %s7, 9
    %p85 = pnand %p83, %p84
    %p86 = pneg %p85
    // Predicated region
    $region9: #{transformer_vae_forward.30} parent=5 // pred_check
      _
    $region10: #{transformer_vae_forward.30} parent=5 // pred_check_branch
      %88 = sbr.rel (%p85) target = $region12
    $region11: #{transformer_vae_forward.30} parent=5 // pred_region
      %s89 = ssub.s32 %s7, 1
    $region12: #{transformer_vae_forward.30} parent=5 // pred_fallthru
      _
    %p90 = scmp.lt.s32.totalorder %s7, 8
    // Predicated region
    $region13: #{transformer_vae_forward.30} parent=5 // pred_check
      %p91 = pneg %p90
    $region14: #{transformer_vae_forward.30} parent=5 // pred_check_branch
      %93 = sbr.rel (%p91) target = $region16
    $region15: #{transformer_vae_forward.30} parent=5 // pred_region
      // Predicated region
      $region17: #{transformer_vae_forward.30} parent=15 // pred_check
        %p94 = pneg %p41
      $region18: #{transformer_vae_forward.30} parent=15 // pred_check_branch
        %96 = sbr.rel (%p94) target = $region20
      $region19: #{transformer_vae_forward.30} parent=15 // pred_region
        %s97 = smul.u32 3, %s15
        %p98 = scmp.lt.s32.totalorder %s14, 1
        %s99 = scalar_select %p98, %s14, 1
        %p100 = scmp.lt.s32.totalorder %s97, 11
        %s101 = scalar_select %p100, %s97, 11
        %s102 = smul.addr %s99, 12
        %s103 = sadd.s32 %s101, %s102
        %s104 = smul.addr %s103, 4
        %s105 = scalar_lea.vmem %s0, %s104
        %s106 = smul.u32 3, %s15
      $region20: #{transformer_vae_forward.30} parent=15 // pred_fallthru
        _
    $region16: #{transformer_vae_forward.30} parent=5 // pred_fallthru
      _
    %p107 = scmp.le.s32.totalorder 1, %s7
    %p108 = scmp.lt.s32.totalorder %s7, 9
    %p109 = pnand %p107, %p108
    %p110 = pneg %p109
    // Predicated region
    $region21: #{transformer_vae_forward.30} parent=5 // pred_check
      _
    $region22: #{transformer_vae_forward.30} parent=5 // pred_check_branch
      %112 = sbr.rel (%p109) target = $region24
    $region23: #{transformer_vae_forward.30} parent=5 // pred_region
      %s113 = ssub.s32 %s7, 1
      %s114 = smul.u32 3, %s17
      %p115 = scmp.lt.s32.totalorder %s16, 1
      %s116 = scalar_select %p115, %s16, 1
      %p117 = scmp.lt.s32.totalorder %s114, 11
      %s118 = scalar_select %p117, %s114, 11
      %s119 = smul.addr %s116, 12
      %s120 = sadd.s32 %s118, %s119
      %s121 = smul.addr %s120, 4
      %s122 = scalar_lea.vmem %s0, %s121
      %p123 = pneg %p47
      %p124 = pneg %p44
      %p125 = pneg %p75
      %p126 = pneg %p72
      %p127 = scmp.lt.s32.totalorder %s16, 1
      %s128 = scalar_select %p127, %s16, 1
      %p129 = scmp.lt.s32.totalorder %s17, 3
      %s130 = scalar_select %p129, %s17, 3
      %s131 = smul.addr %s128, 4
      %s132 = sadd.s32 %s130, %s131
      %s133 = smul.addr %s132, 4
      %s134 = scalar_lea.vmem %s1, %s133
      %s135 = smul.u32 3, %s17
      %p136 = scmp.lt.s32.totalorder %s16, 1
      %s137 = scalar_select %p136, %s16, 1
      %p138 = scmp.lt.s32.totalorder %s135, 11
      %s139 = scalar_select %p138, %s135, 11
      %s140 = smul.addr %s137, 12
      %s141 = sadd.s32 %s139, %s140
      %s142 = smul.addr %s141, 4
      %s143 = scalar_lea.vmem %s0, %s142
      %s144 = smul.u32 3, %s17
      %p145 = scmp.lt.s32.totalorder %s16, 1
      %s146 = scalar_select %p145, %s16, 1
      %p147 = scmp.lt.s32.totalorder %s17, 3
      %s148 = scalar_select %p147, %s17, 3
      %s149 = smul.addr %s146, 4
      %s150 = sadd.s32 %s148, %s149
      %s151 = smul.addr %s150, 4
      %s152 = scalar_lea.vmem %s1, %s151
      %v154 = vld [vmem:[%s143] sm:$0xff]
      %v155 = vld [vmem:[%s143 + $0x8] sm:$0xf]
      %v157 = vrot.slane %v154, 4
      %159 = vmatpush.bf16.xpose.msra.mxu0 0
      %160 = vmatpush.bf16.xpose.msra.mxu0 0
      %161 = vmatpush.bf16.xpose.msra.mxu0 0
      %162 = vmatpush.bf16.xpose.msra.mxu0 0
      %163 = vmatpush.bf16.xpose.msra.mxu0 0
      %164 = vmatpush.bf16.xpose.msra.mxu0 0
      %165 = vmatpush.bf16.xpose.msra.mxu0 0
      %166 = vmatpush.bf16.xpose.msra.mxu0 %v157
      %167 = vmatmul.bf16.gmra.mxu0 %v154
      %v168 = vpop.f32.mrf.mxu0
      %v169 = vadd.f32 0.0, %v168
      %v170 = vpop.f32.mrf.mxu0
      %171 = vdwg.mxu0
      %v172 = vlaneseq
      %v173 = vand.u32 %v172, 127
      %vm174 = vcmp.ge.s32.totalorder %v173, 8
      %v175 = vlaneseq
      %v176 = vshrl.u32 %v175, 7
      %vm177 = vcmp.gt.s32.totalorder %v173, %v176
      %vm178 = vmor %vm174, %vm177
      %v179 = vsel %vm178, -1e+09, %v169
      %vm180 = vcmask 64512
      %v181 = vsel %vm180, %v179, -inf
      %182 = vmax.xlane.f32.xlu0 %v181
      %v183 = vpop.xlane.xlu0 %182
      %v184 = vsub.f32 %v179, %v183
      %v185 = vmul.f32 %v184, 1.442695
      %v186 = vpow.pop %v185
      %v187 = vsel %vm180, %v186, 0.0
      %188 = vadd.xlane.f32.xlu0 %v187
      %v189 = vpop.xlane.xlu0 %188
      %v190 = vrcp.pop %v189
      %v191 = vmul.f32 %v186, %v190
      %v192 = vpack.c.bf16 %v191, %v191
      %v194 = vsel %vm180, %v192, 0
      %vm196 = vcmask 1043456
      %v198 = vsel %vm196, %v155, 0
      %200 = vmatpush.bf16.msra.mxu0 0
      %201 = vmatpush.bf16.msra.mxu0 0
      %202 = vmatpush.bf16.msra.mxu0 0
      %203 = vmatpush.bf16.msra.mxu0 0
      %204 = vmatpush.bf16.msra.mxu0 0
      %205 = vmatpush.bf16.msra.mxu0 0
      %206 = vmatpush.bf16.msra.mxu0 0
      %207 = vmatpush.bf16.msra.mxu0 %v198
      %208 = vmatmul.bf16.gmra.mxu0 %v194
      %v209 = vpop.f32.mrf.mxu0
      %v210 = vadd.f32 0.0, %v209
      %v211 = vpop.f32.mrf.mxu0
      %212 = vdwg.mxu0
      %v213 = vpack.c.bf16 %v210, %v210
      %214 = vst [vmem:[%s152] sm:$0xf] %v213
      %p215 = scmp.lt.s32.totalorder %s16, 1
      %s216 = scalar_select %p215, %s16, 1
      %p217 = scmp.lt.s32.totalorder %s17, 3
      %s218 = scalar_select %p217, %s17, 3
      %s219 = smul.addr %s216, 4
      %s220 = sadd.s32 %s218, %s219
      %s221 = smul.addr %s220, 4
      %s222 = scalar_lea.vmem %s1, %s221
      // Predicated region
      $region25: #{transformer_vae_forward.30} parent=23 // pred_check
        %p223 = pneg %p72
      $region26: #{transformer_vae_forward.30} parent=23 // pred_check_branch
        %225 = sbr.rel (%p223) target = $region28
      $region27: #{transformer_vae_forward.30} parent=23 // pred_region
        _
      $region28: #{transformer_vae_forward.30} parent=23 // pred_fallthru
        _
    $region24: #{transformer_vae_forward.30} parent=5 // pred_fallthru
      _
    %p226 = scmp.le.s32.totalorder 2, %s7
    // Predicated region
    $region29: #{transformer_vae_forward.30} parent=5 // pred_check
      %p227 = pneg %p226
    $region30: #{transformer_vae_forward.30} parent=5 // pred_check_branch
      %229 = sbr.rel (%p227) target = $region32
    $region31: #{transformer_vae_forward.30} parent=5 // pred_region
      %s230 = ssub.s32 %s7, 2
      // Predicated region
      $region33: #{transformer_vae_forward.30} parent=31 // pred_check
        %p231 = pneg %p78
      $region34: #{transformer_vae_forward.30} parent=31 // pred_check_branch
        %233 = sbr.rel (%p231) target = $region36
      $region35: #{transformer_vae_forward.30} parent=31 // pred_region
        %p234 = scmp.lt.s32.totalorder %s18, 1
        %s235 = scalar_select %p234, %s18, 1
        %p236 = scmp.lt.s32.totalorder %s19, 3
        %s237 = scalar_select %p236, %s19, 3
        %s238 = smul.addr %s235, 4
        %s239 = sadd.s32 %s237, %s238
        %s240 = smul.addr %s239, 4
        %s241 = scalar_lea.vmem %s1, %s240
      $region36: #{transformer_vae_forward.30} parent=31 // pred_fallthru
        _
    $region32: #{transformer_vae_forward.30} parent=5 // pred_fallthru
      _
  $region6: #{transformer_vae_forward.30} parent=0 // loop_footer
    %s11 = sadd.s32 1, %s7
  $region7: #{transformer_vae_forward.30} parent=0 // loop_footer_branch
    %6 = sbr.rel target = $region3
  $region8: #{transformer_vae_forward.30} parent=0 // loop_exit
    _

// kernel: transformer_vae_forward.29
$region0: #{transformer_vae_forward.29}
  #allocation0 [shape = 'u32[]', space=smem, size = 0x4, offset = 0x4, fixed_abs, tag = 'smem constant byte address 0x4 - core index']
  #allocation1 [shape = 'u32[72,128]{1,0:T(1,128)}', space=vmem, size = 0x9000, scoped, tag = 'internal scratch']
  #allocation2 [shape = 'f32[16,256]{1,0:T(8,128)}', space=vmem, size = 0x4000, scoped, tag = 'scratch operand']
  %s0 = inlined_call_operand.vmem [shape: bf16[16,128], index: 0, kind: input, shape index: {}]
  %s1 = inlined_call_operand.hbm [shape: bf16[128,1536], index: 1, kind: input, shape index: {}]
  %s2 = inlined_call_operand.vmem [shape: f32[1,1536], index: 2, kind: input, shape index: {}]
  %s3 = inlined_call_operand.vmem [shape: bf16[16,1536], index: 3, kind: output, shape index: {}]
  %s4 = sld [smem:[#allocation0]]
  $region91: #{transformer_vae_forward.29} parent=0
    _
  %s6 = ssub.s32 1, %s4
  %s7 = scalar_select 0, %s6, %s4
  $region1: #{transformer_vae_forward.29} parent=0
    #allocation3 [shape = 'u8[131072]{0}', space=vmem, size = 0x20000, scoped, tag = 'input window, operand 1']
    #allocation4 [shape = 's32[2]{0}', space=sflag, size = 0x8, scoped, tag = 'scoped memory for transformer_vae_forward.29']
    #allocation5 [shape = 'u8[16384]{0}', space=vmem, size = 0x4000, scoped, tag = 'output window, operand 0']
    %8 = vsyncpa [#allocation4], 0
    %s9 = scalar_lea.sflag [#allocation4], 1
    %10 = vsyncpa %s9, 0
    loop: start=0, step=1, limit=8
    $region2: #{transformer_vae_forward.29} parent=1 // loop_pre_header
      _
    $region3: #{transformer_vae_forward.29} parent=1 // loop_header
      %s12 = sphi 0, %s16
      %p13 = scmp.ge.s32.totalorder %s12, 8
      %s19 = sphi 0, %s38
      %s20 = sphi 0, %s34
      %s21 = sphi 0, %s30
      %s22 = sphi 0, %s19
      %s23 = sphi 0, %s20
      %s24 = sphi 0, %s21
      %s25 = sphi 0, %s22
      %s26 = sphi 0, %s23
      %s27 = sphi 0, %s24
      %s43 = sphi 0, %s45
      %s46 = sphi 0, %s43
      %s47 = sphi 0, %s46
      %s63 = sphi 0, %s47
      %s71 = sphi 0, %s73
      %s74 = sphi 0, %s71
      %s75 = sphi 0, %s74
      %s91 = sphi 0, %s75
      %s97 = sphi 0, %s99
      %s100 = sphi 0, %s97
      %s101 = sphi 0, %s100
      %s117 = sphi 0, %s101
      %s125 = sphi 0, %s127
      %s128 = sphi 0, %s125
      %s129 = sphi 0, %s128
      %s145 = sphi 0, %s129
    $region4: #{transformer_vae_forward.29} parent=1 // loop_header_branch
      %15 = sbr.rel (%p13) target = $region8
    $region5: #{transformer_vae_forward.29} parent=1 // loop_body
      %s17 = ssub.s32 %s12, 1
      %s18 = ssub.s32 %s12, 2
      %s28 = sadd.s32 1, %s21
      %p29 = scmp.ge.s32.totalorder %s28, 1
      %s30 = scalar_select %p29, 0, %s28
      %s31 = sadd.s32 1, %s20
      %s32 = scalar_select %p29, %s31, %s20
      %p33 = scmp.ge.s32.totalorder %s32, 6
      %s34 = scalar_select %p33, 0, %s32
      %s35 = sadd.s32 1, %s19
      %s36 = scalar_select %p33, %s35, %s19
      %p37 = scmp.ge.s32.totalorder %s36, 1
      %s38 = scalar_select %p37, 0, %s36
      %s39 = ssub.s32 %s19, %s38
      %s40 = ssub.s32 %s21, %s30
      %s41 = sor.u32 %s39, %s40
      %p42 = scmp.eq.s32.totalorder %s41, 0
      %s44 = sadd.s32 %s43, 1
      %s45 = scalar_select %p42, %s43, %s44
      %p48 = pneg %p42
      %p49 = scmp.eq.s32.totalorder %s12, 5
      %p50 = por %p48, %p49
      %p51 = scmp.ne.s32.totalorder %s43, %s46
      %p52 = scmp.eq.s32.totalorder %s12, 0
      %p53 = por %p51, %p52
      %p54 = scmp.ne.s32.totalorder %s43, %s46
      %p55 = scmp.eq.s32.totalorder %s17, 5
      %p56 = por %p54, %p55
      %p57 = scmp.ne.s32.totalorder %s46, %s47
      %p58 = scmp.eq.s32.totalorder %s17, 0
      %p59 = por %p57, %p58
      %p60 = scmp.ne.s32.totalorder %s46, %s47
      %p61 = scmp.eq.s32.totalorder %s18, 5
      %p62 = por %p60, %p61
      %p64 = scmp.ne.s32.totalorder %s47, %s63
      %p65 = scmp.eq.s32.totalorder %s18, 0
      %p66 = por %p64, %p65
      %s67 = ssub.s32 %s21, %s30
      %s68 = ssub.s32 %s20, %s34
      %s69 = sor.u32 %s67, %s68
      %p70 = scmp.eq.s32.totalorder %s69, 0
      %s72 = sadd.s32 %s71, 1
      %s73 = scalar_select %p70, %s71, %s72
      %p76 = pneg %p70
      %p77 = scmp.eq.s32.totalorder %s12, 5
      %p78 = por %p76, %p77
      %p79 = scmp.ne.s32.totalorder %s71, %s74
      %p80 = scmp.eq.s32.totalorder %s12, 0
      %p81 = por %p79, %p80
      %p82 = scmp.ne.s32.totalorder %s71, %s74
      %p83 = scmp.eq.s32.totalorder %s17, 5
      %p84 = por %p82, %p83
      %p85 = scmp.ne.s32.totalorder %s74, %s75
      %p86 = scmp.eq.s32.totalorder %s17, 0
      %p87 = por %p85, %p86
      %p88 = scmp.ne.s32.totalorder %s74, %s75
      %p89 = scmp.eq.s32.totalorder %s18, 5
      %p90 = por %p88, %p89
      %p92 = scmp.ne.s32.totalorder %s75, %s91
      %p93 = scmp.eq.s32.totalorder %s18, 0
      %p94 = por %p92, %p93
      %s95 = ssub.s32 %s20, %s34
      %p96 = scmp.eq.s32.totalorder %s95, 0
      %s98 = sadd.s32 %s97, 1
      %s99 = scalar_select %p96, %s97, %s98
      %p102 = pneg %p96
      %p103 = scmp.eq.s32.totalorder %s12, 5
      %p104 = por %p102, %p103
      %p105 = scmp.ne.s32.totalorder %s97, %s100
      %p106 = scmp.eq.s32.totalorder %s12, 0
      %p107 = por %p105, %p106
      %p108 = scmp.ne.s32.totalorder %s97, %s100
      %p109 = scmp.eq.s32.totalorder %s17, 5
      %p110 = por %p108, %p109
      %p111 = scmp.ne.s32.totalorder %s100, %s101
      %p112 = scmp.eq.s32.totalorder %s17, 0
      %p113 = por %p111, %p112
      %p114 = scmp.ne.s32.totalorder %s100, %s101
      %p115 = scmp.eq.s32.totalorder %s18, 5
      %p116 = por %p114, %p115
      %p118 = scmp.ne.s32.totalorder %s101, %s117
      %p119 = scmp.eq.s32.totalorder %s18, 0
      %p120 = por %p118, %p119
      %s121 = ssub.s32 %s19, %s38
      %s122 = ssub.s32 %s20, %s34
      %s123 = sor.u32 %s121, %s122
      %p124 = scmp.eq.s32.totalorder %s123, 0
      %s126 = sadd.s32 %s125, 1
      %s127 = scalar_select %p124, %s125, %s126
      %p130 = pneg %p124
      %p131 = scmp.eq.s32.totalorder %s12, 5
      %p132 = por %p130, %p131
      %p133 = scmp.ne.s32.totalorder %s125, %s128
      %p134 = scmp.eq.s32.totalorder %s12, 0
      %p135 = por %p133, %p134
      %p136 = scmp.ne.s32.totalorder %s125, %s128
      %p137 = scmp.eq.s32.totalorder %s17, 5
      %p138 = por %p136, %p137
      %p139 = scmp.ne.s32.totalorder %s128, %s129
      %p140 = scmp.eq.s32.totalorder %s17, 0
      %p141 = por %p139, %p140
      %p142 = scmp.ne.s32.totalorder %s128, %s129
      %p143 = scmp.eq.s32.totalorder %s18, 5
      %p144 = por %p142, %p143
      %p146 = scmp.ne.s32.totalorder %s129, %s145
      %p147 = scmp.eq.s32.totalorder %s18, 0
      %p148 = por %p146, %p147
      %p149 = scmp.le.s32.totalorder 1, %s12
      %p150 = scmp.lt.s32.totalorder %s12, 7
      %p151 = pnand %p149, %p150
      %p152 = pneg %p151
      // Predicated region
      $region9: #{transformer_vae_forward.29} parent=5 // pred_check
        _
      $region10: #{transformer_vae_forward.29} parent=5 // pred_check_branch
        %154 = sbr.rel (%p151) target = $region12
      $region11: #{transformer_vae_forward.29} parent=5 // pred_region
        %s155 = ssub.s32 %s12, 1
        // Predicated region
        $region13: #{transformer_vae_forward.29} parent=11 // pred_check
          %p156 = pneg %p59
        $region14: #{transformer_vae_forward.29} parent=11 // pred_check_branch
          %158 = sbr.rel (%p156) target = $region16
        $region15: #{transformer_vae_forward.29} parent=11 // pred_region
          %s159 = smul.u32 2, %s22
          %p160 = scmp.lt.s32.totalorder %s159, 1
          %s161 = scalar_select %p160, %s159, 1
          %p162 = scmp.lt.s32.totalorder %s24, 0
          %s163 = scalar_select %p162, %s24, 0
          %s164 = sadd.s32 %s163, %s161
          %s165 = smul.addr %s164, 4
          %s166 = scalar_lea.vmem %s0, %s165
          %s167 = smul.u32 2, %s22
        $region16: #{transformer_vae_forward.29} parent=11 // pred_fallthru
          _
      $region12: #{transformer_vae_forward.29} parent=5 // pred_fallthru
        _
      %p168 = scmp.lt.s32.totalorder %s12, 6
      // Predicated region
      $region17: #{transformer_vae_forward.29} parent=5 // pred_check
        %p169 = pneg %p168
      $region18: #{transformer_vae_forward.29} parent=5 // pred_check_branch
        %171 = sbr.rel (%p169) target = $region20
      $region19: #{transformer_vae_forward.29} parent=5 // pred_region
        // Predicated region
        $region21: #{transformer_vae_forward.29} parent=19 // pred_check
          %p172 = pneg %p81
        $region22: #{transformer_vae_forward.29} parent=19 // pred_check_branch
          %174 = sbr.rel (%p172) target = $region24
        $region23: #{transformer_vae_forward.29} parent=19 // pred_region
          %s175 = sand.u32 %s71, 1
          %s176 = scalar_lea.sflag [#allocation4], %s175
          %s177 = sand.u32 %s71, 1
          %s178 = smul.addr %s177, 128
          %s179 = scalar_lea.vmem [#allocation3], %s178
          %s180 = smul.u32 16, %s21
          %s181 = smul.u32 2, %s20
          %183 = vsyncadd %s176, 0
          %s184 = smul.addr %s180, 12
          %s185 = sadd.s32 %s181, %s184
          %s186 = smul.addr %s185, 4
          %s187 = scalar_lea.hbm %s1, %s186
          %s188 = sshll.u32 %s187, 4
          %s189 = int_to_ptr.hbm [resolvable:$true] %s188
          %s190 = sshll.u32 %s179, 4
          %s191 = int_to_ptr.vmem [resolvable:$true] %s190
          %196 = dma.hbm_to_vmem [thread:$0]  %s189, 2048, %s191, %s176, 768, 128, 8
        $region24: #{transformer_vae_forward.29} parent=19 // pred_fallthru
          _
        // Predicated region
        $region25: #{transformer_vae_forward.29} parent=19 // pred_check
          %p197 = pneg %p107
        $region26: #{transformer_vae_forward.29} parent=19 // pred_check_branch
          %199 = sbr.rel (%p197) target = $region28
        $region27: #{transformer_vae_forward.29} parent=19 // pred_region
          %s200 = smul.u32 2, %s20
          %p201 = scmp.lt.s32.totalorder %s200, 11
          %s202 = scalar_select %p201, %s200, 11
          %s203 = scalar_lea.vmem %s2, %s202
          %s204 = smul.u32 2, %s20
        $region28: #{transformer_vae_forward.29} parent=19 // pred_fallthru
          _
      $region20: #{transformer_vae_forward.29} parent=5 // pred_fallthru
        _
      %p205 = scmp.le.s32.totalorder 1, %s12
      %p206 = scmp.lt.s32.totalorder %s12, 7
      %p207 = pnand %p205, %p206
      %p208 = pneg %p207
      // Predicated region
      $region29: #{transformer_vae_forward.29} parent=5 // pred_check
        _
      $region30: #{transformer_vae_forward.29} parent=5 // pred_check_branch
        %210 = sbr.rel (%p207) target = $region32
      $region31: #{transformer_vae_forward.29} parent=5 // pred_region
        %s211 = ssub.s32 %s12, 1
        %s212 = sand.u32 %s74, 1
        %s213 = scalar_lea.sflag [#allocation4], %s212
        %s214 = sand.u32 %s74, 1
        %s215 = smul.addr %s214, 128
        %s216 = scalar_lea.vmem [#allocation3], %s215
        // Predicated region
        $region33: #{transformer_vae_forward.29} parent=31 // pred_check
          %p217 = pneg %p87
        $region34: #{transformer_vae_forward.29} parent=31 // pred_check_branch
          %219 = sbr.rel (%p217) target = $region36
        $region35: #{transformer_vae_forward.29} parent=31 // pred_region
          %221 = dma.done %s213, 2048
        $region36: #{transformer_vae_forward.29} parent=31 // pred_fallthru
          _
        %s222 = smul.u32 2, %s22
        %p223 = scmp.lt.s32.totalorder %s222, 1
        %s224 = scalar_select %p223, %s222, 1
        %p225 = scmp.lt.s32.totalorder %s24, 0
        %s226 = scalar_select %p225, %s24, 0
        %s227 = sadd.s32 %s226, %s224
        %s228 = smul.addr %s227, 4
        %s229 = scalar_lea.vmem %s0, %s228
        %p230 = pneg %p59
        %p231 = pneg %p56
        %s232 = sand.u32 %s74, 1
        %s233 = scalar_lea.sflag [#allocation4], %s232
        %s234 = sand.u32 %s74, 1
        %s235 = smul.addr %s234, 128
        %s236 = scalar_lea.vmem [#allocation3], %s235
        %p237 = pneg %p87
        %p238 = pneg %p84
        %s239 = smul.u32 2, %s23
        %p240 = scmp.lt.s32.totalorder %s239, 11
        %s241 = scalar_select %p240, %s239, 11
        %s242 = scalar_lea.vmem %s2, %s241
        %p243 = pneg %p113
        %p244 = pneg %p110
        %p245 = pneg %p141
        %p246 = pneg %p138
        %s247 = sand.u32 %s128, 1
        %s248 = sand.u32 %s128, 1
        %s249 = smul.addr %s248, 16
        %s250 = scalar_lea.vmem [#allocation5], %s249
        %s251 = smul.u32 2, %s22
        %p252 = scmp.lt.s32.totalorder %s251, 1
        %s253 = scalar_select %p252, %s251, 1
        %p254 = scmp.lt.s32.totalorder %s24, 0
        %s255 = scalar_select %p254, %s24, 0
        %s256 = sadd.s32 %s255, %s253
        %s257 = smul.addr %s256, 4
        %s258 = scalar_lea.vmem %s0, %s257
        %s259 = smul.u32 2, %s22
        %s260 = smul.u32 16, %s24
        %s261 = smul.u32 2, %s23
        %s262 = smul.u32 2, %s23
        %p263 = scmp.lt.s32.totalorder %s262, 11
        %s264 = scalar_select %p263, %s262, 11
        %s265 = scalar_lea.vmem %s2, %s264
        %s266 = smul.u32 2, %s23
        %s267 = smul.u32 2, %s22
        %s268 = smul.u32 2, %s23
        %p269 = scmp.eq.s32.totalorder %s24, 0
        // Predicated region
        $region37: #{transformer_vae_forward.29} parent=31 // pred_check
          %p270 = pneg %p269
        $region38: #{transformer_vae_forward.29} parent=31 // pred_check_branch
          %272 = sbr.rel (%p270) target = $region40
        $region39: #{transformer_vae_forward.29} parent=31 // pred_region
          %273 = vst [vmem:[#allocation2] sm:$0xff] 0.0
          %274 = vst [vmem:[#allocation2 + $0x8] sm:$0xff] 0.0
          %275 = vst [vmem:[#allocation2 + $0x10] sm:$0xff] 0.0
          %276 = vst [vmem:[#allocation2 + $0x18] sm:$0xff] 0.0
        $region40: #{transformer_vae_forward.29} parent=31 // pred_fallthru
          _
        %v277 = vld [vmem:[#allocation2] sm:$0xff]
        %v278 = vld [vmem:[#allocation2 + $0x8] sm:$0xff]
        %v279 = vld [vmem:[#allocation2 + $0x10] sm:$0xff]
        %v280 = vld [vmem:[#allocation2 + $0x18] sm:$0xff]
        %v281 = vld [vmem:[%s258] sm:$0xf]
        %v282 = vld [vmem:[%s258 + $0x4] sm:$0xf]
        %v283 = vld [vmem:[%s216] sm:$0xff]
        %v284 = vld [vmem:[%s216 + $0x8] sm:$0xff]
        %v285 = vld [vmem:[%s216 + $0x10] sm:$0xff]
        %v286 = vld [vmem:[%s216 + $0x18] sm:$0xff]
        %v287 = vld [vmem:[%s216 + $0x20] sm:$0xff]
        %v288 = vld [vmem:[%s216 + $0x28] sm:$0xff]
        %v289 = vld [vmem:[%s216 + $0x30] sm:$0xff]
        %v290 = vld [vmem:[%s216 + $0x38] sm:$0xff]
        %v291 = vld [vmem:[%s216 + $0x40] sm:$0xff]
        %v292 = vld [vmem:[%s216 + $0x48] sm:$0xff]
        %v293 = vld [vmem:[%s216 + $0x50] sm:$0xff]
        %v294 = vld [vmem:[%s216 + $0x58] sm:$0xff]
        %v295 = vld [vmem:[%s216 + $0x60] sm:$0xff]
        %v296 = vld [vmem:[%s216 + $0x68] sm:$0xff]
        %v297 = vld [vmem:[%s216 + $0x70] sm:$0xff]
        %v298 = vld [vmem:[%s216 + $0x78] sm:$0xff]
        %v301 = vunpack.c.l.b16 %v281
        %v302 = vunpack.c.l.b16 %v282
        %v303 = vpack.c.b16 %v302, %v301
        %v321 = vunpack.c.l.b16 %v283
        %v322 = vunpack.c.h.b16 %v283
        %v323 = vunpack.c.l.b16 %v284
        %v324 = vunpack.c.h.b16 %v284
        %v325 = vunpack.c.l.b16 %v285
        %v326 = vunpack.c.h.b16 %v285
        %v327 = vunpack.c.l.b16 %v286
        %v328 = vunpack.c.h.b16 %v286
        %v329 = vunpack.c.l.b16 %v287
        %v330 = vunpack.c.h.b16 %v287
        %v331 = vunpack.c.l.b16 %v288
        %v332 = vunpack.c.h.b16 %v288
        %v333 = vunpack.c.l.b16 %v289
        %v334 = vunpack.c.h.b16 %v289
        %v335 = vunpack.c.l.b16 %v290
        %v336 = vunpack.c.h.b16 %v290
        %v337 = vunpack.c.l.b16 %v291
        %v338 = vunpack.c.h.b16 %v291
        %v339 = vunpack.c.l.b16 %v292
        %v340 = vunpack.c.h.b16 %v292
        %v341 = vunpack.c.l.b16 %v293
        %v342 = vunpack.c.h.b16 %v293
        %v343 = vunpack.c.l.b16 %v294
        %v344 = vunpack.c.h.b16 %v294
        %v345 = vunpack.c.l.b16 %v295
        %v346 = vunpack.c.h.b16 %v295
        %v347 = vunpack.c.l.b16 %v296
        %v348 = vunpack.c.h.b16 %v296
        %v349 = vunpack.c.l.b16 %v297
        %v350 = vunpack.c.h.b16 %v297
        %v351 = vunpack.c.l.b16 %v298
        %v352 = vunpack.c.h.b16 %v298
        %v353 = vpack.c.b16 %v323, %v321
        %v354 = vpack.c.b16 %v324, %v322
        %v355 = vpack.c.b16 %v327, %v325
        %v356 = vpack.c.b16 %v328, %v326
        %v357 = vpack.c.b16 %v331, %v329
        %v358 = vpack.c.b16 %v332, %v330
        %v359 = vpack.c.b16 %v335, %v333
        %v360 = vpack.c.b16 %v336, %v334
        %v361 = vpack.c.b16 %v339, %v337
        %v362 = vpack.c.b16 %v340, %v338
        %v363 = vpack.c.b16 %v343, %v341
        %v364 = vpack.c.b16 %v344, %v342
        %v365 = vpack.c.b16 %v347, %v345
        %v366 = vpack.c.b16 %v348, %v346
        %v367 = vpack.c.b16 %v351, %v349
        %v368 = vpack.c.b16 %v352, %v350
        %385 = vmatpush.bf16.msra.mxu0 %v367
        %386 = vmatpush.bf16.msra.mxu0 %v365
        %387 = vmatpush.bf16.msra.mxu0 %v363
        %388 = vmatpush.bf16.msra.mxu0 %v361
        %389 = vmatpush.bf16.msra.mxu0 %v359
        %390 = vmatpush.bf16.msra.mxu0 %v357
        %391 = vmatpush.bf16.msra.mxu0 %v355
        %392 = vmatpush.bf16.msra.mxu0 %v353
        %393 = vmatmul.bf16.gmra.mxu0 %v303
        %v394 = vpop.f32.mrf.mxu0
        %v395 = vadd.f32 0.0, %v394
        %v396 = vpop.f32.mrf.mxu0
        %v397 = vadd.f32 0.0, %v396
        %398 = vdwg.mxu0
        %399 = vmatpush.bf16.msra.mxu0 %v368
        %400 = vmatpush.bf16.msra.mxu0 %v366
        %401 = vmatpush.bf16.msra.mxu0 %v364
        %402 = vmatpush.bf16.msra.mxu0 %v362
        %403 = vmatpush.bf16.msra.mxu0 %v360
        %404 = vmatpush.bf16.msra.mxu0 %v358
        %405 = vmatpush.bf16.msra.mxu0 %v356
        %406 = vmatpush.bf16.msra.mxu0 %v354
        %407 = vmatmul.bf16.gmra.mxu0 %v303
        %v408 = vpop.f32.mrf.mxu0
        %v409 = vadd.f32 0.0, %v408
        %v410 = vpop.f32.mrf.mxu0
        %v411 = vadd.f32 0.0, %v410
        %412 = vdwg.mxu0
        %v413 = vadd.f32 %v277, %v395
        %v414 = vadd.f32 %v278, %v409
        %v415 = vadd.f32 %v279, %v397
        %v416 = vadd.f32 %v280, %v411
        %417 = vst [vmem:[#allocation2] sm:$0xff] %v413
        %418 = vst [vmem:[#allocation2 + $0x8] sm:$0xff] %v414
        %419 = vst [vmem:[#allocation2 + $0x10] sm:$0xff] %v415
        %420 = vst [vmem:[#allocation2 + $0x18] sm:$0xff] %v416
        // Predicated region
        $region41: #{transformer_vae_forward.29} parent=31 // pred_check
          %p421 = pneg %p269
        $region42: #{transformer_vae_forward.29} parent=31 // pred_check_branch
          %423 = sbr.rel (%p421) target = $region44
        $region43: #{transformer_vae_forward.29} parent=31 // pred_region
          %v424 = vld [vmem:[#allocation2] sm:$0xff]
          %v425 = vld [vmem:[#allocation2 + $0x8] sm:$0xff]
          %v426 = vld [vmem:[#allocation2 + $0x10] sm:$0xff]
          %v427 = vld [vmem:[#allocation2 + $0x18] sm:$0xff]
          %v428 = vld [vmem:[%s265] sm:$0x3]
          %v430 = vperm.slane %v428, 0
          %v431 = vperm.slane %v428, 1
          %v434 = vadd.f32 %v424, %v430
          %v435 = vadd.f32 %v425, %v431
          %v436 = vadd.f32 %v426, %v430
          %v437 = vadd.f32 %v427, %v431
          %v438 = vpack.c.bf16 %v435, %v434
          %v439 = vpack.c.bf16 %v437, %v436
          %440 = vst [vmem:[%s250] sm:$0xff] %v438
          %441 = vst [vmem:[%s250 + $0x8] sm:$0xff] %v439
        $region44: #{transformer_vae_forward.29} parent=31 // pred_fallthru
          _
        %s442 = sand.u32 %s128, 1
        %s443 = sand.u32 %s128, 1
        %s444 = smul.addr %s443, 16
        %s445 = scalar_lea.vmem [#allocation5], %s444
        // Predicated region
        $region45: #{transformer_vae_forward.29} parent=31 // pred_check
          %p446 = pneg %p138
        $region46: #{transformer_vae_forward.29} parent=31 // pred_check_branch
          %448 = sbr.rel (%p446) target = $region48
        $region47: #{transformer_vae_forward.29} parent=31 // pred_region
          %s449 = smul.u32 2, %s22
          %s450 = smul.u32 2, %s23
          %s451 = smul.addr %s449, 12
          %s452 = sadd.s32 %s450, %s451
          %s453 = smul.addr %s452, 4
          %s454 = scalar_lea.vmem %s3, %s453
          // Predicated region
          $region49: #{transformer_vae_forward.29} parent=47 // pred_check
            _
          $region50: #{transformer_vae_forward.29} parent=47 // pred_check_branch
            %456 = sbr.rel (0) target = $region52
          $region51: #{transformer_vae_forward.29} parent=47 // pred_region
            // Predicated region
            $region53: #{transformer_vae_forward.29} parent=51 // pred_check
              _
            $region54: #{transformer_vae_forward.29} parent=51 // pred_check_branch
              %458 = sbr.rel (0) target = $region56
            $region55: #{transformer_vae_forward.29} parent=51 // pred_region
              // Predicated region
              $region68: #{transformer_vae_forward.29} parent=55 // pred_check
                _
              $region69: #{transformer_vae_forward.29} parent=55 // pred_check_branch
                %476 = sbr.rel (0) target = $region71
              $region70: #{transformer_vae_forward.29} parent=55 // pred_region
                loop: start=0, step=1, limit=1
                $region72: #{transformer_vae_forward.29} parent=70 // loop_pre_header
                  _
                $region73: #{transformer_vae_forward.29} parent=70 // loop_header
                  %s478 = sphi 0, %s482
                  %p479 = scmp.ge.s32.totalorder %s478, 1
                  %s483 = sphi %s445, %s445
                  %s484 = sphi %s454, %s454
                $region74: #{transformer_vae_forward.29} parent=70 // loop_header_branch
                  %481 = sbr.rel (%p479) target = $region78
                $region75: #{transformer_vae_forward.29} parent=70 // loop_body
                  %v485 = vld [vmem:[%s483] sm:$0xff]
                  %486 = vst [vmem:[%s484] sm:$0xff] %v485
                  %v487 = vld [vmem:[%s483 + $0x8] sm:$0xff]
                  %488 = vst [vmem:[%s484 + $0x30] sm:$0xff] %v487
                $region76: #{transformer_vae_forward.29} parent=70 // loop_footer
                  %s482 = sadd.s32 1, %s478
                $region77: #{transformer_vae_forward.29} parent=70 // loop_footer_branch
                  %477 = sbr.rel target = $region73
                $region78: #{transformer_vae_forward.29} parent=70 // loop_exit
                  _
              $region71: #{transformer_vae_forward.29} parent=55 // pred_fallthru
                _
              // Predicated region
              $region79: #{transformer_vae_forward.29} parent=55 // pred_check
                _
              $region80: #{transformer_vae_forward.29} parent=55 // pred_check_branch
                %490 = sbr.rel target = $region82
              $region81: #{transformer_vae_forward.29} parent=55 // pred_region
                _
              $region82: #{transformer_vae_forward.29} parent=55 // pred_fallthru
                _
            $region56: #{transformer_vae_forward.29} parent=51 // pred_fallthru
              _
            // Predicated region
            $region57: #{transformer_vae_forward.29} parent=51 // pred_check
              _
            $region58: #{transformer_vae_forward.29} parent=51 // pred_check_branch
              %460 = sbr.rel target = $region60
            $region59: #{transformer_vae_forward.29} parent=51 // pred_region
              %s462 = ssub.s32 256, 1
              loop: start=0, step=1, limit=1
              $region61: #{transformer_vae_forward.29} parent=59 // loop_pre_header
                _
              $region62: #{transformer_vae_forward.29} parent=59 // loop_header
                %s464 = sphi 0, %s468
                %p465 = scmp.ge.s32.totalorder %s464, 1
                %s469 = sphi %s445, %s445
                %s470 = sphi %s454, %s454
              $region63: #{transformer_vae_forward.29} parent=59 // loop_header_branch
                %467 = sbr.rel (%p465) target = $region67
              $region64: #{transformer_vae_forward.29} parent=59 // loop_body
                %v471 = vld [vmem:[%s469] sm:%s462]
                %472 = vst [vmem:[%s470] sm:%s462] %v471
                %v473 = vld [vmem:[%s469 + $0x8] sm:%s462]
                %474 = vst [vmem:[%s470 + $0x30] sm:%s462] %v473
              $region65: #{transformer_vae_forward.29} parent=59 // loop_footer
                %s468 = sadd.s32 1, %s464
              $region66: #{transformer_vae_forward.29} parent=59 // loop_footer_branch
                %463 = sbr.rel target = $region62
              $region67: #{transformer_vae_forward.29} parent=59 // loop_exit
                _
            $region60: #{transformer_vae_forward.29} parent=51 // pred_fallthru
              _
          $region52: #{transformer_vae_forward.29} parent=47 // pred_fallthru
            _
          %491 = vnop
        $region48: #{transformer_vae_forward.29} parent=31 // pred_fallthru
          _
      $region32: #{transformer_vae_forward.29} parent=5 // pred_fallthru
        _
      %p492 = scmp.le.s32.totalorder 2, %s12
      // Predicated region
      $region83: #{transformer_vae_forward.29} parent=5 // pred_check
        %p493 = pneg %p492
      $region84: #{transformer_vae_forward.29} parent=5 // pred_check_branch
        %495 = sbr.rel (%p493) target = $region86
      $region85: #{transformer_vae_forward.29} parent=5 // pred_region
        %s496 = ssub.s32 %s12, 2
        // Predicated region
        $region87: #{transformer_vae_forward.29} parent=85 // pred_check
          %p497 = pneg %p144
        $region88: #{transformer_vae_forward.29} parent=85 // pred_check_branch
          %499 = sbr.rel (%p497) target = $region90
        $region89: #{transformer_vae_forward.29} parent=85 // pred_region
          %s500 = sand.u32 %s129, 1
          %s501 = sand.u32 %s129, 1
          %s502 = smul.addr %s501, 16
          %s503 = scalar_lea.vmem [#allocation5], %s502
        $region90: #{transformer_vae_forward.29} parent=85 // pred_fallthru
          _
      $region86: #{transformer_vae_forward.29} parent=5 // pred_fallthru
        _
    $region6: #{transformer_vae_forward.29} parent=1 // loop_footer
      %s16 = sadd.s32 1, %s12
    $region7: #{transformer_vae_forward.29} parent=1 // loop_footer_branch
      %11 = sbr.rel target = $region3
    $region8: #{transformer_vae_forward.29} parent=1 // loop_exit
      _
    %504 = vsyncpa [#allocation4], 1
    %s505 = scalar_lea.sflag [#allocation4], 1
    %506 = vsyncpa %s505, 1

// kernel: transformer_vae_forward.45
$region0: #{transformer_vae_forward.45}
  #allocation0 [shape = 'u32[]', space=smem, size = 0x4, offset = 0x4, fixed_abs, tag = 'smem constant byte address 0x4 - core index']
  #allocation1 [shape = 'u32[72,128]{1,0:T(1,128)}', space=vmem, size = 0x9000, scoped, tag = 'internal scratch']
  %s0 = inlined_call_operand.vmem [shape: bf16[2,8,128], index: 0, kind: input, shape index: {}]
  %s1 = inlined_call_operand.vmem [shape: bf16[2,1,128], index: 1, kind: input, shape index: {}]
  %s2 = inlined_call_operand.vmem [shape: f32[1,1,128], index: 2, kind: input, shape index: {}]
  %s3 = inlined_call_operand.vmem [shape: f32[1,1,128], index: 3, kind: input, shape index: {}]
  %s4 = inlined_call_operand.vmem [shape: bf16[2,8,128], index: 4, kind: output, shape index: {}]
  %s5 = sld [smem:[#allocation0]]
  $region49: #{transformer_vae_forward.45} parent=0
    _
  %s7 = ssub.s32 1, %s5
  %s8 = scalar_select 0, %s7, %s5
  loop: start=0, step=1, limit=4
  $region2: #{transformer_vae_forward.45} parent=0 // loop_pre_header
    _
  $region3: #{transformer_vae_forward.45} parent=0 // loop_header
    %s10 = sphi 0, %s14
    %p11 = scmp.ge.s32.totalorder %s10, 4
    %s20 = sphi 0, %s22
    %s23 = sphi 0, %s20
    %s24 = sphi 0, %s23
    %s40 = sphi 0, %s24
    %s46 = sphi 0, %s48
    %s49 = sphi 0, %s46
    %s50 = sphi 0, %s49
    %s66 = sphi 0, %s50
    %s70 = sphi 0, %s70
    %s72 = sphi 0, %s70
    %s73 = sphi 0, %s72
    %s87 = sphi 0, %s73
    %s91 = sphi 0, %s91
    %s93 = sphi 0, %s91
    %s94 = sphi 0, %s93
    %s108 = sphi 0, %s94
    %s114 = sphi 0, %s116
    %s117 = sphi 0, %s114
    %s118 = sphi 0, %s117
    %s134 = sphi 0, %s118
  $region4: #{transformer_vae_forward.45} parent=0 // loop_header_branch
    %13 = sbr.rel (%p11) target = $region8
  $region5: #{transformer_vae_forward.45} parent=0 // loop_body
    %s15 = ssub.s32 %s10, 1
    %s16 = ssub.s32 %s10, 2
    %s17 = sadd.s32 %s10, 1
    %s18 = ssub.s32 %s10, %s17
    %p19 = scmp.eq.s32.totalorder %s18, 0
    %s21 = sadd.s32 %s20, 1
    %s22 = scalar_select %p19, %s20, %s21
    %p25 = pneg %p19
    %p26 = scmp.eq.s32.totalorder %s10, 1
    %p27 = por %p25, %p26
    %p28 = scmp.ne.s32.totalorder %s20, %s23
    %p29 = scmp.eq.s32.totalorder %s10, 0
    %p30 = por %p28, %p29
    %p31 = scmp.ne.s32.totalorder %s20, %s23
    %p32 = scmp.eq.s32.totalorder %s15, 1
    %p33 = por %p31, %p32
    %p34 = scmp.ne.s32.totalorder %s23, %s24
    %p35 = scmp.eq.s32.totalorder %s15, 0
    %p36 = por %p34, %p35
    %p37 = scmp.ne.s32.totalorder %s23, %s24
    %p38 = scmp.eq.s32.totalorder %s16, 1
    %p39 = por %p37, %p38
    %p41 = scmp.ne.s32.totalorder %s24, %s40
    %p42 = scmp.eq.s32.totalorder %s16, 0
    %p43 = por %p41, %p42
    %s44 = ssub.s32 %s10, %s17
    %p45 = scmp.eq.s32.totalorder %s44, 0
    %s47 = sadd.s32 %s46, 1
    %s48 = scalar_select %p45, %s46, %s47
    %p51 = pneg %p45
    %p52 = scmp.eq.s32.totalorder %s10, 1
    %p53 = por %p51, %p52
    %p54 = scmp.ne.s32.totalorder %s46, %s49
    %p55 = scmp.eq.s32.totalorder %s10, 0
    %p56 = por %p54, %p55
    %p57 = scmp.ne.s32.totalorder %s46, %s49
    %p58 = scmp.eq.s32.totalorder %s15, 1
    %p59 = por %p57, %p58
    %p60 = scmp.ne.s32.totalorder %s49, %s50
    %p61 = scmp.eq.s32.totalorder %s15, 0
    %p62 = por %p60, %p61
    %p63 = scmp.ne.s32.totalorder %s49, %s50
    %p64 = scmp.eq.s32.totalorder %s16, 1
    %p65 = por %p63, %p64
    %p67 = scmp.ne.s32.totalorder %s50, %s66
    %p68 = scmp.eq.s32.totalorder %s16, 0
    %p69 = por %p67, %p68
    %s71 = sadd.s32 %s70, 1
    %p74 = scmp.eq.s32.totalorder %s10, 1
    %p75 = scmp.ne.s32.totalorder %s70, %s72
    %p76 = scmp.eq.s32.totalorder %s10, 0
    %p77 = por %p75, %p76
    %p78 = scmp.ne.s32.totalorder %s70, %s72
    %p79 = scmp.eq.s32.totalorder %s15, 1
    %p80 = por %p78, %p79
    %p81 = scmp.ne.s32.totalorder %s72, %s73
    %p82 = scmp.eq.s32.totalorder %s15, 0
    %p83 = por %p81, %p82
    %p84 = scmp.ne.s32.totalorder %s72, %s73
    %p85 = scmp.eq.s32.totalorder %s16, 1
    %p86 = por %p84, %p85
    %p88 = scmp.ne.s32.totalorder %s73, %s87
    %p89 = scmp.eq.s32.totalorder %s16, 0
    %p90 = por %p88, %p89
    %s92 = sadd.s32 %s91, 1
    %p95 = scmp.eq.s32.totalorder %s10, 1
    %p96 = scmp.ne.s32.totalorder %s91, %s93
    %p97 = scmp.eq.s32.totalorder %s10, 0
    %p98 = por %p96, %p97
    %p99 = scmp.ne.s32.totalorder %s91, %s93
    %p100 = scmp.eq.s32.totalorder %s15, 1
    %p101 = por %p99, %p100
    %p102 = scmp.ne.s32.totalorder %s93, %s94
    %p103 = scmp.eq.s32.totalorder %s15, 0
    %p104 = por %p102, %p103
    %p105 = scmp.ne.s32.totalorder %s93, %s94
    %p106 = scmp.eq.s32.totalorder %s16, 1
    %p107 = por %p105, %p106
    %p109 = scmp.ne.s32.totalorder %s94, %s108
    %p110 = scmp.eq.s32.totalorder %s16, 0
    %p111 = por %p109, %p110
    %s112 = ssub.s32 %s10, %s17
    %p113 = scmp.eq.s32.totalorder %s112, 0
    %s115 = sadd.s32 %s114, 1
    %s116 = scalar_select %p113, %s114, %s115
    %p119 = pneg %p113
    %p120 = scmp.eq.s32.totalorder %s10, 1
    %p121 = por %p119, %p120
    %p122 = scmp.ne.s32.totalorder %s114, %s117
    %p123 = scmp.eq.s32.totalorder %s10, 0
    %p124 = por %p122, %p123
    %p125 = scmp.ne.s32.totalorder %s114, %s117
    %p126 = scmp.eq.s32.totalorder %s15, 1
    %p127 = por %p125, %p126
    %p128 = scmp.ne.s32.totalorder %s117, %s118
    %p129 = scmp.eq.s32.totalorder %s15, 0
    %p130 = por %p128, %p129
    %p131 = scmp.ne.s32.totalorder %s117, %s118
    %p132 = scmp.eq.s32.totalorder %s16, 1
    %p133 = por %p131, %p132
    %p135 = scmp.ne.s32.totalorder %s118, %s134
    %p136 = scmp.eq.s32.totalorder %s16, 0
    %p137 = por %p135, %p136
    %p138 = scmp.le.s32.totalorder 1, %s10
    %p139 = scmp.lt.s32.totalorder %s10, 3
    %p140 = pnand %p138, %p139
    %p141 = pneg %p140
    // Predicated region
    $region9: #{transformer_vae_forward.45} parent=5 // pred_check
      _
    $region10: #{transformer_vae_forward.45} parent=5 // pred_check_branch
      %143 = sbr.rel (%p140) target = $region12
    $region11: #{transformer_vae_forward.45} parent=5 // pred_region
      %s144 = ssub.s32 %s10, 1
      // Predicated region
      $region13: #{transformer_vae_forward.45} parent=11 // pred_check
        %p145 = pneg %p83
      $region14: #{transformer_vae_forward.45} parent=11 // pred_check_branch
        %147 = sbr.rel (%p145) target = $region16
      $region15: #{transformer_vae_forward.45} parent=11 // pred_region
        _
      $region16: #{transformer_vae_forward.45} parent=11 // pred_fallthru
        _
      // Predicated region
      $region17: #{transformer_vae_forward.45} parent=11 // pred_check
        %p148 = pneg %p104
      $region18: #{transformer_vae_forward.45} parent=11 // pred_check_branch
        %150 = sbr.rel (%p148) target = $region20
      $region19: #{transformer_vae_forward.45} parent=11 // pred_region
        _
      $region20: #{transformer_vae_forward.45} parent=11 // pred_fallthru
        _
    $region12: #{transformer_vae_forward.45} parent=5 // pred_fallthru
      _
    %p151 = scmp.lt.s32.totalorder %s10, 2
    // Predicated region
    $region21: #{transformer_vae_forward.45} parent=5 // pred_check
      %p152 = pneg %p151
    $region22: #{transformer_vae_forward.45} parent=5 // pred_check_branch
      %154 = sbr.rel (%p152) target = $region24
    $region23: #{transformer_vae_forward.45} parent=5 // pred_region
      // Predicated region
      $region25: #{transformer_vae_forward.45} parent=23 // pred_check
        %p155 = pneg %p30
      $region26: #{transformer_vae_forward.45} parent=23 // pred_check_branch
        %157 = sbr.rel (%p155) target = $region28
      $region27: #{transformer_vae_forward.45} parent=23 // pred_region
        %p158 = scmp.lt.s32.totalorder %s10, 1
        %s159 = scalar_select %p158, %s10, 1
        %s160 = smul.addr %s159, 4
        %s161 = scalar_lea.vmem %s0, %s160
      $region28: #{transformer_vae_forward.45} parent=23 // pred_fallthru
        _
      // Predicated region
      $region29: #{transformer_vae_forward.45} parent=23 // pred_check
        %p162 = pneg %p56
      $region30: #{transformer_vae_forward.45} parent=23 // pred_check_branch
        %164 = sbr.rel (%p162) target = $region32
      $region31: #{transformer_vae_forward.45} parent=23 // pred_region
        %p165 = scmp.lt.s32.totalorder %s10, 1
        %s166 = scalar_select %p165, %s10, 1
        %s167 = scalar_lea.vmem %s1, %s166
      $region32: #{transformer_vae_forward.45} parent=23 // pred_fallthru
        _
    $region24: #{transformer_vae_forward.45} parent=5 // pred_fallthru
      _
    %p168 = scmp.le.s32.totalorder 1, %s10
    %p169 = scmp.lt.s32.totalorder %s10, 3
    %p170 = pnand %p168, %p169
    %p171 = pneg %p170
    // Predicated region
    $region33: #{transformer_vae_forward.45} parent=5 // pred_check
      _
    $region34: #{transformer_vae_forward.45} parent=5 // pred_check_branch
      %173 = sbr.rel (%p170) target = $region36
    $region35: #{transformer_vae_forward.45} parent=5 // pred_region
      %s174 = ssub.s32 %s10, 1
      %p175 = scmp.lt.s32.totalorder %s15, 1
      %s176 = scalar_select %p175, %s15, 1
      %s177 = smul.addr %s176, 4
      %s178 = scalar_lea.vmem %s0, %s177
      %p179 = pneg %p36
      %p180 = pneg %p33
      %p181 = scmp.lt.s32.totalorder %s15, 1
      %s182 = scalar_select %p181, %s15, 1
      %s183 = scalar_lea.vmem %s1, %s182
      %p184 = pneg %p62
      %p185 = pneg %p59
      %p186 = pneg %p83
      %p187 = pneg %p80
      %p188 = pneg %p104
      %p189 = pneg %p101
      %p190 = pneg %p130
      %p191 = pneg %p127
      %p192 = scmp.lt.s32.totalorder %s15, 1
      %s193 = scalar_select %p192, %s15, 1
      %s194 = smul.addr %s193, 4
      %s195 = scalar_lea.vmem %s4, %s194
      %p196 = scmp.lt.s32.totalorder %s15, 1
      %s197 = scalar_select %p196, %s15, 1
      %s198 = smul.addr %s197, 4
      %s199 = scalar_lea.vmem %s0, %s198
      %p200 = scmp.lt.s32.totalorder %s15, 1
      %s201 = scalar_select %p200, %s15, 1
      %s202 = scalar_lea.vmem %s1, %s201
      %p203 = scmp.lt.s32.totalorder %s15, 1
      %s204 = scalar_select %p203, %s15, 1
      %s205 = smul.addr %s204, 4
      %s206 = scalar_lea.vmem %s4, %s205
      %v207 = vld [vmem:[%s199] sm:$0xf]
      %v208 = vunpack.c.l.bf16 %v207
      %v209 = vld [vmem:[%s202] sm:$0x1]
      %v210 = vunpack.c.l.bf16 %v209
      %v211 = vperm.slane %v210, 0
      %v212 = vadd.f32 %v208, %v211
      %v213 = vlaneseq
      %v214 = vand.u32 %v213, 127
      %vm215 = vcmp.lt.s32.totalorder %v214, 32
      %v216 = vsel %vm215, %v212, 0.0
      %217 = vadd.xlane.f32.xlu0 %v216
      %v218 = vpop.xlane.xlu0 %217
      %v219 = vmul.f32 %v218, 0.03125
      %v220 = vsub.f32 %v212, %v219
      %v221 = vsel %vm215, %v220, 0.0
      %v222 = vmul.f32 %v221, %v221
      %223 = vadd.xlane.f32.xlu0 %v222
      %v224 = vpop.xlane.xlu0 %223
      %v225 = vmul.f32 %v224, 0.03125
      %v226 = vadd.f32 %v225, 1e-05
      %v227 = vrsqrt.pop %v226
      %v228 = vmul.f32 %v227, %v226
      %v229 = vmul.f32 %v228, %v227
      %v230 = vmul.f32 0.5, %v229
      %v231 = vsub.f32 1.5, %v230
      %v232 = vmul.f32 %v227, %v231
      %vm233 = vweird.f32 %v226
      %vm234 = vweird.f32 %v227
      %vm235 = vmor %vm233, %vm234
      %v236 = vsel %vm235, %v227, %v232
      %v237 = vmul.f32 %v221, %v236
      %v238 = vld [vmem:[%s2] sm:$0x1]
      %v240 = vperm.slane %v238, 0
      %v242 = vmul.f32 %v237, %v240
      %v243 = vld [vmem:[%s3] sm:$0x1]
      %v245 = vperm.slane %v243, 0
      %v247 = vadd.f32 %v242, %v245
      %v248 = vpack.c.bf16 %v247, %v247
      %249 = vst [vmem:[%s206] sm:$0xf] %v248
      %p250 = scmp.lt.s32.totalorder %s15, 1
      %s251 = scalar_select %p250, %s15, 1
      %s252 = smul.addr %s251, 4
      %s253 = scalar_lea.vmem %s4, %s252
      // Predicated region
      $region37: #{transformer_vae_forward.45} parent=35 // pred_check
        %p254 = pneg %p127
      $region38: #{transformer_vae_forward.45} parent=35 // pred_check_branch
        %256 = sbr.rel (%p254) target = $region40
      $region39: #{transformer_vae_forward.45} parent=35 // pred_region
        _
      $region40: #{transformer_vae_forward.45} parent=35 // pred_fallthru
        _
    $region36: #{transformer_vae_forward.45} parent=5 // pred_fallthru
      _
    %p257 = scmp.le.s32.totalorder 2, %s10
    // Predicated region
    $region41: #{transformer_vae_forward.45} parent=5 // pred_check
      %p258 = pneg %p257
    $region42: #{transformer_vae_forward.45} parent=5 // pred_check_branch
      %260 = sbr.rel (%p258) target = $region44
    $region43: #{transformer_vae_forward.45} parent=5 // pred_region
      %s261 = ssub.s32 %s10, 2
      // Predicated region
      $region45: #{transformer_vae_forward.45} parent=43 // pred_check
        %p262 = pneg %p133
      $region46: #{transformer_vae_forward.45} parent=43 // pred_check_branch
        %264 = sbr.rel (%p262) target = $region48
      $region47: #{transformer_vae_forward.45} parent=43 // pred_region
        %p265 = scmp.lt.s32.totalorder %s16, 1
        %s266 = scalar_select %p265, %s16, 1
        %s267 = smul.addr %s266, 4
        %s268 = scalar_lea.vmem %s4, %s267
      $region48: #{transformer_vae_forward.45} parent=43 // pred_fallthru
        _
    $region44: #{transformer_vae_forward.45} parent=5 // pred_fallthru
      _
  $region6: #{transformer_vae_forward.45} parent=0 // loop_footer
    %s14 = sadd.s32 1, %s10
  $region7: #{transformer_vae_forward.45} parent=0 // loop_footer_branch
    %9 = sbr.rel target = $region3
  $region8: #{transformer_vae_forward.45} parent=0 // loop_exit
    _

// kernel: transformer_vae_forward.31
$region0: #{transformer_vae_forward.31}
  #allocation0 [shape = 'u32[]', space=smem, size = 0x4, offset = 0x4, fixed_abs, tag = 'smem constant byte address 0x4 - core index']
  #allocation1 [shape = 'u32[72,128]{1,0:T(1,128)}', space=vmem, size = 0x9000, scoped, tag = 'internal scratch']
  #allocation2 [shape = 'f32[16,128]{1,0:T(8,128)}', space=vmem, size = 0x2000, scoped, tag = 'scratch operand']
  %s0 = inlined_call_operand.vmem [shape: bf16[16,512], index: 0, kind: input, shape index: {}]
  %s1 = inlined_call_operand.hbm [shape: bf16[512,128], index: 1, kind: input, shape index: {}]
  %s2 = inlined_call_operand.vmem [shape: f32[1,128], index: 2, kind: input, shape index: {}]
  %s3 = inlined_call_operand.vmem [shape: bf16[16,128], index: 3, kind: input, shape index: {}]
  %s4 = inlined_call_operand.vmem [shape: f32[1,128], index: 4, kind: input, shape index: {}]
  %s5 = inlined_call_operand.vmem [shape: f32[1,128], index: 5, kind: input, shape index: {}]
  %s6 = inlined_call_operand.vmem [shape: bf16[16,128], index: 6, kind: output, shape index: {}]
  %s7 = sld [smem:[#allocation0]]
  $region107: #{transformer_vae_forward.31} parent=0
    _
  %s9 = ssub.s32 1, %s7
  %s10 = scalar_select 0, %s9, %s7
  $region1: #{transformer_vae_forward.31} parent=0
    #allocation3 [shape = 'u8[16384]{0}', space=vmem, size = 0x4000, scoped, tag = 'input window, operand 0']
    #allocation4 [shape = 'u8[131072]{0}', space=vmem, size = 0x20000, scoped, tag = 'input window, operand 1']
    #allocation5 [shape = 's32[2]{0}', space=sflag, size = 0x8, scoped, tag = 'scoped memory for transformer_vae_forward.31']
    %11 = vsyncpa [#allocation5], 0
    %s12 = scalar_lea.sflag [#allocation5], 1
    %13 = vsyncpa %s12, 0
    loop: start=0, step=1, limit=4
    $region2: #{transformer_vae_forward.31} parent=1 // loop_pre_header
      _
    $region3: #{transformer_vae_forward.31} parent=1 // loop_header
      %s15 = sphi 0, %s19
      %p16 = scmp.ge.s32.totalorder %s15, 4
      %s22 = sphi 0, %s41
      %s23 = sphi 0, %s37
      %s24 = sphi 0, %s33
      %s25 = sphi 0, %s22
      %s26 = sphi 0, %s23
      %s27 = sphi 0, %s24
      %s28 = sphi 0, %s25
      %s29 = sphi 0, %s26
      %s30 = sphi 0, %s27
      %s46 = sphi 0, %s48
      %s49 = sphi 0, %s46
      %s50 = sphi 0, %s49
      %s66 = sphi 0, %s50
      %s74 = sphi 0, %s76
      %s77 = sphi 0, %s74
      %s78 = sphi 0, %s77
      %s94 = sphi 0, %s78
      %s100 = sphi 0, %s102
      %s103 = sphi 0, %s100
      %s104 = sphi 0, %s103
      %s120 = sphi 0, %s104
      %s128 = sphi 0, %s130
      %s131 = sphi 0, %s128
      %s132 = sphi 0, %s131
      %s148 = sphi 0, %s132
      %s154 = sphi 0, %s156
      %s157 = sphi 0, %s154
      %s158 = sphi 0, %s157
      %s174 = sphi 0, %s158
      %s180 = sphi 0, %s182
      %s183 = sphi 0, %s180
      %s184 = sphi 0, %s183
      %s200 = sphi 0, %s184
      %s208 = sphi 0, %s210
      %s211 = sphi 0, %s208
      %s212 = sphi 0, %s211
      %s228 = sphi 0, %s212
    $region4: #{transformer_vae_forward.31} parent=1 // loop_header_branch
      %18 = sbr.rel (%p16) target = $region8
    $region5: #{transformer_vae_forward.31} parent=1 // loop_body
      %s20 = ssub.s32 %s15, 1
      %s21 = ssub.s32 %s15, 2
      %s31 = sadd.s32 1, %s24
      %p32 = scmp.ge.s32.totalorder %s31, 2
      %s33 = scalar_select %p32, 0, %s31
      %s34 = sadd.s32 1, %s23
      %s35 = scalar_select %p32, %s34, %s23
      %p36 = scmp.ge.s32.totalorder %s35, 1
      %s37 = scalar_select %p36, 0, %s35
      %s38 = sadd.s32 1, %s22
      %s39 = scalar_select %p36, %s38, %s22
      %p40 = scmp.ge.s32.totalorder %s39, 1
      %s41 = scalar_select %p40, 0, %s39
      %s42 = ssub.s32 %s22, %s41
      %s43 = ssub.s32 %s24, %s33
      %s44 = sor.u32 %s42, %s43
      %p45 = scmp.eq.s32.totalorder %s44, 0
      %s47 = sadd.s32 %s46, 1
      %s48 = scalar_select %p45, %s46, %s47
      %p51 = pneg %p45
      %p52 = scmp.eq.s32.totalorder %s15, 1
      %p53 = por %p51, %p52
      %p54 = scmp.ne.s32.totalorder %s46, %s49
      %p55 = scmp.eq.s32.totalorder %s15, 0
      %p56 = por %p54, %p55
      %p57 = scmp.ne.s32.totalorder %s46, %s49
      %p58 = scmp.eq.s32.totalorder %s20, 1
      %p59 = por %p57, %p58
      %p60 = scmp.ne.s32.totalorder %s49, %s50
      %p61 = scmp.eq.s32.totalorder %s20, 0
      %p62 = por %p60, %p61
      %p63 = scmp.ne.s32.totalorder %s49, %s50
      %p64 = scmp.eq.s32.totalorder %s21, 1
      %p65 = por %p63, %p64
      %p67 = scmp.ne.s32.totalorder %s50, %s66
      %p68 = scmp.eq.s32.totalorder %s21, 0
      %p69 = por %p67, %p68
      %s70 = ssub.s32 %s24, %s33
      %s71 = ssub.s32 %s23, %s37
      %s72 = sor.u32 %s70, %s71
      %p73 = scmp.eq.s32.totalorder %s72, 0
      %s75 = sadd.s32 %s74, 1
      %s76 = scalar_select %p73, %s74, %s75
      %p79 = pneg %p73
      %p80 = scmp.eq.s32.totalorder %s15, 1
      %p81 = por %p79, %p80
      %p82 = scmp.ne.s32.totalorder %s74, %s77
      %p83 = scmp.eq.s32.totalorder %s15, 0
      %p84 = por %p82, %p83
      %p85 = scmp.ne.s32.totalorder %s74, %s77
      %p86 = scmp.eq.s32.totalorder %s20, 1
      %p87 = por %p85, %p86
      %p88 = scmp.ne.s32.totalorder %s77, %s78
      %p89 = scmp.eq.s32.totalorder %s20, 0
      %p90 = por %p88, %p89
      %p91 = scmp.ne.s32.totalorder %s77, %s78
      %p92 = scmp.eq.s32.totalorder %s21, 1
      %p93 = por %p91, %p92
      %p95 = scmp.ne.s32.totalorder %s78, %s94
      %p96 = scmp.eq.s32.totalorder %s21, 0
      %p97 = por %p95, %p96
      %s98 = ssub.s32 %s23, %s37
      %p99 = scmp.eq.s32.totalorder %s98, 0
      %s101 = sadd.s32 %s100, 1
      %s102 = scalar_select %p99, %s100, %s101
      %p105 = pneg %p99
      %p106 = scmp.eq.s32.totalorder %s15, 1
      %p107 = por %p105, %p106
      %p108 = scmp.ne.s32.totalorder %s100, %s103
      %p109 = scmp.eq.s32.totalorder %s15, 0
      %p110 = por %p108, %p109
      %p111 = scmp.ne.s32.totalorder %s100, %s103
      %p112 = scmp.eq.s32.totalorder %s20, 1
      %p113 = por %p111, %p112
      %p114 = scmp.ne.s32.totalorder %s103, %s104
      %p115 = scmp.eq.s32.totalorder %s20, 0
      %p116 = por %p114, %p115
      %p117 = scmp.ne.s32.totalorder %s103, %s104
      %p118 = scmp.eq.s32.totalorder %s21, 1
      %p119 = por %p117, %p118
      %p121 = scmp.ne.s32.totalorder %s104, %s120
      %p122 = scmp.eq.s32.totalorder %s21, 0
      %p123 = por %p121, %p122
      %s124 = ssub.s32 %s22, %s41
      %s125 = ssub.s32 %s23, %s37
      %s126 = sor.u32 %s124, %s125
      %p127 = scmp.eq.s32.totalorder %s126, 0
      %s129 = sadd.s32 %s128, 1
      %s130 = scalar_select %p127, %s128, %s129
      %p133 = pneg %p127
      %p134 = scmp.eq.s32.totalorder %s15, 1
      %p135 = por %p133, %p134
      %p136 = scmp.ne.s32.totalorder %s128, %s131
      %p137 = scmp.eq.s32.totalorder %s15, 0
      %p138 = por %p136, %p137
      %p139 = scmp.ne.s32.totalorder %s128, %s131
      %p140 = scmp.eq.s32.totalorder %s20, 1
      %p141 = por %p139, %p140
      %p142 = scmp.ne.s32.totalorder %s131, %s132
      %p143 = scmp.eq.s32.totalorder %s20, 0
      %p144 = por %p142, %p143
      %p145 = scmp.ne.s32.totalorder %s131, %s132
      %p146 = scmp.eq.s32.totalorder %s21, 1
      %p147 = por %p145, %p146
      %p149 = scmp.ne.s32.totalorder %s132, %s148
      %p150 = scmp.eq.s32.totalorder %s21, 0
      %p151 = por %p149, %p150
      %s152 = ssub.s32 %s23, %s37
      %p153 = scmp.eq.s32.totalorder %s152, 0
      %s155 = sadd.s32 %s154, 1
      %s156 = scalar_select %p153, %s154, %s155
      %p159 = pneg %p153
      %p160 = scmp.eq.s32.totalorder %s15, 1
      %p161 = por %p159, %p160
      %p162 = scmp.ne.s32.totalorder %s154, %s157
      %p163 = scmp.eq.s32.totalorder %s15, 0
      %p164 = por %p162, %p163
      %p165 = scmp.ne.s32.totalorder %s154, %s157
      %p166 = scmp.eq.s32.totalorder %s20, 1
      %p167 = por %p165, %p166
      %p168 = scmp.ne.s32.totalorder %s157, %s158
      %p169 = scmp.eq.s32.totalorder %s20, 0
      %p170 = por %p168, %p169
      %p171 = scmp.ne.s32.totalorder %s157, %s158
      %p172 = scmp.eq.s32.totalorder %s21, 1
      %p173 = por %p171, %p172
      %p175 = scmp.ne.s32.totalorder %s158, %s174
      %p176 = scmp.eq.s32.totalorder %s21, 0
      %p177 = por %p175, %p176
      %s178 = ssub.s32 %s23, %s37
      %p179 = scmp.eq.s32.totalorder %s178, 0
      %s181 = sadd.s32 %s180, 1
      %s182 = scalar_select %p179, %s180, %s181
      %p185 = pneg %p179
      %p186 = scmp.eq.s32.totalorder %s15, 1
      %p187 = por %p185, %p186
      %p188 = scmp.ne.s32.totalorder %s180, %s183
      %p189 = scmp.eq.s32.totalorder %s15, 0
      %p190 = por %p188, %p189
      %p191 = scmp.ne.s32.totalorder %s180, %s183
      %p192 = scmp.eq.s32.totalorder %s20, 1
      %p193 = por %p191, %p192
      %p194 = scmp.ne.s32.totalorder %s183, %s184
      %p195 = scmp.eq.s32.totalorder %s20, 0
      %p196 = por %p194, %p195
      %p197 = scmp.ne.s32.totalorder %s183, %s184
      %p198 = scmp.eq.s32.totalorder %s21, 1
      %p199 = por %p197, %p198
      %p201 = scmp.ne.s32.totalorder %s184, %s200
      %p202 = scmp.eq.s32.totalorder %s21, 0
      %p203 = por %p201, %p202
      %s204 = ssub.s32 %s22, %s41
      %s205 = ssub.s32 %s23, %s37
      %s206 = sor.u32 %s204, %s205
      %p207 = scmp.eq.s32.totalorder %s206, 0
      %s209 = sadd.s32 %s208, 1
      %s210 = scalar_select %p207, %s208, %s209
      %p213 = pneg %p207
      %p214 = scmp.eq.s32.totalorder %s15, 1
      %p215 = por %p213, %p214
      %p216 = scmp.ne.s32.totalorder %s208, %s211
      %p217 = scmp.eq.s32.totalorder %s15, 0
      %p218 = por %p216, %p217
      %p219 = scmp.ne.s32.totalorder %s208, %s211
      %p220 = scmp.eq.s32.totalorder %s20, 1
      %p221 = por %p219, %p220
      %p222 = scmp.ne.s32.totalorder %s211, %s212
      %p223 = scmp.eq.s32.totalorder %s20, 0
      %p224 = por %p222, %p223
      %p225 = scmp.ne.s32.totalorder %s211, %s212
      %p226 = scmp.eq.s32.totalorder %s21, 1
      %p227 = por %p225, %p226
      %p229 = scmp.ne.s32.totalorder %s212, %s228
      %p230 = scmp.eq.s32.totalorder %s21, 0
      %p231 = por %p229, %p230
      %p232 = scmp.le.s32.totalorder 1, %s15
      %p233 = scmp.lt.s32.totalorder %s15, 3
      %p234 = pnand %p232, %p233
      %p235 = pneg %p234
      // Predicated region
      $region9: #{transformer_vae_forward.31} parent=5 // pred_check
        _
      $region10: #{transformer_vae_forward.31} parent=5 // pred_check_branch
        %237 = sbr.rel (%p234) target = $region12
      $region11: #{transformer_vae_forward.31} parent=5 // pred_region
        %s238 = ssub.s32 %s15, 1
        // Predicated region
        $region13: #{transformer_vae_forward.31} parent=11 // pred_check
          %p239 = pneg %p116
        $region14: #{transformer_vae_forward.31} parent=11 // pred_check_branch
          %241 = sbr.rel (%p239) target = $region16
        $region15: #{transformer_vae_forward.31} parent=11 // pred_region
          %p242 = scmp.lt.s32.totalorder %s26, 0
          %s243 = scalar_select %p242, %s26, 0
          %s244 = scalar_lea.vmem %s2, %s243
        $region16: #{transformer_vae_forward.31} parent=11 // pred_fallthru
          _
        // Predicated region
        $region17: #{transformer_vae_forward.31} parent=11 // pred_check
          %p245 = pneg %p144
        $region18: #{transformer_vae_forward.31} parent=11 // pred_check_branch
          %247 = sbr.rel (%p245) target = $region20
        $region19: #{transformer_vae_forward.31} parent=11 // pred_region
          %s248 = smul.u32 2, %s25
          %p249 = scmp.lt.s32.totalorder %s248, 1
          %s250 = scalar_select %p249, %s248, 1
          %p251 = scmp.lt.s32.totalorder %s26, 0
          %s252 = scalar_select %p251, %s26, 0
          %s253 = sadd.s32 %s252, %s250
          %s254 = smul.addr %s253, 4
          %s255 = scalar_lea.vmem %s3, %s254
          %s256 = smul.u32 2, %s25
        $region20: #{transformer_vae_forward.31} parent=11 // pred_fallthru
          _
        // Predicated region
        $region21: #{transformer_vae_forward.31} parent=11 // pred_check
          %p257 = pneg %p170
        $region22: #{transformer_vae_forward.31} parent=11 // pred_check_branch
          %259 = sbr.rel (%p257) target = $region24
        $region23: #{transformer_vae_forward.31} parent=11 // pred_region
          %p260 = scmp.lt.s32.totalorder %s26, 0
          %s261 = scalar_select %p260, %s26, 0
          %s262 = scalar_lea.vmem %s4, %s261
        $region24: #{transformer_vae_forward.31} parent=11 // pred_fallthru
          _
        // Predicated region
        $region25: #{transformer_vae_forward.31} parent=11 // pred_check
          %p263 = pneg %p196
        $region26: #{transformer_vae_forward.31} parent=11 // pred_check_branch
          %265 = sbr.rel (%p263) target = $region28
        $region27: #{transformer_vae_forward.31} parent=11 // pred_region
          %p266 = scmp.lt.s32.totalorder %s26, 0
          %s267 = scalar_select %p266, %s26, 0
          %s268 = scalar_lea.vmem %s5, %s267
        $region28: #{transformer_vae_forward.31} parent=11 // pred_fallthru
          _
      $region12: #{transformer_vae_forward.31} parent=5 // pred_fallthru
        _
      %p269 = scmp.lt.s32.totalorder %s15, 2
      // Predicated region
      $region29: #{transformer_vae_forward.31} parent=5 // pred_check
        %p270 = pneg %p269
      $region30: #{transformer_vae_forward.31} parent=5 // pred_check_branch
        %272 = sbr.rel (%p270) target = $region32
      $region31: #{transformer_vae_forward.31} parent=5 // pred_region
        // Predicated region
        $region33: #{transformer_vae_forward.31} parent=31 // pred_check
          %p273 = pneg %p56
        $region34: #{transformer_vae_forward.31} parent=31 // pred_check_branch
          %275 = sbr.rel (%p273) target = $region36
        $region35: #{transformer_vae_forward.31} parent=31 // pred_region
          %s276 = sand.u32 %s46, 1
          %s277 = sand.u32 %s46, 1
          %s278 = smul.addr %s277, 16
          %s279 = scalar_lea.vmem [#allocation3], %s278
          %s280 = smul.u32 2, %s22
          %s281 = smul.u32 2, %s24
          %s282 = smul.addr %s280, 4
          %s283 = sadd.s32 %s281, %s282
          %s284 = smul.addr %s283, 4
          %s285 = scalar_lea.vmem %s0, %s284
          // Predicated region
          $region37: #{transformer_vae_forward.31} parent=35 // pred_check
            _
          $region38: #{transformer_vae_forward.31} parent=35 // pred_check_branch
            %287 = sbr.rel (0) target = $region40
          $region39: #{transformer_vae_forward.31} parent=35 // pred_region
            // Predicated region
            $region41: #{transformer_vae_forward.31} parent=39 // pred_check
              _
            $region42: #{transformer_vae_forward.31} parent=39 // pred_check_branch
              %289 = sbr.rel (0) target = $region44
            $region43: #{transformer_vae_forward.31} parent=39 // pred_region
              // Predicated region
              $region56: #{transformer_vae_forward.31} parent=43 // pred_check
                _
              $region57: #{transformer_vae_forward.31} parent=43 // pred_check_branch
                %307 = sbr.rel (0) target = $region59
              $region58: #{transformer_vae_forward.31} parent=43 // pred_region
                loop: start=0, step=1, limit=1
                $region60: #{transformer_vae_forward.31} parent=58 // loop_pre_header
                  _
                $region61: #{transformer_vae_forward.31} parent=58 // loop_header
                  %s309 = sphi 0, %s313
                  %p310 = scmp.ge.s32.totalorder %s309, 1
                  %s314 = sphi %s285, %s285
                  %s315 = sphi %s279, %s279
                $region62: #{transformer_vae_forward.31} parent=58 // loop_header_branch
                  %312 = sbr.rel (%p310) target = $region66
                $region63: #{transformer_vae_forward.31} parent=58 // loop_body
                  %v316 = vld [vmem:[%s314] sm:$0xff]
                  %317 = vst [vmem:[%s315] sm:$0xff] %v316
                  %v318 = vld [vmem:[%s314 + $0x10] sm:$0xff]
                  %319 = vst [vmem:[%s315 + $0x8] sm:$0xff] %v318
                $region64: #{transformer_vae_forward.31} parent=58 // loop_footer
                  %s313 = sadd.s32 1, %s309
                $region65: #{transformer_vae_forward.31} parent=58 // loop_footer_branch
                  %308 = sbr.rel target = $region61
                $region66: #{transformer_vae_forward.31} parent=58 // loop_exit
                  _
              $region59: #{transformer_vae_forward.31} parent=43 // pred_fallthru
                _
              // Predicated region
              $region67: #{transformer_vae_forward.31} parent=43 // pred_check
                _
              $region68: #{transformer_vae_forward.31} parent=43 // pred_check_branch
                %321 = sbr.rel target = $region70
              $region69: #{transformer_vae_forward.31} parent=43 // pred_region
                _
              $region70: #{transformer_vae_forward.31} parent=43 // pred_fallthru
                _
            $region44: #{transformer_vae_forward.31} parent=39 // pred_fallthru
              _
            // Predicated region
            $region45: #{transformer_vae_forward.31} parent=39 // pred_check
              _
            $region46: #{transformer_vae_forward.31} parent=39 // pred_check_branch
              %291 = sbr.rel target = $region48
            $region47: #{transformer_vae_forward.31} parent=39 // pred_region
              %s293 = ssub.s32 256, 1
              loop: start=0, step=1, limit=1
              $region49: #{transformer_vae_forward.31} parent=47 // loop_pre_header
                _
              $region50: #{transformer_vae_forward.31} parent=47 // loop_header
                %s295 = sphi 0, %s299
                %p296 = scmp.ge.s32.totalorder %s295, 1
                %s300 = sphi %s285, %s285
                %s301 = sphi %s279, %s279
              $region51: #{transformer_vae_forward.31} parent=47 // loop_header_branch
                %298 = sbr.rel (%p296) target = $region55
              $region52: #{transformer_vae_forward.31} parent=47 // loop_body
                %v302 = vld [vmem:[%s300] sm:%s293]
                %303 = vst [vmem:[%s301] sm:%s293] %v302
                %v304 = vld [vmem:[%s300 + $0x10] sm:%s293]
                %305 = vst [vmem:[%s301 + $0x8] sm:%s293] %v304
              $region53: #{transformer_vae_forward.31} parent=47 // loop_footer
                %s299 = sadd.s32 1, %s295
              $region54: #{transformer_vae_forward.31} parent=47 // loop_footer_branch
                %294 = sbr.rel target = $region50
              $region55: #{transformer_vae_forward.31} parent=47 // loop_exit
                _
            $region48: #{transformer_vae_forward.31} parent=39 // pred_fallthru
              _
          $region40: #{transformer_vae_forward.31} parent=35 // pred_fallthru
            _
          %322 = vnop
        $region36: #{transformer_vae_forward.31} parent=31 // pred_fallthru
          _
        // Predicated region
        $region71: #{transformer_vae_forward.31} parent=31 // pred_check
          %p323 = pneg %p84
        $region72: #{transformer_vae_forward.31} parent=31 // pred_check_branch
          %325 = sbr.rel (%p323) target = $region74
        $region73: #{transformer_vae_forward.31} parent=31 // pred_region
          %s326 = sand.u32 %s74, 1
          %s327 = scalar_lea.sflag [#allocation5], %s326
          %s328 = sand.u32 %s74, 1
          %s329 = smul.addr %s328, 128
          %s330 = scalar_lea.vmem [#allocation4], %s329
          %s331 = smul.u32 32, %s24
          %333 = vsyncadd %s327, 0
          %s334 = sadd.s32 %s23, %s331
          %s335 = smul.addr %s334, 4
          %s336 = scalar_lea.hbm %s1, %s335
          %s337 = sshll.u32 %s336, 4
          %s338 = int_to_ptr.hbm [resolvable:$true] %s337
          %s339 = sshll.u32 %s330, 4
          %s340 = int_to_ptr.vmem [resolvable:$true] %s339
          %345 = dma.hbm_to_vmem [thread:$0]  %s338, 2048, %s340, %s327, 64, 64, 4
        $region74: #{transformer_vae_forward.31} parent=31 // pred_fallthru
          _
      $region32: #{transformer_vae_forward.31} parent=5 // pred_fallthru
        _
      %p346 = scmp.le.s32.totalorder 1, %s15
      %p347 = scmp.lt.s32.totalorder %s15, 3
      %p348 = pnand %p346, %p347
      %p349 = pneg %p348
      // Predicated region
      $region75: #{transformer_vae_forward.31} parent=5 // pred_check
        _
      $region76: #{transformer_vae_forward.31} parent=5 // pred_check_branch
        %351 = sbr.rel (%p348) target = $region78
      $region77: #{transformer_vae_forward.31} parent=5 // pred_region
        %s352 = ssub.s32 %s15, 1
        %s353 = sand.u32 %s49, 1
        %s354 = sand.u32 %s49, 1
        %s355 = smul.addr %s354, 16
        %s356 = scalar_lea.vmem [#allocation3], %s355
        // Predicated region
        $region79: #{transformer_vae_forward.31} parent=77 // pred_check
          %p357 = pneg %p62
        $region80: #{transformer_vae_forward.31} parent=77 // pred_check_branch
          %359 = sbr.rel (%p357) target = $region82
        $region81: #{transformer_vae_forward.31} parent=77 // pred_region
          _
        $region82: #{transformer_vae_forward.31} parent=77 // pred_fallthru
          _
        %s360 = sand.u32 %s77, 1
        %s361 = scalar_lea.sflag [#allocation5], %s360
        %s362 = sand.u32 %s77, 1
        %s363 = smul.addr %s362, 128
        %s364 = scalar_lea.vmem [#allocation4], %s363
        // Predicated region
        $region83: #{transformer_vae_forward.31} parent=77 // pred_check
          %p365 = pneg %p90
        $region84: #{transformer_vae_forward.31} parent=77 // pred_check_branch
          %367 = sbr.rel (%p365) target = $region86
        $region85: #{transformer_vae_forward.31} parent=77 // pred_region
          %369 = dma.done %s361, 2048
        $region86: #{transformer_vae_forward.31} parent=77 // pred_fallthru
          _
        %s370 = sand.u32 %s49, 1
        %s371 = sand.u32 %s49, 1
        %s372 = smul.addr %s371, 16
        %s373 = scalar_lea.vmem [#allocation3], %s372
        %p374 = pneg %p62
        %p375 = pneg %p59
        %s376 = sand.u32 %s77, 1
        %s377 = scalar_lea.sflag [#allocation5], %s376
        %s378 = sand.u32 %s77, 1
        %s379 = smul.addr %s378, 128
        %s380 = scalar_lea.vmem [#allocation4], %s379
        %p381 = pneg %p90
        %p382 = pneg %p87
        %p383 = scmp.lt.s32.totalorder %s26, 0
        %s384 = scalar_select %p383, %s26, 0
        %s385 = scalar_lea.vmem %s2, %s384
        %p386 = pneg %p116
        %p387 = pneg %p113
        %s388 = smul.u32 2, %s25
        %p389 = scmp.lt.s32.totalorder %s388, 1
        %s390 = scalar_select %p389, %s388, 1
        %p391 = scmp.lt.s32.totalorder %s26, 0
        %s392 = scalar_select %p391, %s26, 0
        %s393 = sadd.s32 %s392, %s390
        %s394 = smul.addr %s393, 4
        %s395 = scalar_lea.vmem %s3, %s394
        %p396 = pneg %p144
        %p397 = pneg %p141
        %p398 = scmp.lt.s32.totalorder %s26, 0
        %s399 = scalar_select %p398, %s26, 0
        %s400 = scalar_lea.vmem %s4, %s399
        %p401 = pneg %p170
        %p402 = pneg %p167
        %p403 = scmp.lt.s32.totalorder %s26, 0
        %s404 = scalar_select %p403, %s26, 0
        %s405 = scalar_lea.vmem %s5, %s404
        %p406 = pneg %p196
        %p407 = pneg %p193
        %p408 = pneg %p224
        %p409 = pneg %p221
        %s410 = smul.u32 2, %s25
        %p411 = scmp.lt.s32.totalorder %s410, 1
        %s412 = scalar_select %p411, %s410, 1
        %p413 = scmp.lt.s32.totalorder %s26, 0
        %s414 = scalar_select %p413, %s26, 0
        %s415 = sadd.s32 %s414, %s412
        %s416 = smul.addr %s415, 4
        %s417 = scalar_lea.vmem %s6, %s416
        %s418 = smul.u32 2, %s25
        %s419 = smul.u32 2, %s27
        %s420 = smul.u32 32, %s27
        %p421 = scmp.lt.s32.totalorder %s26, 0
        %s422 = scalar_select %p421, %s26, 0
        %s423 = scalar_lea.vmem %s2, %s422
        %s424 = smul.u32 2, %s25
        %p425 = scmp.lt.s32.totalorder %s424, 1
        %s426 = scalar_select %p425, %s424, 1
        %p427 = scmp.lt.s32.totalorder %s26, 0
        %s428 = scalar_select %p427, %s26, 0
        %s429 = sadd.s32 %s428, %s426
        %s430 = smul.addr %s429, 4
        %s431 = scalar_lea.vmem %s3, %s430
        %s432 = smul.u32 2, %s25
        %p433 = scmp.lt.s32.totalorder %s26, 0
        %s434 = scalar_select %p433, %s26, 0
        %s435 = scalar_lea.vmem %s4, %s434
        %p436 = scmp.lt.s32.totalorder %s26, 0
        %s437 = scalar_select %p436, %s26, 0
        %s438 = scalar_lea.vmem %s5, %s437
        %s439 = smul.u32 2, %s25
        %p440 = scmp.lt.s32.totalorder %s439, 1
        %s441 = scalar_select %p440, %s439, 1
        %p442 = scmp.lt.s32.totalorder %s26, 0
        %s443 = scalar_select %p442, %s26, 0
        %s444 = sadd.s32 %s443, %s441
        %s445 = smul.addr %s444, 4
        %s446 = scalar_lea.vmem %s6, %s445
        %s447 = smul.u32 2, %s25
        %p448 = scmp.eq.s32.totalorder %s27, 0
        // Predicated region
        $region87: #{transformer_vae_forward.31} parent=77 // pred_check
          %p449 = pneg %p448
        $region88: #{transformer_vae_forward.31} parent=77 // pred_check_branch
          %451 = sbr.rel (%p449) target = $region90
        $region89: #{transformer_vae_forward.31} parent=77 // pred_region
          %452 = vst [vmem:[#allocation2] sm:$0xff] 0.0
          %453 = vst [vmem:[#allocation2 + $0x8] sm:$0xff] 0.0
        $region90: #{transformer_vae_forward.31} parent=77 // pred_fallthru
          _
        %v454 = vld [vmem:[#allocation2] sm:$0xff]
        %v455 = vld [vmem:[#allocation2 + $0x8] sm:$0xff]
        %v456 = vld [vmem:[%s356] sm:$0xff]
        %v457 = vld [vmem:[%s356 + $0x8] sm:$0xff]
        %v458 = vld [vmem:[%s364] sm:$0xf]
        %v459 = vld [vmem:[%s364 + $0x4] sm:$0xf]
        %v460 = vld [vmem:[%s364 + $0x8] sm:$0xf]
        %v461 = vld [vmem:[%s364 + $0xc] sm:$0xf]
        %v462 = vld [vmem:[%s364 + $0x10] sm:$0xf]
        %v463 = vld [vmem:[%s364 + $0x14] sm:$0xf]
        %v464 = vld [vmem:[%s364 + $0x18] sm:$0xf]
        %v465 = vld [vmem:[%s364 + $0x1c] sm:$0xf]
        %v466 = vld [vmem:[%s364 + $0x20] sm:$0xf]
        %v467 = vld [vmem:[%s364 + $0x24] sm:$0xf]
        %v468 = vld [vmem:[%s364 + $0x28] sm:$0xf]
        %v469 = vld [vmem:[%s364 + $0x2c] sm:$0xf]
        %v470 = vld [vmem:[%s364 + $0x30] sm:$0xf]
        %v471 = vld [vmem:[%s364 + $0x34] sm:$0xf]
        %v472 = vld [vmem:[%s364 + $0x38] sm:$0xf]
        %v473 = vld [vmem:[%s364 + $0x3c] sm:$0xf]
        %v474 = vld [vmem:[%s364 + $0x40] sm:$0xf]
        %v475 = vld [vmem:[%s364 + $0x44] sm:$0xf]
        %v476 = vld [vmem:[%s364 + $0x48] sm:$0xf]
        %v477 = vld [vmem:[%s364 + $0x4c] sm:$0xf]
        %v478 = vld [vmem:[%s364 + $0x50] sm:$0xf]
        %v479 = vld [vmem:[%s364 + $0x54] sm:$0xf]
        %v480 = vld [vmem:[%s364 + $0x58] sm:$0xf]
        %v481 = vld [vmem:[%s364 + $0x5c] sm:$0xf]
        %v482 = vld [vmem:[%s364 + $0x60] sm:$0xf]
        %v483 = vld [vmem:[%s364 + $0x64] sm:$0xf]
        %v484 = vld [vmem:[%s364 + $0x68] sm:$0xf]
        %v485 = vld [vmem:[%s364 + $0x6c] sm:$0xf]
        %v486 = vld [vmem:[%s364 + $0x70] sm:$0xf]
        %v487 = vld [vmem:[%s364 + $0x74] sm:$0xf]
        %v488 = vld [vmem:[%s364 + $0x78] sm:$0xf]
        %v489 = vld [vmem:[%s364 + $0x7c] sm:$0xf]
        %v492 = vunpack.c.l.b16 %v456
        %v493 = vunpack.c.h.b16 %v456
        %v494 = vunpack.c.l.b16 %v457
        %v495 = vunpack.c.h.b16 %v457
        %v496 = vpack.c.b16 %v494, %v492
        %v497 = vpack.c.b16 %v495, %v493
        %v532 = vunpack.c.l.b16 %v458
        %v533 = vunpack.c.l.b16 %v459
        %v534 = vunpack.c.l.b16 %v460
        %v535 = vunpack.c.l.b16 %v461
        %v536 = vunpack.c.l.b16 %v462
        %v537 = vunpack.c.l.b16 %v463
        %v538 = vunpack.c.l.b16 %v464
        %v539 = vunpack.c.l.b16 %v465
        %v540 = vunpack.c.l.b16 %v466
        %v541 = vunpack.c.l.b16 %v467
        %v542 = vunpack.c.l.b16 %v468
        %v543 = vunpack.c.l.b16 %v469
        %v544 = vunpack.c.l.b16 %v470
        %v545 = vunpack.c.l.b16 %v471
        %v546 = vunpack.c.l.b16 %v472
        %v547 = vunpack.c.l.b16 %v473
        %v548 = vunpack.c.l.b16 %v474
        %v549 = vunpack.c.l.b16 %v475
        %v550 = vunpack.c.l.b16 %v476
        %v551 = vunpack.c.l.b16 %v477
        %v552 = vunpack.c.l.b16 %v478
        %v553 = vunpack.c.l.b16 %v479
        %v554 = vunpack.c.l.b16 %v480
        %v555 = vunpack.c.l.b16 %v481
        %v556 = vunpack.c.l.b16 %v482
        %v557 = vunpack.c.l.b16 %v483
        %v558 = vunpack.c.l.b16 %v484
        %v559 = vunpack.c.l.b16 %v485
        %v560 = vunpack.c.l.b16 %v486
        %v561 = vunpack.c.l.b16 %v487
        %v562 = vunpack.c.l.b16 %v488
        %v563 = vunpack.c.l.b16 %v489
        %v564 = vpack.c.b16 %v533, %v532
        %v565 = vpack.c.b16 %v535, %v534
        %v566 = vpack.c.b16 %v537, %v536
        %v567 = vpack.c.b16 %v539, %v538
        %v568 = vpack.c.b16 %v541, %v540
        %v569 = vpack.c.b16 %v543, %v542
        %v570 = vpack.c.b16 %v545, %v544
        %v571 = vpack.c.b16 %v547, %v546
        %v572 = vpack.c.b16 %v549, %v548
        %v573 = vpack.c.b16 %v551, %v550
        %v574 = vpack.c.b16 %v553, %v552
        %v575 = vpack.c.b16 %v555, %v554
        %v576 = vpack.c.b16 %v557, %v556
        %v577 = vpack.c.b16 %v559, %v558
        %v578 = vpack.c.b16 %v561, %v560
        %v579 = vpack.c.b16 %v563, %v562
        %596 = vmatpush.bf16.msra.mxu0 %v571
        %597 = vmatpush.bf16.msra.mxu0 %v570
        %598 = vmatpush.bf16.msra.mxu0 %v569
        %599 = vmatpush.bf16.msra.mxu0 %v568
        %600 = vmatpush.bf16.msra.mxu0 %v567
        %601 = vmatpush.bf16.msra.mxu0 %v566
        %602 = vmatpush.bf16.msra.mxu0 %v565
        %603 = vmatpush.bf16.msra.mxu0 %v564
        %604 = vmatmul.bf16.gmra.mxu0 %v496
        %v605 = vpop.f32.mrf.mxu0
        %v606 = vadd.f32 0.0, %v605
        %v607 = vpop.f32.mrf.mxu0
        %v608 = vadd.f32 0.0, %v607
        %609 = vdwg.mxu0
        %610 = vmatpush.bf16.msra.mxu0 %v579
        %611 = vmatpush.bf16.msra.mxu0 %v578
        %612 = vmatpush.bf16.msra.mxu0 %v577
        %613 = vmatpush.bf16.msra.mxu0 %v576
        %614 = vmatpush.bf16.msra.mxu0 %v575
        %615 = vmatpush.bf16.msra.mxu0 %v574
        %616 = vmatpush.bf16.msra.mxu0 %v573
        %617 = vmatpush.bf16.msra.mxu0 %v572
        %618 = vmatmul.bf16.gmra.mxu0 %v497
        %v619 = vpop.f32.mrf.mxu0
        %v620 = vadd.f32 %v606, %v619
        %v621 = vpop.f32.mrf.mxu0
        %v622 = vadd.f32 %v608, %v621
        %623 = vdwg.mxu0
        %v624 = vadd.f32 %v454, %v620
        %v625 = vadd.f32 %v455, %v622
        %626 = vst [vmem:[#allocation2] sm:$0xff] %v624
        %627 = vst [vmem:[#allocation2 + $0x8] sm:$0xff] %v625
        %p628 = scmp.eq.s32.totalorder %s27, 1
        // Predicated region
        $region91: #{transformer_vae_forward.31} parent=77 // pred_check
          %p629 = pneg %p628
        $region92: #{transformer_vae_forward.31} parent=77 // pred_check_branch
          %631 = sbr.rel (%p629) target = $region94
        $region93: #{transformer_vae_forward.31} parent=77 // pred_region
          %v632 = vld [vmem:[#allocation2] sm:$0xff]
          %v633 = vld [vmem:[#allocation2 + $0x8] sm:$0xff]
          %v634 = vld [vmem:[%s423] sm:$0x1]
          %v636 = vperm.slane %v634, 0
          %v638 = vadd.f32 %v632, %v636
          %v639 = vadd.f32 %v633, %v636
          %v640 = vld [vmem:[%s431] sm:$0xf]
          %v641 = vld [vmem:[%s431 + $0x4] sm:$0xf]
          %v642 = vunpack.c.l.bf16 %v640
          %v643 = vunpack.c.l.bf16 %v641
          %v644 = vadd.f32 %v638, %v642
          %v645 = vadd.f32 %v639, %v643
          %v646 = vlaneseq
          %v647 = vand.u32 %v646, 127
          %vm648 = vcmp.lt.s32.totalorder %v647, 32
          %v649 = vsel %vm648, %v644, 0.0
          %v650 = vsel %vm648, %v645, 0.0
          %651 = vadd.xlane.f32.xlu0 %v649
          %v652 = vpop.xlane.xlu0 %651
          %653 = vadd.xlane.f32.xlu0 %v650
          %v654 = vpop.xlane.xlu0 %653
          %v655 = vmul.f32 %v652, 0.03125
          %v656 = vmul.f32 %v654, 0.03125
          %v657 = vsub.f32 %v644, %v655
          %v658 = vsub.f32 %v645, %v656
          %v659 = vsel %vm648, %v657, 0.0
          %v660 = vsel %vm648, %v658, 0.0
          %v661 = vmul.f32 %v659, %v659
          %v662 = vmul.f32 %v660, %v660
          %663 = vadd.xlane.f32.xlu0 %v661
          %v664 = vpop.xlane.xlu0 %663
          %665 = vadd.xlane.f32.xlu0 %v662
          %v666 = vpop.xlane.xlu0 %665
          %v667 = vmul.f32 %v664, 0.03125
          %v668 = vmul.f32 %v666, 0.03125
          %v669 = vadd.f32 %v667, 1e-05
          %v670 = vadd.f32 %v668, 1e-05
          %v671 = vrsqrt.pop %v669
          %v672 = vmul.f32 %v671, %v669
          %v673 = vmul.f32 %v672, %v671
          %v674 = vmul.f32 0.5, %v673
          %v675 = vsub.f32 1.5, %v674
          %v676 = vmul.f32 %v671, %v675
          %vm677 = vweird.f32 %v669
          %vm678 = vweird.f32 %v671
          %vm679 = vmor %vm677, %vm678
          %v680 = vsel %vm679, %v671, %v676
          %v681 = vrsqrt.pop %v670
          %v682 = vmul.f32 %v681, %v670
          %v683 = vmul.f32 %v682, %v681
          %v684 = vmul.f32 0.5, %v683
          %v685 = vsub.f32 1.5, %v684
          %v686 = vmul.f32 %v681, %v685
          %vm687 = vweird.f32 %v670
          %vm688 = vweird.f32 %v681
          %vm689 = vmor %vm687, %vm688
          %v690 = vsel %vm689, %v681, %v686
          %v691 = vmul.f32 %v659, %v680
          %v692 = vmul.f32 %v660, %v690
          %v693 = vld [vmem:[%s435] sm:$0x1]
          %v695 = vperm.slane %v693, 0
          %v697 = vmul.f32 %v691, %v695
          %v698 = vmul.f32 %v692, %v695
          %v699 = vld [vmem:[%s438] sm:$0x1]
          %v701 = vperm.slane %v699, 0
          %v703 = vadd.f32 %v697, %v701
          %v704 = vadd.f32 %v698, %v701
          %v705 = vpack.c.bf16 %v703, %v703
          %v706 = vpack.c.bf16 %v704, %v704
          %707 = vst [vmem:[%s446] sm:$0xf] %v705
          %708 = vst [vmem:[%s446 + $0x4] sm:$0xf] %v706
        $region94: #{transformer_vae_forward.31} parent=77 // pred_fallthru
          _
        %s709 = smul.u32 2, %s25
        %p710 = scmp.lt.s32.totalorder %s709, 1
        %s711 = scalar_select %p710, %s709, 1
        %p712 = scmp.lt.s32.totalorder %s26, 0
        %s713 = scalar_select %p712, %s26, 0
        %s714 = sadd.s32 %s713, %s711
        %s715 = smul.addr %s714, 4
        %s716 = scalar_lea.vmem %s6, %s715
        // Predicated region
        $region95: #{transformer_vae_forward.31} parent=77 // pred_check
          %p717 = pneg %p221
        $region96: #{transformer_vae_forward.31} parent=77 // pred_check_branch
          %719 = sbr.rel (%p717) target = $region98
        $region97: #{transformer_vae_forward.31} parent=77 // pred_region
          %s720 = smul.u32 2, %s25
        $region98: #{transformer_vae_forward.31} parent=77 // pred_fallthru
          _
        // Predicated region
        $region99: #{transformer_vae_forward.31} parent=77 // pred_check
          %p721 = pneg %p221
        $region100: #{transformer_vae_forward.31} parent=77 // pred_check_branch
          %723 = sbr.rel (%p721) target = $region102
        $region101: #{transformer_vae_forward.31} parent=77 // pred_region
          %s724 = smul.u32 2, %s25
          %p725 = scmp.lt.s32.totalorder %s724, 1
          %s726 = scalar_select %p725, %s724, 1
          %p727 = scmp.lt.s32.totalorder %s26, 0
          %s728 = scalar_select %p727, %s26, 0
          %s729 = sadd.s32 %s728, %s726
          %s730 = smul.addr %s729, 4
          %s731 = scalar_lea.vmem %s6, %s730
        $region102: #{transformer_vae_forward.31} parent=77 // pred_fallthru
          _
      $region78: #{transformer_vae_forward.31} parent=5 // pred_fallthru
        _
      %p732 = scmp.le.s32.totalorder 2, %s15
      // Predicated region
      $region103: #{transformer_vae_forward.31} parent=5 // pred_check
        %p733 = pneg %p732
      $region104: #{transformer_vae_forward.31} parent=5 // pred_check_branch
        %735 = sbr.rel (%p733) target = $region106
      $region105: #{transformer_vae_forward.31} parent=5 // pred_region
        %s736 = ssub.s32 %s15, 2
      $region106: #{transformer_vae_forward.31} parent=5 // pred_fallthru
        _
    $region6: #{transformer_vae_forward.31} parent=1 // loop_footer
      %s19 = sadd.s32 1, %s15
    $region7: #{transformer_vae_forward.31} parent=1 // loop_footer_branch
      %14 = sbr.rel target = $region3
    $region8: #{transformer_vae_forward.31} parent=1 // loop_exit
      _
    %737 = vsyncpa [#allocation5], 1
    %s738 = scalar_lea.sflag [#allocation5], 1
    %739 = vsyncpa %s738, 1

// kernel: transformer_vae_forward.46
$region0: #{transformer_vae_forward.46}
  #allocation0 [shape = 'u32[]', space=smem, size = 0x4, offset = 0x4, fixed_abs, tag = 'smem constant byte address 0x4 - core index']
  #allocation1 [shape = 'u32[72,128]{1,0:T(1,128)}', space=vmem, size = 0x9000, scoped, tag = 'internal scratch']
  #allocation2 [shape = 'f32[16,128]{1,0:T(8,128)}', space=vmem, size = 0x2000, scoped, tag = 'scratch operand']
  %s0 = inlined_call_operand.vmem [shape: bf16[16,128], index: 0, kind: input, shape index: {}]
  %s1 = inlined_call_operand.hbm [shape: bf16[128,128], index: 1, kind: input, shape index: {}]
  %s2 = inlined_call_operand.vmem [shape: f32[1,128], index: 2, kind: input, shape index: {}]
  %s3 = inlined_call_operand.vmem [shape: bf16[16,128], index: 3, kind: output, shape index: {}]
  %s4 = sld [smem:[#allocation0]]
  $region34: #{transformer_vae_forward.46} parent=0
    _
  %s6 = ssub.s32 1, %s4
  %s7 = scalar_select 0, %s6, %s4
  $region1: #{transformer_vae_forward.46} parent=0
    #allocation3 [shape = 'u8[32768]{0}', space=vmem, size = 0x8000, scoped, tag = 'input window, operand 1, single buffered']
    #allocation4 [shape = 's32[1]{0}', space=sflag, size = 0x4, scoped, tag = 'scoped memory for transformer_vae_forward.46']
    %8 = vsyncpa [#allocation4], 0
    // Predicated region
    $region2: #{transformer_vae_forward.46} parent=1 // pred_check
      _
    $region3: #{transformer_vae_forward.46} parent=1 // pred_check_branch
      %10 = sbr.rel (0) target = $region5
    $region4: #{transformer_vae_forward.46} parent=1 // pred_region
      _
    $region5: #{transformer_vae_forward.46} parent=1 // pred_fallthru
      _
    // Predicated region
    $region6: #{transformer_vae_forward.46} parent=1 // pred_check
      _
    $region7: #{transformer_vae_forward.46} parent=1 // pred_check_branch
      %12 = sbr.rel (0) target = $region9
    $region8: #{transformer_vae_forward.46} parent=1 // pred_region
      %14 = vsyncadd [#allocation4], 0
      %s15 = sshll.u32 %s1, 4
      %s16 = int_to_ptr.hbm [resolvable:$true] %s15
      %s17 = sshll.u32 [#allocation3], 4
      %s18 = int_to_ptr.vmem [resolvable:$true] %s17
      %23 = dma.hbm_to_vmem [thread:$0]  %s16, 1024, %s18, [#allocation4], 64, 64, 4
    $region9: #{transformer_vae_forward.46} parent=1 // pred_fallthru
      _
    // Predicated region
    $region10: #{transformer_vae_forward.46} parent=1 // pred_check
      _
    $region11: #{transformer_vae_forward.46} parent=1 // pred_check_branch
      %25 = sbr.rel (0) target = $region13
    $region12: #{transformer_vae_forward.46} parent=1 // pred_region
      _
    $region13: #{transformer_vae_forward.46} parent=1 // pred_fallthru
      _
    // Predicated region
    $region14: #{transformer_vae_forward.46} parent=1 // pred_check
      _
    $region15: #{transformer_vae_forward.46} parent=1 // pred_check_branch
      %27 = sbr.rel (0) target = $region17
    $region16: #{transformer_vae_forward.46} parent=1 // pred_region
      %29 = dma.done [#allocation4], 1024
    $region17: #{transformer_vae_forward.46} parent=1 // pred_fallthru
      _
    %p30 = scmp.eq.s32.totalorder 0, 0
    // Predicated region
    $region18: #{transformer_vae_forward.46} parent=1 // pred_check
      %p31 = pneg %p30
    $region19: #{transformer_vae_forward.46} parent=1 // pred_check_branch
      %33 = sbr.rel (%p31) target = $region21
    $region20: #{transformer_vae_forward.46} parent=1 // pred_region
      %34 = vst [vmem:[#allocation2] sm:$0xff] 0.0
      %35 = vst [vmem:[#allocation2 + $0x8] sm:$0xff] 0.0
    $region21: #{transformer_vae_forward.46} parent=1 // pred_fallthru
      _
    %v36 = vld [vmem:[#allocation2] sm:$0xff]
    %v37 = vld [vmem:[#allocation2 + $0x8] sm:$0xff]
    %v38 = vld [vmem:[%s0] sm:$0xf]
    %v39 = vld [vmem:[%s0 + $0x4] sm:$0xf]
    %v40 = vld [vmem:[#allocation3] sm:$0xf]
    %v41 = vld [vmem:[#allocation3 + $0x4] sm:$0xf]
    %v42 = vld [vmem:[#allocation3 + $0x8] sm:$0xf]
    %v43 = vld [vmem:[#allocation3 + $0xc] sm:$0xf]
    %v44 = vld [vmem:[#allocation3 + $0x10] sm:$0xf]
    %v45 = vld [vmem:[#allocation3 + $0x14] sm:$0xf]
    %v46 = vld [vmem:[#allocation3 + $0x18] sm:$0xf]
    %v47 = vld [vmem:[#allocation3 + $0x1c] sm:$0xf]
    %v48 = vld [vmem:[#allocation3 + $0x20] sm:$0xf]
    %v49 = vld [vmem:[#allocation3 + $0x24] sm:$0xf]
    %v50 = vld [vmem:[#allocation3 + $0x28] sm:$0xf]
    %v51 = vld [vmem:[#allocation3 + $0x2c] sm:$0xf]
    %v52 = vld [vmem:[#allocation3 + $0x30] sm:$0xf]
    %v53 = vld [vmem:[#allocation3 + $0x34] sm:$0xf]
    %v54 = vld [vmem:[#allocation3 + $0x38] sm:$0xf]
    %v55 = vld [vmem:[#allocation3 + $0x3c] sm:$0xf]
    %v58 = vunpack.c.l.b16 %v38
    %v59 = vunpack.c.l.b16 %v39
    %v60 = vpack.c.b16 %v59, %v58
    %v78 = vunpack.c.l.b16 %v40
    %v79 = vunpack.c.l.b16 %v41
    %v80 = vunpack.c.l.b16 %v42
    %v81 = vunpack.c.l.b16 %v43
    %v82 = vunpack.c.l.b16 %v44
    %v83 = vunpack.c.l.b16 %v45
    %v84 = vunpack.c.l.b16 %v46
    %v85 = vunpack.c.l.b16 %v47
    %v86 = vunpack.c.l.b16 %v48
    %v87 = vunpack.c.l.b16 %v49
    %v88 = vunpack.c.l.b16 %v50
    %v89 = vunpack.c.l.b16 %v51
    %v90 = vunpack.c.l.b16 %v52
    %v91 = vunpack.c.l.b16 %v53
    %v92 = vunpack.c.l.b16 %v54
    %v93 = vunpack.c.l.b16 %v55
    %v94 = vpack.c.b16 %v79, %v78
    %v95 = vpack.c.b16 %v81, %v80
    %v96 = vpack.c.b16 %v83, %v82
    %v97 = vpack.c.b16 %v85, %v84
    %v98 = vpack.c.b16 %v87, %v86
    %v99 = vpack.c.b16 %v89, %v88
    %v100 = vpack.c.b16 %v91, %v90
    %v101 = vpack.c.b16 %v93, %v92
    %110 = vmatpush.bf16.msra.mxu0 %v101
    %111 = vmatpush.bf16.msra.mxu0 %v100
    %112 = vmatpush.bf16.msra.mxu0 %v99
    %113 = vmatpush.bf16.msra.mxu0 %v98
    %114 = vmatpush.bf16.msra.mxu0 %v97
    %115 = vmatpush.bf16.msra.mxu0 %v96
    %116 = vmatpush.bf16.msra.mxu0 %v95
    %117 = vmatpush.bf16.msra.mxu0 %v94
    %118 = vmatmul.bf16.gmra.mxu0 %v60
    %v119 = vpop.f32.mrf.mxu0
    %v120 = vadd.f32 0.0, %v119
    %v121 = vpop.f32.mrf.mxu0
    %v122 = vadd.f32 0.0, %v121
    %123 = vdwg.mxu0
    %v124 = vadd.f32 %v36, %v120
    %v125 = vadd.f32 %v37, %v122
    %126 = vst [vmem:[#allocation2] sm:$0xff] %v124
    %127 = vst [vmem:[#allocation2 + $0x8] sm:$0xff] %v125
    // Predicated region
    $region22: #{transformer_vae_forward.46} parent=1 // pred_check
      %p128 = pneg %p30
    $region23: #{transformer_vae_forward.46} parent=1 // pred_check_branch
      %130 = sbr.rel (%p128) target = $region25
    $region24: #{transformer_vae_forward.46} parent=1 // pred_region
      %v131 = vld [vmem:[#allocation2] sm:$0xff]
      %v132 = vld [vmem:[#allocation2 + $0x8] sm:$0xff]
      %v133 = vld [vmem:[%s2] sm:$0x1]
      %v135 = vperm.slane %v133, 0
      %v137 = vadd.f32 %v131, %v135
      %v138 = vadd.f32 %v132, %v135
      %v139 = vmax.f32 %v137, 0.0
      %v140 = vmax.f32 %v138, 0.0
      %v141 = vpack.c.bf16 %v139, %v139
      %v142 = vpack.c.bf16 %v140, %v140
      %143 = vst [vmem:[%s3] sm:$0xf] %v141
      %144 = vst [vmem:[%s3 + $0x4] sm:$0xf] %v142
    $region25: #{transformer_vae_forward.46} parent=1 // pred_fallthru
      _
    // Predicated region
    $region26: #{transformer_vae_forward.46} parent=1 // pred_check
      _
    $region27: #{transformer_vae_forward.46} parent=1 // pred_check_branch
      %146 = sbr.rel (0) target = $region29
    $region28: #{transformer_vae_forward.46} parent=1 // pred_region
      _
    $region29: #{transformer_vae_forward.46} parent=1 // pred_fallthru
      _
    // Predicated region
    $region30: #{transformer_vae_forward.46} parent=1 // pred_check
      _
    $region31: #{transformer_vae_forward.46} parent=1 // pred_check_branch
      %148 = sbr.rel (0) target = $region33
    $region32: #{transformer_vae_forward.46} parent=1 // pred_region
      _
    $region33: #{transformer_vae_forward.46} parent=1 // pred_fallthru
      _
    %149 = vsyncpa [#allocation4], 1

// kernel: transformer_vae_forward.47
$region0: #{transformer_vae_forward.47}
  #allocation0 [shape = 'u32[]', space=smem, size = 0x4, offset = 0x4, fixed_abs, tag = 'smem constant byte address 0x4 - core index']
  #allocation1 [shape = 'u32[72,128]{1,0:T(1,128)}', space=vmem, size = 0x9000, scoped, tag = 'internal scratch']
  #allocation2 [shape = 'f32[16,128]{1,0:T(8,128)}', space=vmem, size = 0x2000, scoped, tag = 'scratch operand']
  %s0 = inlined_call_operand.vmem [shape: bf16[16,128], index: 0, kind: input, shape index: {}]
  %s1 = inlined_call_operand.hbm [shape: bf16[128,128], index: 1, kind: input, shape index: {}]
  %s2 = inlined_call_operand.vmem [shape: f32[1,128], index: 2, kind: input, shape index: {}]
  %s3 = inlined_call_operand.vmem [shape: bf16[16,128], index: 3, kind: input, shape index: {}]
  %s4 = inlined_call_operand.vmem [shape: f32[1,128], index: 4, kind: input, shape index: {}]
  %s5 = inlined_call_operand.vmem [shape: f32[1,128], index: 5, kind: input, shape index: {}]
  %s6 = inlined_call_operand.vmem [shape: bf16[16,128], index: 6, kind: output, shape index: {}]
  %s7 = sld [smem:[#allocation0]]
  $region46: #{transformer_vae_forward.47} parent=0
    _
  %s9 = ssub.s32 1, %s7
  %s10 = scalar_select 0, %s9, %s7
  $region1: #{transformer_vae_forward.47} parent=0
    #allocation3 [shape = 'u8[32768]{0}', space=vmem, size = 0x8000, scoped, tag = 'input window, operand 1, single buffered']
    #allocation4 [shape = 's32[1]{0}', space=sflag, size = 0x4, scoped, tag = 'scoped memory for transformer_vae_forward.47']
    %11 = vsyncpa [#allocation4], 0
    // Predicated region
    $region2: #{transformer_vae_forward.47} parent=1 // pred_check
      _
    $region3: #{transformer_vae_forward.47} parent=1 // pred_check_branch
      %13 = sbr.rel (0) target = $region5
    $region4: #{transformer_vae_forward.47} parent=1 // pred_region
      _
    $region5: #{transformer_vae_forward.47} parent=1 // pred_fallthru
      _
    // Predicated region
    $region6: #{transformer_vae_forward.47} parent=1 // pred_check
      _
    $region7: #{transformer_vae_forward.47} parent=1 // pred_check_branch
      %15 = sbr.rel (0) target = $region9
    $region8: #{transformer_vae_forward.47} parent=1 // pred_region
      %17 = vsyncadd [#allocation4], 0
      %s18 = sshll.u32 %s1, 4
      %s19 = int_to_ptr.hbm [resolvable:$true] %s18
      %s20 = sshll.u32 [#allocation3], 4
      %s21 = int_to_ptr.vmem [resolvable:$true] %s20
      %26 = dma.hbm_to_vmem [thread:$0]  %s19, 1024, %s21, [#allocation4], 64, 64, 4
    $region9: #{transformer_vae_forward.47} parent=1 // pred_fallthru
      _
    // Predicated region
    $region10: #{transformer_vae_forward.47} parent=1 // pred_check
      _
    $region11: #{transformer_vae_forward.47} parent=1 // pred_check_branch
      %28 = sbr.rel (0) target = $region13
    $region12: #{transformer_vae_forward.47} parent=1 // pred_region
      _
    $region13: #{transformer_vae_forward.47} parent=1 // pred_fallthru
      _
    // Predicated region
    $region14: #{transformer_vae_forward.47} parent=1 // pred_check
      _
    $region15: #{transformer_vae_forward.47} parent=1 // pred_check_branch
      %30 = sbr.rel (0) target = $region17
    $region16: #{transformer_vae_forward.47} parent=1 // pred_region
      _
    $region17: #{transformer_vae_forward.47} parent=1 // pred_fallthru
      _
    // Predicated region
    $region18: #{transformer_vae_forward.47} parent=1 // pred_check
      _
    $region19: #{transformer_vae_forward.47} parent=1 // pred_check_branch
      %32 = sbr.rel (0) target = $region21
    $region20: #{transformer_vae_forward.47} parent=1 // pred_region
      _
    $region21: #{transformer_vae_forward.47} parent=1 // pred_fallthru
      _
    // Predicated region
    $region22: #{transformer_vae_forward.47} parent=1 // pred_check
      _
    $region23: #{transformer_vae_forward.47} parent=1 // pred_check_branch
      %34 = sbr.rel (0) target = $region25
    $region24: #{transformer_vae_forward.47} parent=1 // pred_region
      _
    $region25: #{transformer_vae_forward.47} parent=1 // pred_fallthru
      _
    // Predicated region
    $region26: #{transformer_vae_forward.47} parent=1 // pred_check
      _
    $region27: #{transformer_vae_forward.47} parent=1 // pred_check_branch
      %36 = sbr.rel (0) target = $region29
    $region28: #{transformer_vae_forward.47} parent=1 // pred_region
      %38 = dma.done [#allocation4], 1024
    $region29: #{transformer_vae_forward.47} parent=1 // pred_fallthru
      _
    %p39 = scmp.eq.s32.totalorder 0, 0
    // Predicated region
    $region30: #{transformer_vae_forward.47} parent=1 // pred_check
      %p40 = pneg %p39
    $region31: #{transformer_vae_forward.47} parent=1 // pred_check_branch
      %42 = sbr.rel (%p40) target = $region33
    $region32: #{transformer_vae_forward.47} parent=1 // pred_region
      %43 = vst [vmem:[#allocation2] sm:$0xff] 0.0
      %44 = vst [vmem:[#allocation2 + $0x8] sm:$0xff] 0.0
    $region33: #{transformer_vae_forward.47} parent=1 // pred_fallthru
      _
    %v45 = vld [vmem:[#allocation2] sm:$0xff]
    %v46 = vld [vmem:[#allocation2 + $0x8] sm:$0xff]
    %v47 = vld [vmem:[%s0] sm:$0xf]
    %v48 = vld [vmem:[%s0 + $0x4] sm:$0xf]
    %v49 = vld [vmem:[#allocation3] sm:$0xf]
    %v50 = vld [vmem:[#allocation3 + $0x4] sm:$0xf]
    %v51 = vld [vmem:[#allocation3 + $0x8] sm:$0xf]
    %v52 = vld [vmem:[#allocation3 + $0xc] sm:$0xf]
    %v53 = vld [vmem:[#allocation3 + $0x10] sm:$0xf]
    %v54 = vld [vmem:[#allocation3 + $0x14] sm:$0xf]
    %v55 = vld [vmem:[#allocation3 + $0x18] sm:$0xf]
    %v56 = vld [vmem:[#allocation3 + $0x1c] sm:$0xf]
    %v57 = vld [vmem:[#allocation3 + $0x20] sm:$0xf]
    %v58 = vld [vmem:[#allocation3 + $0x24] sm:$0xf]
    %v59 = vld [vmem:[#allocation3 + $0x28] sm:$0xf]
    %v60 = vld [vmem:[#allocation3 + $0x2c] sm:$0xf]
    %v61 = vld [vmem:[#allocation3 + $0x30] sm:$0xf]
    %v62 = vld [vmem:[#allocation3 + $0x34] sm:$0xf]
    %v63 = vld [vmem:[#allocation3 + $0x38] sm:$0xf]
    %v64 = vld [vmem:[#allocation3 + $0x3c] sm:$0xf]
    %v67 = vunpack.c.l.b16 %v47
    %v68 = vunpack.c.l.b16 %v48
    %v69 = vpack.c.b16 %v68, %v67
    %v87 = vunpack.c.l.b16 %v49
    %v88 = vunpack.c.l.b16 %v50
    %v89 = vunpack.c.l.b16 %v51
    %v90 = vunpack.c.l.b16 %v52
    %v91 = vunpack.c.l.b16 %v53
    %v92 = vunpack.c.l.b16 %v54
    %v93 = vunpack.c.l.b16 %v55
    %v94 = vunpack.c.l.b16 %v56
    %v95 = vunpack.c.l.b16 %v57
    %v96 = vunpack.c.l.b16 %v58
    %v97 = vunpack.c.l.b16 %v59
    %v98 = vunpack.c.l.b16 %v60
    %v99 = vunpack.c.l.b16 %v61
    %v100 = vunpack.c.l.b16 %v62
    %v101 = vunpack.c.l.b16 %v63
    %v102 = vunpack.c.l.b16 %v64
    %v103 = vpack.c.b16 %v88, %v87
    %v104 = vpack.c.b16 %v90, %v89
    %v105 = vpack.c.b16 %v92, %v91
    %v106 = vpack.c.b16 %v94, %v93
    %v107 = vpack.c.b16 %v96, %v95
    %v108 = vpack.c.b16 %v98, %v97
    %v109 = vpack.c.b16 %v100, %v99
    %v110 = vpack.c.b16 %v102, %v101
    %119 = vmatpush.bf16.msra.mxu0 %v110
    %120 = vmatpush.bf16.msra.mxu0 %v109
    %121 = vmatpush.bf16.msra.mxu0 %v108
    %122 = vmatpush.bf16.msra.mxu0 %v107
    %123 = vmatpush.bf16.msra.mxu0 %v106
    %124 = vmatpush.bf16.msra.mxu0 %v105
    %125 = vmatpush.bf16.msra.mxu0 %v104
    %126 = vmatpush.bf16.msra.mxu0 %v103
    %127 = vmatmul.bf16.gmra.mxu0 %v69
    %v128 = vpop.f32.mrf.mxu0
    %v129 = vadd.f32 0.0, %v128
    %v130 = vpop.f32.mrf.mxu0
    %v131 = vadd.f32 0.0, %v130
    %132 = vdwg.mxu0
    %v133 = vadd.f32 %v45, %v129
    %v134 = vadd.f32 %v46, %v131
    %135 = vst [vmem:[#allocation2] sm:$0xff] %v133
    %136 = vst [vmem:[#allocation2 + $0x8] sm:$0xff] %v134
    // Predicated region
    $region34: #{transformer_vae_forward.47} parent=1 // pred_check
      %p137 = pneg %p39
    $region35: #{transformer_vae_forward.47} parent=1 // pred_check_branch
      %139 = sbr.rel (%p137) target = $region37
    $region36: #{transformer_vae_forward.47} parent=1 // pred_region
      %v140 = vld [vmem:[#allocation2] sm:$0xff]
      %v141 = vld [vmem:[#allocation2 + $0x8] sm:$0xff]
      %v142 = vld [vmem:[%s2] sm:$0x1]
      %v144 = vperm.slane %v142, 0
      %v146 = vadd.f32 %v140, %v144
      %v147 = vadd.f32 %v141, %v144
      %v148 = vld [vmem:[%s3] sm:$0xf]
      %v149 = vld [vmem:[%s3 + $0x4] sm:$0xf]
      %v150 = vunpack.c.l.bf16 %v148
      %v151 = vunpack.c.l.bf16 %v149
      %v152 = vadd.f32 %v146, %v150
      %v153 = vadd.f32 %v147, %v151
      %v154 = vlaneseq
      %v155 = vand.u32 %v154, 127
      %vm156 = vcmp.lt.s32.totalorder %v155, 32
      %v157 = vsel %vm156, %v152, 0.0
      %v158 = vsel %vm156, %v153, 0.0
      %159 = vadd.xlane.f32.xlu0 %v157
      %v160 = vpop.xlane.xlu0 %159
      %161 = vadd.xlane.f32.xlu0 %v158
      %v162 = vpop.xlane.xlu0 %161
      %v163 = vmul.f32 %v160, 0.03125
      %v164 = vmul.f32 %v162, 0.03125
      %v165 = vsub.f32 %v152, %v163
      %v166 = vsub.f32 %v153, %v164
      %v167 = vsel %vm156, %v165, 0.0
      %v168 = vsel %vm156, %v166, 0.0
      %v169 = vmul.f32 %v167, %v167
      %v170 = vmul.f32 %v168, %v168
      %171 = vadd.xlane.f32.xlu0 %v169
      %v172 = vpop.xlane.xlu0 %171
      %173 = vadd.xlane.f32.xlu0 %v170
      %v174 = vpop.xlane.xlu0 %173
      %v175 = vmul.f32 %v172, 0.03125
      %v176 = vmul.f32 %v174, 0.03125
      %v177 = vadd.f32 %v175, 1e-05
      %v178 = vadd.f32 %v176, 1e-05
      %v179 = vrsqrt.pop %v177
      %v180 = vmul.f32 %v179, %v177
      %v181 = vmul.f32 %v180, %v179
      %v182 = vmul.f32 0.5, %v181
      %v183 = vsub.f32 1.5, %v182
      %v184 = vmul.f32 %v179, %v183
      %vm185 = vweird.f32 %v177
      %vm186 = vweird.f32 %v179
      %vm187 = vmor %vm185, %vm186
      %v188 = vsel %vm187, %v179, %v184
      %v189 = vrsqrt.pop %v178
      %v190 = vmul.f32 %v189, %v178
      %v191 = vmul.f32 %v190, %v189
      %v192 = vmul.f32 0.5, %v191
      %v193 = vsub.f32 1.5, %v192
      %v194 = vmul.f32 %v189, %v193
      %vm195 = vweird.f32 %v178
      %vm196 = vweird.f32 %v189
      %vm197 = vmor %vm195, %vm196
      %v198 = vsel %vm197, %v189, %v194
      %v199 = vmul.f32 %v167, %v188
      %v200 = vmul.f32 %v168, %v198
      %v201 = vld [vmem:[%s4] sm:$0x1]
      %v203 = vperm.slane %v201, 0
      %v205 = vmul.f32 %v199, %v203
      %v206 = vmul.f32 %v200, %v203
      %v207 = vld [vmem:[%s5] sm:$0x1]
      %v209 = vperm.slane %v207, 0
      %v211 = vadd.f32 %v205, %v209
      %v212 = vadd.f32 %v206, %v209
      %v213 = vpack.c.bf16 %v211, %v211
      %v214 = vpack.c.bf16 %v212, %v212
      %215 = vst [vmem:[%s6] sm:$0xf] %v213
      %216 = vst [vmem:[%s6 + $0x4] sm:$0xf] %v214
    $region37: #{transformer_vae_forward.47} parent=1 // pred_fallthru
      _
    // Predicated region
    $region38: #{transformer_vae_forward.47} parent=1 // pred_check
      _
    $region39: #{transformer_vae_forward.47} parent=1 // pred_check_branch
      %218 = sbr.rel (0) target = $region41
    $region40: #{transformer_vae_forward.47} parent=1 // pred_region
      _
    $region41: #{transformer_vae_forward.47} parent=1 // pred_fallthru
      _
    // Predicated region
    $region42: #{transformer_vae_forward.47} parent=1 // pred_check
      _
    $region43: #{transformer_vae_forward.47} parent=1 // pred_check_branch
      %220 = sbr.rel (0) target = $region45
    $region44: #{transformer_vae_forward.47} parent=1 // pred_region
      _
    $region45: #{transformer_vae_forward.47} parent=1 // pred_fallthru
      _
    %221 = vsyncpa [#allocation4], 1

// kernel: transformer_vae_forward.50
$region0: #{transformer_vae_forward.50}
  #allocation0 [shape = 'u32[]', space=smem, size = 0x4, offset = 0x4, fixed_abs, tag = 'smem constant byte address 0x4 - core index']
  #allocation1 [shape = 'u32[72,128]{1,0:T(1,128)}', space=vmem, size = 0x9000, scoped, tag = 'internal scratch']
  #allocation2 [shape = 'f32[16,128]{1,0:T(8,128)}', space=vmem, size = 0x2000, scoped, tag = 'scratch operand']
  %s0 = inlined_call_operand.vmem [shape: bf16[16,512], index: 0, kind: input, shape index: {}]
  %s1 = inlined_call_operand.hbm [shape: bf16[512,128], index: 1, kind: input, shape index: {}]
  %s2 = inlined_call_operand.vmem [shape: f32[1,128], index: 2, kind: input, shape index: {}]
  %s3 = inlined_call_operand.vmem [shape: bf16[16,128], index: 3, kind: input, shape index: {}]
  %s4 = inlined_call_operand.vmem [shape: f32[1,128], index: 4, kind: input, shape index: {}]
  %s5 = inlined_call_operand.hbm [shape: f32[1,128], index: 5, kind: input, shape index: {}]
  %s6 = inlined_call_operand.vmem [shape: bf16[16,128], index: 6, kind: output, shape index: {}]
  %s7 = sld [smem:[#allocation0]]
  $region111: #{transformer_vae_forward.50} parent=0
    _
  %s9 = ssub.s32 1, %s7
  %s10 = scalar_select 0, %s9, %s7
  $region1: #{transformer_vae_forward.50} parent=0
    #allocation3 [shape = 'u8[16384]{0}', space=vmem, size = 0x4000, scoped, tag = 'input window, operand 0']
    #allocation4 [shape = 'u8[131072]{0}', space=vmem, size = 0x20000, scoped, tag = 'input window, operand 1']
    #allocation5 [shape = 's32[2]{0}', space=sflag, size = 0x8, scoped, tag = 'scoped memory for transformer_vae_forward.50']
    #allocation6 [shape = 'u8[512]{0}', space=vmem, size = 0x400, scoped, tag = 'input window, operand 5, single buffered']
    #allocation7 [shape = 's32[1]{0}', space=sflag, size = 0x4, scoped, tag = 'scoped memory for transformer_vae_forward.50']
    %11 = vsyncpa [#allocation5], 0
    %s12 = scalar_lea.sflag [#allocation5], 1
    %13 = vsyncpa %s12, 0
    %14 = vsyncpa [#allocation7], 0
    loop: start=0, step=1, limit=4
    $region2: #{transformer_vae_forward.50} parent=1 // loop_pre_header
      _
    $region3: #{transformer_vae_forward.50} parent=1 // loop_header
      %s16 = sphi 0, %s20
      %p17 = scmp.ge.s32.totalorder %s16, 4
      %s23 = sphi 0, %s42
      %s24 = sphi 0, %s38
      %s25 = sphi 0, %s34
      %s26 = sphi 0, %s23
      %s27 = sphi 0, %s24
      %s28 = sphi 0, %s25
      %s29 = sphi 0, %s26
      %s30 = sphi 0, %s27
      %s31 = sphi 0, %s28
      %s47 = sphi 0, %s49
      %s50 = sphi 0, %s47
      %s51 = sphi 0, %s50
      %s67 = sphi 0, %s51
      %s75 = sphi 0, %s77
      %s78 = sphi 0, %s75
      %s79 = sphi 0, %s78
      %s95 = sphi 0, %s79
      %s101 = sphi 0, %s103
      %s104 = sphi 0, %s101
      %s105 = sphi 0, %s104
      %s121 = sphi 0, %s105
      %s129 = sphi 0, %s131
      %s132 = sphi 0, %s129
      %s133 = sphi 0, %s132
      %s149 = sphi 0, %s133
      %s155 = sphi 0, %s157
      %s158 = sphi 0, %s155
      %s159 = sphi 0, %s158
      %s175 = sphi 0, %s159
      %s181 = sphi 0, %s183
      %s184 = sphi 0, %s181
      %s185 = sphi 0, %s184
      %s201 = sphi 0, %s185
      %s209 = sphi 0, %s211
      %s212 = sphi 0, %s209
      %s213 = sphi 0, %s212
      %s229 = sphi 0, %s213
    $region4: #{transformer_vae_forward.50} parent=1 // loop_header_branch
      %19 = sbr.rel (%p17) target = $region8
    $region5: #{transformer_vae_forward.50} parent=1 // loop_body
      %s21 = ssub.s32 %s16, 1
      %s22 = ssub.s32 %s16, 2
      %s32 = sadd.s32 1, %s25
      %p33 = scmp.ge.s32.totalorder %s32, 2
      %s34 = scalar_select %p33, 0, %s32
      %s35 = sadd.s32 1, %s24
      %s36 = scalar_select %p33, %s35, %s24
      %p37 = scmp.ge.s32.totalorder %s36, 1
      %s38 = scalar_select %p37, 0, %s36
      %s39 = sadd.s32 1, %s23
      %s40 = scalar_select %p37, %s39, %s23
      %p41 = scmp.ge.s32.totalorder %s40, 1
      %s42 = scalar_select %p41, 0, %s40
      %s43 = ssub.s32 %s23, %s42
      %s44 = ssub.s32 %s25, %s34
      %s45 = sor.u32 %s43, %s44
      %p46 = scmp.eq.s32.totalorder %s45, 0
      %s48 = sadd.s32 %s47, 1
      %s49 = scalar_select %p46, %s47, %s48
      %p52 = pneg %p46
      %p53 = scmp.eq.s32.totalorder %s16, 1
      %p54 = por %p52, %p53
      %p55 = scmp.ne.s32.totalorder %s47, %s50
      %p56 = scmp.eq.s32.totalorder %s16, 0
      %p57 = por %p55, %p56
      %p58 = scmp.ne.s32.totalorder %s47, %s50
      %p59 = scmp.eq.s32.totalorder %s21, 1
      %p60 = por %p58, %p59
      %p61 = scmp.ne.s32.totalorder %s50, %s51
      %p62 = scmp.eq.s32.totalorder %s21, 0
      %p63 = por %p61, %p62
      %p64 = scmp.ne.s32.totalorder %s50, %s51
      %p65 = scmp.eq.s32.totalorder %s22, 1
      %p66 = por %p64, %p65
      %p68 = scmp.ne.s32.totalorder %s51, %s67
      %p69 = scmp.eq.s32.totalorder %s22, 0
      %p70 = por %p68, %p69
      %s71 = ssub.s32 %s25, %s34
      %s72 = ssub.s32 %s24, %s38
      %s73 = sor.u32 %s71, %s72
      %p74 = scmp.eq.s32.totalorder %s73, 0
      %s76 = sadd.s32 %s75, 1
      %s77 = scalar_select %p74, %s75, %s76
      %p80 = pneg %p74
      %p81 = scmp.eq.s32.totalorder %s16, 1
      %p82 = por %p80, %p81
      %p83 = scmp.ne.s32.totalorder %s75, %s78
      %p84 = scmp.eq.s32.totalorder %s16, 0
      %p85 = por %p83, %p84
      %p86 = scmp.ne.s32.totalorder %s75, %s78
      %p87 = scmp.eq.s32.totalorder %s21, 1
      %p88 = por %p86, %p87
      %p89 = scmp.ne.s32.totalorder %s78, %s79
      %p90 = scmp.eq.s32.totalorder %s21, 0
      %p91 = por %p89, %p90
      %p92 = scmp.ne.s32.totalorder %s78, %s79
      %p93 = scmp.eq.s32.totalorder %s22, 1
      %p94 = por %p92, %p93
      %p96 = scmp.ne.s32.totalorder %s79, %s95
      %p97 = scmp.eq.s32.totalorder %s22, 0
      %p98 = por %p96, %p97
      %s99 = ssub.s32 %s24, %s38
      %p100 = scmp.eq.s32.totalorder %s99, 0
      %s102 = sadd.s32 %s101, 1
      %s103 = scalar_select %p100, %s101, %s102
      %p106 = pneg %p100
      %p107 = scmp.eq.s32.totalorder %s16, 1
      %p108 = por %p106, %p107
      %p109 = scmp.ne.s32.totalorder %s101, %s104
      %p110 = scmp.eq.s32.totalorder %s16, 0
      %p111 = por %p109, %p110
      %p112 = scmp.ne.s32.totalorder %s101, %s104
      %p113 = scmp.eq.s32.totalorder %s21, 1
      %p114 = por %p112, %p113
      %p115 = scmp.ne.s32.totalorder %s104, %s105
      %p116 = scmp.eq.s32.totalorder %s21, 0
      %p117 = por %p115, %p116
      %p118 = scmp.ne.s32.totalorder %s104, %s105
      %p119 = scmp.eq.s32.totalorder %s22, 1
      %p120 = por %p118, %p119
      %p122 = scmp.ne.s32.totalorder %s105, %s121
      %p123 = scmp.eq.s32.totalorder %s22, 0
      %p124 = por %p122, %p123
      %s125 = ssub.s32 %s23, %s42
      %s126 = ssub.s32 %s24, %s38
      %s127 = sor.u32 %s125, %s126
      %p128 = scmp.eq.s32.totalorder %s127, 0
      %s130 = sadd.s32 %s129, 1
      %s131 = scalar_select %p128, %s129, %s130
      %p134 = pneg %p128
      %p135 = scmp.eq.s32.totalorder %s16, 1
      %p136 = por %p134, %p135
      %p137 = scmp.ne.s32.totalorder %s129, %s132
      %p138 = scmp.eq.s32.totalorder %s16, 0
      %p139 = por %p137, %p138
      %p140 = scmp.ne.s32.totalorder %s129, %s132
      %p141 = scmp.eq.s32.totalorder %s21, 1
      %p142 = por %p140, %p141
      %p143 = scmp.ne.s32.totalorder %s132, %s133
      %p144 = scmp.eq.s32.totalorder %s21, 0
      %p145 = por %p143, %p144
      %p146 = scmp.ne.s32.totalorder %s132, %s133
      %p147 = scmp.eq.s32.totalorder %s22, 1
      %p148 = por %p146, %p147
      %p150 = scmp.ne.s32.totalorder %s133, %s149
      %p151 = scmp.eq.s32.totalorder %s22, 0
      %p152 = por %p150, %p151
      %s153 = ssub.s32 %s24, %s38
      %p154 = scmp.eq.s32.totalorder %s153, 0
      %s156 = sadd.s32 %s155, 1
      %s157 = scalar_select %p154, %s155, %s156
      %p160 = pneg %p154
      %p161 = scmp.eq.s32.totalorder %s16, 1
      %p162 = por %p160, %p161
      %p163 = scmp.ne.s32.totalorder %s155, %s158
      %p164 = scmp.eq.s32.totalorder %s16, 0
      %p165 = por %p163, %p164
      %p166 = scmp.ne.s32.totalorder %s155, %s158
      %p167 = scmp.eq.s32.totalorder %s21, 1
      %p168 = por %p166, %p167
      %p169 = scmp.ne.s32.totalorder %s158, %s159
      %p170 = scmp.eq.s32.totalorder %s21, 0
      %p171 = por %p169, %p170
      %p172 = scmp.ne.s32.totalorder %s158, %s159
      %p173 = scmp.eq.s32.totalorder %s22, 1
      %p174 = por %p172, %p173
      %p176 = scmp.ne.s32.totalorder %s159, %s175
      %p177 = scmp.eq.s32.totalorder %s22, 0
      %p178 = por %p176, %p177
      %s179 = ssub.s32 %s24, %s38
      %p180 = scmp.eq.s32.totalorder %s179, 0
      %s182 = sadd.s32 %s181, 1
      %s183 = scalar_select %p180, %s181, %s182
      %p186 = pneg %p180
      %p187 = scmp.eq.s32.totalorder %s16, 1
      %p188 = por %p186, %p187
      %p189 = scmp.ne.s32.totalorder %s181, %s184
      %p190 = scmp.eq.s32.totalorder %s16, 0
      %p191 = por %p189, %p190
      %p192 = scmp.ne.s32.totalorder %s181, %s184
      %p193 = scmp.eq.s32.totalorder %s21, 1
      %p194 = por %p192, %p193
      %p195 = scmp.ne.s32.totalorder %s184, %s185
      %p196 = scmp.eq.s32.totalorder %s21, 0
      %p197 = por %p195, %p196
      %p198 = scmp.ne.s32.totalorder %s184, %s185
      %p199 = scmp.eq.s32.totalorder %s22, 1
      %p200 = por %p198, %p199
      %p202 = scmp.ne.s32.totalorder %s185, %s201
      %p203 = scmp.eq.s32.totalorder %s22, 0
      %p204 = por %p202, %p203
      %s205 = ssub.s32 %s23, %s42
      %s206 = ssub.s32 %s24, %s38
      %s207 = sor.u32 %s205, %s206
      %p208 = scmp.eq.s32.totalorder %s207, 0
      %s210 = sadd.s32 %s209, 1
      %s211 = scalar_select %p208, %s209, %s210
      %p214 = pneg %p208
      %p215 = scmp.eq.s32.totalorder %s16, 1
      %p216 = por %p214, %p215
      %p217 = scmp.ne.s32.totalorder %s209, %s212
      %p218 = scmp.eq.s32.totalorder %s16, 0
      %p219 = por %p217, %p218
      %p220 = scmp.ne.s32.totalorder %s209, %s212
      %p221 = scmp.eq.s32.totalorder %s21, 1
      %p222 = por %p220, %p221
      %p223 = scmp.ne.s32.totalorder %s212, %s213
      %p224 = scmp.eq.s32.totalorder %s21, 0
      %p225 = por %p223, %p224
      %p226 = scmp.ne.s32.totalorder %s212, %s213
      %p227 = scmp.eq.s32.totalorder %s22, 1
      %p228 = por %p226, %p227
      %p230 = scmp.ne.s32.totalorder %s213, %s229
      %p231 = scmp.eq.s32.totalorder %s22, 0
      %p232 = por %p230, %p231
      %p233 = scmp.le.s32.totalorder 1, %s16
      %p234 = scmp.lt.s32.totalorder %s16, 3
      %p235 = pnand %p233, %p234
      %p236 = pneg %p235
      // Predicated region
      $region9: #{transformer_vae_forward.50} parent=5 // pred_check
        _
      $region10: #{transformer_vae_forward.50} parent=5 // pred_check_branch
        %238 = sbr.rel (%p235) target = $region12
      $region11: #{transformer_vae_forward.50} parent=5 // pred_region
        %s239 = ssub.s32 %s16, 1
        // Predicated region
        $region13: #{transformer_vae_forward.50} parent=11 // pred_check
          %p240 = pneg %p117
        $region14: #{transformer_vae_forward.50} parent=11 // pred_check_branch
          %242 = sbr.rel (%p240) target = $region16
        $region15: #{transformer_vae_forward.50} parent=11 // pred_region
          %p243 = scmp.lt.s32.totalorder %s27, 0
          %s244 = scalar_select %p243, %s27, 0
          %s245 = scalar_lea.vmem %s2, %s244
        $region16: #{transformer_vae_forward.50} parent=11 // pred_fallthru
          _
        // Predicated region
        $region17: #{transformer_vae_forward.50} parent=11 // pred_check
          %p246 = pneg %p145
        $region18: #{transformer_vae_forward.50} parent=11 // pred_check_branch
          %248 = sbr.rel (%p246) target = $region20
        $region19: #{transformer_vae_forward.50} parent=11 // pred_region
          %s249 = smul.u32 2, %s26
          %p250 = scmp.lt.s32.totalorder %s249, 1
          %s251 = scalar_select %p250, %s249, 1
          %p252 = scmp.lt.s32.totalorder %s27, 0
          %s253 = scalar_select %p252, %s27, 0
          %s254 = sadd.s32 %s253, %s251
          %s255 = smul.addr %s254, 4
          %s256 = scalar_lea.vmem %s3, %s255
          %s257 = smul.u32 2, %s26
        $region20: #{transformer_vae_forward.50} parent=11 // pred_fallthru
          _
        // Predicated region
        $region21: #{transformer_vae_forward.50} parent=11 // pred_check
          %p258 = pneg %p171
        $region22: #{transformer_vae_forward.50} parent=11 // pred_check_branch
          %260 = sbr.rel (%p258) target = $region24
        $region23: #{transformer_vae_forward.50} parent=11 // pred_region
          %p261 = scmp.lt.s32.totalorder %s27, 0
          %s262 = scalar_select %p261, %s27, 0
          %s263 = scalar_lea.vmem %s4, %s262
        $region24: #{transformer_vae_forward.50} parent=11 // pred_fallthru
          _
        // Predicated region
        $region25: #{transformer_vae_forward.50} parent=11 // pred_check
          %p264 = pneg %p197
        $region26: #{transformer_vae_forward.50} parent=11 // pred_check_branch
          %266 = sbr.rel (%p264) target = $region28
        $region27: #{transformer_vae_forward.50} parent=11 // pred_region
          %268 = vsyncadd [#allocation7], 0
          %s269 = scalar_lea.hbm %s5, %s27
          %s271 = sshll.u32 %s269, 4
          %s272 = int_to_ptr.hbm [resolvable:$true] %s271
          %s273 = sshll.u32 [#allocation6], 4
          %s274 = int_to_ptr.vmem [resolvable:$true] %s273
          %276 = dma.hbm_to_vmem [thread:$0]  %s272, 16, %s274, [#allocation7]
        $region28: #{transformer_vae_forward.50} parent=11 // pred_fallthru
          _
      $region12: #{transformer_vae_forward.50} parent=5 // pred_fallthru
        _
      %p277 = scmp.lt.s32.totalorder %s16, 2
      // Predicated region
      $region29: #{transformer_vae_forward.50} parent=5 // pred_check
        %p278 = pneg %p277
      $region30: #{transformer_vae_forward.50} parent=5 // pred_check_branch
        %280 = sbr.rel (%p278) target = $region32
      $region31: #{transformer_vae_forward.50} parent=5 // pred_region
        // Predicated region
        $region33: #{transformer_vae_forward.50} parent=31 // pred_check
          %p281 = pneg %p57
        $region34: #{transformer_vae_forward.50} parent=31 // pred_check_branch
          %283 = sbr.rel (%p281) target = $region36
        $region35: #{transformer_vae_forward.50} parent=31 // pred_region
          %s284 = sand.u32 %s47, 1
          %s285 = sand.u32 %s47, 1
          %s286 = smul.addr %s285, 16
          %s287 = scalar_lea.vmem [#allocation3], %s286
          %s288 = smul.u32 2, %s23
          %s289 = smul.u32 2, %s25
          %s290 = smul.addr %s288, 4
          %s291 = sadd.s32 %s289, %s290
          %s292 = smul.addr %s291, 4
          %s293 = scalar_lea.vmem %s0, %s292
          // Predicated region
          $region37: #{transformer_vae_forward.50} parent=35 // pred_check
            _
          $region38: #{transformer_vae_forward.50} parent=35 // pred_check_branch
            %295 = sbr.rel (0) target = $region40
          $region39: #{transformer_vae_forward.50} parent=35 // pred_region
            // Predicated region
            $region41: #{transformer_vae_forward.50} parent=39 // pred_check
              _
            $region42: #{transformer_vae_forward.50} parent=39 // pred_check_branch
              %297 = sbr.rel (0) target = $region44
            $region43: #{transformer_vae_forward.50} parent=39 // pred_region
              // Predicated region
              $region56: #{transformer_vae_forward.50} parent=43 // pred_check
                _
              $region57: #{transformer_vae_forward.50} parent=43 // pred_check_branch
                %315 = sbr.rel (0) target = $region59
              $region58: #{transformer_vae_forward.50} parent=43 // pred_region
                loop: start=0, step=1, limit=1
                $region60: #{transformer_vae_forward.50} parent=58 // loop_pre_header
                  _
                $region61: #{transformer_vae_forward.50} parent=58 // loop_header
                  %s317 = sphi 0, %s321
                  %p318 = scmp.ge.s32.totalorder %s317, 1
                  %s322 = sphi %s293, %s293
                  %s323 = sphi %s287, %s287
                $region62: #{transformer_vae_forward.50} parent=58 // loop_header_branch
                  %320 = sbr.rel (%p318) target = $region66
                $region63: #{transformer_vae_forward.50} parent=58 // loop_body
                  %v324 = vld [vmem:[%s322] sm:$0xff]
                  %325 = vst [vmem:[%s323] sm:$0xff] %v324
                  %v326 = vld [vmem:[%s322 + $0x10] sm:$0xff]
                  %327 = vst [vmem:[%s323 + $0x8] sm:$0xff] %v326
                $region64: #{transformer_vae_forward.50} parent=58 // loop_footer
                  %s321 = sadd.s32 1, %s317
                $region65: #{transformer_vae_forward.50} parent=58 // loop_footer_branch
                  %316 = sbr.rel target = $region61
                $region66: #{transformer_vae_forward.50} parent=58 // loop_exit
                  _
              $region59: #{transformer_vae_forward.50} parent=43 // pred_fallthru
                _
              // Predicated region
              $region67: #{transformer_vae_forward.50} parent=43 // pred_check
                _
              $region68: #{transformer_vae_forward.50} parent=43 // pred_check_branch
                %329 = sbr.rel target = $region70
              $region69: #{transformer_vae_forward.50} parent=43 // pred_region
                _
              $region70: #{transformer_vae_forward.50} parent=43 // pred_fallthru
                _
            $region44: #{transformer_vae_forward.50} parent=39 // pred_fallthru
              _
            // Predicated region
            $region45: #{transformer_vae_forward.50} parent=39 // pred_check
              _
            $region46: #{transformer_vae_forward.50} parent=39 // pred_check_branch
              %299 = sbr.rel target = $region48
            $region47: #{transformer_vae_forward.50} parent=39 // pred_region
              %s301 = ssub.s32 256, 1
              loop: start=0, step=1, limit=1
              $region49: #{transformer_vae_forward.50} parent=47 // loop_pre_header
                _
              $region50: #{transformer_vae_forward.50} parent=47 // loop_header
                %s303 = sphi 0, %s307
                %p304 = scmp.ge.s32.totalorder %s303, 1
                %s308 = sphi %s293, %s293
                %s309 = sphi %s287, %s287
              $region51: #{transformer_vae_forward.50} parent=47 // loop_header_branch
                %306 = sbr.rel (%p304) target = $region55
              $region52: #{transformer_vae_forward.50} parent=47 // loop_body
                %v310 = vld [vmem:[%s308] sm:%s301]
                %311 = vst [vmem:[%s309] sm:%s301] %v310
                %v312 = vld [vmem:[%s308 + $0x10] sm:%s301]
                %313 = vst [vmem:[%s309 + $0x8] sm:%s301] %v312
              $region53: #{transformer_vae_forward.50} parent=47 // loop_footer
                %s307 = sadd.s32 1, %s303
              $region54: #{transformer_vae_forward.50} parent=47 // loop_footer_branch
                %302 = sbr.rel target = $region50
              $region55: #{transformer_vae_forward.50} parent=47 // loop_exit
                _
            $region48: #{transformer_vae_forward.50} parent=39 // pred_fallthru
              _
          $region40: #{transformer_vae_forward.50} parent=35 // pred_fallthru
            _
          %330 = vnop
        $region36: #{transformer_vae_forward.50} parent=31 // pred_fallthru
          _
        // Predicated region
        $region71: #{transformer_vae_forward.50} parent=31 // pred_check
          %p331 = pneg %p85
        $region72: #{transformer_vae_forward.50} parent=31 // pred_check_branch
          %333 = sbr.rel (%p331) target = $region74
        $region73: #{transformer_vae_forward.50} parent=31 // pred_region
          %s334 = sand.u32 %s75, 1
          %s335 = scalar_lea.sflag [#allocation5], %s334
          %s336 = sand.u32 %s75, 1
          %s337 = smul.addr %s336, 128
          %s338 = scalar_lea.vmem [#allocation4], %s337
          %s339 = smul.u32 32, %s25
          %341 = vsyncadd %s335, 0
          %s342 = sadd.s32 %s24, %s339
          %s343 = smul.addr %s342, 4
          %s344 = scalar_lea.hbm %s1, %s343
          %s345 = sshll.u32 %s344, 4
          %s346 = int_to_ptr.hbm [resolvable:$true] %s345
          %s347 = sshll.u32 %s338, 4
          %s348 = int_to_ptr.vmem [resolvable:$true] %s347
          %353 = dma.hbm_to_vmem [thread:$0]  %s346, 2048, %s348, %s335, 64, 64, 4
        $region74: #{transformer_vae_forward.50} parent=31 // pred_fallthru
          _
      $region32: #{transformer_vae_forward.50} parent=5 // pred_fallthru
        _
      %p354 = scmp.le.s32.totalorder 1, %s16
      %p355 = scmp.lt.s32.totalorder %s16, 3
      %p356 = pnand %p354, %p355
      %p357 = pneg %p356
      // Predicated region
      $region75: #{transformer_vae_forward.50} parent=5 // pred_check
        _
      $region76: #{transformer_vae_forward.50} parent=5 // pred_check_branch
        %359 = sbr.rel (%p356) target = $region78
      $region77: #{transformer_vae_forward.50} parent=5 // pred_region
        %s360 = ssub.s32 %s16, 1
        %s361 = sand.u32 %s50, 1
        %s362 = sand.u32 %s50, 1
        %s363 = smul.addr %s362, 16
        %s364 = scalar_lea.vmem [#allocation3], %s363
        // Predicated region
        $region79: #{transformer_vae_forward.50} parent=77 // pred_check
          %p365 = pneg %p63
        $region80: #{transformer_vae_forward.50} parent=77 // pred_check_branch
          %367 = sbr.rel (%p365) target = $region82
        $region81: #{transformer_vae_forward.50} parent=77 // pred_region
          _
        $region82: #{transformer_vae_forward.50} parent=77 // pred_fallthru
          _
        %s368 = sand.u32 %s78, 1
        %s369 = scalar_lea.sflag [#allocation5], %s368
        %s370 = sand.u32 %s78, 1
        %s371 = smul.addr %s370, 128
        %s372 = scalar_lea.vmem [#allocation4], %s371
        // Predicated region
        $region83: #{transformer_vae_forward.50} parent=77 // pred_check
          %p373 = pneg %p91
        $region84: #{transformer_vae_forward.50} parent=77 // pred_check_branch
          %375 = sbr.rel (%p373) target = $region86
        $region85: #{transformer_vae_forward.50} parent=77 // pred_region
          %377 = dma.done %s369, 2048
        $region86: #{transformer_vae_forward.50} parent=77 // pred_fallthru
          _
        // Predicated region
        $region87: #{transformer_vae_forward.50} parent=77 // pred_check
          %p378 = pneg %p197
        $region88: #{transformer_vae_forward.50} parent=77 // pred_check_branch
          %380 = sbr.rel (%p378) target = $region90
        $region89: #{transformer_vae_forward.50} parent=77 // pred_region
          %382 = dma.done [#allocation7], 16
        $region90: #{transformer_vae_forward.50} parent=77 // pred_fallthru
          _
        %s383 = sand.u32 %s50, 1
        %s384 = sand.u32 %s50, 1
        %s385 = smul.addr %s384, 16
        %s386 = scalar_lea.vmem [#allocation3], %s385
        %p387 = pneg %p63
        %p388 = pneg %p60
        %s389 = sand.u32 %s78, 1
        %s390 = scalar_lea.sflag [#allocation5], %s389
        %s391 = sand.u32 %s78, 1
        %s392 = smul.addr %s391, 128
        %s393 = scalar_lea.vmem [#allocation4], %s392
        %p394 = pneg %p91
        %p395 = pneg %p88
        %p396 = scmp.lt.s32.totalorder %s27, 0
        %s397 = scalar_select %p396, %s27, 0
        %s398 = scalar_lea.vmem %s2, %s397
        %p399 = pneg %p117
        %p400 = pneg %p114
        %s401 = smul.u32 2, %s26
        %p402 = scmp.lt.s32.totalorder %s401, 1
        %s403 = scalar_select %p402, %s401, 1
        %p404 = scmp.lt.s32.totalorder %s27, 0
        %s405 = scalar_select %p404, %s27, 0
        %s406 = sadd.s32 %s405, %s403
        %s407 = smul.addr %s406, 4
        %s408 = scalar_lea.vmem %s3, %s407
        %p409 = pneg %p145
        %p410 = pneg %p142
        %p411 = scmp.lt.s32.totalorder %s27, 0
        %s412 = scalar_select %p411, %s27, 0
        %s413 = scalar_lea.vmem %s4, %s412
        %p414 = pneg %p171
        %p415 = pneg %p168
        %p416 = pneg %p197
        %p417 = pneg %p194
        %p418 = pneg %p225
        %p419 = pneg %p222
        %s420 = smul.u32 2, %s26
        %p421 = scmp.lt.s32.totalorder %s420, 1
        %s422 = scalar_select %p421, %s420, 1
        %p423 = scmp.lt.s32.totalorder %s27, 0
        %s424 = scalar_select %p423, %s27, 0
        %s425 = sadd.s32 %s424, %s422
        %s426 = smul.addr %s425, 4
        %s427 = scalar_lea.vmem %s6, %s426
        %s428 = smul.u32 2, %s26
        %s429 = smul.u32 2, %s28
        %s430 = smul.u32 32, %s28
        %p431 = scmp.lt.s32.totalorder %s27, 0
        %s432 = scalar_select %p431, %s27, 0
        %s433 = scalar_lea.vmem %s2, %s432
        %s434 = smul.u32 2, %s26
        %p435 = scmp.lt.s32.totalorder %s434, 1
        %s436 = scalar_select %p435, %s434, 1
        %p437 = scmp.lt.s32.totalorder %s27, 0
        %s438 = scalar_select %p437, %s27, 0
        %s439 = sadd.s32 %s438, %s436
        %s440 = smul.addr %s439, 4
        %s441 = scalar_lea.vmem %s3, %s440
        %s442 = smul.u32 2, %s26
        %p443 = scmp.lt.s32.totalorder %s27, 0
        %s444 = scalar_select %p443, %s27, 0
        %s445 = scalar_lea.vmem %s4, %s444
        %s446 = smul.u32 2, %s26
        %p447 = scmp.lt.s32.totalorder %s446, 1
        %s448 = scalar_select %p447, %s446, 1
        %p449 = scmp.lt.s32.totalorder %s27, 0
        %s450 = scalar_select %p449, %s27, 0
        %s451 = sadd.s32 %s450, %s448
        %s452 = smul.addr %s451, 4
        %s453 = scalar_lea.vmem %s6, %s452
        %s454 = smul.u32 2, %s26
        %p455 = scmp.eq.s32.totalorder %s28, 0
        // Predicated region
        $region91: #{transformer_vae_forward.50} parent=77 // pred_check
          %p456 = pneg %p455
        $region92: #{transformer_vae_forward.50} parent=77 // pred_check_branch
          %458 = sbr.rel (%p456) target = $region94
        $region93: #{transformer_vae_forward.50} parent=77 // pred_region
          %459 = vst [vmem:[#allocation2] sm:$0xff] 0.0
          %460 = vst [vmem:[#allocation2 + $0x8] sm:$0xff] 0.0
        $region94: #{transformer_vae_forward.50} parent=77 // pred_fallthru
          _
        %v461 = vld [vmem:[#allocation2] sm:$0xff]
        %v462 = vld [vmem:[#allocation2 + $0x8] sm:$0xff]
        %v463 = vld [vmem:[%s364] sm:$0xff]
        %v464 = vld [vmem:[%s364 + $0x8] sm:$0xff]
        %v465 = vld [vmem:[%s372] sm:$0xf]
        %v466 = vld [vmem:[%s372 + $0x4] sm:$0xf]
        %v467 = vld [vmem:[%s372 + $0x8] sm:$0xf]
        %v468 = vld [vmem:[%s372 + $0xc] sm:$0xf]
        %v469 = vld [vmem:[%s372 + $0x10] sm:$0xf]
        %v470 = vld [vmem:[%s372 + $0x14] sm:$0xf]
        %v471 = vld [vmem:[%s372 + $0x18] sm:$0xf]
        %v472 = vld [vmem:[%s372 + $0x1c] sm:$0xf]
        %v473 = vld [vmem:[%s372 + $0x20] sm:$0xf]
        %v474 = vld [vmem:[%s372 + $0x24] sm:$0xf]
        %v475 = vld [vmem:[%s372 + $0x28] sm:$0xf]
        %v476 = vld [vmem:[%s372 + $0x2c] sm:$0xf]
        %v477 = vld [vmem:[%s372 + $0x30] sm:$0xf]
        %v478 = vld [vmem:[%s372 + $0x34] sm:$0xf]
        %v479 = vld [vmem:[%s372 + $0x38] sm:$0xf]
        %v480 = vld [vmem:[%s372 + $0x3c] sm:$0xf]
        %v481 = vld [vmem:[%s372 + $0x40] sm:$0xf]
        %v482 = vld [vmem:[%s372 + $0x44] sm:$0xf]
        %v483 = vld [vmem:[%s372 + $0x48] sm:$0xf]
        %v484 = vld [vmem:[%s372 + $0x4c] sm:$0xf]
        %v485 = vld [vmem:[%s372 + $0x50] sm:$0xf]
        %v486 = vld [vmem:[%s372 + $0x54] sm:$0xf]
        %v487 = vld [vmem:[%s372 + $0x58] sm:$0xf]
        %v488 = vld [vmem:[%s372 + $0x5c] sm:$0xf]
        %v489 = vld [vmem:[%s372 + $0x60] sm:$0xf]
        %v490 = vld [vmem:[%s372 + $0x64] sm:$0xf]
        %v491 = vld [vmem:[%s372 + $0x68] sm:$0xf]
        %v492 = vld [vmem:[%s372 + $0x6c] sm:$0xf]
        %v493 = vld [vmem:[%s372 + $0x70] sm:$0xf]
        %v494 = vld [vmem:[%s372 + $0x74] sm:$0xf]
        %v495 = vld [vmem:[%s372 + $0x78] sm:$0xf]
        %v496 = vld [vmem:[%s372 + $0x7c] sm:$0xf]
        %v499 = vunpack.c.l.b16 %v463
        %v500 = vunpack.c.h.b16 %v463
        %v501 = vunpack.c.l.b16 %v464
        %v502 = vunpack.c.h.b16 %v464
        %v503 = vpack.c.b16 %v501, %v499
        %v504 = vpack.c.b16 %v502, %v500
        %v539 = vunpack.c.l.b16 %v465
        %v540 = vunpack.c.l.b16 %v466
        %v541 = vunpack.c.l.b16 %v467
        %v542 = vunpack.c.l.b16 %v468
        %v543 = vunpack.c.l.b16 %v469
        %v544 = vunpack.c.l.b16 %v470
        %v545 = vunpack.c.l.b16 %v471
        %v546 = vunpack.c.l.b16 %v472
        %v547 = vunpack.c.l.b16 %v473
        %v548 = vunpack.c.l.b16 %v474
        %v549 = vunpack.c.l.b16 %v475
        %v550 = vunpack.c.l.b16 %v476
        %v551 = vunpack.c.l.b16 %v477
        %v552 = vunpack.c.l.b16 %v478
        %v553 = vunpack.c.l.b16 %v479
        %v554 = vunpack.c.l.b16 %v480
        %v555 = vunpack.c.l.b16 %v481
        %v556 = vunpack.c.l.b16 %v482
        %v557 = vunpack.c.l.b16 %v483
        %v558 = vunpack.c.l.b16 %v484
        %v559 = vunpack.c.l.b16 %v485
        %v560 = vunpack.c.l.b16 %v486
        %v561 = vunpack.c.l.b16 %v487
        %v562 = vunpack.c.l.b16 %v488
        %v563 = vunpack.c.l.b16 %v489
        %v564 = vunpack.c.l.b16 %v490
        %v565 = vunpack.c.l.b16 %v491
        %v566 = vunpack.c.l.b16 %v492
        %v567 = vunpack.c.l.b16 %v493
        %v568 = vunpack.c.l.b16 %v494
        %v569 = vunpack.c.l.b16 %v495
        %v570 = vunpack.c.l.b16 %v496
        %v571 = vpack.c.b16 %v540, %v539
        %v572 = vpack.c.b16 %v542, %v541
        %v573 = vpack.c.b16 %v544, %v543
        %v574 = vpack.c.b16 %v546, %v545
        %v575 = vpack.c.b16 %v548, %v547
        %v576 = vpack.c.b16 %v550, %v549
        %v577 = vpack.c.b16 %v552, %v551
        %v578 = vpack.c.b16 %v554, %v553
        %v579 = vpack.c.b16 %v556, %v555
        %v580 = vpack.c.b16 %v558, %v557
        %v581 = vpack.c.b16 %v560, %v559
        %v582 = vpack.c.b16 %v562, %v561
        %v583 = vpack.c.b16 %v564, %v563
        %v584 = vpack.c.b16 %v566, %v565
        %v585 = vpack.c.b16 %v568, %v567
        %v586 = vpack.c.b16 %v570, %v569
        %603 = vmatpush.bf16.msra.mxu0 %v578
        %604 = vmatpush.bf16.msra.mxu0 %v577
        %605 = vmatpush.bf16.msra.mxu0 %v576
        %606 = vmatpush.bf16.msra.mxu0 %v575
        %607 = vmatpush.bf16.msra.mxu0 %v574
        %608 = vmatpush.bf16.msra.mxu0 %v573
        %609 = vmatpush.bf16.msra.mxu0 %v572
        %610 = vmatpush.bf16.msra.mxu0 %v571
        %611 = vmatmul.bf16.gmra.mxu0 %v503
        %v612 = vpop.f32.mrf.mxu0
        %v613 = vadd.f32 0.0, %v612
        %v614 = vpop.f32.mrf.mxu0
        %v615 = vadd.f32 0.0, %v614
        %616 = vdwg.mxu0
        %617 = vmatpush.bf16.msra.mxu0 %v586
        %618 = vmatpush.bf16.msra.mxu0 %v585
        %619 = vmatpush.bf16.msra.mxu0 %v584
        %620 = vmatpush.bf16.msra.mxu0 %v583
        %621 = vmatpush.bf16.msra.mxu0 %v582
        %622 = vmatpush.bf16.msra.mxu0 %v581
        %623 = vmatpush.bf16.msra.mxu0 %v580
        %624 = vmatpush.bf16.msra.mxu0 %v579
        %625 = vmatmul.bf16.gmra.mxu0 %v504
        %v626 = vpop.f32.mrf.mxu0
        %v627 = vadd.f32 %v613, %v626
        %v628 = vpop.f32.mrf.mxu0
        %v629 = vadd.f32 %v615, %v628
        %630 = vdwg.mxu0
        %v631 = vadd.f32 %v461, %v627
        %v632 = vadd.f32 %v462, %v629
        %633 = vst [vmem:[#allocation2] sm:$0xff] %v631
        %634 = vst [vmem:[#allocation2 + $0x8] sm:$0xff] %v632
        %p635 = scmp.eq.s32.totalorder %s28, 1
        // Predicated region
        $region95: #{transformer_vae_forward.50} parent=77 // pred_check
          %p636 = pneg %p635
        $region96: #{transformer_vae_forward.50} parent=77 // pred_check_branch
          %638 = sbr.rel (%p636) target = $region98
        $region97: #{transformer_vae_forward.50} parent=77 // pred_region
          %v639 = vld [vmem:[#allocation2] sm:$0xff]
          %v640 = vld [vmem:[#allocation2 + $0x8] sm:$0xff]
          %v641 = vld [vmem:[%s433] sm:$0x1]
          %v643 = vperm.slane %v641, 0
          %v645 = vadd.f32 %v639, %v643
          %v646 = vadd.f32 %v640, %v643
          %v647 = vld [vmem:[%s441] sm:$0xf]
          %v648 = vld [vmem:[%s441 + $0x4] sm:$0xf]
          %v649 = vunpack.c.l.bf16 %v647
          %v650 = vunpack.c.l.bf16 %v648
          %v651 = vadd.f32 %v645, %v649
          %v652 = vadd.f32 %v646, %v650
          %v653 = vlaneseq
          %v654 = vand.u32 %v653, 127
          %vm655 = vcmp.lt.s32.totalorder %v654, 32
          %v656 = vsel %vm655, %v651, 0.0
          %v657 = vsel %vm655, %v652, 0.0
          %658 = vadd.xlane.f32.xlu0 %v656
          %v659 = vpop.xlane.xlu0 %658
          %660 = vadd.xlane.f32.xlu0 %v657
          %v661 = vpop.xlane.xlu0 %660
          %v662 = vmul.f32 %v659, 0.03125
          %v663 = vmul.f32 %v661, 0.03125
          %v664 = vsub.f32 %v651, %v662
          %v665 = vsub.f32 %v652, %v663
          %v666 = vsel %vm655, %v664, 0.0
          %v667 = vsel %vm655, %v665, 0.0
          %v668 = vmul.f32 %v666, %v666
          %v669 = vmul.f32 %v667, %v667
          %670 = vadd.xlane.f32.xlu0 %v668
          %v671 = vpop.xlane.xlu0 %670
          %672 = vadd.xlane.f32.xlu0 %v669
          %v673 = vpop.xlane.xlu0 %672
          %v674 = vmul.f32 %v671, 0.03125
          %v675 = vmul.f32 %v673, 0.03125
          %v676 = vadd.f32 %v674, 1e-05
          %v677 = vadd.f32 %v675, 1e-05
          %v678 = vrsqrt.pop %v676
          %v679 = vmul.f32 %v678, %v676
          %v680 = vmul.f32 %v679, %v678
          %v681 = vmul.f32 0.5, %v680
          %v682 = vsub.f32 1.5, %v681
          %v683 = vmul.f32 %v678, %v682
          %vm684 = vweird.f32 %v676
          %vm685 = vweird.f32 %v678
          %vm686 = vmor %vm684, %vm685
          %v687 = vsel %vm686, %v678, %v683
          %v688 = vrsqrt.pop %v677
          %v689 = vmul.f32 %v688, %v677
          %v690 = vmul.f32 %v689, %v688
          %v691 = vmul.f32 0.5, %v690
          %v692 = vsub.f32 1.5, %v691
          %v693 = vmul.f32 %v688, %v692
          %vm694 = vweird.f32 %v677
          %vm695 = vweird.f32 %v688
          %vm696 = vmor %vm694, %vm695
          %v697 = vsel %vm696, %v688, %v693
          %v698 = vmul.f32 %v666, %v687
          %v699 = vmul.f32 %v667, %v697
          %v700 = vld [vmem:[%s445] sm:$0x1]
          %v702 = vperm.slane %v700, 0
          %v704 = vmul.f32 %v698, %v702
          %v705 = vmul.f32 %v699, %v702
          %v706 = vld [vmem:[#allocation6] sm:$0x1]
          %v708 = vperm.slane %v706, 0
          %v710 = vadd.f32 %v704, %v708
          %v711 = vadd.f32 %v705, %v708
          %v712 = vpack.c.bf16 %v710, %v710
          %v713 = vpack.c.bf16 %v711, %v711
          %714 = vst [vmem:[%s453] sm:$0xf] %v712
          %715 = vst [vmem:[%s453 + $0x4] sm:$0xf] %v713
        $region98: #{transformer_vae_forward.50} parent=77 // pred_fallthru
          _
        %s716 = smul.u32 2, %s26
        %p717 = scmp.lt.s32.totalorder %s716, 1
        %s718 = scalar_select %p717, %s716, 1
        %p719 = scmp.lt.s32.totalorder %s27, 0
        %s720 = scalar_select %p719, %s27, 0
        %s721 = sadd.s32 %s720, %s718
        %s722 = smul.addr %s721, 4
        %s723 = scalar_lea.vmem %s6, %s722
        // Predicated region
        $region99: #{transformer_vae_forward.50} parent=77 // pred_check
          %p724 = pneg %p222
        $region100: #{transformer_vae_forward.50} parent=77 // pred_check_branch
          %726 = sbr.rel (%p724) target = $region102
        $region101: #{transformer_vae_forward.50} parent=77 // pred_region
          %s727 = smul.u32 2, %s26
        $region102: #{transformer_vae_forward.50} parent=77 // pred_fallthru
          _
        // Predicated region
        $region103: #{transformer_vae_forward.50} parent=77 // pred_check
          %p728 = pneg %p222
        $region104: #{transformer_vae_forward.50} parent=77 // pred_check_branch
          %730 = sbr.rel (%p728) target = $region106
        $region105: #{transformer_vae_forward.50} parent=77 // pred_region
          %s731 = smul.u32 2, %s26
          %p732 = scmp.lt.s32.totalorder %s731, 1
          %s733 = scalar_select %p732, %s731, 1
          %p734 = scmp.lt.s32.totalorder %s27, 0
          %s735 = scalar_select %p734, %s27, 0
          %s736 = sadd.s32 %s735, %s733
          %s737 = smul.addr %s736, 4
          %s738 = scalar_lea.vmem %s6, %s737
        $region106: #{transformer_vae_forward.50} parent=77 // pred_fallthru
          _
      $region78: #{transformer_vae_forward.50} parent=5 // pred_fallthru
        _
      %p739 = scmp.le.s32.totalorder 2, %s16
      // Predicated region
      $region107: #{transformer_vae_forward.50} parent=5 // pred_check
        %p740 = pneg %p739
      $region108: #{transformer_vae_forward.50} parent=5 // pred_check_branch
        %742 = sbr.rel (%p740) target = $region110
      $region109: #{transformer_vae_forward.50} parent=5 // pred_region
        %s743 = ssub.s32 %s16, 2
      $region110: #{transformer_vae_forward.50} parent=5 // pred_fallthru
        _
    $region6: #{transformer_vae_forward.50} parent=1 // loop_footer
      %s20 = sadd.s32 1, %s16
    $region7: #{transformer_vae_forward.50} parent=1 // loop_footer_branch
      %15 = sbr.rel target = $region3
    $region8: #{transformer_vae_forward.50} parent=1 // loop_exit
      _
    %744 = vsyncpa [#allocation5], 1
    %s745 = scalar_lea.sflag [#allocation5], 1
    %746 = vsyncpa %s745, 1
    %747 = vsyncpa [#allocation7], 1

// kernel: transformer_vae_forward.51
$region0: #{transformer_vae_forward.51}
  #allocation0 [shape = 'u32[]', space=smem, size = 0x4, offset = 0x4, fixed_abs, tag = 'smem constant byte address 0x4 - core index']
  #allocation1 [shape = 'u32[72,128]{1,0:T(1,128)}', space=vmem, size = 0x9000, scoped, tag = 'internal scratch']
  #allocation2 [shape = 'f32[8,128]{1,0:T(8,128)}', space=vmem, size = 0x1000, scoped, tag = 'scratch operand']
  %s0 = inlined_call_operand.vmem [shape: bf16[8,128], index: 0, kind: input, shape index: {}]
  %s1 = inlined_call_operand.hbm [shape: bf16[128,128], index: 1, kind: input, shape index: {}]
  %s2 = inlined_call_operand.hbm [shape: f32[1,128], index: 2, kind: input, shape index: {}]
  %s3 = inlined_call_operand.vmem [shape: bf16[8,128], index: 3, kind: output, shape index: {}]
  %s4 = sld [smem:[#allocation0]]
  $region38: #{transformer_vae_forward.51} parent=0
    _
  %s6 = ssub.s32 1, %s4
  %s7 = scalar_select 0, %s6, %s4
  $region1: #{transformer_vae_forward.51} parent=0
    #allocation3 [shape = 'u8[32768]{0}', space=vmem, size = 0x8000, scoped, tag = 'input window, operand 1, single buffered']
    #allocation4 [shape = 's32[1]{0}', space=sflag, size = 0x4, scoped, tag = 'scoped memory for transformer_vae_forward.51']
    #allocation5 [shape = 'u8[512]{0}', space=vmem, size = 0x400, scoped, tag = 'input window, operand 2, single buffered']
    #allocation6 [shape = 's32[1]{0}', space=sflag, size = 0x4, scoped, tag = 'scoped memory for transformer_vae_forward.51']
    %8 = vsyncpa [#allocation4], 0
    %9 = vsyncpa [#allocation6], 0
    // Predicated region
    $region2: #{transformer_vae_forward.51} parent=1 // pred_check
      _
    $region3: #{transformer_vae_forward.51} parent=1 // pred_check_branch
      %11 = sbr.rel (0) target = $region5
    $region4: #{transformer_vae_forward.51} parent=1 // pred_region
      _
    $region5: #{transformer_vae_forward.51} parent=1 // pred_fallthru
      _
    // Predicated region
    $region6: #{transformer_vae_forward.51} parent=1 // pred_check
      _
    $region7: #{transformer_vae_forward.51} parent=1 // pred_check_branch
      %13 = sbr.rel (0) target = $region9
    $region8: #{transformer_vae_forward.51} parent=1 // pred_region
      %15 = vsyncadd [#allocation4], 0
      %s16 = sshll.u32 %s1, 4
      %s17 = int_to_ptr.hbm [resolvable:$true] %s16
      %s18 = sshll.u32 [#allocation3], 4
      %s19 = int_to_ptr.vmem [resolvable:$true] %s18
      %24 = dma.hbm_to_vmem [thread:$0]  %s17, 1024, %s19, [#allocation4], 64, 64, 4
    $region9: #{transformer_vae_forward.51} parent=1 // pred_fallthru
      _
    // Predicated region
    $region10: #{transformer_vae_forward.51} parent=1 // pred_check
      _
    $region11: #{transformer_vae_forward.51} parent=1 // pred_check_branch
      %26 = sbr.rel (0) target = $region13
    $region12: #{transformer_vae_forward.51} parent=1 // pred_region
      %28 = vsyncadd [#allocation6], 0
      %s30 = sshll.u32 %s2, 4
      %s31 = int_to_ptr.hbm [resolvable:$true] %s30
      %s32 = sshll.u32 [#allocation5], 4
      %s33 = int_to_ptr.vmem [resolvable:$true] %s32
      %35 = dma.hbm_to_vmem [thread:$0]  %s31, 16, %s33, [#allocation6]
    $region13: #{transformer_vae_forward.51} parent=1 // pred_fallthru
      _
    // Predicated region
    $region14: #{transformer_vae_forward.51} parent=1 // pred_check
      _
    $region15: #{transformer_vae_forward.51} parent=1 // pred_check_branch
      %37 = sbr.rel (0) target = $region17
    $region16: #{transformer_vae_forward.51} parent=1 // pred_region
      %39 = dma.done [#allocation4], 1024
    $region17: #{transformer_vae_forward.51} parent=1 // pred_fallthru
      _
    // Predicated region
    $region18: #{transformer_vae_forward.51} parent=1 // pred_check
      _
    $region19: #{transformer_vae_forward.51} parent=1 // pred_check_branch
      %41 = sbr.rel (0) target = $region21
    $region20: #{transformer_vae_forward.51} parent=1 // pred_region
      %43 = dma.done [#allocation6], 16
    $region21: #{transformer_vae_forward.51} parent=1 // pred_fallthru
      _
    %p44 = scmp.eq.s32.totalorder 0, 0
    // Predicated region
    $region22: #{transformer_vae_forward.51} parent=1 // pred_check
      %p45 = pneg %p44
    $region23: #{transformer_vae_forward.51} parent=1 // pred_check_branch
      %47 = sbr.rel (%p45) target = $region25
    $region24: #{transformer_vae_forward.51} parent=1 // pred_region
      %48 = vst [vmem:[#allocation2] sm:$0xff] 0.0
    $region25: #{transformer_vae_forward.51} parent=1 // pred_fallthru
      _
    %v49 = vld [vmem:[#allocation2] sm:$0xff]
    %v50 = vld [vmem:[%s0] sm:$0xf]
    %v51 = vld [vmem:[#allocation3] sm:$0xf]
    %v52 = vld [vmem:[#allocation3 + $0x4] sm:$0xf]
    %v53 = vld [vmem:[#allocation3 + $0x8] sm:$0xf]
    %v54 = vld [vmem:[#allocation3 + $0xc] sm:$0xf]
    %v55 = vld [vmem:[#allocation3 + $0x10] sm:$0xf]
    %v56 = vld [vmem:[#allocation3 + $0x14] sm:$0xf]
    %v57 = vld [vmem:[#allocation3 + $0x18] sm:$0xf]
    %v58 = vld [vmem:[#allocation3 + $0x1c] sm:$0xf]
    %v59 = vld [vmem:[#allocation3 + $0x20] sm:$0xf]
    %v60 = vld [vmem:[#allocation3 + $0x24] sm:$0xf]
    %v61 = vld [vmem:[#allocation3 + $0x28] sm:$0xf]
    %v62 = vld [vmem:[#allocation3 + $0x2c] sm:$0xf]
    %v63 = vld [vmem:[#allocation3 + $0x30] sm:$0xf]
    %v64 = vld [vmem:[#allocation3 + $0x34] sm:$0xf]
    %v65 = vld [vmem:[#allocation3 + $0x38] sm:$0xf]
    %v66 = vld [vmem:[#allocation3 + $0x3c] sm:$0xf]
    %v83 = vunpack.c.l.b16 %v51
    %v84 = vunpack.c.l.b16 %v52
    %v85 = vunpack.c.l.b16 %v53
    %v86 = vunpack.c.l.b16 %v54
    %v87 = vunpack.c.l.b16 %v55
    %v88 = vunpack.c.l.b16 %v56
    %v89 = vunpack.c.l.b16 %v57
    %v90 = vunpack.c.l.b16 %v58
    %v91 = vunpack.c.l.b16 %v59
    %v92 = vunpack.c.l.b16 %v60
    %v93 = vunpack.c.l.b16 %v61
    %v94 = vunpack.c.l.b16 %v62
    %v95 = vunpack.c.l.b16 %v63
    %v96 = vunpack.c.l.b16 %v64
    %v97 = vunpack.c.l.b16 %v65
    %v98 = vunpack.c.l.b16 %v66
    %v99 = vpack.c.b16 %v84, %v83
    %v100 = vpack.c.b16 %v86, %v85
    %v101 = vpack.c.b16 %v88, %v87
    %v102 = vpack.c.b16 %v90, %v89
    %v103 = vpack.c.b16 %v92, %v91
    %v104 = vpack.c.b16 %v94, %v93
    %v105 = vpack.c.b16 %v96, %v95
    %v106 = vpack.c.b16 %v98, %v97
    %115 = vmatpush.bf16.msra.mxu0 %v106
    %116 = vmatpush.bf16.msra.mxu0 %v105
    %117 = vmatpush.bf16.msra.mxu0 %v104
    %118 = vmatpush.bf16.msra.mxu0 %v103
    %119 = vmatpush.bf16.msra.mxu0 %v102
    %120 = vmatpush.bf16.msra.mxu0 %v101
    %121 = vmatpush.bf16.msra.mxu0 %v100
    %122 = vmatpush.bf16.msra.mxu0 %v99
    %123 = vmatmul.bf16.gmra.mxu0 %v50
    %v124 = vpop.f32.mrf.mxu0
    %v125 = vadd.f32 0.0, %v124
    %v126 = vpop.f32.mrf.mxu0
    %127 = vdwg.mxu0
    %v128 = vadd.f32 %v49, %v125
    %129 = vst [vmem:[#allocation2] sm:$0xff] %v128
    // Predicated region
    $region26: #{transformer_vae_forward.51} parent=1 // pred_check
      %p130 = pneg %p44
    $region27: #{transformer_vae_forward.51} parent=1 // pred_check_branch
      %132 = sbr.rel (%p130) target = $region29
    $region28: #{transformer_vae_forward.51} parent=1 // pred_region
      %v133 = vld [vmem:[#allocation2] sm:$0xff]
      %v134 = vld [vmem:[#allocation5] sm:$0x1]
      %v136 = vperm.slane %v134, 0
      %v138 = vadd.f32 %v133, %v136
      %v139 = vpack.c.bf16 %v138, %v138
      %140 = vst [vmem:[%s3] sm:$0xf] %v139
    $region29: #{transformer_vae_forward.51} parent=1 // pred_fallthru
      _
    // Predicated region
    $region30: #{transformer_vae_forward.51} parent=1 // pred_check
      _
    $region31: #{transformer_vae_forward.51} parent=1 // pred_check_branch
      %142 = sbr.rel (0) target = $region33
    $region32: #{transformer_vae_forward.51} parent=1 // pred_region
      _
    $region33: #{transformer_vae_forward.51} parent=1 // pred_fallthru
      _
    // Predicated region
    $region34: #{transformer_vae_forward.51} parent=1 // pred_check
      _
    $region35: #{transformer_vae_forward.51} parent=1 // pred_check_branch
      %144 = sbr.rel (0) target = $region37
    $region36: #{transformer_vae_forward.51} parent=1 // pred_region
      _
    $region37: #{transformer_vae_forward.51} parent=1 // pred_fallthru
      _
    %145 = vsyncpa [#allocation4], 1
    %146 = vsyncpa [#allocation6], 1

// kernel: transformer_vae_forward.52
$region0: #{transformer_vae_forward.52}
  #allocation0 [shape = 'u32[]', space=smem, size = 0x4, offset = 0x4, fixed_abs, tag = 'smem constant byte address 0x4 - core index']
  #allocation1 [shape = 'u32[72,128]{1,0:T(1,128)}', space=vmem, size = 0x9000, scoped, tag = 'internal scratch']
  %s0 = inlined_call_operand.vmem [shape: bf16[2,8,128], index: 0, kind: input, shape index: {}]
  %s1 = inlined_call_operand.vmem [shape: bf16[2,1,128], index: 1, kind: input, shape index: {}]
  %s2 = inlined_call_operand.hbm [shape: f32[1,1,128], index: 2, kind: input, shape index: {}]
  %s3 = inlined_call_operand.hbm [shape: f32[1,1,128], index: 3, kind: input, shape index: {}]
  %s4 = inlined_call_operand.vmem [shape: bf16[2,8,128], index: 4, kind: output, shape index: {}]
  %s5 = sld [smem:[#allocation0]]
  $region57: #{transformer_vae_forward.52} parent=0
    _
  %s7 = ssub.s32 1, %s5
  %s8 = scalar_select 0, %s7, %s5
  $region1: #{transformer_vae_forward.52} parent=0
    #allocation2 [shape = 'u8[512]{0}', space=vmem, size = 0x400, scoped, tag = 'input window, operand 2, single buffered']
    #allocation3 [shape = 's32[2]{0}', space=sflag, size = 0x8, scoped, tag = 'scoped memory for transformer_vae_forward.52']
    #allocation4 [shape = 'u8[512]{0}', space=vmem, size = 0x400, scoped, tag = 'input window, operand 3, single buffered']
    #allocation5 [shape = 's32[1]{0}', space=sflag, size = 0x4, scoped, tag = 'scoped memory for transformer_vae_forward.52']
    %9 = vsyncpa [#allocation3], 0
    %10 = vsyncpa [#allocation5], 0
    loop: start=0, step=1, limit=4
    $region2: #{transformer_vae_forward.52} parent=1 // loop_pre_header
      _
    $region3: #{transformer_vae_forward.52} parent=1 // loop_header
      %s12 = sphi 0, %s16
      %p13 = scmp.ge.s32.totalorder %s12, 4
      %s22 = sphi 0, %s24
      %s25 = sphi 0, %s22
      %s26 = sphi 0, %s25
      %s42 = sphi 0, %s26
      %s48 = sphi 0, %s50
      %s51 = sphi 0, %s48
      %s52 = sphi 0, %s51
      %s68 = sphi 0, %s52
      %s72 = sphi 0, %s72
      %s74 = sphi 0, %s72
      %s75 = sphi 0, %s74
      %s89 = sphi 0, %s75
      %s93 = sphi 0, %s93
      %s95 = sphi 0, %s93
      %s96 = sphi 0, %s95
      %s110 = sphi 0, %s96
      %s116 = sphi 0, %s118
      %s119 = sphi 0, %s116
      %s120 = sphi 0, %s119
      %s136 = sphi 0, %s120
    $region4: #{transformer_vae_forward.52} parent=1 // loop_header_branch
      %15 = sbr.rel (%p13) target = $region8
    $region5: #{transformer_vae_forward.52} parent=1 // loop_body
      %s17 = ssub.s32 %s12, 1
      %s18 = ssub.s32 %s12, 2
      %s19 = sadd.s32 %s12, 1
      %s20 = ssub.s32 %s12, %s19
      %p21 = scmp.eq.s32.totalorder %s20, 0
      %s23 = sadd.s32 %s22, 1
      %s24 = scalar_select %p21, %s22, %s23
      %p27 = pneg %p21
      %p28 = scmp.eq.s32.totalorder %s12, 1
      %p29 = por %p27, %p28
      %p30 = scmp.ne.s32.totalorder %s22, %s25
      %p31 = scmp.eq.s32.totalorder %s12, 0
      %p32 = por %p30, %p31
      %p33 = scmp.ne.s32.totalorder %s22, %s25
      %p34 = scmp.eq.s32.totalorder %s17, 1
      %p35 = por %p33, %p34
      %p36 = scmp.ne.s32.totalorder %s25, %s26
      %p37 = scmp.eq.s32.totalorder %s17, 0
      %p38 = por %p36, %p37
      %p39 = scmp.ne.s32.totalorder %s25, %s26
      %p40 = scmp.eq.s32.totalorder %s18, 1
      %p41 = por %p39, %p40
      %p43 = scmp.ne.s32.totalorder %s26, %s42
      %p44 = scmp.eq.s32.totalorder %s18, 0
      %p45 = por %p43, %p44
      %s46 = ssub.s32 %s12, %s19
      %p47 = scmp.eq.s32.totalorder %s46, 0
      %s49 = sadd.s32 %s48, 1
      %s50 = scalar_select %p47, %s48, %s49
      %p53 = pneg %p47
      %p54 = scmp.eq.s32.totalorder %s12, 1
      %p55 = por %p53, %p54
      %p56 = scmp.ne.s32.totalorder %s48, %s51
      %p57 = scmp.eq.s32.totalorder %s12, 0
      %p58 = por %p56, %p57
      %p59 = scmp.ne.s32.totalorder %s48, %s51
      %p60 = scmp.eq.s32.totalorder %s17, 1
      %p61 = por %p59, %p60
      %p62 = scmp.ne.s32.totalorder %s51, %s52
      %p63 = scmp.eq.s32.totalorder %s17, 0
      %p64 = por %p62, %p63
      %p65 = scmp.ne.s32.totalorder %s51, %s52
      %p66 = scmp.eq.s32.totalorder %s18, 1
      %p67 = por %p65, %p66
      %p69 = scmp.ne.s32.totalorder %s52, %s68
      %p70 = scmp.eq.s32.totalorder %s18, 0
      %p71 = por %p69, %p70
      %s73 = sadd.s32 %s72, 1
      %p76 = scmp.eq.s32.totalorder %s12, 1
      %p77 = scmp.ne.s32.totalorder %s72, %s74
      %p78 = scmp.eq.s32.totalorder %s12, 0
      %p79 = por %p77, %p78
      %p80 = scmp.ne.s32.totalorder %s72, %s74
      %p81 = scmp.eq.s32.totalorder %s17, 1
      %p82 = por %p80, %p81
      %p83 = scmp.ne.s32.totalorder %s74, %s75
      %p84 = scmp.eq.s32.totalorder %s17, 0
      %p85 = por %p83, %p84
      %p86 = scmp.ne.s32.totalorder %s74, %s75
      %p87 = scmp.eq.s32.totalorder %s18, 1
      %p88 = por %p86, %p87
      %p90 = scmp.ne.s32.totalorder %s75, %s89
      %p91 = scmp.eq.s32.totalorder %s18, 0
      %p92 = por %p90, %p91
      %s94 = sadd.s32 %s93, 1
      %p97 = scmp.eq.s32.totalorder %s12, 1
      %p98 = scmp.ne.s32.totalorder %s93, %s95
      %p99 = scmp.eq.s32.totalorder %s12, 0
      %p100 = por %p98, %p99
      %p101 = scmp.ne.s32.totalorder %s93, %s95
      %p102 = scmp.eq.s32.totalorder %s17, 1
      %p103 = por %p101, %p102
      %p104 = scmp.ne.s32.totalorder %s95, %s96
      %p105 = scmp.eq.s32.totalorder %s17, 0
      %p106 = por %p104, %p105
      %p107 = scmp.ne.s32.totalorder %s95, %s96
      %p108 = scmp.eq.s32.totalorder %s18, 1
      %p109 = por %p107, %p108
      %p111 = scmp.ne.s32.totalorder %s96, %s110
      %p112 = scmp.eq.s32.totalorder %s18, 0
      %p113 = por %p111, %p112
      %s114 = ssub.s32 %s12, %s19
      %p115 = scmp.eq.s32.totalorder %s114, 0
      %s117 = sadd.s32 %s116, 1
      %s118 = scalar_select %p115, %s116, %s117
      %p121 = pneg %p115
      %p122 = scmp.eq.s32.totalorder %s12, 1
      %p123 = por %p121, %p122
      %p124 = scmp.ne.s32.totalorder %s116, %s119
      %p125 = scmp.eq.s32.totalorder %s12, 0
      %p126 = por %p124, %p125
      %p127 = scmp.ne.s32.totalorder %s116, %s119
      %p128 = scmp.eq.s32.totalorder %s17, 1
      %p129 = por %p127, %p128
      %p130 = scmp.ne.s32.totalorder %s119, %s120
      %p131 = scmp.eq.s32.totalorder %s17, 0
      %p132 = por %p130, %p131
      %p133 = scmp.ne.s32.totalorder %s119, %s120
      %p134 = scmp.eq.s32.totalorder %s18, 1
      %p135 = por %p133, %p134
      %p137 = scmp.ne.s32.totalorder %s120, %s136
      %p138 = scmp.eq.s32.totalorder %s18, 0
      %p139 = por %p137, %p138
      %p140 = scmp.le.s32.totalorder 1, %s12
      %p141 = scmp.lt.s32.totalorder %s12, 3
      %p142 = pnand %p140, %p141
      %p143 = pneg %p142
      // Predicated region
      $region9: #{transformer_vae_forward.52} parent=5 // pred_check
        _
      $region10: #{transformer_vae_forward.52} parent=5 // pred_check_branch
        %145 = sbr.rel (%p142) target = $region12
      $region11: #{transformer_vae_forward.52} parent=5 // pred_region
        %s146 = ssub.s32 %s12, 1
        // Predicated region
        $region13: #{transformer_vae_forward.52} parent=11 // pred_check
          %p147 = pneg %p85
        $region14: #{transformer_vae_forward.52} parent=11 // pred_check_branch
          %149 = sbr.rel (%p147) target = $region16
        $region15: #{transformer_vae_forward.52} parent=11 // pred_region
          %151 = vsyncadd [#allocation3], 0
          %s153 = sshll.u32 %s2, 4
          %s154 = int_to_ptr.hbm [resolvable:$true] %s153
          %s155 = sshll.u32 [#allocation2], 4
          %s156 = int_to_ptr.vmem [resolvable:$true] %s155
          %158 = dma.hbm_to_vmem [thread:$0]  %s154, 16, %s156, [#allocation3]
        $region16: #{transformer_vae_forward.52} parent=11 // pred_fallthru
          _
        // Predicated region
        $region17: #{transformer_vae_forward.52} parent=11 // pred_check
          %p159 = pneg %p106
        $region18: #{transformer_vae_forward.52} parent=11 // pred_check_branch
          %161 = sbr.rel (%p159) target = $region20
        $region19: #{transformer_vae_forward.52} parent=11 // pred_region
          %163 = vsyncadd [#allocation5], 0
          %s165 = sshll.u32 %s3, 4
          %s166 = int_to_ptr.hbm [resolvable:$true] %s165
          %s167 = sshll.u32 [#allocation4], 4
          %s168 = int_to_ptr.vmem [resolvable:$true] %s167
          %170 = dma.hbm_to_vmem [thread:$0]  %s166, 16, %s168, [#allocation5]
        $region20: #{transformer_vae_forward.52} parent=11 // pred_fallthru
          _
      $region12: #{transformer_vae_forward.52} parent=5 // pred_fallthru
        _
      %p171 = scmp.lt.s32.totalorder %s12, 2
      // Predicated region
      $region21: #{transformer_vae_forward.52} parent=5 // pred_check
        %p172 = pneg %p171
      $region22: #{transformer_vae_forward.52} parent=5 // pred_check_branch
        %174 = sbr.rel (%p172) target = $region24
      $region23: #{transformer_vae_forward.52} parent=5 // pred_region
        // Predicated region
        $region25: #{transformer_vae_forward.52} parent=23 // pred_check
          %p175 = pneg %p32
        $region26: #{transformer_vae_forward.52} parent=23 // pred_check_branch
          %177 = sbr.rel (%p175) target = $region28
        $region27: #{transformer_vae_forward.52} parent=23 // pred_region
          %p178 = scmp.lt.s32.totalorder %s12, 1
          %s179 = scalar_select %p178, %s12, 1
          %s180 = smul.addr %s179, 4
          %s181 = scalar_lea.vmem %s0, %s180
        $region28: #{transformer_vae_forward.52} parent=23 // pred_fallthru
          _
        // Predicated region
        $region29: #{transformer_vae_forward.52} parent=23 // pred_check
          %p182 = pneg %p58
        $region30: #{transformer_vae_forward.52} parent=23 // pred_check_branch
          %184 = sbr.rel (%p182) target = $region32
        $region31: #{transformer_vae_forward.52} parent=23 // pred_region
          %p185 = scmp.lt.s32.totalorder %s12, 1
          %s186 = scalar_select %p185, %s12, 1
          %s187 = scalar_lea.vmem %s1, %s186
        $region32: #{transformer_vae_forward.52} parent=23 // pred_fallthru
          _
      $region24: #{transformer_vae_forward.52} parent=5 // pred_fallthru
        _
      %p188 = scmp.le.s32.totalorder 1, %s12
      %p189 = scmp.lt.s32.totalorder %s12, 3
      %p190 = pnand %p188, %p189
      %p191 = pneg %p190
      // Predicated region
      $region33: #{transformer_vae_forward.52} parent=5 // pred_check
        _
      $region34: #{transformer_vae_forward.52} parent=5 // pred_check_branch
        %193 = sbr.rel (%p190) target = $region36
      $region35: #{transformer_vae_forward.52} parent=5 // pred_region
        %s194 = ssub.s32 %s12, 1
        // Predicated region
        $region37: #{transformer_vae_forward.52} parent=35 // pred_check
          %p195 = pneg %p85
        $region38: #{transformer_vae_forward.52} parent=35 // pred_check_branch
          %197 = sbr.rel (%p195) target = $region40
        $region39: #{transformer_vae_forward.52} parent=35 // pred_region
          %199 = dma.done [#allocation3], 16
        $region40: #{transformer_vae_forward.52} parent=35 // pred_fallthru
          _
        // Predicated region
        $region41: #{transformer_vae_forward.52} parent=35 // pred_check
          %p200 = pneg %p106
        $region42: #{transformer_vae_forward.52} parent=35 // pred_check_branch
          %202 = sbr.rel (%p200) target = $region44
        $region43: #{transformer_vae_forward.52} parent=35 // pred_region
          %204 = dma.done [#allocation5], 16
        $region44: #{transformer_vae_forward.52} parent=35 // pred_fallthru
          _
        %p205 = scmp.lt.s32.totalorder %s17, 1
        %s206 = scalar_select %p205, %s17, 1
        %s207 = smul.addr %s206, 4
        %s208 = scalar_lea.vmem %s0, %s207
        %p209 = pneg %p38
        %p210 = pneg %p35
        %p211 = scmp.lt.s32.totalorder %s17, 1
        %s212 = scalar_select %p211, %s17, 1
        %s213 = scalar_lea.vmem %s1, %s212
        %p214 = pneg %p64
        %p215 = pneg %p61
        %p216 = pneg %p85
        %p217 = pneg %p82
        %p218 = pneg %p106
        %p219 = pneg %p103
        %p220 = pneg %p132
        %p221 = pneg %p129
        %p222 = scmp.lt.s32.totalorder %s17, 1
        %s223 = scalar_select %p222, %s17, 1
        %s224 = smul.addr %s223, 4
        %s225 = scalar_lea.vmem %s4, %s224
        %p226 = scmp.lt.s32.totalorder %s17, 1
        %s227 = scalar_select %p226, %s17, 1
        %s228 = smul.addr %s227, 4
        %s229 = scalar_lea.vmem %s0, %s228
        %p230 = scmp.lt.s32.totalorder %s17, 1
        %s231 = scalar_select %p230, %s17, 1
        %s232 = scalar_lea.vmem %s1, %s231
        %p233 = scmp.lt.s32.totalorder %s17, 1
        %s234 = scalar_select %p233, %s17, 1
        %s235 = smul.addr %s234, 4
        %s236 = scalar_lea.vmem %s4, %s235
        %v237 = vld [vmem:[%s229] sm:$0xf]
        %v238 = vunpack.c.l.bf16 %v237
        %v239 = vld [vmem:[%s232] sm:$0x1]
        %v240 = vunpack.c.l.bf16 %v239
        %v241 = vperm.slane %v240, 0
        %v242 = vadd.f32 %v238, %v241
        %v243 = vlaneseq
        %v244 = vand.u32 %v243, 127
        %vm245 = vcmp.lt.s32.totalorder %v244, 32
        %v246 = vsel %vm245, %v242, 0.0
        %247 = vadd.xlane.f32.xlu0 %v246
        %v248 = vpop.xlane.xlu0 %247
        %v249 = vmul.f32 %v248, 0.03125
        %v250 = vsub.f32 %v242, %v249
        %v251 = vsel %vm245, %v250, 0.0
        %v252 = vmul.f32 %v251, %v251
        %253 = vadd.xlane.f32.xlu0 %v252
        %v254 = vpop.xlane.xlu0 %253
        %v255 = vmul.f32 %v254, 0.03125
        %v256 = vadd.f32 %v255, 1e-05
        %v257 = vrsqrt.pop %v256
        %v258 = vmul.f32 %v257, %v256
        %v259 = vmul.f32 %v258, %v257
        %v260 = vmul.f32 0.5, %v259
        %v261 = vsub.f32 1.5, %v260
        %v262 = vmul.f32 %v257, %v261
        %vm263 = vweird.f32 %v256
        %vm264 = vweird.f32 %v257
        %vm265 = vmor %vm263, %vm264
        %v266 = vsel %vm265, %v257, %v262
        %v267 = vmul.f32 %v251, %v266
        %v268 = vld [vmem:[#allocation2] sm:$0x1]
        %v270 = vperm.slane %v268, 0
        %v272 = vmul.f32 %v267, %v270
        %v273 = vld [vmem:[#allocation4] sm:$0x1]
        %v275 = vperm.slane %v273, 0
        %v277 = vadd.f32 %v272, %v275
        %v278 = vpack.c.bf16 %v277, %v277
        %279 = vst [vmem:[%s236] sm:$0xf] %v278
        %p280 = scmp.lt.s32.totalorder %s17, 1
        %s281 = scalar_select %p280, %s17, 1
        %s282 = smul.addr %s281, 4
        %s283 = scalar_lea.vmem %s4, %s282
        // Predicated region
        $region45: #{transformer_vae_forward.52} parent=35 // pred_check
          %p284 = pneg %p129
        $region46: #{transformer_vae_forward.52} parent=35 // pred_check_branch
          %286 = sbr.rel (%p284) target = $region48
        $region47: #{transformer_vae_forward.52} parent=35 // pred_region
          _
        $region48: #{transformer_vae_forward.52} parent=35 // pred_fallthru
          _
      $region36: #{transformer_vae_forward.52} parent=5 // pred_fallthru
        _
      %p287 = scmp.le.s32.totalorder 2, %s12
      // Predicated region
      $region49: #{transformer_vae_forward.52} parent=5 // pred_check
        %p288 = pneg %p287
      $region50: #{transformer_vae_forward.52} parent=5 // pred_check_branch
        %290 = sbr.rel (%p288) target = $region52
      $region51: #{transformer_vae_forward.52} parent=5 // pred_region
        %s291 = ssub.s32 %s12, 2
        // Predicated region
        $region53: #{transformer_vae_forward.52} parent=51 // pred_check
          %p292 = pneg %p135
        $region54: #{transformer_vae_forward.52} parent=51 // pred_check_branch
          %294 = sbr.rel (%p292) target = $region56
        $region55: #{transformer_vae_forward.52} parent=51 // pred_region
          %p295 = scmp.lt.s32.totalorder %s18, 1
          %s296 = scalar_select %p295, %s18, 1
          %s297 = smul.addr %s296, 4
          %s298 = scalar_lea.vmem %s4, %s297
        $region56: #{transformer_vae_forward.52} parent=51 // pred_fallthru
          _
      $region52: #{transformer_vae_forward.52} parent=5 // pred_fallthru
        _
    $region6: #{transformer_vae_forward.52} parent=1 // loop_footer
      %s16 = sadd.s32 1, %s12
    $region7: #{transformer_vae_forward.52} parent=1 // loop_footer_branch
      %11 = sbr.rel target = $region3
    $region8: #{transformer_vae_forward.52} parent=1 // loop_exit
      _
    %299 = vsyncpa [#allocation3], 1
    %s300 = scalar_lea.sflag [#allocation3], 1
    %301 = vsyncpa %s300, 1
    %302 = vsyncpa [#allocation5], 1

// kernel: transformer_vae_forward.53
$region0: #{transformer_vae_forward.53}
  #allocation0 [shape = 'u32[]', space=smem, size = 0x4, offset = 0x4, fixed_abs, tag = 'smem constant byte address 0x4 - core index']
  #allocation1 [shape = 'u32[72,128]{1,0:T(1,128)}', space=vmem, size = 0x9000, scoped, tag = 'internal scratch']
  #allocation2 [shape = 'f32[16,128]{1,0:T(8,128)}', space=vmem, size = 0x2000, scoped, tag = 'scratch operand']
  %s0 = inlined_call_operand.vmem [shape: bf16[16,128], index: 0, kind: input, shape index: {}]
  %s1 = inlined_call_operand.vmem [shape: bf16[128,128], index: 1, kind: input, shape index: {}]
  %s2 = inlined_call_operand.hbm [shape: f32[1,128], index: 2, kind: input, shape index: {}]
  %s3 = inlined_call_operand.vmem [shape: bf16[16,128], index: 3, kind: output, shape index: {}]
  %s4 = sld [smem:[#allocation0]]
  $region34: #{transformer_vae_forward.53} parent=0
    _
  %s6 = ssub.s32 1, %s4
  %s7 = scalar_select 0, %s6, %s4
  $region1: #{transformer_vae_forward.53} parent=0
    #allocation3 [shape = 'u8[512]{0}', space=vmem, size = 0x400, scoped, tag = 'input window, operand 2, single buffered']
    #allocation4 [shape = 's32[1]{0}', space=sflag, size = 0x4, scoped, tag = 'scoped memory for transformer_vae_forward.53']
    %8 = vsyncpa [#allocation4], 0
    // Predicated region
    $region2: #{transformer_vae_forward.53} parent=1 // pred_check
      _
    $region3: #{transformer_vae_forward.53} parent=1 // pred_check_branch
      %10 = sbr.rel (0) target = $region5
    $region4: #{transformer_vae_forward.53} parent=1 // pred_region
      _
    $region5: #{transformer_vae_forward.53} parent=1 // pred_fallthru
      _
    // Predicated region
    $region6: #{transformer_vae_forward.53} parent=1 // pred_check
      _
    $region7: #{transformer_vae_forward.53} parent=1 // pred_check_branch
      %12 = sbr.rel (0) target = $region9
    $region8: #{transformer_vae_forward.53} parent=1 // pred_region
      _
    $region9: #{transformer_vae_forward.53} parent=1 // pred_fallthru
      _
    // Predicated region
    $region10: #{transformer_vae_forward.53} parent=1 // pred_check
      _
    $region11: #{transformer_vae_forward.53} parent=1 // pred_check_branch
      %14 = sbr.rel (0) target = $region13
    $region12: #{transformer_vae_forward.53} parent=1 // pred_region
      %16 = vsyncadd [#allocation4], 0
      %s18 = sshll.u32 %s2, 4
      %s19 = int_to_ptr.hbm [resolvable:$true] %s18
      %s20 = sshll.u32 [#allocation3], 4
      %s21 = int_to_ptr.vmem [resolvable:$true] %s20
      %23 = dma.hbm_to_vmem [thread:$0]  %s19, 16, %s21, [#allocation4]
    $region13: #{transformer_vae_forward.53} parent=1 // pred_fallthru
      _
    // Predicated region
    $region14: #{transformer_vae_forward.53} parent=1 // pred_check
      _
    $region15: #{transformer_vae_forward.53} parent=1 // pred_check_branch
      %25 = sbr.rel (0) target = $region17
    $region16: #{transformer_vae_forward.53} parent=1 // pred_region
      %27 = dma.done [#allocation4], 16
    $region17: #{transformer_vae_forward.53} parent=1 // pred_fallthru
      _
    %p28 = scmp.eq.s32.totalorder 0, 0
    // Predicated region
    $region18: #{transformer_vae_forward.53} parent=1 // pred_check
      %p29 = pneg %p28
    $region19: #{transformer_vae_forward.53} parent=1 // pred_check_branch
      %31 = sbr.rel (%p29) target = $region21
    $region20: #{transformer_vae_forward.53} parent=1 // pred_region
      %32 = vst [vmem:[#allocation2] sm:$0xff] 0.0
      %33 = vst [vmem:[#allocation2 + $0x8] sm:$0xff] 0.0
    $region21: #{transformer_vae_forward.53} parent=1 // pred_fallthru
      _
    %v34 = vld [vmem:[#allocation2] sm:$0xff]
    %v35 = vld [vmem:[#allocation2 + $0x8] sm:$0xff]
    %v36 = vld [vmem:[%s0] sm:$0xf]
    %v37 = vld [vmem:[%s0 + $0x4] sm:$0xf]
    %v38 = vld [vmem:[%s1] sm:$0xf]
    %v39 = vld [vmem:[%s1 + $0x4] sm:$0xf]
    %v40 = vld [vmem:[%s1 + $0x8] sm:$0xf]
    %v41 = vld [vmem:[%s1 + $0xc] sm:$0xf]
    %v42 = vld [vmem:[%s1 + $0x10] sm:$0xf]
    %v43 = vld [vmem:[%s1 + $0x14] sm:$0xf]
    %v44 = vld [vmem:[%s1 + $0x18] sm:$0xf]
    %v45 = vld [vmem:[%s1 + $0x1c] sm:$0xf]
    %v46 = vld [vmem:[%s1 + $0x20] sm:$0xf]
    %v47 = vld [vmem:[%s1 + $0x24] sm:$0xf]
    %v48 = vld [vmem:[%s1 + $0x28] sm:$0xf]
    %v49 = vld [vmem:[%s1 + $0x2c] sm:$0xf]
    %v50 = vld [vmem:[%s1 + $0x30] sm:$0xf]
    %v51 = vld [vmem:[%s1 + $0x34] sm:$0xf]
    %v52 = vld [vmem:[%s1 + $0x38] sm:$0xf]
    %v53 = vld [vmem:[%s1 + $0x3c] sm:$0xf]
    %v56 = vunpack.c.l.b16 %v36
    %v57 = vunpack.c.l.b16 %v37
    %v58 = vpack.c.b16 %v57, %v56
    %v76 = vunpack.c.l.b16 %v38
    %v77 = vunpack.c.l.b16 %v39
    %v78 = vunpack.c.l.b16 %v40
    %v79 = vunpack.c.l.b16 %v41
    %v80 = vunpack.c.l.b16 %v42
    %v81 = vunpack.c.l.b16 %v43
    %v82 = vunpack.c.l.b16 %v44
    %v83 = vunpack.c.l.b16 %v45
    %v84 = vunpack.c.l.b16 %v46
    %v85 = vunpack.c.l.b16 %v47
    %v86 = vunpack.c.l.b16 %v48
    %v87 = vunpack.c.l.b16 %v49
    %v88 = vunpack.c.l.b16 %v50
    %v89 = vunpack.c.l.b16 %v51
    %v90 = vunpack.c.l.b16 %v52
    %v91 = vunpack.c.l.b16 %v53
    %v92 = vpack.c.b16 %v77, %v76
    %v93 = vpack.c.b16 %v79, %v78
    %v94 = vpack.c.b16 %v81, %v80
    %v95 = vpack.c.b16 %v83, %v82
    %v96 = vpack.c.b16 %v85, %v84
    %v97 = vpack.c.b16 %v87, %v86
    %v98 = vpack.c.b16 %v89, %v88
    %v99 = vpack.c.b16 %v91, %v90
    %108 = vmatpush.bf16.msra.mxu0 %v99
    %109 = vmatpush.bf16.msra.mxu0 %v98
    %110 = vmatpush.bf16.msra.mxu0 %v97
    %111 = vmatpush.bf16.msra.mxu0 %v96
    %112 = vmatpush.bf16.msra.mxu0 %v95
    %113 = vmatpush.bf16.msra.mxu0 %v94
    %114 = vmatpush.bf16.msra.mxu0 %v93
    %115 = vmatpush.bf16.msra.mxu0 %v92
    %116 = vmatmul.bf16.gmra.mxu0 %v58
    %v117 = vpop.f32.mrf.mxu0
    %v118 = vadd.f32 0.0, %v117
    %v119 = vpop.f32.mrf.mxu0
    %v120 = vadd.f32 0.0, %v119
    %121 = vdwg.mxu0
    %v122 = vadd.f32 %v34, %v118
    %v123 = vadd.f32 %v35, %v120
    %124 = vst [vmem:[#allocation2] sm:$0xff] %v122
    %125 = vst [vmem:[#allocation2 + $0x8] sm:$0xff] %v123
    // Predicated region
    $region22: #{transformer_vae_forward.53} parent=1 // pred_check
      %p126 = pneg %p28
    $region23: #{transformer_vae_forward.53} parent=1 // pred_check_branch
      %128 = sbr.rel (%p126) target = $region25
    $region24: #{transformer_vae_forward.53} parent=1 // pred_region
      %v129 = vld [vmem:[#allocation2] sm:$0xff]
      %v130 = vld [vmem:[#allocation2 + $0x8] sm:$0xff]
      %v131 = vld [vmem:[#allocation3] sm:$0x1]
      %v133 = vperm.slane %v131, 0
      %v135 = vadd.f32 %v129, %v133
      %v136 = vadd.f32 %v130, %v133
      %v137 = vmax.f32 %v135, 0.0
      %v138 = vmax.f32 %v136, 0.0
      %v139 = vpack.c.bf16 %v137, %v137
      %v140 = vpack.c.bf16 %v138, %v138
      %141 = vst [vmem:[%s3] sm:$0xf] %v139
      %142 = vst [vmem:[%s3 + $0x4] sm:$0xf] %v140
    $region25: #{transformer_vae_forward.53} parent=1 // pred_fallthru
      _
    // Predicated region
    $region26: #{transformer_vae_forward.53} parent=1 // pred_check
      _
    $region27: #{transformer_vae_forward.53} parent=1 // pred_check_branch
      %144 = sbr.rel (0) target = $region29
    $region28: #{transformer_vae_forward.53} parent=1 // pred_region
      _
    $region29: #{transformer_vae_forward.53} parent=1 // pred_fallthru
      _
    // Predicated region
    $region30: #{transformer_vae_forward.53} parent=1 // pred_check
      _
    $region31: #{transformer_vae_forward.53} parent=1 // pred_check_branch
      %146 = sbr.rel (0) target = $region33
    $region32: #{transformer_vae_forward.53} parent=1 // pred_region
      _
    $region33: #{transformer_vae_forward.53} parent=1 // pred_fallthru
      _
    %147 = vsyncpa [#allocation4], 1

// kernel: transformer_vae_forward.55
$region0: #{transformer_vae_forward.55}
  #allocation0 [shape = 'u32[]', space=smem, size = 0x4, offset = 0x4, fixed_abs, tag = 'smem constant byte address 0x4 - core index']
  #allocation1 [shape = 'u32[72,128]{1,0:T(1,128)}', space=vmem, size = 0x9000, scoped, tag = 'internal scratch']
  #allocation2 [shape = 'f32[16,128]{1,0:T(8,128)}', space=vmem, size = 0x2000, scoped, tag = 'scratch operand']
  %s0 = inlined_call_operand.vmem [shape: bf16[16,128], index: 0, kind: input, shape index: {}]
  %s1 = inlined_call_operand.hbm [shape: bf16[128,128], index: 1, kind: input, shape index: {}]
  %s2 = inlined_call_operand.hbm [shape: f32[1,128], index: 2, kind: input, shape index: {}]
  %s3 = inlined_call_operand.vmem [shape: f32[16,128], index: 3, kind: output, shape index: {}]
  %s4 = sld [smem:[#allocation0]]
  $region38: #{transformer_vae_forward.55} parent=0
    _
  %s6 = ssub.s32 1, %s4
  %s7 = scalar_select 0, %s6, %s4
  $region1: #{transformer_vae_forward.55} parent=0
    #allocation3 [shape = 'u8[32768]{0}', space=vmem, size = 0x8000, scoped, tag = 'input window, operand 1, single buffered']
    #allocation4 [shape = 's32[1]{0}', space=sflag, size = 0x4, scoped, tag = 'scoped memory for transformer_vae_forward.55']
    #allocation5 [shape = 'u8[512]{0}', space=vmem, size = 0x400, scoped, tag = 'input window, operand 2, single buffered']
    #allocation6 [shape = 's32[1]{0}', space=sflag, size = 0x4, scoped, tag = 'scoped memory for transformer_vae_forward.55']
    %8 = vsyncpa [#allocation4], 0
    %9 = vsyncpa [#allocation6], 0
    // Predicated region
    $region2: #{transformer_vae_forward.55} parent=1 // pred_check
      _
    $region3: #{transformer_vae_forward.55} parent=1 // pred_check_branch
      %11 = sbr.rel (0) target = $region5
    $region4: #{transformer_vae_forward.55} parent=1 // pred_region
      _
    $region5: #{transformer_vae_forward.55} parent=1 // pred_fallthru
      _
    // Predicated region
    $region6: #{transformer_vae_forward.55} parent=1 // pred_check
      _
    $region7: #{transformer_vae_forward.55} parent=1 // pred_check_branch
      %13 = sbr.rel (0) target = $region9
    $region8: #{transformer_vae_forward.55} parent=1 // pred_region
      %15 = vsyncadd [#allocation4], 0
      %s16 = sshll.u32 %s1, 4
      %s17 = int_to_ptr.hbm [resolvable:$true] %s16
      %s18 = sshll.u32 [#allocation3], 4
      %s19 = int_to_ptr.vmem [resolvable:$true] %s18
      %24 = dma.hbm_to_vmem [thread:$0]  %s17, 1024, %s19, [#allocation4], 64, 64, 4
    $region9: #{transformer_vae_forward.55} parent=1 // pred_fallthru
      _
    // Predicated region
    $region10: #{transformer_vae_forward.55} parent=1 // pred_check
      _
    $region11: #{transformer_vae_forward.55} parent=1 // pred_check_branch
      %26 = sbr.rel (0) target = $region13
    $region12: #{transformer_vae_forward.55} parent=1 // pred_region
      %28 = vsyncadd [#allocation6], 0
      %s30 = sshll.u32 %s2, 4
      %s31 = int_to_ptr.hbm [resolvable:$true] %s30
      %s32 = sshll.u32 [#allocation5], 4
      %s33 = int_to_ptr.vmem [resolvable:$true] %s32
      %35 = dma.hbm_to_vmem [thread:$0]  %s31, 16, %s33, [#allocation6]
    $region13: #{transformer_vae_forward.55} parent=1 // pred_fallthru
      _
    // Predicated region
    $region14: #{transformer_vae_forward.55} parent=1 // pred_check
      _
    $region15: #{transformer_vae_forward.55} parent=1 // pred_check_branch
      %37 = sbr.rel (0) target = $region17
    $region16: #{transformer_vae_forward.55} parent=1 // pred_region
      %39 = dma.done [#allocation4], 1024
    $region17: #{transformer_vae_forward.55} parent=1 // pred_fallthru
      _
    // Predicated region
    $region18: #{transformer_vae_forward.55} parent=1 // pred_check
      _
    $region19: #{transformer_vae_forward.55} parent=1 // pred_check_branch
      %41 = sbr.rel (0) target = $region21
    $region20: #{transformer_vae_forward.55} parent=1 // pred_region
      %43 = dma.done [#allocation6], 16
    $region21: #{transformer_vae_forward.55} parent=1 // pred_fallthru
      _
    %p44 = scmp.eq.s32.totalorder 0, 0
    // Predicated region
    $region22: #{transformer_vae_forward.55} parent=1 // pred_check
      %p45 = pneg %p44
    $region23: #{transformer_vae_forward.55} parent=1 // pred_check_branch
      %47 = sbr.rel (%p45) target = $region25
    $region24: #{transformer_vae_forward.55} parent=1 // pred_region
      %48 = vst [vmem:[#allocation2] sm:$0xff] 0.0
      %49 = vst [vmem:[#allocation2 + $0x8] sm:$0xff] 0.0
    $region25: #{transformer_vae_forward.55} parent=1 // pred_fallthru
      _
    %v50 = vld [vmem:[#allocation2] sm:$0xff]
    %v51 = vld [vmem:[#allocation2 + $0x8] sm:$0xff]
    %v52 = vld [vmem:[%s0] sm:$0xf]
    %v53 = vld [vmem:[%s0 + $0x4] sm:$0xf]
    %v54 = vld [vmem:[#allocation3] sm:$0xf]
    %v55 = vld [vmem:[#allocation3 + $0x4] sm:$0xf]
    %v56 = vld [vmem:[#allocation3 + $0x8] sm:$0xf]
    %v57 = vld [vmem:[#allocation3 + $0xc] sm:$0xf]
    %v58 = vld [vmem:[#allocation3 + $0x10] sm:$0xf]
    %v59 = vld [vmem:[#allocation3 + $0x14] sm:$0xf]
    %v60 = vld [vmem:[#allocation3 + $0x18] sm:$0xf]
    %v61 = vld [vmem:[#allocation3 + $0x1c] sm:$0xf]
    %v62 = vld [vmem:[#allocation3 + $0x20] sm:$0xf]
    %v63 = vld [vmem:[#allocation3 + $0x24] sm:$0xf]
    %v64 = vld [vmem:[#allocation3 + $0x28] sm:$0xf]
    %v65 = vld [vmem:[#allocation3 + $0x2c] sm:$0xf]
    %v66 = vld [vmem:[#allocation3 + $0x30] sm:$0xf]
    %v67 = vld [vmem:[#allocation3 + $0x34] sm:$0xf]
    %v68 = vld [vmem:[#allocation3 + $0x38] sm:$0xf]
    %v69 = vld [vmem:[#allocation3 + $0x3c] sm:$0xf]
    %v72 = vunpack.c.l.b16 %v52
    %v73 = vunpack.c.l.b16 %v53
    %v74 = vpack.c.b16 %v73, %v72
    %v92 = vunpack.c.l.b16 %v54
    %v93 = vunpack.c.l.b16 %v55
    %v94 = vunpack.c.l.b16 %v56
    %v95 = vunpack.c.l.b16 %v57
    %v96 = vunpack.c.l.b16 %v58
    %v97 = vunpack.c.l.b16 %v59
    %v98 = vunpack.c.l.b16 %v60
    %v99 = vunpack.c.l.b16 %v61
    %v100 = vunpack.c.l.b16 %v62
    %v101 = vunpack.c.l.b16 %v63
    %v102 = vunpack.c.l.b16 %v64
    %v103 = vunpack.c.l.b16 %v65
    %v104 = vunpack.c.l.b16 %v66
    %v105 = vunpack.c.l.b16 %v67
    %v106 = vunpack.c.l.b16 %v68
    %v107 = vunpack.c.l.b16 %v69
    %v108 = vpack.c.b16 %v93, %v92
    %v109 = vpack.c.b16 %v95, %v94
    %v110 = vpack.c.b16 %v97, %v96
    %v111 = vpack.c.b16 %v99, %v98
    %v112 = vpack.c.b16 %v101, %v100
    %v113 = vpack.c.b16 %v103, %v102
    %v114 = vpack.c.b16 %v105, %v104
    %v115 = vpack.c.b16 %v107, %v106
    %124 = vmatpush.bf16.msra.mxu0 %v115
    %125 = vmatpush.bf16.msra.mxu0 %v114
    %126 = vmatpush.bf16.msra.mxu0 %v113
    %127 = vmatpush.bf16.msra.mxu0 %v112
    %128 = vmatpush.bf16.msra.mxu0 %v111
    %129 = vmatpush.bf16.msra.mxu0 %v110
    %130 = vmatpush.bf16.msra.mxu0 %v109
    %131 = vmatpush.bf16.msra.mxu0 %v108
    %132 = vmatmul.bf16.gmra.mxu0 %v74
    %v133 = vpop.f32.mrf.mxu0
    %v134 = vadd.f32 0.0, %v133
    %v135 = vpop.f32.mrf.mxu0
    %v136 = vadd.f32 0.0, %v135
    %137 = vdwg.mxu0
    %v138 = vadd.f32 %v50, %v134
    %v139 = vadd.f32 %v51, %v136
    %140 = vst [vmem:[#allocation2] sm:$0xff] %v138
    %141 = vst [vmem:[#allocation2 + $0x8] sm:$0xff] %v139
    // Predicated region
    $region26: #{transformer_vae_forward.55} parent=1 // pred_check
      %p142 = pneg %p44
    $region27: #{transformer_vae_forward.55} parent=1 // pred_check_branch
      %144 = sbr.rel (%p142) target = $region29
    $region28: #{transformer_vae_forward.55} parent=1 // pred_region
      %v145 = vld [vmem:[#allocation2] sm:$0xff]
      %v146 = vld [vmem:[#allocation2 + $0x8] sm:$0xff]
      %v147 = vld [vmem:[#allocation5] sm:$0x1]
      %v149 = vperm.slane %v147, 0
      %v151 = vadd.f32 %v145, %v149
      %v152 = vadd.f32 %v146, %v149
      %153 = vst [vmem:[%s3] sm:$0xff] %v151
      %154 = vst [vmem:[%s3 + $0x8] sm:$0xff] %v152
    $region29: #{transformer_vae_forward.55} parent=1 // pred_fallthru
      _
    // Predicated region
    $region30: #{transformer_vae_forward.55} parent=1 // pred_check
      _
    $region31: #{transformer_vae_forward.55} parent=1 // pred_check_branch
      %156 = sbr.rel (0) target = $region33
    $region32: #{transformer_vae_forward.55} parent=1 // pred_region
      _
    $region33: #{transformer_vae_forward.55} parent=1 // pred_fallthru
      _
    // Predicated region
    $region34: #{transformer_vae_forward.55} parent=1 // pred_check
      _
    $region35: #{transformer_vae_forward.55} parent=1 // pred_check_branch
      %158 = sbr.rel (0) target = $region37
    $region36: #{transformer_vae_forward.55} parent=1 // pred_region
      _
    $region37: #{transformer_vae_forward.55} parent=1 // pred_fallthru
      _
    %159 = vsyncpa [#allocation4], 1
    %160 = vsyncpa [#allocation6], 1

// kernel: transformer_vae_forward.54
$region0: #{transformer_vae_forward.54}
  #allocation0 [shape = 'u32[]', space=smem, size = 0x4, offset = 0x4, fixed_abs, tag = 'smem constant byte address 0x4 - core index']
  #allocation1 [shape = 'u32[72,128]{1,0:T(1,128)}', space=vmem, size = 0x9000, scoped, tag = 'internal scratch']
  #allocation2 [shape = 'f32[16,128]{1,0:T(8,128)}', space=vmem, size = 0x2000, scoped, tag = 'scratch operand']
  %s0 = inlined_call_operand.vmem [shape: bf16[16,128], index: 0, kind: input, shape index: {}]
  %s1 = inlined_call_operand.hbm [shape: bf16[128,128], index: 1, kind: input, shape index: {}]
  %s2 = inlined_call_operand.vmem [shape: f32[1,128], index: 2, kind: input, shape index: {}]
  %s3 = inlined_call_operand.vmem [shape: bf16[16,128], index: 3, kind: input, shape index: {}]
  %s4 = inlined_call_operand.hbm [shape: f32[1,128], index: 4, kind: input, shape index: {}]
  %s5 = inlined_call_operand.hbm [shape: f32[1,128], index: 5, kind: input, shape index: {}]
  %s6 = inlined_call_operand.vmem [shape: bf16[16,128], index: 6, kind: output, shape index: {}]
  %s7 = sld [smem:[#allocation0]]
  $region54: #{transformer_vae_forward.54} parent=0
    _
  %s9 = ssub.s32 1, %s7
  %s10 = scalar_select 0, %s9, %s7
  $region1: #{transformer_vae_forward.54} parent=0
    #allocation3 [shape = 'u8[32768]{0}', space=vmem, size = 0x8000, scoped, tag = 'input window, operand 1, single buffered']
    #allocation4 [shape = 's32[1]{0}', space=sflag, size = 0x4, scoped, tag = 'scoped memory for transformer_vae_forward.54']
    #allocation5 [shape = 'u8[512]{0}', space=vmem, size = 0x400, scoped, tag = 'input window, operand 4, single buffered']
    #allocation6 [shape = 's32[1]{0}', space=sflag, size = 0x4, scoped, tag = 'scoped memory for transformer_vae_forward.54']
    #allocation7 [shape = 'u8[512]{0}', space=vmem, size = 0x400, scoped, tag = 'input window, operand 5, single buffered']
    %11 = vsyncpa [#allocation4], 0
    %12 = vsyncpa [#allocation6], 0
    // Predicated region
    $region2: #{transformer_vae_forward.54} parent=1 // pred_check
      _
    $region3: #{transformer_vae_forward.54} parent=1 // pred_check_branch
      %14 = sbr.rel (0) target = $region5
    $region4: #{transformer_vae_forward.54} parent=1 // pred_region
      _
    $region5: #{transformer_vae_forward.54} parent=1 // pred_fallthru
      _
    // Predicated region
    $region6: #{transformer_vae_forward.54} parent=1 // pred_check
      _
    $region7: #{transformer_vae_forward.54} parent=1 // pred_check_branch
      %16 = sbr.rel (0) target = $region9
    $region8: #{transformer_vae_forward.54} parent=1 // pred_region
      %18 = vsyncadd [#allocation4], 0
      %s19 = sshll.u32 %s1, 4
      %s20 = int_to_ptr.hbm [resolvable:$true] %s19
      %s21 = sshll.u32 [#allocation3], 4
      %s22 = int_to_ptr.vmem [resolvable:$true] %s21
      %27 = dma.hbm_to_vmem [thread:$0]  %s20, 1024, %s22, [#allocation4], 64, 64, 4
    $region9: #{transformer_vae_forward.54} parent=1 // pred_fallthru
      _
    // Predicated region
    $region10: #{transformer_vae_forward.54} parent=1 // pred_check
      _
    $region11: #{transformer_vae_forward.54} parent=1 // pred_check_branch
      %29 = sbr.rel (0) target = $region13
    $region12: #{transformer_vae_forward.54} parent=1 // pred_region
      _
    $region13: #{transformer_vae_forward.54} parent=1 // pred_fallthru
      _
    // Predicated region
    $region14: #{transformer_vae_forward.54} parent=1 // pred_check
      _
    $region15: #{transformer_vae_forward.54} parent=1 // pred_check_branch
      %31 = sbr.rel (0) target = $region17
    $region16: #{transformer_vae_forward.54} parent=1 // pred_region
      _
    $region17: #{transformer_vae_forward.54} parent=1 // pred_fallthru
      _
    // Predicated region
    $region18: #{transformer_vae_forward.54} parent=1 // pred_check
      _
    $region19: #{transformer_vae_forward.54} parent=1 // pred_check_branch
      %33 = sbr.rel (0) target = $region21
    $region20: #{transformer_vae_forward.54} parent=1 // pred_region
      %35 = vsyncadd [#allocation6], 0
      %s37 = sshll.u32 %s4, 4
      %s38 = int_to_ptr.hbm [resolvable:$true] %s37
      %s39 = sshll.u32 [#allocation5], 4
      %s40 = int_to_ptr.vmem [resolvable:$true] %s39
      %42 = dma.hbm_to_vmem [thread:$0]  %s38, 16, %s40, [#allocation6]
    $region21: #{transformer_vae_forward.54} parent=1 // pred_fallthru
      _
    // Predicated region
    $region22: #{transformer_vae_forward.54} parent=1 // pred_check
      _
    $region23: #{transformer_vae_forward.54} parent=1 // pred_check_branch
      %44 = sbr.rel (0) target = $region25
    $region24: #{transformer_vae_forward.54} parent=1 // pred_region
      %46 = vsyncadd [#allocation6], 0
      %s48 = sshll.u32 %s5, 4
      %s49 = int_to_ptr.hbm [resolvable:$true] %s48
      %s50 = sshll.u32 [#allocation7], 4
      %s51 = int_to_ptr.vmem [resolvable:$true] %s50
      %53 = dma.hbm_to_vmem [thread:$0]  %s49, 16, %s51, [#allocation6]
    $region25: #{transformer_vae_forward.54} parent=1 // pred_fallthru
      _
    // Predicated region
    $region26: #{transformer_vae_forward.54} parent=1 // pred_check
      _
    $region27: #{transformer_vae_forward.54} parent=1 // pred_check_branch
      %55 = sbr.rel (0) target = $region29
    $region28: #{transformer_vae_forward.54} parent=1 // pred_region
      %57 = dma.done [#allocation4], 1024
    $region29: #{transformer_vae_forward.54} parent=1 // pred_fallthru
      _
    // Predicated region
    $region30: #{transformer_vae_forward.54} parent=1 // pred_check
      _
    $region31: #{transformer_vae_forward.54} parent=1 // pred_check_branch
      %59 = sbr.rel (0) target = $region33
    $region32: #{transformer_vae_forward.54} parent=1 // pred_region
      %61 = dma.done [#allocation6], 16
    $region33: #{transformer_vae_forward.54} parent=1 // pred_fallthru
      _
    // Predicated region
    $region34: #{transformer_vae_forward.54} parent=1 // pred_check
      _
    $region35: #{transformer_vae_forward.54} parent=1 // pred_check_branch
      %63 = sbr.rel (0) target = $region37
    $region36: #{transformer_vae_forward.54} parent=1 // pred_region
      %65 = dma.done [#allocation6], 16
    $region37: #{transformer_vae_forward.54} parent=1 // pred_fallthru
      _
    %p66 = scmp.eq.s32.totalorder 0, 0
    // Predicated region
    $region38: #{transformer_vae_forward.54} parent=1 // pred_check
      %p67 = pneg %p66
    $region39: #{transformer_vae_forward.54} parent=1 // pred_check_branch
      %69 = sbr.rel (%p67) target = $region41
    $region40: #{transformer_vae_forward.54} parent=1 // pred_region
      %70 = vst [vmem:[#allocation2] sm:$0xff] 0.0
      %71 = vst [vmem:[#allocation2 + $0x8] sm:$0xff] 0.0
    $region41: #{transformer_vae_forward.54} parent=1 // pred_fallthru
      _
    %v72 = vld [vmem:[#allocation2] sm:$0xff]
    %v73 = vld [vmem:[#allocation2 + $0x8] sm:$0xff]
    %v74 = vld [vmem:[%s0] sm:$0xf]
    %v75 = vld [vmem:[%s0 + $0x4] sm:$0xf]
    %v76 = vld [vmem:[#allocation3] sm:$0xf]
    %v77 = vld [vmem:[#allocation3 + $0x4] sm:$0xf]
    %v78 = vld [vmem:[#allocation3 + $0x8] sm:$0xf]
    %v79 = vld [vmem:[#allocation3 + $0xc] sm:$0xf]
    %v80 = vld [vmem:[#allocation3 + $0x10] sm:$0xf]
    %v81 = vld [vmem:[#allocation3 + $0x14] sm:$0xf]
    %v82 = vld [vmem:[#allocation3 + $0x18] sm:$0xf]
    %v83 = vld [vmem:[#allocation3 + $0x1c] sm:$0xf]
    %v84 = vld [vmem:[#allocation3 + $0x20] sm:$0xf]
    %v85 = vld [vmem:[#allocation3 + $0x24] sm:$0xf]
    %v86 = vld [vmem:[#allocation3 + $0x28] sm:$0xf]
    %v87 = vld [vmem:[#allocation3 + $0x2c] sm:$0xf]
    %v88 = vld [vmem:[#allocation3 + $0x30] sm:$0xf]
    %v89 = vld [vmem:[#allocation3 + $0x34] sm:$0xf]
    %v90 = vld [vmem:[#allocation3 + $0x38] sm:$0xf]
    %v91 = vld [vmem:[#allocation3 + $0x3c] sm:$0xf]
    %v94 = vunpack.c.l.b16 %v74
    %v95 = vunpack.c.l.b16 %v75
    %v96 = vpack.c.b16 %v95, %v94
    %v114 = vunpack.c.l.b16 %v76
    %v115 = vunpack.c.l.b16 %v77
    %v116 = vunpack.c.l.b16 %v78
    %v117 = vunpack.c.l.b16 %v79
    %v118 = vunpack.c.l.b16 %v80
    %v119 = vunpack.c.l.b16 %v81
    %v120 = vunpack.c.l.b16 %v82
    %v121 = vunpack.c.l.b16 %v83
    %v122 = vunpack.c.l.b16 %v84
    %v123 = vunpack.c.l.b16 %v85
    %v124 = vunpack.c.l.b16 %v86
    %v125 = vunpack.c.l.b16 %v87
    %v126 = vunpack.c.l.b16 %v88
    %v127 = vunpack.c.l.b16 %v89
    %v128 = vunpack.c.l.b16 %v90
    %v129 = vunpack.c.l.b16 %v91
    %v130 = vpack.c.b16 %v115, %v114
    %v131 = vpack.c.b16 %v117, %v116
    %v132 = vpack.c.b16 %v119, %v118
    %v133 = vpack.c.b16 %v121, %v120
    %v134 = vpack.c.b16 %v123, %v122
    %v135 = vpack.c.b16 %v125, %v124
    %v136 = vpack.c.b16 %v127, %v126
    %v137 = vpack.c.b16 %v129, %v128
    %146 = vmatpush.bf16.msra.mxu0 %v137
    %147 = vmatpush.bf16.msra.mxu0 %v136
    %148 = vmatpush.bf16.msra.mxu0 %v135
    %149 = vmatpush.bf16.msra.mxu0 %v134
    %150 = vmatpush.bf16.msra.mxu0 %v133
    %151 = vmatpush.bf16.msra.mxu0 %v132
    %152 = vmatpush.bf16.msra.mxu0 %v131
    %153 = vmatpush.bf16.msra.mxu0 %v130
    %154 = vmatmul.bf16.gmra.mxu0 %v96
    %v155 = vpop.f32.mrf.mxu0
    %v156 = vadd.f32 0.0, %v155
    %v157 = vpop.f32.mrf.mxu0
    %v158 = vadd.f32 0.0, %v157
    %159 = vdwg.mxu0
    %v160 = vadd.f32 %v72, %v156
    %v161 = vadd.f32 %v73, %v158
    %162 = vst [vmem:[#allocation2] sm:$0xff] %v160
    %163 = vst [vmem:[#allocation2 + $0x8] sm:$0xff] %v161
    // Predicated region
    $region42: #{transformer_vae_forward.54} parent=1 // pred_check
      %p164 = pneg %p66
    $region43: #{transformer_vae_forward.54} parent=1 // pred_check_branch
      %166 = sbr.rel (%p164) target = $region45
    $region44: #{transformer_vae_forward.54} parent=1 // pred_region
      %v167 = vld [vmem:[#allocation2] sm:$0xff]
      %v168 = vld [vmem:[#allocation2 + $0x8] sm:$0xff]
      %v169 = vld [vmem:[%s2] sm:$0x1]
      %v171 = vperm.slane %v169, 0
      %v173 = vadd.f32 %v167, %v171
      %v174 = vadd.f32 %v168, %v171
      %v175 = vld [vmem:[%s3] sm:$0xf]
      %v176 = vld [vmem:[%s3 + $0x4] sm:$0xf]
      %v177 = vunpack.c.l.bf16 %v175
      %v178 = vunpack.c.l.bf16 %v176
      %v179 = vadd.f32 %v173, %v177
      %v180 = vadd.f32 %v174, %v178
      %v181 = vlaneseq
      %v182 = vand.u32 %v181, 127
      %vm183 = vcmp.lt.s32.totalorder %v182, 32
      %v184 = vsel %vm183, %v179, 0.0
      %v185 = vsel %vm183, %v180, 0.0
      %186 = vadd.xlane.f32.xlu0 %v184
      %v187 = vpop.xlane.xlu0 %186
      %188 = vadd.xlane.f32.xlu0 %v185
      %v189 = vpop.xlane.xlu0 %188
      %v190 = vmul.f32 %v187, 0.03125
      %v191 = vmul.f32 %v189, 0.03125
      %v192 = vsub.f32 %v179, %v190
      %v193 = vsub.f32 %v180, %v191
      %v194 = vsel %vm183, %v192, 0.0
      %v195 = vsel %vm183, %v193, 0.0
      %v196 = vmul.f32 %v194, %v194
      %v197 = vmul.f32 %v195, %v195
      %198 = vadd.xlane.f32.xlu0 %v196
      %v199 = vpop.xlane.xlu0 %198
      %200 = vadd.xlane.f32.xlu0 %v197
      %v201 = vpop.xlane.xlu0 %200
      %v202 = vmul.f32 %v199, 0.03125
      %v203 = vmul.f32 %v201, 0.03125
      %v204 = vadd.f32 %v202, 1e-05
      %v205 = vadd.f32 %v203, 1e-05
      %v206 = vrsqrt.pop %v204
      %v207 = vmul.f32 %v206, %v204
      %v208 = vmul.f32 %v207, %v206
      %v209 = vmul.f32 0.5, %v208
      %v210 = vsub.f32 1.5, %v209
      %v211 = vmul.f32 %v206, %v210
      %vm212 = vweird.f32 %v204
      %vm213 = vweird.f32 %v206
      %vm214 = vmor %vm212, %vm213
      %v215 = vsel %vm214, %v206, %v211
      %v216 = vrsqrt.pop %v205
      %v217 = vmul.f32 %v216, %v205
      %v218 = vmul.f32 %v217, %v216
      %v219 = vmul.f32 0.5, %v218
      %v220 = vsub.f32 1.5, %v219
      %v221 = vmul.f32 %v216, %v220
      %vm222 = vweird.f32 %v205
      %vm223 = vweird.f32 %v216
      %vm224 = vmor %vm222, %vm223
      %v225 = vsel %vm224, %v216, %v221
      %v226 = vmul.f32 %v194, %v215
      %v227 = vmul.f32 %v195, %v225
      %v228 = vld [vmem:[#allocation5] sm:$0x1]
      %v230 = vperm.slane %v228, 0
      %v232 = vmul.f32 %v226, %v230
      %v233 = vmul.f32 %v227, %v230
      %v234 = vld [vmem:[#allocation7] sm:$0x1]
      %v236 = vperm.slane %v234, 0
      %v238 = vadd.f32 %v232, %v236
      %v239 = vadd.f32 %v233, %v236
      %v240 = vpack.c.bf16 %v238, %v238
      %v241 = vpack.c.bf16 %v239, %v239
      %242 = vst [vmem:[%s6] sm:$0xf] %v240
      %243 = vst [vmem:[%s6 + $0x4] sm:$0xf] %v241
    $region45: #{transformer_vae_forward.54} parent=1 // pred_fallthru
      _
    // Predicated region
    $region46: #{transformer_vae_forward.54} parent=1 // pred_check
      _
    $region47: #{transformer_vae_forward.54} parent=1 // pred_check_branch
      %245 = sbr.rel (0) target = $region49
    $region48: #{transformer_vae_forward.54} parent=1 // pred_region
      _
    $region49: #{transformer_vae_forward.54} parent=1 // pred_fallthru
      _
    // Predicated region
    $region50: #{transformer_vae_forward.54} parent=1 // pred_check
      _
    $region51: #{transformer_vae_forward.54} parent=1 // pred_check_branch
      %247 = sbr.rel (0) target = $region53
    $region52: #{transformer_vae_forward.54} parent=1 // pred_region
      _
    $region53: #{transformer_vae_forward.54} parent=1 // pred_fallthru
      _
    %248 = vsyncpa [#allocation4], 1
    %249 = vsyncpa [#allocation6], 1

</llo_original>
